<compile_context>
chip_gen: v5e
topology: v5e:2x2
jax: 0.10.0
libtpu: 0.0.40
codegen_flags: <defaults>
</compile_context>

<pallas_src>
import functools

import jax
import jax.numpy as jnp
from jax import lax
from jax.experimental import pallas as pl
from jax.experimental.pallas import tpu as pltpu


# ------------------- fused 1x1 conv + depthwise 3x3 conv --------------------
def _qkv_fused_kernel(xw_ref, wq_ref, wd_ref, col_ref, oqk_ref, ov_ref, *, W):
    """pw = Wqkv @ x_window (MXU), then 9-tap depthwise on the halo'd tile.

    xw_ref:  (1, 1, C, T + 2*PAD) bf16   (halo'd window of the padded image)
    wq_ref:  (5C, C)              bf16
    wd_ref:  (5C, 9)              f32    (tap t = dh*3 + dw)
    col_ref: (1, T)               i32    (w-coordinate of each output lane)
    oqk_ref: (1, 4C, T)           bf16   (q1,k1,q2,k2 channels)
    ov_ref:  (1, C, T)            f32    (v channels; f32 so the argsort key
                                          downstream keeps full precision)
    """
    xs = xw_ref[0, 0]                                       # (C, L) bf16
    pw = jnp.dot(wq_ref[...], xs,
                 preferred_element_type=jnp.float32)        # (5C, L) f32
    c5, L = pw.shape
    T = oqk_ref.shape[2]
    PAD = (L - T) // 2                                      # == W + 1

    # Out-of-image ROWS are handled by the wrapper-side zero padding of x
    # (conv1x1 of zeros is zero); only the dw=+-1 COLUMN edges need masks.
    col = col_ref[...]                                      # (1, T) i32
    not_first_col = col >= 1                                 # dw = -1 valid
    not_last_col = col <= (W - 2)                            # dw = +1 valid

    acc = jnp.zeros((c5, T), jnp.float32)
    for dh in range(3):
        for dw in range(3):
            t = dh * 3 + dw
            k = (dh - 1) * W + (dw - 1)
            tap = lax.slice(pw, (0, PAD + k), (c5, PAD + k + T))
            if dw == 0:
                tap = jnp.where(not_first_col, tap, 0.0)
            elif dw == 2:
                tap = jnp.where(not_last_col, tap, 0.0)
            acc = acc + tap * wd_ref[:, t:t + 1]

    c4 = oqk_ref.shape[1]                                   # 4C
    oqk_ref[0] = acc[:c4].astype(jnp.bfloat16)
    ov_ref[0] = acc[c4:]


def _pick_qkv_tile(hw, c5, pad):
    if hw % 128 != 0:
        # TODO(synk): odd resolutions fall back to a single full-hw tile; a
        # halo-DMA (memory_space=pl.ANY) path would lift this restriction.
        return hw
    budget = 8 << 20                           # f32 pw + acc + tap slabs
    cap_elems = budget // (c5 * 4)
    cap_t = max(128, (cap_elems - 2 * pad) // 3)
    best = 128
    for t in range(128, hw + 1, 128):
        if hw % t == 0 and t <= cap_t:
            best = t
    return best


def qkv_fused(x_cf, w_qkv, w_dw9, H, W):
    """x_cf (b, C, HW) bf16 -> (q1k1q2k2 (b,4C,HW) bf16, v (b,C,HW) f32)."""
    b, c, hw = x_cf.shape
    c5 = w_qkv.shape[0]
    PAD = W + 1
    T = _pick_qkv_tile(hw, c5, PAD)
    n_tiles = hw // T
    L = T + 2 * PAD

    # Pad x once (cheap: x is the smallest tensor) and materialize the per-tile
    # halo'd windows in HBM -> every BlockSpec below is a plain static block.
    x_pad = jnp.pad(x_cf, ((0, 0), (0, 0), (PAD, PAD)))
    xw = jnp.stack([lax.slice_in_dim(x_pad, j * T, j * T + L, axis=2)
                    for j in range(n_tiles)], axis=1)        # (b, nt, C, L)
    col_ids = (jnp.arange(hw, dtype=jnp.int32) % W).reshape(1, hw)

    kern = functools.partial(_qkv_fused_kernel, W=W)
    return pl.pallas_call(
        kern,
        out_shape=(jax.ShapeDtypeStruct((b, 4 * c, hw), jnp.bfloat16),
                   jax.ShapeDtypeStruct((b, c, hw), jnp.float32)),
        grid=(b, n_tiles),
        in_specs=[pl.BlockSpec((1, 1, c, L), lambda i, j: (i, j, 0, 0)),
                  pl.BlockSpec((c5, c), lambda i, j: (0, 0)),
                  pl.BlockSpec((c5, 9), lambda i, j: (0, 0)),
                  pl.BlockSpec((1, T), lambda i, j: (0, j))],
        out_specs=[pl.BlockSpec((1, 4 * c, T), lambda i, j: (i, 0, j)),
                   pl.BlockSpec((1, c, T), lambda i, j: (i, 0, j))],
        compiler_params=pltpu.CompilerParams(
            dimension_semantics=("parallel", "parallel"),
            vmem_limit_bytes=32 * 1024 * 1024),
    )(xw, w_qkv, w_dw9, col_ids)


# ------------------------ channel-attention kernel --------------------------
def _attn_kernel(t_ref, q_ref, k_ref, v_ref, o_ref):
    """Batched (G slices per step) channel attention with safe softmax_1.

    t_ref: (b*heads,) f32 SMEM (scalar prefetch)   temperature per slice
    q/k/v: (G, D, hw) bf16                         o: (G, D, hw) bf16
    """
    q = q_ref[...]
    k = k_ref[...]
    v = v_ref[...]
    G = q.shape[0]

    # L2 normalize along hw: sum-of-squares + rsqrt in f32, scaling multiply
    # in bf16 (native on v6e/v7x VPU; identical work to the f32 path on v5e).
    q32 = q.astype(jnp.float32)
    k32 = k.astype(jnp.float32)
    inv_q = lax.rsqrt(jnp.sum(q32 * q32, axis=-1, keepdims=True) + 1e-12)
    inv_k = lax.rsqrt(jnp.sum(k32 * k32, axis=-1, keepdims=True) + 1e-12)
    qn = q * inv_q.astype(jnp.bfloat16)
    kn = k * inv_k.astype(jnp.bfloat16)

    # Contract the hw dims directly (batched einsum, no explicit transpose).
    attn = jnp.einsum("gdh,geh->gde", qn, kn,
                      preferred_element_type=jnp.float32)   # (G, D, D) f32

    # Per-(batch,head) temperature scalars live in SMEM (scalar prefetch).
    i = pl.program_id(0)
    gid = lax.broadcasted_iota(jnp.int32, attn.shape, 0)
    scale = jnp.zeros_like(attn)
    for g0 in range(G):
        scale = jnp.where(gid == g0, t_ref[i * G + g0], scale)
    attn = attn * scale

    # Reference uses softmax_1: exp(a) / (sum exp(a) + 1).  With m=max(a,0):
    #   = exp(a-m) / (sum exp(a-m) + exp(-m))   -- overflow safe, exact.
    m = jnp.maximum(jnp.max(attn, axis=-1, keepdims=True), 0.0)
    e = jnp.exp(attn - m)
    denom = jnp.sum(e, axis=-1, keepdims=True) + jnp.exp(-m)
    p = (e * pl.reciprocal(denom, approx=True)).astype(jnp.bfloat16)

    o_ref[...] = jnp.einsum("gde,geh->gdh", p, v,
                            preferred_element_type=jnp.float32
                            ).astype(jnp.bfloat16)


def _heads_per_step(bh, d, hw):
    # Per (b,head) slice: q/k/v + out in bf16 (double-buffered) plus the
    # in-kernel f32 temporaries (norm upcasts, f32 PV result) and the small
    # (D, D) attention matrices.  Keep the working set ~<=12 MiB.
    per_slice = d * hw * (3 * 2 * 2 + 2 * 2 + 3 * 4) + d * d * 48
    cap = max(1, (12 << 20) // max(per_slice, 1))
    g = 1
    for cand in range(1, bh + 1):
        if bh % cand == 0 and cand <= cap:
            g = cand
    return g


def channel_attention(q, k, v, temp_flat):
    bh, d, hw = q.shape
    g = _heads_per_step(bh, d, hw)
    blk = pl.BlockSpec((g, d, hw), lambda i, t: (i, 0, 0))
    return pl.pallas_call(
        _attn_kernel,
        out_shape=jax.ShapeDtypeStruct((bh, d, hw), jnp.bfloat16),
        grid_spec=pltpu.PrefetchScalarGridSpec(
            num_scalar_prefetch=1,
            grid=(bh // g,),
            in_specs=[blk, blk, blk],
            out_specs=blk),
        compiler_params=pltpu.CompilerParams(
            dimension_semantics=("parallel",),
            vmem_limit_bytes=48 * 1024 * 1024),
    )(temp_flat, q, k, v)


# ------------------- fused multiply + project_out (1x1) ---------------------
def _proj_kernel(a_ref, b_ref, w_ref, o_ref):
    prod = a_ref[0] * b_ref[0]                               # bf16 (C, T)
    o_ref[0] = jnp.dot(w_ref[...], prod,
                       preferred_element_type=jnp.float32)   # lane-dense out


def _pick_proj_tile(hw_p, c):
    budget = 8 << 20
    per_lane = c * (2 + 2 + 4) * 2           # a,b bf16 + f32 out, dbl-buffered
    cap = max(128, budget // max(per_lane, 1))
    best = 128
    for t in range(128, hw_p + 1, 128):
        if hw_p % t == 0 and t <= cap:
            best = t
    return best


def project_out_fused(a, b_, w):
    bsz, c, hw = a.shape
    hw_p = ((hw + 127) // 128) * 128          # never a full odd-hw block
    if hw_p != hw:
        padw = ((0, 0), (0, 0), (0, hw_p - hw))
        a, b_ = jnp.pad(a, padw), jnp.pad(b_, padw)
    t = _pick_proj_tile(hw_p, c)
    blk = pl.BlockSpec((1, c, t), lambda i, j: (i, 0, j))
    out = pl.pallas_call(
        _proj_kernel,
        out_shape=jax.ShapeDtypeStruct((bsz, c, hw_p), jnp.float32),
        grid=(bsz, hw_p // t),
        in_specs=[blk, blk, pl.BlockSpec((c, c), lambda i, j: (0, 0))],
        out_specs=blk,
        compiler_params=pltpu.CompilerParams(
            dimension_semantics=("parallel", "parallel"),
            vmem_limit_bytes=32 * 1024 * 1024),
    )(a, b_, w)
    return out[:, :, :hw] if hw_p != hw else out


# ------------------------------ module glue ---------------------------------
def _reshape_attn(q, k, v, if_box, temperature, num_heads, factor):
    b, c, hw0 = q.shape
    pad_len = 0 if hw0 % factor == 0 else (hw0 // factor + 1) * factor - hw0
    if pad_len:
        padw = ((0, 0), (0, 0), (0, pad_len))
        q, k, v = jnp.pad(q, padw), jnp.pad(k, padw), jnp.pad(v, padw)
    hwp = hw0 + pad_len
    hw = hwp // factor
    c_per = c // num_heads
    d = c_per * factor

    def fwd(t):
        if if_box:   # 'b (head c) (factor hw) -> b head (c factor) hw'
            return t.reshape(b, num_heads, d, hw)
        # 'b (head c) (hw factor) -> b head (c factor) hw'
        t = t.reshape(b, num_heads, c_per, hw, factor)
        return t.transpose(0, 1, 2, 4, 3).reshape(b, num_heads, d, hw)

    def bwd(t):
        t = t.reshape(b, num_heads, c_per, factor, hw)
        if if_box:
            return t.reshape(b, c, hwp)
        return t.transpose(0, 1, 2, 4, 3).reshape(b, c, hwp)

    qh = fwd(q).reshape(b * num_heads, d, hw)
    kh = fwd(k).reshape(b * num_heads, d, hw)
    vh = fwd(v).reshape(b * num_heads, d, hw)
    temp_flat = jnp.tile(temperature.reshape(num_heads), (b,)).astype(jnp.float32)

    out = channel_attention(qh, kh, vh, temp_flat)          # bf16
    out = bwd(out.reshape(b, num_heads, d, hw))
    if pad_len:
        out = out[:, :, :hw0]
    return out


def improved_dhsa_forward(x, params, num_heads=4):
    factor = num_heads
    b, c, h, w = x.shape
    half = c // 2
    hw = h * w

    # --- sort first half channels along H then W (plain-JAX glue) ---
    x_first = x[:, :half]
    idx_h = jnp.argsort(x_first, axis=-2)
    xs = jnp.take_along_axis(x_first, idx_h, axis=-2)
    idx_w = jnp.argsort(xs, axis=-1)
    xs = jnp.take_along_axis(xs, idx_w, axis=-1)
    x = x.at[:, :half].set(xs)
    # TODO(synk): adaptive_bin_sort (torch.bucketize on intensity_map) is
    # computed in the PyTorch module but its result is never used in forward().

    # --- fused qkv = dwconv3x3(conv1x1(x)), channels-first, hw-tiled ---
    x_cf = x.reshape(b, c, hw).astype(jnp.bfloat16)
    qk, v = qkv_fused(x_cf,
                      params["w_qkv"].astype(jnp.bfloat16),
                      params["w_dw"].reshape(5 * c, 9).astype(jnp.float32),
                      h, w)
    # qk: (b, 4c, hw) bf16 (q1,k1,q2,k2) ; v: (b, c, hw) f32 (sort key)

    # --- sort v along hw; gather q1/k1/q2/k2 with ONE take_along_axis ---
    idx = jnp.argsort(v, axis=-1)
    v_sorted = jnp.take_along_axis(v, idx, axis=-1).astype(jnp.bfloat16)
    idx4 = jnp.broadcast_to(idx[:, None], (b, 4, c, hw))
    qk_sorted = jnp.take_along_axis(qk.reshape(b, 4, c, hw), idx4, axis=-1)
    q1s, k1s = qk_sorted[:, 0], qk_sorted[:, 1]
    q2s, k2s = qk_sorted[:, 2], qk_sorted[:, 3]

    temp = params["temperature"]
    out1 = _reshape_attn(q1s, k1s, v_sorted, True, temp, num_heads, factor)
    out2 = _reshape_attn(q2s, k2s, v_sorted, False, temp, num_heads, factor)

    # out1/out2 are still in sorted-hw order.  The inverse permutation (the
    # torch.scatter) commutes with the per-pixel multiply and 1x1 projection,
    # so multiply+project are fused first and the un-permute happens ONCE.
    out_sorted = project_out_fused(out1, out2,
                                   params["w_proj"].astype(jnp.bfloat16))
    inv_idx = jnp.argsort(idx, axis=-1)
    out = jnp.take_along_axis(out_sorted, inv_idx, axis=-1).reshape(b, c, h, w)

    # --- un-sort the first half channels (W first, then H) ---
    out_replace = out[:, :half]
    out_replace = jnp.take_along_axis(out_replace,
                                      jnp.argsort(idx_w, axis=-1), axis=-1)
    out_replace = jnp.take_along_axis(out_replace,
                                      jnp.argsort(idx_h, axis=-2), axis=-2)
    out = out.at[:, :half].set(out_replace)
    return out


if __name__ == "__main__":
    B, C, H, W = 2, 8, 16, 16
    NUM_HEADS = 4

    key = jax.random.PRNGKey(0)
    k_qkv, k_dw, k_proj, k_x = jax.random.split(key, 4)
    params = {
        # qkv 1x1 conv: (5C, C)        (PyTorch weight (5c, c, 1, 1) squeezed)
        "w_qkv": jax.random.normal(k_qkv, (5 * C, C), jnp.float32) * 0.1,
        # depthwise 3x3: (5C, 3, 3)    (PyTorch weight (5c, 1, 3, 3) squeezed)
        "w_dw": jax.random.normal(k_dw, (5 * C, 3, 3), jnp.float32) * 0.1,
        # project_out 1x1: (C, C)
        "w_proj": jax.random.normal(k_proj, (C, C), jnp.float32) * 0.1,
        # temperature: ones(num_heads, 1, 1)  (all convs are bias=False)
        "temperature": jnp.ones((NUM_HEADS, 1, 1), jnp.float32),
    }
    x = jax.random.normal(k_x, (B, C, H, W), jnp.float32)

    fwd = jax.jit(functools.partial(improved_dhsa_forward, num_heads=NUM_HEADS))
    out = jax.block_until_ready(fwd(x, params))
    assert out.shape == (B, C, H, W)
    assert bool(jnp.all(jnp.isfinite(out)))
    print("KERNEL_OK")
</pallas_src>

<mosaic_0001>
module attributes {stable_mosaic.version = 11 : i64} {
  func.func @_qkv_fused_kernel(%arg0: i32, %arg1: i32, %arg2: memref<1x1x8x290xbf16, #tpu.memory_space<vmem>>, %arg3: memref<40x8xbf16, #tpu.memory_space<vmem>>, %arg4: memref<40x9xf32, #tpu.memory_space<vmem>>, %arg5: memref<1x256xi32, #tpu.memory_space<vmem>>, %arg6: memref<1x32x256xbf16, #tpu.memory_space<vmem>>, %arg7: memref<1x8x256xf32, #tpu.memory_space<vmem>>) attributes {dimension_semantics = [#tpu.dimension_semantics<parallel>, #tpu.dimension_semantics<parallel>], iteration_bounds = array<i64: 2, 1>, scalar_prefetch = 0 : i64, scratch_operands = 0 : i64, tpu.core_type = #tpu.core_type<tc>, window_params = [{transform_indices = @transform_0, window_bounds = array<i64: 1, 1, 8, 290>}, {pipeline_mode = #tpu.pipeline_mode<synchronous>, transform_indices = @transform_1, window_bounds = array<i64: 40, 8>}, {pipeline_mode = #tpu.pipeline_mode<synchronous>, transform_indices = @transform_2, window_bounds = array<i64: 40, 9>}, {transform_indices = @transform_3, window_bounds = array<i64: 1, 256>}, {transform_indices = @transform_4, window_bounds = array<i64: 1, 32, 256>}, {transform_indices = @transform_5, window_bounds = array<i64: 1, 8, 256>}]} {
    %c0 = arith.constant 0 : index
    %c0_0 = arith.constant 0 : index
    %c0_1 = arith.constant 0 : index
    %c0_2 = arith.constant 0 : index
    %0 = vector.load %arg2[%c0, %c0_0, %c0_1, %c0_2] : memref<1x1x8x290xbf16, #tpu.memory_space<vmem>>, vector<1x1x8x290xbf16>
    %1 = vector.shape_cast %0 : vector<1x1x8x290xbf16> to vector<8x290xbf16>
    %c0_3 = arith.constant 0 : index
    %c0_4 = arith.constant 0 : index
    %2 = vector.load %arg3[%c0_3, %c0_4] : memref<40x8xbf16, #tpu.memory_space<vmem>>, vector<40x8xbf16>
    %cst = arith.constant dense<0.000000e+00> : vector<40x290xf32>
    %3 = tpu.matmul %2, %1, %cst {dimension_numbers = #tpu.dot_dimension_numbers<[1], [0], [0], [1], [0, 0, 1, 1], [], []>} : vector<40x8xbf16>, vector<8x290xbf16>, vector<40x290xf32> -> vector<40x290xf32>
    %c0_5 = arith.constant 0 : index
    %c0_6 = arith.constant 0 : index
    %4 = vector.load %arg5[%c0_5, %c0_6] : memref<1x256xi32, #tpu.memory_space<vmem>>, vector<1x256xi32>
    %c1_i32 = arith.constant 1 : i32
    %5 = vector.broadcast %c1_i32 : i32 to vector<1x256xi32>
    %6 = arith.cmpi sge, %4, %5 : vector<1x256xi32>
    %c14_i32 = arith.constant 14 : i32
    %7 = vector.broadcast %c14_i32 : i32 to vector<1x256xi32>
    %8 = arith.cmpi sle, %4, %7 : vector<1x256xi32>
    %cst_7 = arith.constant 0.000000e+00 : f32
    %9 = vector.broadcast %cst_7 : f32 to vector<40x256xf32>
    %10 = vector.extract_strided_slice %3 {offsets = [0, 0], sizes = [40, 256], strides = [1, 1]} : vector<40x290xf32> to vector<40x256xf32>
    %cst_8 = arith.constant 0.000000e+00 : f32
    %11 = vector.shape_cast %6 : vector<1x256xi1> to vector<1x256xi1>
    %12 = vector.broadcast %11 : vector<1x256xi1> to vector<40x256xi1>
    %13 = vector.broadcast %cst_8 : f32 to vector<40x256xf32>
    %14 = arith.select %12, %10, %13 : vector<40x256xi1>, vector<40x256xf32>
    %c0_9 = arith.constant 0 : index
    %c0_10 = arith.constant 0 : index
    %15 = vector.load %arg4[%c0_9, %c0_10] : memref<40x9xf32, #tpu.memory_space<vmem>>, vector<40x1xf32>
    %16 = vector.broadcast %15 : vector<40x1xf32> to vector<40x256xf32>
    %17 = arith.mulf %14, %16 : vector<40x256xf32>
    %18 = arith.addf %9, %17 : vector<40x256xf32>
    %19 = vector.extract_strided_slice %3 {offsets = [0, 1], sizes = [40, 256], strides = [1, 1]} : vector<40x290xf32> to vector<40x256xf32>
    %c0_11 = arith.constant 0 : index
    %c1 = arith.constant 1 : index
    %20 = vector.load %arg4[%c0_11, %c1] : memref<40x9xf32, #tpu.memory_space<vmem>>, vector<40x1xf32>
    %21 = vector.broadcast %20 : vector<40x1xf32> to vector<40x256xf32>
    %22 = arith.mulf %19, %21 : vector<40x256xf32>
    %23 = arith.addf %18, %22 : vector<40x256xf32>
    %24 = vector.extract_strided_slice %3 {offsets = [0, 2], sizes = [40, 256], strides = [1, 1]} : vector<40x290xf32> to vector<40x256xf32>
    %cst_12 = arith.constant 0.000000e+00 : f32
    %25 = vector.shape_cast %8 : vector<1x256xi1> to vector<1x256xi1>
    %26 = vector.broadcast %25 : vector<1x256xi1> to vector<40x256xi1>
    %27 = vector.broadcast %cst_12 : f32 to vector<40x256xf32>
    %28 = arith.select %26, %24, %27 : vector<40x256xi1>, vector<40x256xf32>
    %c0_13 = arith.constant 0 : index
    %c2 = arith.constant 2 : index
    %29 = vector.load %arg4[%c0_13, %c2] : memref<40x9xf32, #tpu.memory_space<vmem>>, vector<40x1xf32>
    %30 = vector.broadcast %29 : vector<40x1xf32> to vector<40x256xf32>
    %31 = arith.mulf %28, %30 : vector<40x256xf32>
    %32 = arith.addf %23, %31 : vector<40x256xf32>
    %33 = vector.extract_strided_slice %3 {offsets = [0, 16], sizes = [40, 256], strides = [1, 1]} : vector<40x290xf32> to vector<40x256xf32>
    %cst_14 = arith.constant 0.000000e+00 : f32
    %34 = vector.shape_cast %6 : vector<1x256xi1> to vector<1x256xi1>
    %35 = vector.broadcast %34 : vector<1x256xi1> to vector<40x256xi1>
    %36 = vector.broadcast %cst_14 : f32 to vector<40x256xf32>
    %37 = arith.select %35, %33, %36 : vector<40x256xi1>, vector<40x256xf32>
    %c0_15 = arith.constant 0 : index
    %c3 = arith.constant 3 : index
    %38 = vector.load %arg4[%c0_15, %c3] : memref<40x9xf32, #tpu.memory_space<vmem>>, vector<40x1xf32>
    %39 = vector.broadcast %38 : vector<40x1xf32> to vector<40x256xf32>
    %40 = arith.mulf %37, %39 : vector<40x256xf32>
    %41 = arith.addf %32, %40 : vector<40x256xf32>
    %42 = vector.extract_strided_slice %3 {offsets = [0, 17], sizes = [40, 256], strides = [1, 1]} : vector<40x290xf32> to vector<40x256xf32>
    %c0_16 = arith.constant 0 : index
    %c4 = arith.constant 4 : index
    %43 = vector.load %arg4[%c0_16, %c4] : memref<40x9xf32, #tpu.memory_space<vmem>>, vector<40x1xf32>
    %44 = vector.broadcast %43 : vector<40x1xf32> to vector<40x256xf32>
    %45 = arith.mulf %42, %44 : vector<40x256xf32>
    %46 = arith.addf %41, %45 : vector<40x256xf32>
    %47 = vector.extract_strided_slice %3 {offsets = [0, 18], sizes = [40, 256], strides = [1, 1]} : vector<40x290xf32> to vector<40x256xf32>
    %cst_17 = arith.constant 0.000000e+00 : f32
    %48 = vector.shape_cast %8 : vector<1x256xi1> to vector<1x256xi1>
    %49 = vector.broadcast %48 : vector<1x256xi1> to vector<40x256xi1>
    %50 = vector.broadcast %cst_17 : f32 to vector<40x256xf32>
    %51 = arith.select %49, %47, %50 : vector<40x256xi1>, vector<40x256xf32>
    %c0_18 = arith.constant 0 : index
    %c5 = arith.constant 5 : index
    %52 = vector.load %arg4[%c0_18, %c5] : memref<40x9xf32, #tpu.memory_space<vmem>>, vector<40x1xf32>
    %53 = vector.broadcast %52 : vector<40x1xf32> to vector<40x256xf32>
    %54 = arith.mulf %51, %53 : vector<40x256xf32>
    %55 = arith.addf %46, %54 : vector<40x256xf32>
    %56 = vector.extract_strided_slice %3 {offsets = [0, 32], sizes = [40, 256], strides = [1, 1]} : vector<40x290xf32> to vector<40x256xf32>
    %cst_19 = arith.constant 0.000000e+00 : f32
    %57 = vector.shape_cast %6 : vector<1x256xi1> to vector<1x256xi1>
    %58 = vector.broadcast %57 : vector<1x256xi1> to vector<40x256xi1>
    %59 = vector.broadcast %cst_19 : f32 to vector<40x256xf32>
    %60 = arith.select %58, %56, %59 : vector<40x256xi1>, vector<40x256xf32>
    %c0_20 = arith.constant 0 : index
    %c6 = arith.constant 6 : index
    %61 = vector.load %arg4[%c0_20, %c6] : memref<40x9xf32, #tpu.memory_space<vmem>>, vector<40x1xf32>
    %62 = vector.broadcast %61 : vector<40x1xf32> to vector<40x256xf32>
    %63 = arith.mulf %60, %62 : vector<40x256xf32>
    %64 = arith.addf %55, %63 : vector<40x256xf32>
    %65 = vector.extract_strided_slice %3 {offsets = [0, 33], sizes = [40, 256], strides = [1, 1]} : vector<40x290xf32> to vector<40x256xf32>
    %c0_21 = arith.constant 0 : index
    %c7 = arith.constant 7 : index
    %66 = vector.load %arg4[%c0_21, %c7] : memref<40x9xf32, #tpu.memory_space<vmem>>, vector<40x1xf32>
    %67 = vector.broadcast %66 : vector<40x1xf32> to vector<40x256xf32>
    %68 = arith.mulf %65, %67 : vector<40x256xf32>
    %69 = arith.addf %64, %68 : vector<40x256xf32>
    %70 = vector.extract_strided_slice %3 {offsets = [0, 34], sizes = [40, 256], strides = [1, 1]} : vector<40x290xf32> to vector<40x256xf32>
    %cst_22 = arith.constant 0.000000e+00 : f32
    %71 = vector.shape_cast %8 : vector<1x256xi1> to vector<1x256xi1>
    %72 = vector.broadcast %71 : vector<1x256xi1> to vector<40x256xi1>
    %73 = vector.broadcast %cst_22 : f32 to vector<40x256xf32>
    %74 = arith.select %72, %70, %73 : vector<40x256xi1>, vector<40x256xf32>
    %c0_23 = arith.constant 0 : index
    %c8 = arith.constant 8 : index
    %75 = vector.load %arg4[%c0_23, %c8] : memref<40x9xf32, #tpu.memory_space<vmem>>, vector<40x1xf32>
    %76 = vector.broadcast %75 : vector<40x1xf32> to vector<40x256xf32>
    %77 = arith.mulf %74, %76 : vector<40x256xf32>
    %78 = arith.addf %69, %77 : vector<40x256xf32>
    %79 = vector.extract_strided_slice %78 {offsets = [0, 0], sizes = [32, 256], strides = [1, 1]} : vector<40x256xf32> to vector<32x256xf32>
    %80 = arith.truncf %79 : vector<32x256xf32> to vector<32x256xbf16>
    %c0_24 = arith.constant 0 : index
    %c0_25 = arith.constant 0 : index
    %c0_26 = arith.constant 0 : index
    %81 = vector.load %arg6[%c0_24, %c0_25, %c0_26] : memref<1x32x256xbf16, #tpu.memory_space<vmem>>, vector<1x32x256xbf16>
    %82 = vector.shape_cast %81 : vector<1x32x256xbf16> to vector<32x256xbf16>
    %83 = vector.shape_cast %80 : vector<32x256xbf16> to vector<1x32x256xbf16>
    tpu.vector_store %arg6[%c0_24, %c0_25, %c0_26], %83 {strides = array<i32>} : memref<1x32x256xbf16, #tpu.memory_space<vmem>>, vector<1x32x256xbf16>,
    %84 = vector.extract_strided_slice %78 {offsets = [32, 0], sizes = [8, 256], strides = [1, 1]} : vector<40x256xf32> to vector<8x256xf32>
    %c0_27 = arith.constant 0 : index
    %c0_28 = arith.constant 0 : index
    %c0_29 = arith.constant 0 : index
    %85 = vector.load %arg7[%c0_27, %c0_28, %c0_29] : memref<1x8x256xf32, #tpu.memory_space<vmem>>, vector<1x8x256xf32>
    %86 = vector.shape_cast %85 : vector<1x8x256xf32> to vector<8x256xf32>
    %87 = vector.shape_cast %84 : vector<8x256xf32> to vector<1x8x256xf32>
    tpu.vector_store %arg7[%c0_27, %c0_28, %c0_29], %87 {strides = array<i32>} : memref<1x8x256xf32, #tpu.memory_space<vmem>>, vector<1x8x256xf32>,
    return
  }
  func.func @transform_0(%arg0: i32, %arg1: i32) -> (i32, i32, i32, i32) {
    %c0_i32 = arith.constant 0 : i32
    %c0_i32_0 = arith.constant 0 : i32
    %c0_i32_1 = arith.constant 0 : i32
    return %arg0, %arg1, %c0_i32, %c0_i32_0 : i32, i32, i32, i32
  }
  func.func @transform_1(%arg0: i32, %arg1: i32) -> (i32, i32) {
    %c0_i32 = arith.constant 0 : i32
    %c0_i32_0 = arith.constant 0 : i32
    %c0_i32_1 = arith.constant 0 : i32
    return %c0_i32, %c0_i32_0 : i32, i32
  }
  func.func @transform_2(%arg0: i32, %arg1: i32) -> (i32, i32) {
    %c0_i32 = arith.constant 0 : i32
    %c0_i32_0 = arith.constant 0 : i32
    %c0_i32_1 = arith.constant 0 : i32
    return %c0_i32, %c0_i32_0 : i32, i32
  }
  func.func @transform_3(%arg0: i32, %arg1: i32) -> (i32, i32) {
    %c0_i32 = arith.constant 0 : i32
    %c0_i32_0 = arith.constant 0 : i32
    return %c0_i32, %arg1 : i32, i32
  }
  func.func @transform_4(%arg0: i32, %arg1: i32) -> (i32, i32, i32) {
    %c0_i32 = arith.constant 0 : i32
    %c0_i32_0 = arith.constant 0 : i32
    return %arg0, %c0_i32, %arg1 : i32, i32, i32
  }
  func.func @transform_5(%arg0: i32, %arg1: i32) -> (i32, i32, i32) {
    %c0_i32 = arith.constant 0 : i32
    %c0_i32_0 = arith.constant 0 : i32
    return %arg0, %c0_i32, %arg1 : i32, i32, i32
  }
}

module attributes {stable_mosaic.version = 11 : i64} {
  func.func @_attn_kernel(%arg0: i32, %arg1: memref<8xf32, #tpu.memory_space<smem>>, %arg2: memref<8x8x64xbf16, #tpu.memory_space<vmem>>, %arg3: memref<8x8x64xbf16, #tpu.memory_space<vmem>>, %arg4: memref<8x8x64xbf16, #tpu.memory_space<vmem>>, %arg5: memref<8x8x64xbf16, #tpu.memory_space<vmem>>) attributes {dimension_semantics = [#tpu.dimension_semantics<parallel>], iteration_bounds = array<i64: 1>, scalar_prefetch = 1 : i64, scratch_operands = 0 : i64, tpu.core_type = #tpu.core_type<tc>, window_params = [{transform_indices = @transform_0, window_bounds = array<i64: 8, 8, 64>}, {transform_indices = @transform_1, window_bounds = array<i64: 8, 8, 64>}, {transform_indices = @transform_2, window_bounds = array<i64: 8, 8, 64>}, {transform_indices = @transform_3, window_bounds = array<i64: 8, 8, 64>}]} {
    %c0 = arith.constant 0 : index
    %c0_0 = arith.constant 0 : index
    %c0_1 = arith.constant 0 : index
    %0 = vector.load %arg2[%c0, %c0_0, %c0_1] : memref<8x8x64xbf16, #tpu.memory_space<vmem>>, vector<8x8x64xbf16>
    %c0_2 = arith.constant 0 : index
    %c0_3 = arith.constant 0 : index
    %c0_4 = arith.constant 0 : index
    %1 = vector.load %arg3[%c0_2, %c0_3, %c0_4] : memref<8x8x64xbf16, #tpu.memory_space<vmem>>, vector<8x8x64xbf16>
    %c0_5 = arith.constant 0 : index
    %c0_6 = arith.constant 0 : index
    %c0_7 = arith.constant 0 : index
    %2 = vector.load %arg4[%c0_5, %c0_6, %c0_7] : memref<8x8x64xbf16, #tpu.memory_space<vmem>>, vector<8x8x64xbf16>
    %3 = arith.extf %0 : vector<8x8x64xbf16> to vector<8x8x64xf32>
    %4 = arith.extf %1 : vector<8x8x64xbf16> to vector<8x8x64xf32>
    %5 = arith.mulf %3, %3 : vector<8x8x64xf32>
    %cst = arith.constant dense<0.000000e+00> : vector<8x8xf32>
    %6 = vector.multi_reduction <add>, %5, %cst [2] : vector<8x8x64xf32> to vector<8x8xf32>
    %7 = vector.shape_cast %6 : vector<8x8xf32> to vector<8x8x1xf32>
    %cst_8 = arith.constant 9.99999996E-13 : f32
    %8 = vector.broadcast %cst_8 : f32 to vector<8x8x1xf32>
    %9 = arith.addf %7, %8 : vector<8x8x1xf32>
    %10 = math.rsqrt %9 : vector<8x8x1xf32>
    %11 = arith.mulf %4, %4 : vector<8x8x64xf32>
    %cst_9 = arith.constant dense<0.000000e+00> : vector<8x8xf32>
    %12 = vector.multi_reduction <add>, %11, %cst_9 [2] : vector<8x8x64xf32> to vector<8x8xf32>
    %13 = vector.shape_cast %12 : vector<8x8xf32> to vector<8x8x1xf32>
    %cst_10 = arith.constant 9.99999996E-13 : f32
    %14 = vector.broadcast %cst_10 : f32 to vector<8x8x1xf32>
    %15 = arith.addf %13, %14 : vector<8x8x1xf32>
    %16 = math.rsqrt %15 : vector<8x8x1xf32>
    %17 = arith.truncf %10 : vector<8x8x1xf32> to vector<8x8x1xbf16>
    %18 = vector.broadcast %17 : vector<8x8x1xbf16> to vector<8x8x64xbf16>
    %19 = arith.mulf %0, %18 : vector<8x8x64xbf16>
    %20 = arith.truncf %16 : vector<8x8x1xf32> to vector<8x8x1xbf16>
    %21 = vector.broadcast %20 : vector<8x8x1xbf16> to vector<8x8x64xbf16>
    %22 = arith.mulf %1, %21 : vector<8x8x64xbf16>
    "tpu.trace_start"() <{level = 10 : i32, message = "gdh,geh->gde"}> : () -> ()
    %cst_11 = arith.constant dense<0.000000e+00> : vector<8x8x8xf32>
    %23 = tpu.matmul %19, %22, %cst_11 {dimension_numbers = #tpu.dot_dimension_numbers<[2], [2], [1], [1], [0, 0, 0, 1, 1, 1], [0], [0]>} : vector<8x8x64xbf16>, vector<8x8x64xbf16>, vector<8x8x8xf32> -> vector<8x8x8xf32>
    "tpu.trace_stop"() : () -> ()
    %24 = tpu.iota {dimensions = array<i32: 0>} : vector<8x8x8xi32>
    %cst_12 = arith.constant 0.000000e+00 : f32
    %25 = vector.broadcast %cst_12 : f32 to vector<8x8x8xf32>
    %c0_i32 = arith.constant 0 : i32
    %26 = vector.broadcast %c0_i32 : i32 to vector<8x8x8xi32>
    %27 = arith.cmpi eq, %24, %26 : vector<8x8x8xi32>
    %c8_i32 = arith.constant 8 : i32
    %28 = arith.muli %arg0, %c8_i32 : i32
    %c0_i32_13 = arith.constant 0 : i32
    %29 = arith.addi %28, %c0_i32_13 : i32
    %30 = arith.index_cast %29 : i32 to index
    %31 = memref.load %arg1[%30] : memref<8xf32, #tpu.memory_space<smem>>
    %32 = vector.broadcast %31 : f32 to vector<8x8x8xf32>
    %33 = arith.select %27, %32, %25 : vector<8x8x8xi1>, vector<8x8x8xf32>
    %c1_i32 = arith.constant 1 : i32
    %34 = vector.broadcast %c1_i32 : i32 to vector<8x8x8xi32>
    %35 = arith.cmpi eq, %24, %34 : vector<8x8x8xi32>
    %c8_i32_14 = arith.constant 8 : i32
    %36 = arith.muli %arg0, %c8_i32_14 : i32
    %c1_i32_15 = arith.constant 1 : i32
    %37 = arith.addi %36, %c1_i32_15 : i32
    %38 = arith.index_cast %37 : i32 to index
    %39 = memref.load %arg1[%38] : memref<8xf32, #tpu.memory_space<smem>>
    %40 = vector.broadcast %39 : f32 to vector<8x8x8xf32>
    %41 = arith.select %35, %40, %33 : vector<8x8x8xi1>, vector<8x8x8xf32>
    %c2_i32 = arith.constant 2 : i32
    %42 = vector.broadcast %c2_i32 : i32 to vector<8x8x8xi32>
    %43 = arith.cmpi eq, %24, %42 : vector<8x8x8xi32>
    %c8_i32_16 = arith.constant 8 : i32
    %44 = arith.muli %arg0, %c8_i32_16 : i32
    %c2_i32_17 = arith.constant 2 : i32
    %45 = arith.addi %44, %c2_i32_17 : i32
    %46 = arith.index_cast %45 : i32 to index
    %47 = memref.load %arg1[%46] : memref<8xf32, #tpu.memory_space<smem>>
    %48 = vector.broadcast %47 : f32 to vector<8x8x8xf32>
    %49 = arith.select %43, %48, %41 : vector<8x8x8xi1>, vector<8x8x8xf32>
    %c3_i32 = arith.constant 3 : i32
    %50 = vector.broadcast %c3_i32 : i32 to vector<8x8x8xi32>
    %51 = arith.cmpi eq, %24, %50 : vector<8x8x8xi32>
    %c8_i32_18 = arith.constant 8 : i32
    %52 = arith.muli %arg0, %c8_i32_18 : i32
    %c3_i32_19 = arith.constant 3 : i32
    %53 = arith.addi %52, %c3_i32_19 : i32
    %54 = arith.index_cast %53 : i32 to index
    %55 = memref.load %arg1[%54] : memref<8xf32, #tpu.memory_space<smem>>
    %56 = vector.broadcast %55 : f32 to vector<8x8x8xf32>
    %57 = arith.select %51, %56, %49 : vector<8x8x8xi1>, vector<8x8x8xf32>
    %c4_i32 = arith.constant 4 : i32
    %58 = vector.broadcast %c4_i32 : i32 to vector<8x8x8xi32>
    %59 = arith.cmpi eq, %24, %58 : vector<8x8x8xi32>
    %c8_i32_20 = arith.constant 8 : i32
    %60 = arith.muli %arg0, %c8_i32_20 : i32
    %c4_i32_21 = arith.constant 4 : i32
    %61 = arith.addi %60, %c4_i32_21 : i32
    %62 = arith.index_cast %61 : i32 to index
    %63 = memref.load %arg1[%62] : memref<8xf32, #tpu.memory_space<smem>>
    %64 = vector.broadcast %63 : f32 to vector<8x8x8xf32>
    %65 = arith.select %59, %64, %57 : vector<8x8x8xi1>, vector<8x8x8xf32>
    %c5_i32 = arith.constant 5 : i32
    %66 = vector.broadcast %c5_i32 : i32 to vector<8x8x8xi32>
    %67 = arith.cmpi eq, %24, %66 : vector<8x8x8xi32>
    %c8_i32_22 = arith.constant 8 : i32
    %68 = arith.muli %arg0, %c8_i32_22 : i32
    %c5_i32_23 = arith.constant 5 : i32
    %69 = arith.addi %68, %c5_i32_23 : i32
    %70 = arith.index_cast %69 : i32 to index
    %71 = memref.load %arg1[%70] : memref<8xf32, #tpu.memory_space<smem>>
    %72 = vector.broadcast %71 : f32 to vector<8x8x8xf32>
    %73 = arith.select %67, %72, %65 : vector<8x8x8xi1>, vector<8x8x8xf32>
    %c6_i32 = arith.constant 6 : i32
    %74 = vector.broadcast %c6_i32 : i32 to vector<8x8x8xi32>
    %75 = arith.cmpi eq, %24, %74 : vector<8x8x8xi32>
    %c8_i32_24 = arith.constant 8 : i32
    %76 = arith.muli %arg0, %c8_i32_24 : i32
    %c6_i32_25 = arith.constant 6 : i32
    %77 = arith.addi %76, %c6_i32_25 : i32
    %78 = arith.index_cast %77 : i32 to index
    %79 = memref.load %arg1[%78] : memref<8xf32, #tpu.memory_space<smem>>
    %80 = vector.broadcast %79 : f32 to vector<8x8x8xf32>
    %81 = arith.select %75, %80, %73 : vector<8x8x8xi1>, vector<8x8x8xf32>
    %c7_i32 = arith.constant 7 : i32
    %82 = vector.broadcast %c7_i32 : i32 to vector<8x8x8xi32>
    %83 = arith.cmpi eq, %24, %82 : vector<8x8x8xi32>
    %c8_i32_26 = arith.constant 8 : i32
    %84 = arith.muli %arg0, %c8_i32_26 : i32
    %c7_i32_27 = arith.constant 7 : i32
    %85 = arith.addi %84, %c7_i32_27 : i32
    %86 = arith.index_cast %85 : i32 to index
    %87 = memref.load %arg1[%86] : memref<8xf32, #tpu.memory_space<smem>>
    %88 = vector.broadcast %87 : f32 to vector<8x8x8xf32>
    %89 = arith.select %83, %88, %81 : vector<8x8x8xi1>, vector<8x8x8xf32>
    %90 = arith.mulf %23, %89 : vector<8x8x8xf32>
    %cst_28 = arith.constant dense<0xFF800000> : vector<8x8xf32>
    %91 = vector.multi_reduction <maximumf>, %90, %cst_28 [2] : vector<8x8x8xf32> to vector<8x8xf32>
    %92 = vector.shape_cast %91 : vector<8x8xf32> to vector<8x8x1xf32>
    %cst_29 = arith.constant 0.000000e+00 : f32
    %93 = vector.broadcast %cst_29 : f32 to vector<8x8x1xf32>
    %94 = arith.maximumf %92, %93 : vector<8x8x1xf32>
    %95 = vector.broadcast %94 : vector<8x8x1xf32> to vector<8x8x8xf32>
    %96 = arith.subf %90, %95 : vector<8x8x8xf32>
    %97 = math.exp %96 : vector<8x8x8xf32>
    %cst_30 = arith.constant dense<0.000000e+00> : vector<8x8xf32>
    %98 = vector.multi_reduction <add>, %97, %cst_30 [2] : vector<8x8x8xf32> to vector<8x8xf32>
    %99 = vector.shape_cast %98 : vector<8x8xf32> to vector<8x8x1xf32>
    %cst_31 = arith.constant 0.000000e+00 : f32
    %100 = vector.broadcast %cst_31 : f32 to vector<8x8x1xf32>
    %101 = arith.subf %100, %94 : vector<8x8x1xf32>
    %102 = math.exp %101 : vector<8x8x1xf32>
    %103 = arith.addf %99, %102 : vector<8x8x1xf32>
    %104 = tpu.reciprocal %103 {approx = true} : vector<8x8x1xf32> -> vector<8x8x1xf32>
    %105 = vector.broadcast %104 : vector<8x8x1xf32> to vector<8x8x8xf32>
    %106 = arith.mulf %97, %105 : vector<8x8x8xf32>
    %107 = arith.truncf %106 : vector<8x8x8xf32> to vector<8x8x8xbf16>
    "tpu.trace_start"() <{level = 10 : i32, message = "gde,geh->gdh"}> : () -> ()
    %cst_32 = arith.constant dense<0.000000e+00> : vector<8x8x64xf32>
    %108 = tpu.matmul %107, %2, %cst_32 {dimension_numbers = #tpu.dot_dimension_numbers<[2], [1], [1], [2], [0, 0, 0, 1, 1, 2], [0], [0]>} : vector<8x8x8xbf16>, vector<8x8x64xbf16>, vector<8x8x64xf32> -> vector<8x8x64xf32>
    "tpu.trace_stop"() : () -> ()
    %109 = arith.truncf %108 : vector<8x8x64xf32> to vector<8x8x64xbf16>
    %c0_33 = arith.constant 0 : index
    %c0_34 = arith.constant 0 : index
    %c0_35 = arith.constant 0 : index
    %110 = vector.load %arg5[%c0_33, %c0_34, %c0_35] : memref<8x8x64xbf16, #tpu.memory_space<vmem>>, vector<8x8x64xbf16>
    tpu.vector_store %arg5[%c0_33, %c0_34, %c0_35], %109 {strides = array<i32>} : memref<8x8x64xbf16, #tpu.memory_space<vmem>>, vector<8x8x64xbf16>,
    return
  }
  func.func @transform_0(%arg0: i32, %arg1: memref<8xf32, #tpu.memory_space<smem>>) -> (i32, i32, i32) {
    %c0_i32 = arith.constant 0 : i32
    %c0_i32_0 = arith.constant 0 : i32
    %c0_i32_1 = arith.constant 0 : i32
    return %arg0, %c0_i32, %c0_i32_0 : i32, i32, i32
  }
  func.func @transform_1(%arg0: i32, %arg1: memref<8xf32, #tpu.memory_space<smem>>) -> (i32, i32, i32) {
    %c0_i32 = arith.constant 0 : i32
    %c0_i32_0 = arith.constant 0 : i32
    %c0_i32_1 = arith.constant 0 : i32
    return %arg0, %c0_i32, %c0_i32_0 : i32, i32, i32
  }
  func.func @transform_2(%arg0: i32, %arg1: memref<8xf32, #tpu.memory_space<smem>>) -> (i32, i32, i32) {
    %c0_i32 = arith.constant 0 : i32
    %c0_i32_0 = arith.constant 0 : i32
    %c0_i32_1 = arith.constant 0 : i32
    return %arg0, %c0_i32, %c0_i32_0 : i32, i32, i32
  }
  func.func @transform_3(%arg0: i32, %arg1: memref<8xf32, #tpu.memory_space<smem>>) -> (i32, i32, i32) {
    %c0_i32 = arith.constant 0 : i32
    %c0_i32_0 = arith.constant 0 : i32
    %c0_i32_1 = arith.constant 0 : i32
    return %arg0, %c0_i32, %c0_i32_0 : i32, i32, i32
  }
}

module attributes {stable_mosaic.version = 11 : i64} {
  func.func @_proj_kernel(%arg0: i32, %arg1: i32, %arg2: memref<1x8x256xbf16, #tpu.memory_space<vmem>>, %arg3: memref<1x8x256xbf16, #tpu.memory_space<vmem>>, %arg4: memref<8x8xbf16, #tpu.memory_space<vmem>>, %arg5: memref<1x8x256xf32, #tpu.memory_space<vmem>>) attributes {dimension_semantics = [#tpu.dimension_semantics<parallel>, #tpu.dimension_semantics<parallel>], iteration_bounds = array<i64: 2, 1>, scalar_prefetch = 0 : i64, scratch_operands = 0 : i64, tpu.core_type = #tpu.core_type<tc>, window_params = [{transform_indices = @transform_0, window_bounds = array<i64: 1, 8, 256>}, {transform_indices = @transform_1, window_bounds = array<i64: 1, 8, 256>}, {pipeline_mode = #tpu.pipeline_mode<synchronous>, transform_indices = @transform_2, window_bounds = array<i64: 8, 8>}, {transform_indices = @transform_3, window_bounds = array<i64: 1, 8, 256>}]} {
    %c0 = arith.constant 0 : index
    %c0_0 = arith.constant 0 : index
    %c0_1 = arith.constant 0 : index
    %0 = vector.load %arg2[%c0, %c0_0, %c0_1] : memref<1x8x256xbf16, #tpu.memory_space<vmem>>, vector<1x8x256xbf16>
    %1 = vector.shape_cast %0 : vector<1x8x256xbf16> to vector<8x256xbf16>
    %c0_2 = arith.constant 0 : index
    %c0_3 = arith.constant 0 : index
    %c0_4 = arith.constant 0 : index
    %2 = vector.load %arg3[%c0_2, %c0_3, %c0_4] : memref<1x8x256xbf16, #tpu.memory_space<vmem>>, vector<1x8x256xbf16>
    %3 = vector.shape_cast %2 : vector<1x8x256xbf16> to vector<8x256xbf16>
    %4 = arith.mulf %1, %3 : vector<8x256xbf16>
    %c0_5 = arith.constant 0 : index
    %c0_6 = arith.constant 0 : index
    %5 = vector.load %arg4[%c0_5, %c0_6] : memref<8x8xbf16, #tpu.memory_space<vmem>>, vector<8x8xbf16>
    %cst = arith.constant dense<0.000000e+00> : vector<8x256xf32>
    %6 = tpu.matmul %5, %4, %cst {dimension_numbers = #tpu.dot_dimension_numbers<[1], [0], [0], [1], [0, 0, 1, 1], [], []>} : vector<8x8xbf16>, vector<8x256xbf16>, vector<8x256xf32> -> vector<8x256xf32>
    %c0_7 = arith.constant 0 : index
    %c0_8 = arith.constant 0 : index
    %c0_9 = arith.constant 0 : index
    %7 = vector.load %arg5[%c0_7, %c0_8, %c0_9] : memref<1x8x256xf32, #tpu.memory_space<vmem>>, vector<1x8x256xf32>
    %8 = vector.shape_cast %7 : vector<1x8x256xf32> to vector<8x256xf32>
    %9 = vector.shape_cast %6 : vector<8x256xf32> to vector<1x8x256xf32>
    tpu.vector_store %arg5[%c0_7, %c0_8, %c0_9], %9 {strides = array<i32>} : memref<1x8x256xf32, #tpu.memory_space<vmem>>, vector<1x8x256xf32>,
    return
  }
  func.func @transform_0(%arg0: i32, %arg1: i32) -> (i32, i32, i32) {
    %c0_i32 = arith.constant 0 : i32
    %c0_i32_0 = arith.constant 0 : i32
    return %arg0, %c0_i32, %arg1 : i32, i32, i32
  }
  func.func @transform_1(%arg0: i32, %arg1: i32) -> (i32, i32, i32) {
    %c0_i32 = arith.constant 0 : i32
    %c0_i32_0 = arith.constant 0 : i32
    return %arg0, %c0_i32, %arg1 : i32, i32, i32
  }
  func.func @transform_2(%arg0: i32, %arg1: i32) -> (i32, i32) {
    %c0_i32 = arith.constant 0 : i32
    %c0_i32_0 = arith.constant 0 : i32
    %c0_i32_1 = arith.constant 0 : i32
    return %c0_i32, %c0_i32_0 : i32, i32
  }
  func.func @transform_3(%arg0: i32, %arg1: i32) -> (i32, i32, i32) {
    %c0_i32 = arith.constant 0 : i32
    %c0_i32_0 = arith.constant 0 : i32
    return %arg0, %c0_i32, %arg1 : i32, i32, i32
  }
}

</mosaic_0001>

<llo_original>
// kernel: tile.10
$region0: #{tile.10}
  #allocation0 [shape = 's32[1]{0}', space=sflag, size = 0x4, scoped, tag = 'scoped memory for tile.10']
  %s0 = inlined_call_operand.vmem [shape: f32[4], index: 0, kind: input, shape index: {}]
  %s1 = inlined_call_operand.vmem [shape: f32[2,4], index: 1, kind: output, shape index: {}]
  // Predicated region
  $region2: #{tile.10} parent=0 // pred_check
    _
  $region3: #{tile.10} parent=0 // pred_check_branch
    %3 = sbr.rel (0) target = $region5
  $region4: #{tile.10} parent=0 // pred_region
    _
  $region5: #{tile.10} parent=0 // pred_fallthru
    _
  %v4 = vld [vmem:[%s0] ss:$0 sm:$0xff]
  %5 = vst [vmem:[%s1] sm:$0x3] %v4

// kernel: tile.11
$region0: #{tile.11}
  %s0 = inlined_call_operand.vmem [shape: f32[2,4], index: 0, kind: input, shape index: {}]
  %s1 = inlined_call_operand.vmem [shape: f32[8], index: 1, kind: output, shape index: {}]
  $region1: #{tile.11} parent=0
    #allocation0 [shape = 'u8[4096]{0}', space=vmem, size = 0x1000, scoped, tag = 'scoped mem for output reshape']
    #allocation1 [shape = 'u8[4096]{0}', space=vmem, size = 0x1000, scoped, tag = 'scoped mem for input reshape']
    %s3 = ssub.s32 4, 1
    %v4 = vld [vmem:[%s0] sm:%s3]
    %5 = vst [vmem:[#allocation1] sm:%s3] %v4
    %v6 = vld [vmem:[#allocation1] sm:$0x1]
    %vm7 = vcmask 31744
    %8 = vst.msk [vmem:[#allocation0] sm:$0x1] %vm7, %v6
    %s9 = scalar_lea.vmem [#allocation1], 1
    %v10 = vld [vmem:[%s9] sm:$0x1]
    %11 = vrot.lane.b32.xlu0 %v10, 4
    %v12 = vpop.permute.xlu0 %11
    %vm13 = vcmask 64544
    %14 = vst.msk [vmem:[#allocation0] sm:$0x1] %vm13, %v12
    %s16 = ssub.s32 2, 1
    %v17 = vld [vmem:[#allocation0] sm:%s16]
    %s19 = ssub.s32 2, 1
    %20 = vst [vmem:[%s1] sm:%s19] %v17

// kernel: improved_dhsa_forward.4
$region0: #{improved_dhsa_forward.4}
  #allocation0 [shape = 'u32[]', space=smem, size = 0x4, offset = 0x4, fixed_abs, tag = 'smem constant byte address 0x4 - core index']
  #allocation1 [shape = 'u32[72,128]{1,0:T(1,128)}', space=vmem, size = 0x9000, scoped, tag = 'internal scratch']
  %s0 = inlined_call_operand.vmem [shape: bf16[2,1,8,290], index: 0, kind: input, shape index: {}]
  %s1 = inlined_call_operand.vmem [shape: bf16[40,8], index: 1, kind: input, shape index: {}]
  %s2 = inlined_call_operand.vmem [shape: f32[40,9], index: 2, kind: input, shape index: {}]
  %s3 = inlined_call_operand.vmem [shape: s32[1,256], index: 3, kind: input, shape index: {}]
  %s4 = inlined_call_operand.vmem [shape: bf16[2,32,256], index: 4, kind: output, shape index: {0}]
  %s5 = inlined_call_operand.vmem [shape: f32[2,8,256], index: 5, kind: output, shape index: {1}]
  %6 = xla_tuple %s4, %s5
  %s7 = sld [smem:[#allocation0]]
  $region57: #{improved_dhsa_forward.4} parent=0
    _
  %s9 = ssub.s32 1, %s7
  %s10 = scalar_select 0, %s9, %s7
  loop: start=0, step=1, limit=4
  $region2: #{improved_dhsa_forward.4} parent=0 // loop_pre_header
    _
  $region3: #{improved_dhsa_forward.4} parent=0 // loop_header
    %s12 = sphi 0, %s16
    %p13 = scmp.ge.s32.totalorder %s12, 4
    %s19 = sphi 0, %s31
    %s20 = sphi 0, %s27
    %s21 = sphi 0, %s19
    %s22 = sphi 0, %s20
    %s23 = sphi 0, %s21
    %s24 = sphi 0, %s22
    %s36 = sphi 0, %s38
    %s39 = sphi 0, %s36
    %s40 = sphi 0, %s39
    %s56 = sphi 0, %s40
    %s60 = sphi 0, %s60
    %s62 = sphi 0, %s60
    %s63 = sphi 0, %s62
    %s77 = sphi 0, %s63
    %s81 = sphi 0, %s81
    %s83 = sphi 0, %s81
    %s84 = sphi 0, %s83
    %s98 = sphi 0, %s84
    %s104 = sphi 0, %s106
    %s107 = sphi 0, %s104
    %s108 = sphi 0, %s107
    %s124 = sphi 0, %s108
    %s132 = sphi 0, %s134
    %s135 = sphi 0, %s132
    %s136 = sphi 0, %s135
    %s152 = sphi 0, %s136
    %s160 = sphi 0, %s162
    %s163 = sphi 0, %s160
    %s164 = sphi 0, %s163
    %s180 = sphi 0, %s164
  $region4: #{improved_dhsa_forward.4} parent=0 // loop_header_branch
    %15 = sbr.rel (%p13) target = $region8
  $region5: #{improved_dhsa_forward.4} parent=0 // loop_body
    %s17 = ssub.s32 %s12, 1
    %s18 = ssub.s32 %s12, 2
    %s25 = sadd.s32 1, %s20
    %p26 = scmp.ge.s32.totalorder %s25, 1
    %s27 = scalar_select %p26, 0, %s25
    %s28 = sadd.s32 1, %s19
    %s29 = scalar_select %p26, %s28, %s19
    %p30 = scmp.ge.s32.totalorder %s29, 2
    %s31 = scalar_select %p30, 0, %s29
    %s32 = ssub.s32 %s19, %s31
    %s33 = ssub.s32 %s20, %s27
    %s34 = sor.u32 %s32, %s33
    %p35 = scmp.eq.s32.totalorder %s34, 0
    %s37 = sadd.s32 %s36, 1
    %s38 = scalar_select %p35, %s36, %s37
    %p41 = pneg %p35
    %p42 = scmp.eq.s32.totalorder %s12, 1
    %p43 = por %p41, %p42
    %p44 = scmp.ne.s32.totalorder %s36, %s39
    %p45 = scmp.eq.s32.totalorder %s12, 0
    %p46 = por %p44, %p45
    %p47 = scmp.ne.s32.totalorder %s36, %s39
    %p48 = scmp.eq.s32.totalorder %s17, 1
    %p49 = por %p47, %p48
    %p50 = scmp.ne.s32.totalorder %s39, %s40
    %p51 = scmp.eq.s32.totalorder %s17, 0
    %p52 = por %p50, %p51
    %p53 = scmp.ne.s32.totalorder %s39, %s40
    %p54 = scmp.eq.s32.totalorder %s18, 1
    %p55 = por %p53, %p54
    %p57 = scmp.ne.s32.totalorder %s40, %s56
    %p58 = scmp.eq.s32.totalorder %s18, 0
    %p59 = por %p57, %p58
    %s61 = sadd.s32 %s60, 1
    %p64 = scmp.eq.s32.totalorder %s12, 1
    %p65 = scmp.ne.s32.totalorder %s60, %s62
    %p66 = scmp.eq.s32.totalorder %s12, 0
    %p67 = por %p65, %p66
    %p68 = scmp.ne.s32.totalorder %s60, %s62
    %p69 = scmp.eq.s32.totalorder %s17, 1
    %p70 = por %p68, %p69
    %p71 = scmp.ne.s32.totalorder %s62, %s63
    %p72 = scmp.eq.s32.totalorder %s17, 0
    %p73 = por %p71, %p72
    %p74 = scmp.ne.s32.totalorder %s62, %s63
    %p75 = scmp.eq.s32.totalorder %s18, 1
    %p76 = por %p74, %p75
    %p78 = scmp.ne.s32.totalorder %s63, %s77
    %p79 = scmp.eq.s32.totalorder %s18, 0
    %p80 = por %p78, %p79
    %s82 = sadd.s32 %s81, 1
    %p85 = scmp.eq.s32.totalorder %s12, 1
    %p86 = scmp.ne.s32.totalorder %s81, %s83
    %p87 = scmp.eq.s32.totalorder %s12, 0
    %p88 = por %p86, %p87
    %p89 = scmp.ne.s32.totalorder %s81, %s83
    %p90 = scmp.eq.s32.totalorder %s17, 1
    %p91 = por %p89, %p90
    %p92 = scmp.ne.s32.totalorder %s83, %s84
    %p93 = scmp.eq.s32.totalorder %s17, 0
    %p94 = por %p92, %p93
    %p95 = scmp.ne.s32.totalorder %s83, %s84
    %p96 = scmp.eq.s32.totalorder %s18, 1
    %p97 = por %p95, %p96
    %p99 = scmp.ne.s32.totalorder %s84, %s98
    %p100 = scmp.eq.s32.totalorder %s18, 0
    %p101 = por %p99, %p100
    %s102 = ssub.s32 %s20, %s27
    %p103 = scmp.eq.s32.totalorder %s102, 0
    %s105 = sadd.s32 %s104, 1
    %s106 = scalar_select %p103, %s104, %s105
    %p109 = pneg %p103
    %p110 = scmp.eq.s32.totalorder %s12, 1
    %p111 = por %p109, %p110
    %p112 = scmp.ne.s32.totalorder %s104, %s107
    %p113 = scmp.eq.s32.totalorder %s12, 0
    %p114 = por %p112, %p113
    %p115 = scmp.ne.s32.totalorder %s104, %s107
    %p116 = scmp.eq.s32.totalorder %s17, 1
    %p117 = por %p115, %p116
    %p118 = scmp.ne.s32.totalorder %s107, %s108
    %p119 = scmp.eq.s32.totalorder %s17, 0
    %p120 = por %p118, %p119
    %p121 = scmp.ne.s32.totalorder %s107, %s108
    %p122 = scmp.eq.s32.totalorder %s18, 1
    %p123 = por %p121, %p122
    %p125 = scmp.ne.s32.totalorder %s108, %s124
    %p126 = scmp.eq.s32.totalorder %s18, 0
    %p127 = por %p125, %p126
    %s128 = ssub.s32 %s19, %s31
    %s129 = ssub.s32 %s20, %s27
    %s130 = sor.u32 %s128, %s129
    %p131 = scmp.eq.s32.totalorder %s130, 0
    %s133 = sadd.s32 %s132, 1
    %s134 = scalar_select %p131, %s132, %s133
    %p137 = pneg %p131
    %p138 = scmp.eq.s32.totalorder %s12, 1
    %p139 = por %p137, %p138
    %p140 = scmp.ne.s32.totalorder %s132, %s135
    %p141 = scmp.eq.s32.totalorder %s12, 0
    %p142 = por %p140, %p141
    %p143 = scmp.ne.s32.totalorder %s132, %s135
    %p144 = scmp.eq.s32.totalorder %s17, 1
    %p145 = por %p143, %p144
    %p146 = scmp.ne.s32.totalorder %s135, %s136
    %p147 = scmp.eq.s32.totalorder %s17, 0
    %p148 = por %p146, %p147
    %p149 = scmp.ne.s32.totalorder %s135, %s136
    %p150 = scmp.eq.s32.totalorder %s18, 1
    %p151 = por %p149, %p150
    %p153 = scmp.ne.s32.totalorder %s136, %s152
    %p154 = scmp.eq.s32.totalorder %s18, 0
    %p155 = por %p153, %p154
    %s156 = ssub.s32 %s19, %s31
    %s157 = ssub.s32 %s20, %s27
    %s158 = sor.u32 %s156, %s157
    %p159 = scmp.eq.s32.totalorder %s158, 0
    %s161 = sadd.s32 %s160, 1
    %s162 = scalar_select %p159, %s160, %s161
    %p165 = pneg %p159
    %p166 = scmp.eq.s32.totalorder %s12, 1
    %p167 = por %p165, %p166
    %p168 = scmp.ne.s32.totalorder %s160, %s163
    %p169 = scmp.eq.s32.totalorder %s12, 0
    %p170 = por %p168, %p169
    %p171 = scmp.ne.s32.totalorder %s160, %s163
    %p172 = scmp.eq.s32.totalorder %s17, 1
    %p173 = por %p171, %p172
    %p174 = scmp.ne.s32.totalorder %s163, %s164
    %p175 = scmp.eq.s32.totalorder %s17, 0
    %p176 = por %p174, %p175
    %p177 = scmp.ne.s32.totalorder %s163, %s164
    %p178 = scmp.eq.s32.totalorder %s18, 1
    %p179 = por %p177, %p178
    %p181 = scmp.ne.s32.totalorder %s164, %s180
    %p182 = scmp.eq.s32.totalorder %s18, 0
    %p183 = por %p181, %p182
    %p184 = scmp.le.s32.totalorder 1, %s12
    %p185 = scmp.lt.s32.totalorder %s12, 3
    %p186 = pnand %p184, %p185
    %p187 = pneg %p186
    // Predicated region
    $region9: #{improved_dhsa_forward.4} parent=5 // pred_check
      _
    $region10: #{improved_dhsa_forward.4} parent=5 // pred_check_branch
      %189 = sbr.rel (%p186) target = $region12
    $region11: #{improved_dhsa_forward.4} parent=5 // pred_region
      %s190 = ssub.s32 %s12, 1
      // Predicated region
      $region13: #{improved_dhsa_forward.4} parent=11 // pred_check
        %p191 = pneg %p73
      $region14: #{improved_dhsa_forward.4} parent=11 // pred_check_branch
        %193 = sbr.rel (%p191) target = $region16
      $region15: #{improved_dhsa_forward.4} parent=11 // pred_region
        _
      $region16: #{improved_dhsa_forward.4} parent=11 // pred_fallthru
        _
      // Predicated region
      $region17: #{improved_dhsa_forward.4} parent=11 // pred_check
        %p194 = pneg %p94
      $region18: #{improved_dhsa_forward.4} parent=11 // pred_check_branch
        %196 = sbr.rel (%p194) target = $region20
      $region19: #{improved_dhsa_forward.4} parent=11 // pred_region
        _
      $region20: #{improved_dhsa_forward.4} parent=11 // pred_fallthru
        _
      // Predicated region
      $region21: #{improved_dhsa_forward.4} parent=11 // pred_check
        %p197 = pneg %p120
      $region22: #{improved_dhsa_forward.4} parent=11 // pred_check_branch
        %199 = sbr.rel (%p197) target = $region24
      $region23: #{improved_dhsa_forward.4} parent=11 // pred_region
        %s200 = smul.u32 2, %s22
        %p201 = scmp.lt.s32.totalorder %s200, 1
        %s202 = scalar_select %p201, %s200, 1
        %s203 = scalar_lea.vmem %s3, %s202
        %s204 = smul.u32 2, %s22
      $region24: #{improved_dhsa_forward.4} parent=11 // pred_fallthru
        _
    $region12: #{improved_dhsa_forward.4} parent=5 // pred_fallthru
      _
    %p205 = scmp.lt.s32.totalorder %s12, 2
    // Predicated region
    $region25: #{improved_dhsa_forward.4} parent=5 // pred_check
      %p206 = pneg %p205
    $region26: #{improved_dhsa_forward.4} parent=5 // pred_check_branch
      %208 = sbr.rel (%p206) target = $region28
    $region27: #{improved_dhsa_forward.4} parent=5 // pred_region
      // Predicated region
      $region29: #{improved_dhsa_forward.4} parent=27 // pred_check
        %p209 = pneg %p46
      $region30: #{improved_dhsa_forward.4} parent=27 // pred_check_branch
        %211 = sbr.rel (%p209) target = $region32
      $region31: #{improved_dhsa_forward.4} parent=27 // pred_region
        %p212 = scmp.lt.s32.totalorder %s19, 1
        %s213 = scalar_select %p212, %s19, 1
        %p214 = scmp.lt.s32.totalorder %s20, 0
        %s215 = scalar_select %p214, %s20, 0
        %s216 = smul.addr %s215, 3
        %s217 = smul.addr %s213, 3
        %s218 = sadd.s32 %s216, %s217
        %s219 = smul.addr %s218, 4
        %s220 = scalar_lea.vmem %s0, %s219
      $region32: #{improved_dhsa_forward.4} parent=27 // pred_fallthru
        _
    $region28: #{improved_dhsa_forward.4} parent=5 // pred_fallthru
      _
    %p221 = scmp.le.s32.totalorder 1, %s12
    %p222 = scmp.lt.s32.totalorder %s12, 3
    %p223 = pnand %p221, %p222
    %p224 = pneg %p223
    // Predicated region
    $region33: #{improved_dhsa_forward.4} parent=5 // pred_check
      _
    $region34: #{improved_dhsa_forward.4} parent=5 // pred_check_branch
      %226 = sbr.rel (%p223) target = $region36
    $region35: #{improved_dhsa_forward.4} parent=5 // pred_region
      %s227 = ssub.s32 %s12, 1
      %p228 = scmp.lt.s32.totalorder %s21, 1
      %s229 = scalar_select %p228, %s21, 1
      %p230 = scmp.lt.s32.totalorder %s22, 0
      %s231 = scalar_select %p230, %s22, 0
      %s232 = smul.addr %s231, 3
      %s233 = smul.addr %s229, 3
      %s234 = sadd.s32 %s232, %s233
      %s235 = smul.addr %s234, 4
      %s236 = scalar_lea.vmem %s0, %s235
      %p237 = pneg %p52
      %p238 = pneg %p49
      %p239 = pneg %p73
      %p240 = pneg %p70
      %p241 = pneg %p94
      %p242 = pneg %p91
      %s243 = smul.u32 2, %s22
      %p244 = scmp.lt.s32.totalorder %s243, 1
      %s245 = scalar_select %p244, %s243, 1
      %s246 = scalar_lea.vmem %s3, %s245
      %p247 = pneg %p120
      %p248 = pneg %p117
      %p249 = pneg %p148
      %p250 = pneg %p145
      %s251 = smul.u32 2, %s22
      %p252 = scmp.lt.s32.totalorder %s21, 1
      %s253 = scalar_select %p252, %s21, 1
      %p254 = scmp.lt.s32.totalorder %s251, 1
      %s255 = scalar_select %p254, %s251, 1
      %s256 = smul.addr %s253, 8
      %s257 = sadd.s32 %s255, %s256
      %s258 = smul.addr %s257, 4
      %s259 = scalar_lea.vmem %s4, %s258
      %p260 = pneg %p176
      %p261 = pneg %p173
      %s262 = smul.u32 2, %s22
      %p263 = scmp.lt.s32.totalorder %s21, 1
      %s264 = scalar_select %p263, %s21, 1
      %p265 = scmp.lt.s32.totalorder %s262, 1
      %s266 = scalar_select %p265, %s262, 1
      %s267 = smul.addr %s264, 2
      %s268 = sadd.s32 %s266, %s267
      %s269 = smul.addr %s268, 8
      %s270 = scalar_lea.vmem %s5, %s269
      %p271 = scmp.lt.s32.totalorder %s21, 1
      %s272 = scalar_select %p271, %s21, 1
      %p273 = scmp.lt.s32.totalorder %s22, 0
      %s274 = scalar_select %p273, %s22, 0
      %s275 = smul.addr %s274, 3
      %s276 = smul.addr %s272, 3
      %s277 = sadd.s32 %s275, %s276
      %s278 = smul.addr %s277, 4
      %s279 = scalar_lea.vmem %s0, %s278
      %s280 = smul.u32 2, %s22
      %p281 = scmp.lt.s32.totalorder %s280, 1
      %s282 = scalar_select %p281, %s280, 1
      %s283 = scalar_lea.vmem %s3, %s282
      %s284 = smul.u32 2, %s22
      %s285 = smul.u32 2, %s22
      %p286 = scmp.lt.s32.totalorder %s21, 1
      %s287 = scalar_select %p286, %s21, 1
      %p288 = scmp.lt.s32.totalorder %s285, 1
      %s289 = scalar_select %p288, %s285, 1
      %s290 = smul.addr %s287, 8
      %s291 = sadd.s32 %s289, %s290
      %s292 = smul.addr %s291, 4
      %s293 = scalar_lea.vmem %s4, %s292
      %s294 = smul.u32 2, %s22
      %s295 = smul.u32 2, %s22
      %p296 = scmp.lt.s32.totalorder %s21, 1
      %s297 = scalar_select %p296, %s21, 1
      %p298 = scmp.lt.s32.totalorder %s295, 1
      %s299 = scalar_select %p298, %s295, 1
      %s300 = smul.addr %s297, 2
      %s301 = sadd.s32 %s299, %s300
      %s302 = smul.addr %s301, 8
      %s303 = scalar_lea.vmem %s5, %s302
      %s304 = smul.u32 2, %s22
      %v306 = vld [vmem:[%s279] sm:$0xff]
      %v307 = vld [vmem:[%s279 + $0x8] sm:$0xf]
      %v308 = vld [vmem:[%s1] sm:$0xf]
      %v309 = vld [vmem:[%s1 + $0x4] sm:$0xf]
      %v310 = vld [vmem:[%s1 + $0x8] sm:$0xf]
      %v311 = vld [vmem:[%s1 + $0xc] sm:$0xf]
      %v312 = vld [vmem:[%s1 + $0x10] sm:$0xf]
      %v318 = vunpack.c.l.b16 %v308
      %v319 = vunpack.c.l.b16 %v309
      %v320 = vunpack.c.l.b16 %v310
      %v321 = vunpack.c.l.b16 %v311
      %v322 = vunpack.c.l.b16 %v312
      %v323 = vpack.c.b16 %v319, %v318
      %v324 = vpack.c.b16 %v321, %v320
      %v325 = vpack.c.b16 %v322, %v322
      %v328 = vunpack.c.l.b16 %v306
      %v329 = vunpack.c.h.b16 %v306
      %v330 = vunpack.c.l.b16 %v307
      %v331 = vpack.c.b16 %v328, %v328
      %v332 = vpack.c.b16 %v329, %v329
      %v333 = vpack.c.b16 %v330, %v330
      %vm334 = vcmask 64512
      %v336 = vsel %vm334, %v323, 0
      %v339 = vsel %vm334, %v324, 0
      %v342 = vsel %vm334, %v325, 0
      %vm344 = vcmask 1043456
      %v346 = vsel %vm344, %v331, 0
      %v349 = vsel %vm344, %v332, 0
      %v352 = vsel %vm344, %v333, 0
      %354 = vmatpush.bf16.msra.mxu0 0
      %355 = vmatpush.bf16.msra.mxu0 0
      %356 = vmatpush.bf16.msra.mxu0 0
      %357 = vmatpush.bf16.msra.mxu0 0
      %358 = vmatpush.bf16.msra.mxu0 0
      %359 = vmatpush.bf16.msra.mxu0 0
      %360 = vmatpush.bf16.msra.mxu0 0
      %361 = vmatpush.bf16.msra.mxu0 %v346
      %362 = vmatmul.bf16.gmra.mxu0 %v336
      %v363 = vpop.f32.mrf.mxu0
      %v364 = vadd.f32 0.0, %v363
      %v365 = vpop.f32.mrf.mxu0
      %v366 = vadd.f32 0.0, %v365
      %367 = vmatmul.bf16.gmra.mxu0 %v339
      %v368 = vpop.f32.mrf.mxu0
      %v369 = vadd.f32 0.0, %v368
      %v370 = vpop.f32.mrf.mxu0
      %v371 = vadd.f32 0.0, %v370
      %372 = vmatmul.bf16.gmra.mxu0 %v342
      %v373 = vpop.f32.mrf.mxu0
      %v374 = vadd.f32 0.0, %v373
      %v375 = vpop.f32.mrf.mxu0
      %376 = vdwg.mxu0
      %377 = vmatpush.bf16.msra.mxu0 0
      %378 = vmatpush.bf16.msra.mxu0 0
      %379 = vmatpush.bf16.msra.mxu0 0
      %380 = vmatpush.bf16.msra.mxu0 0
      %381 = vmatpush.bf16.msra.mxu0 0
      %382 = vmatpush.bf16.msra.mxu0 0
      %383 = vmatpush.bf16.msra.mxu0 0
      %384 = vmatpush.bf16.msra.mxu0 %v349
      %385 = vmatmul.bf16.gmra.mxu0 %v336
      %v386 = vpop.f32.mrf.mxu0
      %v387 = vadd.f32 0.0, %v386
      %v388 = vpop.f32.mrf.mxu0
      %v389 = vadd.f32 0.0, %v388
      %390 = vmatmul.bf16.gmra.mxu0 %v339
      %v391 = vpop.f32.mrf.mxu0
      %v392 = vadd.f32 0.0, %v391
      %v393 = vpop.f32.mrf.mxu0
      %v394 = vadd.f32 0.0, %v393
      %395 = vmatmul.bf16.gmra.mxu0 %v342
      %v396 = vpop.f32.mrf.mxu0
      %v397 = vadd.f32 0.0, %v396
      %v398 = vpop.f32.mrf.mxu0
      %399 = vdwg.mxu0
      %400 = vmatpush.bf16.msra.mxu0 0
      %401 = vmatpush.bf16.msra.mxu0 0
      %402 = vmatpush.bf16.msra.mxu0 0
      %403 = vmatpush.bf16.msra.mxu0 0
      %404 = vmatpush.bf16.msra.mxu0 0
      %405 = vmatpush.bf16.msra.mxu0 0
      %406 = vmatpush.bf16.msra.mxu0 0
      %407 = vmatpush.bf16.msra.mxu0 %v352
      %408 = vmatmul.bf16.gmra.mxu0 %v336
      %v409 = vpop.f32.mrf.mxu0
      %v410 = vadd.f32 0.0, %v409
      %v411 = vpop.f32.mrf.mxu0
      %v412 = vadd.f32 0.0, %v411
      %413 = vmatmul.bf16.gmra.mxu0 %v339
      %v414 = vpop.f32.mrf.mxu0
      %v415 = vadd.f32 0.0, %v414
      %v416 = vpop.f32.mrf.mxu0
      %v417 = vadd.f32 0.0, %v416
      %418 = vmatmul.bf16.gmra.mxu0 %v342
      %v419 = vpop.f32.mrf.mxu0
      %v420 = vadd.f32 0.0, %v419
      %v421 = vpop.f32.mrf.mxu0
      %422 = vdwg.mxu0
      %v423 = vld [vmem:[%s283] sm:$0x3]
      %vm424 = vcmp.ge.s32.totalorder %v423, 1
      %vm425 = vcmp.le.s32.totalorder %v423, 14
      %v426 = vsel %vm424, 1, 0
      %v427 = vperm.slane %v426, 0
      %v428 = vperm.slane %v426, 1
      %vm429 = vcmp.eq.s32.totalorder %v427, 1
      %vm430 = vcmp.eq.s32.totalorder %v428, 1
      %v431 = vsel %vm429, %v364, 0.0
      %v432 = vsel %vm430, %v387, 0.0
      %v433 = vsel %vm429, %v366, 0.0
      %v434 = vsel %vm430, %v389, 0.0
      %v435 = vsel %vm429, %v369, 0.0
      %v436 = vsel %vm430, %v392, 0.0
      %v437 = vsel %vm429, %v371, 0.0
      %v438 = vsel %vm430, %v394, 0.0
      %v439 = vsel %vm429, %v374, 0.0
      %v440 = vsel %vm430, %v397, 0.0
      %v441 = vld [vmem:[%s2] sm:$0xff]
      %v442 = vld [vmem:[%s2 + $0x8] sm:$0xff]
      %v443 = vld [vmem:[%s2 + $0x10] sm:$0xff]
      %v444 = vld [vmem:[%s2 + $0x18] sm:$0xff]
      %v445 = vld [vmem:[%s2 + $0x20] sm:$0xff]
      %447 = vset.pattern.permute.xlu0 0
      %448 = vperm.xlu0 %447, %v441
      %v449 = vpop.permute.xlu0 %448
      %452 = vset.pattern.permute.xlu0 0
      %453 = vperm.xlu0 %452, %v442
      %v454 = vpop.permute.xlu0 %453
      %457 = vset.pattern.permute.xlu0 0
      %458 = vperm.xlu0 %457, %v443
      %v459 = vpop.permute.xlu0 %458
      %462 = vset.pattern.permute.xlu0 0
      %463 = vperm.xlu0 %462, %v444
      %v464 = vpop.permute.xlu0 %463
      %467 = vset.pattern.permute.xlu0 0
      %468 = vperm.xlu0 %467, %v445
      %v469 = vpop.permute.xlu0 %468
      %v471 = vmul.f32 %v431, %v449
      %v472 = vmul.f32 %v432, %v449
      %v473 = vmul.f32 %v433, %v454
      %v474 = vmul.f32 %v434, %v454
      %v475 = vmul.f32 %v435, %v459
      %v476 = vmul.f32 %v436, %v459
      %v477 = vmul.f32 %v437, %v464
      %v478 = vmul.f32 %v438, %v464
      %v479 = vmul.f32 %v439, %v469
      %v480 = vmul.f32 %v440, %v469
      %v481 = vadd.f32 %v471, 0.0
      %v482 = vadd.f32 %v472, 0.0
      %v483 = vadd.f32 %v473, 0.0
      %v484 = vadd.f32 %v474, 0.0
      %v485 = vadd.f32 %v475, 0.0
      %v486 = vadd.f32 %v476, 0.0
      %v487 = vadd.f32 %v477, 0.0
      %v488 = vadd.f32 %v478, 0.0
      %v489 = vadd.f32 %v479, 0.0
      %v490 = vadd.f32 %v480, 0.0
      %491 = vset.pattern.permute.xlu0 1
      %492 = vperm.xlu0 %491, %v441
      %v493 = vpop.permute.xlu0 %492
      %495 = vset.pattern.permute.xlu0 1
      %496 = vperm.xlu0 %495, %v442
      %v497 = vpop.permute.xlu0 %496
      %499 = vset.pattern.permute.xlu0 1
      %500 = vperm.xlu0 %499, %v443
      %v501 = vpop.permute.xlu0 %500
      %503 = vset.pattern.permute.xlu0 1
      %504 = vperm.xlu0 %503, %v444
      %v505 = vpop.permute.xlu0 %504
      %507 = vset.pattern.permute.xlu0 1
      %508 = vperm.xlu0 %507, %v445
      %v509 = vpop.permute.xlu0 %508
      %v511 = vmul.f32 %v364, %v493
      %v512 = vmul.f32 %v387, %v493
      %v513 = vmul.f32 %v410, %v493
      %v514 = vmul.f32 %v366, %v497
      %v515 = vmul.f32 %v389, %v497
      %v516 = vmul.f32 %v412, %v497
      %v517 = vmul.f32 %v369, %v501
      %v518 = vmul.f32 %v392, %v501
      %v519 = vmul.f32 %v415, %v501
      %v520 = vmul.f32 %v371, %v505
      %v521 = vmul.f32 %v394, %v505
      %v522 = vmul.f32 %v417, %v505
      %v523 = vmul.f32 %v374, %v509
      %v524 = vmul.f32 %v397, %v509
      %v525 = vmul.f32 %v420, %v509
      %541 = vrot.lane.b32.xlu0 %v511, 127
      %v542 = vpop.permute.xlu0 %541
      %543 = vrot.lane.b32.xlu0 %v512, 127
      %v544 = vpop.permute.xlu0 %543
      %545 = vrot.lane.b32.xlu0 %v513, 127
      %v546 = vpop.permute.xlu0 %545
      %547 = vrot.lane.b32.xlu0 %v514, 127
      %v548 = vpop.permute.xlu0 %547
      %549 = vrot.lane.b32.xlu0 %v515, 127
      %v550 = vpop.permute.xlu0 %549
      %551 = vrot.lane.b32.xlu0 %v516, 127
      %v552 = vpop.permute.xlu0 %551
      %553 = vrot.lane.b32.xlu0 %v517, 127
      %v554 = vpop.permute.xlu0 %553
      %555 = vrot.lane.b32.xlu0 %v518, 127
      %v556 = vpop.permute.xlu0 %555
      %557 = vrot.lane.b32.xlu0 %v519, 127
      %v558 = vpop.permute.xlu0 %557
      %559 = vrot.lane.b32.xlu0 %v520, 127
      %v560 = vpop.permute.xlu0 %559
      %561 = vrot.lane.b32.xlu0 %v521, 127
      %v562 = vpop.permute.xlu0 %561
      %563 = vrot.lane.b32.xlu0 %v522, 127
      %v564 = vpop.permute.xlu0 %563
      %565 = vrot.lane.b32.xlu0 %v523, 127
      %v566 = vpop.permute.xlu0 %565
      %567 = vrot.lane.b32.xlu0 %v524, 127
      %v568 = vpop.permute.xlu0 %567
      %569 = vrot.lane.b32.xlu0 %v525, 127
      %v570 = vpop.permute.xlu0 %569
      %vm571 = vcmask 1039360
      %v572 = vsel %vm571, %v542, %v544
      %v573 = vsel %vm571, %v544, %v546
      %v574 = vsel %vm571, %v548, %v550
      %v575 = vsel %vm571, %v550, %v552
      %v576 = vsel %vm571, %v554, %v556
      %v577 = vsel %vm571, %v556, %v558
      %v578 = vsel %vm571, %v560, %v562
      %v579 = vsel %vm571, %v562, %v564
      %v580 = vsel %vm571, %v566, %v568
      %v581 = vsel %vm571, %v568, %v570
      %v592 = vadd.f32 %v481, %v572
      %v593 = vadd.f32 %v482, %v573
      %v594 = vadd.f32 %v483, %v574
      %v595 = vadd.f32 %v484, %v575
      %v596 = vadd.f32 %v485, %v576
      %v597 = vadd.f32 %v486, %v577
      %v598 = vadd.f32 %v487, %v578
      %v599 = vadd.f32 %v488, %v579
      %v600 = vadd.f32 %v489, %v580
      %v601 = vadd.f32 %v490, %v581
      %v602 = vsel %vm425, 1, 0
      %v603 = vperm.slane %v602, 0
      %v604 = vperm.slane %v602, 1
      %vm605 = vcmp.eq.s32.totalorder %v603, 1
      %vm606 = vcmp.eq.s32.totalorder %v604, 1
      %622 = vrot.lane.b32.xlu0 %v364, 126
      %v623 = vpop.permute.xlu0 %622
      %624 = vrot.lane.b32.xlu0 %v387, 126
      %v625 = vpop.permute.xlu0 %624
      %626 = vrot.lane.b32.xlu0 %v410, 126
      %v627 = vpop.permute.xlu0 %626
      %628 = vrot.lane.b32.xlu0 %v366, 126
      %v629 = vpop.permute.xlu0 %628
      %630 = vrot.lane.b32.xlu0 %v389, 126
      %v631 = vpop.permute.xlu0 %630
      %632 = vrot.lane.b32.xlu0 %v412, 126
      %v633 = vpop.permute.xlu0 %632
      %634 = vrot.lane.b32.xlu0 %v369, 126
      %v635 = vpop.permute.xlu0 %634
      %636 = vrot.lane.b32.xlu0 %v392, 126
      %v637 = vpop.permute.xlu0 %636
      %638 = vrot.lane.b32.xlu0 %v415, 126
      %v639 = vpop.permute.xlu0 %638
      %640 = vrot.lane.b32.xlu0 %v371, 126
      %v641 = vpop.permute.xlu0 %640
      %642 = vrot.lane.b32.xlu0 %v394, 126
      %v643 = vpop.permute.xlu0 %642
      %644 = vrot.lane.b32.xlu0 %v417, 126
      %v645 = vpop.permute.xlu0 %644
      %646 = vrot.lane.b32.xlu0 %v374, 126
      %v647 = vpop.permute.xlu0 %646
      %648 = vrot.lane.b32.xlu0 %v397, 126
      %v649 = vpop.permute.xlu0 %648
      %650 = vrot.lane.b32.xlu0 %v420, 126
      %v651 = vpop.permute.xlu0 %650
      %vm652 = vcmask 1031168
      %v653 = vsel %vm652, %v623, %v625
      %v654 = vsel %vm652, %v625, %v627
      %v655 = vsel %vm652, %v629, %v631
      %v656 = vsel %vm652, %v631, %v633
      %v657 = vsel %vm652, %v635, %v637
      %v658 = vsel %vm652, %v637, %v639
      %v659 = vsel %vm652, %v641, %v643
      %v660 = vsel %vm652, %v643, %v645
      %v661 = vsel %vm652, %v647, %v649
      %v662 = vsel %vm652, %v649, %v651
      %v673 = vsel %vm605, %v653, 0.0
      %v674 = vsel %vm606, %v654, 0.0
      %v675 = vsel %vm605, %v655, 0.0
      %v676 = vsel %vm606, %v656, 0.0
      %v677 = vsel %vm605, %v657, 0.0
      %v678 = vsel %vm606, %v658, 0.0
      %v679 = vsel %vm605, %v659, 0.0
      %v680 = vsel %vm606, %v660, 0.0
      %v681 = vsel %vm605, %v661, 0.0
      %v682 = vsel %vm606, %v662, 0.0
      %683 = vset.pattern.permute.xlu0 2
      %684 = vperm.xlu0 %683, %v441
      %v685 = vpop.permute.xlu0 %684
      %687 = vset.pattern.permute.xlu0 2
      %688 = vperm.xlu0 %687, %v442
      %v689 = vpop.permute.xlu0 %688
      %691 = vset.pattern.permute.xlu0 2
      %692 = vperm.xlu0 %691, %v443
      %v693 = vpop.permute.xlu0 %692
      %695 = vset.pattern.permute.xlu0 2
      %696 = vperm.xlu0 %695, %v444
      %v697 = vpop.permute.xlu0 %696
      %699 = vset.pattern.permute.xlu0 2
      %700 = vperm.xlu0 %699, %v445
      %v701 = vpop.permute.xlu0 %700
      %v703 = vmul.f32 %v673, %v685
      %v704 = vmul.f32 %v674, %v685
      %v705 = vmul.f32 %v675, %v689
      %v706 = vmul.f32 %v676, %v689
      %v707 = vmul.f32 %v677, %v693
      %v708 = vmul.f32 %v678, %v693
      %v709 = vmul.f32 %v679, %v697
      %v710 = vmul.f32 %v680, %v697
      %v711 = vmul.f32 %v681, %v701
      %v712 = vmul.f32 %v682, %v701
      %v713 = vadd.f32 %v592, %v703
      %v714 = vadd.f32 %v593, %v704
      %v715 = vadd.f32 %v594, %v705
      %v716 = vadd.f32 %v595, %v706
      %v717 = vadd.f32 %v596, %v707
      %v718 = vadd.f32 %v597, %v708
      %v719 = vadd.f32 %v598, %v709
      %v720 = vadd.f32 %v599, %v710
      %v721 = vadd.f32 %v600, %v711
      %v722 = vadd.f32 %v601, %v712
      %723 = vrot.lane.b32.xlu0 %v364, 112
      %v724 = vpop.permute.xlu0 %723
      %725 = vrot.lane.b32.xlu0 %v387, 112
      %v726 = vpop.permute.xlu0 %725
      %727 = vrot.lane.b32.xlu0 %v410, 112
      %v728 = vpop.permute.xlu0 %727
      %729 = vrot.lane.b32.xlu0 %v366, 112
      %v730 = vpop.permute.xlu0 %729
      %731 = vrot.lane.b32.xlu0 %v389, 112
      %v732 = vpop.permute.xlu0 %731
      %733 = vrot.lane.b32.xlu0 %v412, 112
      %v734 = vpop.permute.xlu0 %733
      %735 = vrot.lane.b32.xlu0 %v369, 112
      %v736 = vpop.permute.xlu0 %735
      %737 = vrot.lane.b32.xlu0 %v392, 112
      %v738 = vpop.permute.xlu0 %737
      %739 = vrot.lane.b32.xlu0 %v415, 112
      %v740 = vpop.permute.xlu0 %739
      %741 = vrot.lane.b32.xlu0 %v371, 112
      %v742 = vpop.permute.xlu0 %741
      %743 = vrot.lane.b32.xlu0 %v394, 112
      %v744 = vpop.permute.xlu0 %743
      %745 = vrot.lane.b32.xlu0 %v417, 112
      %v746 = vpop.permute.xlu0 %745
      %747 = vrot.lane.b32.xlu0 %v374, 112
      %v748 = vpop.permute.xlu0 %747
      %749 = vrot.lane.b32.xlu0 %v397, 112
      %v750 = vpop.permute.xlu0 %749
      %751 = vrot.lane.b32.xlu0 %v420, 112
      %v752 = vpop.permute.xlu0 %751
      %vm753 = vcmask 916480
      %v754 = vsel %vm753, %v724, %v726
      %v755 = vsel %vm753, %v726, %v728
      %v756 = vsel %vm753, %v730, %v732
      %v757 = vsel %vm753, %v732, %v734
      %v758 = vsel %vm753, %v736, %v738
      %v759 = vsel %vm753, %v738, %v740
      %v760 = vsel %vm753, %v742, %v744
      %v761 = vsel %vm753, %v744, %v746
      %v762 = vsel %vm753, %v748, %v750
      %v763 = vsel %vm753, %v750, %v752
      %v774 = vsel %vm429, %v754, 0.0
      %v775 = vsel %vm430, %v755, 0.0
      %v776 = vsel %vm429, %v756, 0.0
      %v777 = vsel %vm430, %v757, 0.0
      %v778 = vsel %vm429, %v758, 0.0
      %v779 = vsel %vm430, %v759, 0.0
      %v780 = vsel %vm429, %v760, 0.0
      %v781 = vsel %vm430, %v761, 0.0
      %v782 = vsel %vm429, %v762, 0.0
      %v783 = vsel %vm430, %v763, 0.0
      %784 = vset.pattern.permute.xlu0 3
      %785 = vperm.xlu0 %784, %v441
      %v786 = vpop.permute.xlu0 %785
      %788 = vset.pattern.permute.xlu0 3
      %789 = vperm.xlu0 %788, %v442
      %v790 = vpop.permute.xlu0 %789
      %792 = vset.pattern.permute.xlu0 3
      %793 = vperm.xlu0 %792, %v443
      %v794 = vpop.permute.xlu0 %793
      %796 = vset.pattern.permute.xlu0 3
      %797 = vperm.xlu0 %796, %v444
      %v798 = vpop.permute.xlu0 %797
      %800 = vset.pattern.permute.xlu0 3
      %801 = vperm.xlu0 %800, %v445
      %v802 = vpop.permute.xlu0 %801
      %v804 = vmul.f32 %v774, %v786
      %v805 = vmul.f32 %v775, %v786
      %v806 = vmul.f32 %v776, %v790
      %v807 = vmul.f32 %v777, %v790
      %v808 = vmul.f32 %v778, %v794
      %v809 = vmul.f32 %v779, %v794
      %v810 = vmul.f32 %v780, %v798
      %v811 = vmul.f32 %v781, %v798
      %v812 = vmul.f32 %v782, %v802
      %v813 = vmul.f32 %v783, %v802
      %v814 = vadd.f32 %v713, %v804
      %v815 = vadd.f32 %v714, %v805
      %v816 = vadd.f32 %v715, %v806
      %v817 = vadd.f32 %v716, %v807
      %v818 = vadd.f32 %v717, %v808
      %v819 = vadd.f32 %v718, %v809
      %v820 = vadd.f32 %v719, %v810
      %v821 = vadd.f32 %v720, %v811
      %v822 = vadd.f32 %v721, %v812
      %v823 = vadd.f32 %v722, %v813
      %824 = vset.pattern.permute.xlu0 4
      %825 = vperm.xlu0 %824, %v441
      %v826 = vpop.permute.xlu0 %825
      %828 = vset.pattern.permute.xlu0 4
      %829 = vperm.xlu0 %828, %v442
      %v830 = vpop.permute.xlu0 %829
      %832 = vset.pattern.permute.xlu0 4
      %833 = vperm.xlu0 %832, %v443
      %v834 = vpop.permute.xlu0 %833
      %836 = vset.pattern.permute.xlu0 4
      %837 = vperm.xlu0 %836, %v444
      %v838 = vpop.permute.xlu0 %837
      %840 = vset.pattern.permute.xlu0 4
      %841 = vperm.xlu0 %840, %v445
      %v842 = vpop.permute.xlu0 %841
      %v844 = vmul.f32 %v364, %v826
      %v845 = vmul.f32 %v387, %v826
      %v846 = vmul.f32 %v410, %v826
      %v847 = vmul.f32 %v366, %v830
      %v848 = vmul.f32 %v389, %v830
      %v849 = vmul.f32 %v412, %v830
      %v850 = vmul.f32 %v369, %v834
      %v851 = vmul.f32 %v392, %v834
      %v852 = vmul.f32 %v415, %v834
      %v853 = vmul.f32 %v371, %v838
      %v854 = vmul.f32 %v394, %v838
      %v855 = vmul.f32 %v417, %v838
      %v856 = vmul.f32 %v374, %v842
      %v857 = vmul.f32 %v397, %v842
      %v858 = vmul.f32 %v420, %v842
      %874 = vrot.lane.b32.xlu0 %v844, 111
      %v875 = vpop.permute.xlu0 %874
      %876 = vrot.lane.b32.xlu0 %v845, 111
      %v877 = vpop.permute.xlu0 %876
      %878 = vrot.lane.b32.xlu0 %v846, 111
      %v879 = vpop.permute.xlu0 %878
      %880 = vrot.lane.b32.xlu0 %v847, 111
      %v881 = vpop.permute.xlu0 %880
      %882 = vrot.lane.b32.xlu0 %v848, 111
      %v883 = vpop.permute.xlu0 %882
      %884 = vrot.lane.b32.xlu0 %v849, 111
      %v885 = vpop.permute.xlu0 %884
      %886 = vrot.lane.b32.xlu0 %v850, 111
      %v887 = vpop.permute.xlu0 %886
      %888 = vrot.lane.b32.xlu0 %v851, 111
      %v889 = vpop.permute.xlu0 %888
      %890 = vrot.lane.b32.xlu0 %v852, 111
      %v891 = vpop.permute.xlu0 %890
      %892 = vrot.lane.b32.xlu0 %v853, 111
      %v893 = vpop.permute.xlu0 %892
      %894 = vrot.lane.b32.xlu0 %v854, 111
      %v895 = vpop.permute.xlu0 %894
      %896 = vrot.lane.b32.xlu0 %v855, 111
      %v897 = vpop.permute.xlu0 %896
      %898 = vrot.lane.b32.xlu0 %v856, 111
      %v899 = vpop.permute.xlu0 %898
      %900 = vrot.lane.b32.xlu0 %v857, 111
      %v901 = vpop.permute.xlu0 %900
      %902 = vrot.lane.b32.xlu0 %v858, 111
      %v903 = vpop.permute.xlu0 %902
      %vm904 = vcmask 908288
      %v905 = vsel %vm904, %v875, %v877
      %v906 = vsel %vm904, %v877, %v879
      %v907 = vsel %vm904, %v881, %v883
      %v908 = vsel %vm904, %v883, %v885
      %v909 = vsel %vm904, %v887, %v889
      %v910 = vsel %vm904, %v889, %v891
      %v911 = vsel %vm904, %v893, %v895
      %v912 = vsel %vm904, %v895, %v897
      %v913 = vsel %vm904, %v899, %v901
      %v914 = vsel %vm904, %v901, %v903
      %v925 = vadd.f32 %v814, %v905
      %v926 = vadd.f32 %v815, %v906
      %v927 = vadd.f32 %v816, %v907
      %v928 = vadd.f32 %v817, %v908
      %v929 = vadd.f32 %v818, %v909
      %v930 = vadd.f32 %v819, %v910
      %v931 = vadd.f32 %v820, %v911
      %v932 = vadd.f32 %v821, %v912
      %v933 = vadd.f32 %v822, %v913
      %v934 = vadd.f32 %v823, %v914
      %935 = vrot.lane.b32.xlu0 %v364, 110
      %v936 = vpop.permute.xlu0 %935
      %937 = vrot.lane.b32.xlu0 %v387, 110
      %v938 = vpop.permute.xlu0 %937
      %939 = vrot.lane.b32.xlu0 %v410, 110
      %v940 = vpop.permute.xlu0 %939
      %941 = vrot.lane.b32.xlu0 %v366, 110
      %v942 = vpop.permute.xlu0 %941
      %943 = vrot.lane.b32.xlu0 %v389, 110
      %v944 = vpop.permute.xlu0 %943
      %945 = vrot.lane.b32.xlu0 %v412, 110
      %v946 = vpop.permute.xlu0 %945
      %947 = vrot.lane.b32.xlu0 %v369, 110
      %v948 = vpop.permute.xlu0 %947
      %949 = vrot.lane.b32.xlu0 %v392, 110
      %v950 = vpop.permute.xlu0 %949
      %951 = vrot.lane.b32.xlu0 %v415, 110
      %v952 = vpop.permute.xlu0 %951
      %953 = vrot.lane.b32.xlu0 %v371, 110
      %v954 = vpop.permute.xlu0 %953
      %955 = vrot.lane.b32.xlu0 %v394, 110
      %v956 = vpop.permute.xlu0 %955
      %957 = vrot.lane.b32.xlu0 %v417, 110
      %v958 = vpop.permute.xlu0 %957
      %959 = vrot.lane.b32.xlu0 %v374, 110
      %v960 = vpop.permute.xlu0 %959
      %961 = vrot.lane.b32.xlu0 %v397, 110
      %v962 = vpop.permute.xlu0 %961
      %963 = vrot.lane.b32.xlu0 %v420, 110
      %v964 = vpop.permute.xlu0 %963
      %vm965 = vcmask 900096
      %v966 = vsel %vm965, %v936, %v938
      %v967 = vsel %vm965, %v938, %v940
      %v968 = vsel %vm965, %v942, %v944
      %v969 = vsel %vm965, %v944, %v946
      %v970 = vsel %vm965, %v948, %v950
      %v971 = vsel %vm965, %v950, %v952
      %v972 = vsel %vm965, %v954, %v956
      %v973 = vsel %vm965, %v956, %v958
      %v974 = vsel %vm965, %v960, %v962
      %v975 = vsel %vm965, %v962, %v964
      %v986 = vsel %vm605, %v966, 0.0
      %v987 = vsel %vm606, %v967, 0.0
      %v988 = vsel %vm605, %v968, 0.0
      %v989 = vsel %vm606, %v969, 0.0
      %v990 = vsel %vm605, %v970, 0.0
      %v991 = vsel %vm606, %v971, 0.0
      %v992 = vsel %vm605, %v972, 0.0
      %v993 = vsel %vm606, %v973, 0.0
      %v994 = vsel %vm605, %v974, 0.0
      %v995 = vsel %vm606, %v975, 0.0
      %996 = vset.pattern.permute.xlu0 5
      %997 = vperm.xlu0 %996, %v441
      %v998 = vpop.permute.xlu0 %997
      %1000 = vset.pattern.permute.xlu0 5
      %1001 = vperm.xlu0 %1000, %v442
      %v1002 = vpop.permute.xlu0 %1001
      %1004 = vset.pattern.permute.xlu0 5
      %1005 = vperm.xlu0 %1004, %v443
      %v1006 = vpop.permute.xlu0 %1005
      %1008 = vset.pattern.permute.xlu0 5
      %1009 = vperm.xlu0 %1008, %v444
      %v1010 = vpop.permute.xlu0 %1009
      %1012 = vset.pattern.permute.xlu0 5
      %1013 = vperm.xlu0 %1012, %v445
      %v1014 = vpop.permute.xlu0 %1013
      %v1016 = vmul.f32 %v986, %v998
      %v1017 = vmul.f32 %v987, %v998
      %v1018 = vmul.f32 %v988, %v1002
      %v1019 = vmul.f32 %v989, %v1002
      %v1020 = vmul.f32 %v990, %v1006
      %v1021 = vmul.f32 %v991, %v1006
      %v1022 = vmul.f32 %v992, %v1010
      %v1023 = vmul.f32 %v993, %v1010
      %v1024 = vmul.f32 %v994, %v1014
      %v1025 = vmul.f32 %v995, %v1014
      %v1026 = vadd.f32 %v925, %v1016
      %v1027 = vadd.f32 %v926, %v1017
      %v1028 = vadd.f32 %v927, %v1018
      %v1029 = vadd.f32 %v928, %v1019
      %v1030 = vadd.f32 %v929, %v1020
      %v1031 = vadd.f32 %v930, %v1021
      %v1032 = vadd.f32 %v931, %v1022
      %v1033 = vadd.f32 %v932, %v1023
      %v1034 = vadd.f32 %v933, %v1024
      %v1035 = vadd.f32 %v934, %v1025
      %1036 = vrot.lane.b32.xlu0 %v364, 96
      %v1037 = vpop.permute.xlu0 %1036
      %1038 = vrot.lane.b32.xlu0 %v387, 96
      %v1039 = vpop.permute.xlu0 %1038
      %1040 = vrot.lane.b32.xlu0 %v410, 96
      %v1041 = vpop.permute.xlu0 %1040
      %1042 = vrot.lane.b32.xlu0 %v366, 96
      %v1043 = vpop.permute.xlu0 %1042
      %1044 = vrot.lane.b32.xlu0 %v389, 96
      %v1045 = vpop.permute.xlu0 %1044
      %1046 = vrot.lane.b32.xlu0 %v412, 96
      %v1047 = vpop.permute.xlu0 %1046
      %1048 = vrot.lane.b32.xlu0 %v369, 96
      %v1049 = vpop.permute.xlu0 %1048
      %1050 = vrot.lane.b32.xlu0 %v392, 96
      %v1051 = vpop.permute.xlu0 %1050
      %1052 = vrot.lane.b32.xlu0 %v415, 96
      %v1053 = vpop.permute.xlu0 %1052
      %1054 = vrot.lane.b32.xlu0 %v371, 96
      %v1055 = vpop.permute.xlu0 %1054
      %1056 = vrot.lane.b32.xlu0 %v394, 96
      %v1057 = vpop.permute.xlu0 %1056
      %1058 = vrot.lane.b32.xlu0 %v417, 96
      %v1059 = vpop.permute.xlu0 %1058
      %1060 = vrot.lane.b32.xlu0 %v374, 96
      %v1061 = vpop.permute.xlu0 %1060
      %1062 = vrot.lane.b32.xlu0 %v397, 96
      %v1063 = vpop.permute.xlu0 %1062
      %1064 = vrot.lane.b32.xlu0 %v420, 96
      %v1065 = vpop.permute.xlu0 %1064
      %vm1066 = vcmask 785408
      %v1067 = vsel %vm1066, %v1037, %v1039
      %v1068 = vsel %vm1066, %v1039, %v1041
      %v1069 = vsel %vm1066, %v1043, %v1045
      %v1070 = vsel %vm1066, %v1045, %v1047
      %v1071 = vsel %vm1066, %v1049, %v1051
      %v1072 = vsel %vm1066, %v1051, %v1053
      %v1073 = vsel %vm1066, %v1055, %v1057
      %v1074 = vsel %vm1066, %v1057, %v1059
      %v1075 = vsel %vm1066, %v1061, %v1063
      %v1076 = vsel %vm1066, %v1063, %v1065
      %v1087 = vsel %vm429, %v1067, 0.0
      %v1088 = vsel %vm430, %v1068, 0.0
      %v1089 = vsel %vm429, %v1069, 0.0
      %v1090 = vsel %vm430, %v1070, 0.0
      %v1091 = vsel %vm429, %v1071, 0.0
      %v1092 = vsel %vm430, %v1072, 0.0
      %v1093 = vsel %vm429, %v1073, 0.0
      %v1094 = vsel %vm430, %v1074, 0.0
      %v1095 = vsel %vm429, %v1075, 0.0
      %v1096 = vsel %vm430, %v1076, 0.0
      %1097 = vset.pattern.permute.xlu0 6
      %1098 = vperm.xlu0 %1097, %v441
      %v1099 = vpop.permute.xlu0 %1098
      %1101 = vset.pattern.permute.xlu0 6
      %1102 = vperm.xlu0 %1101, %v442
      %v1103 = vpop.permute.xlu0 %1102
      %1105 = vset.pattern.permute.xlu0 6
      %1106 = vperm.xlu0 %1105, %v443
      %v1107 = vpop.permute.xlu0 %1106
      %1109 = vset.pattern.permute.xlu0 6
      %1110 = vperm.xlu0 %1109, %v444
      %v1111 = vpop.permute.xlu0 %1110
      %1113 = vset.pattern.permute.xlu0 6
      %1114 = vperm.xlu0 %1113, %v445
      %v1115 = vpop.permute.xlu0 %1114
      %v1117 = vmul.f32 %v1087, %v1099
      %v1118 = vmul.f32 %v1088, %v1099
      %v1119 = vmul.f32 %v1089, %v1103
      %v1120 = vmul.f32 %v1090, %v1103
      %v1121 = vmul.f32 %v1091, %v1107
      %v1122 = vmul.f32 %v1092, %v1107
      %v1123 = vmul.f32 %v1093, %v1111
      %v1124 = vmul.f32 %v1094, %v1111
      %v1125 = vmul.f32 %v1095, %v1115
      %v1126 = vmul.f32 %v1096, %v1115
      %v1127 = vadd.f32 %v1026, %v1117
      %v1128 = vadd.f32 %v1027, %v1118
      %v1129 = vadd.f32 %v1028, %v1119
      %v1130 = vadd.f32 %v1029, %v1120
      %v1131 = vadd.f32 %v1030, %v1121
      %v1132 = vadd.f32 %v1031, %v1122
      %v1133 = vadd.f32 %v1032, %v1123
      %v1134 = vadd.f32 %v1033, %v1124
      %v1135 = vadd.f32 %v1034, %v1125
      %v1136 = vadd.f32 %v1035, %v1126
      %1137 = vset.pattern.permute.xlu0 7
      %1138 = vperm.xlu0 %1137, %v441
      %v1139 = vpop.permute.xlu0 %1138
      %1141 = vset.pattern.permute.xlu0 7
      %1142 = vperm.xlu0 %1141, %v442
      %v1143 = vpop.permute.xlu0 %1142
      %1145 = vset.pattern.permute.xlu0 7
      %1146 = vperm.xlu0 %1145, %v443
      %v1147 = vpop.permute.xlu0 %1146
      %1149 = vset.pattern.permute.xlu0 7
      %1150 = vperm.xlu0 %1149, %v444
      %v1151 = vpop.permute.xlu0 %1150
      %1153 = vset.pattern.permute.xlu0 7
      %1154 = vperm.xlu0 %1153, %v445
      %v1155 = vpop.permute.xlu0 %1154
      %v1157 = vmul.f32 %v364, %v1139
      %v1158 = vmul.f32 %v387, %v1139
      %v1159 = vmul.f32 %v410, %v1139
      %v1160 = vmul.f32 %v366, %v1143
      %v1161 = vmul.f32 %v389, %v1143
      %v1162 = vmul.f32 %v412, %v1143
      %v1163 = vmul.f32 %v369, %v1147
      %v1164 = vmul.f32 %v392, %v1147
      %v1165 = vmul.f32 %v415, %v1147
      %v1166 = vmul.f32 %v371, %v1151
      %v1167 = vmul.f32 %v394, %v1151
      %v1168 = vmul.f32 %v417, %v1151
      %v1169 = vmul.f32 %v374, %v1155
      %v1170 = vmul.f32 %v397, %v1155
      %v1171 = vmul.f32 %v420, %v1155
      %1187 = vrot.lane.b32.xlu0 %v1157, 95
      %v1188 = vpop.permute.xlu0 %1187
      %1189 = vrot.lane.b32.xlu0 %v1158, 95
      %v1190 = vpop.permute.xlu0 %1189
      %1191 = vrot.lane.b32.xlu0 %v1159, 95
      %v1192 = vpop.permute.xlu0 %1191
      %1193 = vrot.lane.b32.xlu0 %v1160, 95
      %v1194 = vpop.permute.xlu0 %1193
      %1195 = vrot.lane.b32.xlu0 %v1161, 95
      %v1196 = vpop.permute.xlu0 %1195
      %1197 = vrot.lane.b32.xlu0 %v1162, 95
      %v1198 = vpop.permute.xlu0 %1197
      %1199 = vrot.lane.b32.xlu0 %v1163, 95
      %v1200 = vpop.permute.xlu0 %1199
      %1201 = vrot.lane.b32.xlu0 %v1164, 95
      %v1202 = vpop.permute.xlu0 %1201
      %1203 = vrot.lane.b32.xlu0 %v1165, 95
      %v1204 = vpop.permute.xlu0 %1203
      %1205 = vrot.lane.b32.xlu0 %v1166, 95
      %v1206 = vpop.permute.xlu0 %1205
      %1207 = vrot.lane.b32.xlu0 %v1167, 95
      %v1208 = vpop.permute.xlu0 %1207
      %1209 = vrot.lane.b32.xlu0 %v1168, 95
      %v1210 = vpop.permute.xlu0 %1209
      %1211 = vrot.lane.b32.xlu0 %v1169, 95
      %v1212 = vpop.permute.xlu0 %1211
      %1213 = vrot.lane.b32.xlu0 %v1170, 95
      %v1214 = vpop.permute.xlu0 %1213
      %1215 = vrot.lane.b32.xlu0 %v1171, 95
      %v1216 = vpop.permute.xlu0 %1215
      %vm1217 = vcmask 777216
      %v1218 = vsel %vm1217, %v1188, %v1190
      %v1219 = vsel %vm1217, %v1190, %v1192
      %v1220 = vsel %vm1217, %v1194, %v1196
      %v1221 = vsel %vm1217, %v1196, %v1198
      %v1222 = vsel %vm1217, %v1200, %v1202
      %v1223 = vsel %vm1217, %v1202, %v1204
      %v1224 = vsel %vm1217, %v1206, %v1208
      %v1225 = vsel %vm1217, %v1208, %v1210
      %v1226 = vsel %vm1217, %v1212, %v1214
      %v1227 = vsel %vm1217, %v1214, %v1216
      %v1238 = vadd.f32 %v1127, %v1218
      %v1239 = vadd.f32 %v1128, %v1219
      %v1240 = vadd.f32 %v1129, %v1220
      %v1241 = vadd.f32 %v1130, %v1221
      %v1242 = vadd.f32 %v1131, %v1222
      %v1243 = vadd.f32 %v1132, %v1223
      %v1244 = vadd.f32 %v1133, %v1224
      %v1245 = vadd.f32 %v1134, %v1225
      %v1246 = vadd.f32 %v1135, %v1226
      %v1247 = vadd.f32 %v1136, %v1227
      %1248 = vrot.lane.b32.xlu0 %v364, 94
      %v1249 = vpop.permute.xlu0 %1248
      %1250 = vrot.lane.b32.xlu0 %v387, 94
      %v1251 = vpop.permute.xlu0 %1250
      %1252 = vrot.lane.b32.xlu0 %v410, 94
      %v1253 = vpop.permute.xlu0 %1252
      %1254 = vrot.lane.b32.xlu0 %v366, 94
      %v1255 = vpop.permute.xlu0 %1254
      %1256 = vrot.lane.b32.xlu0 %v389, 94
      %v1257 = vpop.permute.xlu0 %1256
      %1258 = vrot.lane.b32.xlu0 %v412, 94
      %v1259 = vpop.permute.xlu0 %1258
      %1260 = vrot.lane.b32.xlu0 %v369, 94
      %v1261 = vpop.permute.xlu0 %1260
      %1262 = vrot.lane.b32.xlu0 %v392, 94
      %v1263 = vpop.permute.xlu0 %1262
      %1264 = vrot.lane.b32.xlu0 %v415, 94
      %v1265 = vpop.permute.xlu0 %1264
      %1266 = vrot.lane.b32.xlu0 %v371, 94
      %v1267 = vpop.permute.xlu0 %1266
      %1268 = vrot.lane.b32.xlu0 %v394, 94
      %v1269 = vpop.permute.xlu0 %1268
      %1270 = vrot.lane.b32.xlu0 %v417, 94
      %v1271 = vpop.permute.xlu0 %1270
      %1272 = vrot.lane.b32.xlu0 %v374, 94
      %v1273 = vpop.permute.xlu0 %1272
      %1274 = vrot.lane.b32.xlu0 %v397, 94
      %v1275 = vpop.permute.xlu0 %1274
      %1276 = vrot.lane.b32.xlu0 %v420, 94
      %v1277 = vpop.permute.xlu0 %1276
      %vm1278 = vcmask 769024
      %v1279 = vsel %vm1278, %v1249, %v1251
      %v1280 = vsel %vm1278, %v1251, %v1253
      %v1281 = vsel %vm1278, %v1255, %v1257
      %v1282 = vsel %vm1278, %v1257, %v1259
      %v1283 = vsel %vm1278, %v1261, %v1263
      %v1284 = vsel %vm1278, %v1263, %v1265
      %v1285 = vsel %vm1278, %v1267, %v1269
      %v1286 = vsel %vm1278, %v1269, %v1271
      %v1287 = vsel %vm1278, %v1273, %v1275
      %v1288 = vsel %vm1278, %v1275, %v1277
      %v1299 = vsel %vm605, %v1279, 0.0
      %v1300 = vsel %vm606, %v1280, 0.0
      %v1301 = vsel %vm605, %v1281, 0.0
      %v1302 = vsel %vm606, %v1282, 0.0
      %v1303 = vsel %vm605, %v1283, 0.0
      %v1304 = vsel %vm606, %v1284, 0.0
      %v1305 = vsel %vm605, %v1285, 0.0
      %v1306 = vsel %vm606, %v1286, 0.0
      %v1307 = vsel %vm605, %v1287, 0.0
      %v1308 = vsel %vm606, %v1288, 0.0
      %1309 = vset.pattern.permute.xlu0 8
      %1310 = vperm.xlu0 %1309, %v441
      %v1311 = vpop.permute.xlu0 %1310
      %1313 = vset.pattern.permute.xlu0 8
      %1314 = vperm.xlu0 %1313, %v442
      %v1315 = vpop.permute.xlu0 %1314
      %1317 = vset.pattern.permute.xlu0 8
      %1318 = vperm.xlu0 %1317, %v443
      %v1319 = vpop.permute.xlu0 %1318
      %1321 = vset.pattern.permute.xlu0 8
      %1322 = vperm.xlu0 %1321, %v444
      %v1323 = vpop.permute.xlu0 %1322
      %1325 = vset.pattern.permute.xlu0 8
      %1326 = vperm.xlu0 %1325, %v445
      %v1327 = vpop.permute.xlu0 %1326
      %v1329 = vmul.f32 %v1299, %v1311
      %v1330 = vmul.f32 %v1300, %v1311
      %v1331 = vmul.f32 %v1301, %v1315
      %v1332 = vmul.f32 %v1302, %v1315
      %v1333 = vmul.f32 %v1303, %v1319
      %v1334 = vmul.f32 %v1304, %v1319
      %v1335 = vmul.f32 %v1305, %v1323
      %v1336 = vmul.f32 %v1306, %v1323
      %v1337 = vmul.f32 %v1307, %v1327
      %v1338 = vmul.f32 %v1308, %v1327
      %v1339 = vadd.f32 %v1238, %v1329
      %v1340 = vadd.f32 %v1239, %v1330
      %v1341 = vadd.f32 %v1240, %v1331
      %v1342 = vadd.f32 %v1241, %v1332
      %v1343 = vadd.f32 %v1242, %v1333
      %v1344 = vadd.f32 %v1243, %v1334
      %v1345 = vadd.f32 %v1244, %v1335
      %v1346 = vadd.f32 %v1245, %v1336
      %v1347 = vadd.f32 %v1246, %v1337
      %v1348 = vadd.f32 %v1247, %v1338
      %v1349 = vpack.c.bf16 %v1340, %v1339
      %v1350 = vpack.c.bf16 %v1342, %v1341
      %v1351 = vpack.c.bf16 %v1344, %v1343
      %v1352 = vpack.c.bf16 %v1346, %v1345
      %1353 = vst [vmem:[%s293] sm:$0xff] %v1349
      %1354 = vst [vmem:[%s293 + $0x8] sm:$0xff] %v1350
      %1355 = vst [vmem:[%s293 + $0x10] sm:$0xff] %v1351
      %1356 = vst [vmem:[%s293 + $0x18] sm:$0xff] %v1352
      %1357 = vst [vmem:[%s303] sm:$0xff] %v1347
      %1358 = vst [vmem:[%s303 + $0x8] sm:$0xff] %v1348
      %s1359 = smul.u32 2, %s22
      %p1360 = scmp.lt.s32.totalorder %s21, 1
      %s1361 = scalar_select %p1360, %s21, 1
      %p1362 = scmp.lt.s32.totalorder %s1359, 1
      %s1363 = scalar_select %p1362, %s1359, 1
      %s1364 = smul.addr %s1361, 8
      %s1365 = sadd.s32 %s1363, %s1364
      %s1366 = smul.addr %s1365, 4
      %s1367 = scalar_lea.vmem %s4, %s1366
      %s1368 = smul.u32 2, %s22
      %p1369 = scmp.lt.s32.totalorder %s21, 1
      %s1370 = scalar_select %p1369, %s21, 1
      %p1371 = scmp.lt.s32.totalorder %s1368, 1
      %s1372 = scalar_select %p1371, %s1368, 1
      %s1373 = smul.addr %s1370, 2
      %s1374 = sadd.s32 %s1372, %s1373
      %s1375 = smul.addr %s1374, 8
      %s1376 = scalar_lea.vmem %s5, %s1375
      // Predicated region
      $region37: #{improved_dhsa_forward.4} parent=35 // pred_check
        %p1377 = pneg %p145
      $region38: #{improved_dhsa_forward.4} parent=35 // pred_check_branch
        %1379 = sbr.rel (%p1377) target = $region40
      $region39: #{improved_dhsa_forward.4} parent=35 // pred_region
        %s1380 = smul.u32 2, %s22
      $region40: #{improved_dhsa_forward.4} parent=35 // pred_fallthru
        _
      // Predicated region
      $region41: #{improved_dhsa_forward.4} parent=35 // pred_check
        %p1381 = pneg %p173
      $region42: #{improved_dhsa_forward.4} parent=35 // pred_check_branch
        %1383 = sbr.rel (%p1381) target = $region44
      $region43: #{improved_dhsa_forward.4} parent=35 // pred_region
        %s1384 = smul.u32 2, %s22
      $region44: #{improved_dhsa_forward.4} parent=35 // pred_fallthru
        _
    $region36: #{improved_dhsa_forward.4} parent=5 // pred_fallthru
      _
    %p1385 = scmp.le.s32.totalorder 2, %s12
    // Predicated region
    $region45: #{improved_dhsa_forward.4} parent=5 // pred_check
      %p1386 = pneg %p1385
    $region46: #{improved_dhsa_forward.4} parent=5 // pred_check_branch
      %1388 = sbr.rel (%p1386) target = $region48
    $region47: #{improved_dhsa_forward.4} parent=5 // pred_region
      %s1389 = ssub.s32 %s12, 2
      // Predicated region
      $region49: #{improved_dhsa_forward.4} parent=47 // pred_check
        %p1390 = pneg %p151
      $region50: #{improved_dhsa_forward.4} parent=47 // pred_check_branch
        %1392 = sbr.rel (%p1390) target = $region52
      $region51: #{improved_dhsa_forward.4} parent=47 // pred_region
        %s1393 = smul.u32 2, %s24
        %p1394 = scmp.lt.s32.totalorder %s23, 1
        %s1395 = scalar_select %p1394, %s23, 1
        %p1396 = scmp.lt.s32.totalorder %s1393, 1
        %s1397 = scalar_select %p1396, %s1393, 1
        %s1398 = smul.addr %s1395, 8
        %s1399 = sadd.s32 %s1397, %s1398
        %s1400 = smul.addr %s1399, 4
        %s1401 = scalar_lea.vmem %s4, %s1400
      $region52: #{improved_dhsa_forward.4} parent=47 // pred_fallthru
        _
      // Predicated region
      $region53: #{improved_dhsa_forward.4} parent=47 // pred_check
        %p1402 = pneg %p179
      $region54: #{improved_dhsa_forward.4} parent=47 // pred_check_branch
        %1404 = sbr.rel (%p1402) target = $region56
      $region55: #{improved_dhsa_forward.4} parent=47 // pred_region
        %s1405 = smul.u32 2, %s24
        %p1406 = scmp.lt.s32.totalorder %s23, 1
        %s1407 = scalar_select %p1406, %s23, 1
        %p1408 = scmp.lt.s32.totalorder %s1405, 1
        %s1409 = scalar_select %p1408, %s1405, 1
        %s1410 = smul.addr %s1407, 2
        %s1411 = sadd.s32 %s1409, %s1410
        %s1412 = smul.addr %s1411, 8
        %s1413 = scalar_lea.vmem %s5, %s1412
      $region56: #{improved_dhsa_forward.4} parent=47 // pred_fallthru
        _
    $region48: #{improved_dhsa_forward.4} parent=5 // pred_fallthru
      _
  $region6: #{improved_dhsa_forward.4} parent=0 // loop_footer
    %s16 = sadd.s32 1, %s12
  $region7: #{improved_dhsa_forward.4} parent=0 // loop_footer_branch
    %11 = sbr.rel target = $region3
  $region8: #{improved_dhsa_forward.4} parent=0 // loop_exit
    _

// kernel: squeeze.5
$region0: #{squeeze.5}
  %s0 = inlined_call_operand.vmem [shape: bf16[2,1,8,256], index: 0, kind: input, shape index: {}]
  %s1 = inlined_call_operand.vmem [shape: bf16[8,8,64], index: 1, kind: output, shape index: {}]
  $region1: #{squeeze.5} parent=0
    #allocation0 [shape = 'u8[32768]{0}', space=vmem, size = 0x8000, scoped, tag = 'scoped mem for output reshape']
    #allocation1 [shape = 'u8[16384]{0}', space=vmem, size = 0x4000, scoped, tag = 'scoped mem for input reshape']
    %s3 = ssub.s32 256, 1
    %s4 = scalar_lea.vmem %s0, 12
    %s5 = sshrl.u32 %s3, 1
    %s6 = sor.u32 %s3, %s5
    %s7 = sand.u32 %s6, 85
    %s8 = sshrl.u32 %s7, 1
    %s9 = sor.u32 %s7, %s8
    %s10 = sand.u32 51, %s9
    %s11 = sshrl.u32 %s10, 2
    %s12 = sor.u32 %s10, %s11
    %s13 = sand.u32 15, %s12
    %v14 = vld [vmem:[%s4] sm:%s13]
    %v15 = vunpack.c.l.bf16 %v14
    %v16 = vunpack.c.h.bf16 %v14
    %s17 = scalar_lea.vmem [#allocation1], 24
    %18 = vst [vmem:[%s17] sm:%s3] %v15
    %s19 = scalar_lea.vmem %s0, 8
    %s20 = sshrl.u32 %s3, 1
    %s21 = sor.u32 %s3, %s20
    %s22 = sand.u32 %s21, 85
    %s23 = sshrl.u32 %s22, 1
    %s24 = sor.u32 %s22, %s23
    %s25 = sand.u32 51, %s24
    %s26 = sshrl.u32 %s25, 2
    %s27 = sor.u32 %s25, %s26
    %s28 = sand.u32 15, %s27
    %v29 = vld [vmem:[%s19] sm:%s28]
    %v30 = vunpack.c.l.bf16 %v29
    %v31 = vunpack.c.h.bf16 %v29
    %s32 = scalar_lea.vmem [#allocation1], 16
    %33 = vst [vmem:[%s32] sm:%s3] %v30
    %s34 = scalar_lea.vmem %s0, 4
    %s35 = sshrl.u32 %s3, 1
    %s36 = sor.u32 %s3, %s35
    %s37 = sand.u32 %s36, 85
    %s38 = sshrl.u32 %s37, 1
    %s39 = sor.u32 %s37, %s38
    %s40 = sand.u32 51, %s39
    %s41 = sshrl.u32 %s40, 2
    %s42 = sor.u32 %s40, %s41
    %s43 = sand.u32 15, %s42
    %v44 = vld [vmem:[%s34] sm:%s43]
    %v45 = vunpack.c.l.bf16 %v44
    %v46 = vunpack.c.h.bf16 %v44
    %s47 = scalar_lea.vmem [#allocation1], 8
    %48 = vst [vmem:[%s47] sm:%s3] %v45
    %s49 = sshrl.u32 %s3, 1
    %s50 = sor.u32 %s3, %s49
    %s51 = sand.u32 %s50, 85
    %s52 = sshrl.u32 %s51, 1
    %s53 = sor.u32 %s51, %s52
    %s54 = sand.u32 51, %s53
    %s55 = sshrl.u32 %s54, 2
    %s56 = sor.u32 %s54, %s55
    %s57 = sand.u32 15, %s56
    %v58 = vld [vmem:[%s0] sm:%s57]
    %v59 = vunpack.c.l.bf16 %v58
    %v60 = vunpack.c.h.bf16 %v58
    %61 = vst [vmem:[#allocation1] sm:%s3] %v59
    %v62 = vld [vmem:[#allocation1] sm:$0xff]
    %vm63 = vcmask 523264
    %64 = vst.msk [vmem:[#allocation0] ss:$4 sm:$0xff] %vm63, %v62
    %s65 = scalar_lea.vmem [#allocation1], 8
    %v66 = vld [vmem:[%s65] sm:$0xff]
    %vm67 = vcmask 523264
    %s68 = scalar_lea.vmem [#allocation0], 2
    %69 = vst.msk [vmem:[%s68] ss:$4 sm:$0xff] %vm67, %v66
    %s70 = scalar_lea.vmem [#allocation1], 16
    %v71 = vld [vmem:[%s70] sm:$0xff]
    %vm72 = vcmask 523264
    %s73 = scalar_lea.vmem [#allocation0], 32
    %74 = vst.msk [vmem:[%s73] ss:$4 sm:$0xff] %vm72, %v71
    %s75 = scalar_lea.vmem [#allocation1], 24
    %v76 = vld [vmem:[%s75] sm:$0xff]
    %vm77 = vcmask 523264
    %s78 = scalar_lea.vmem [#allocation0], 34
    %79 = vst.msk [vmem:[%s78] ss:$4 sm:$0xff] %vm77, %v76
    %v80 = vld.sshfl [vmem:[#allocation1] sm:$0xff pattern:$0xb3a29180]
    %81 = vrot.lane.b32.xlu0 %v80, 64
    %v82 = vpop.permute.xlu0 %81
    %vm83 = vcmask 523264
    %s84 = scalar_lea.vmem [#allocation0], 1
    %85 = vst.msk [vmem:[%s84] ss:$2 sm:$0xff] %vm83, %v82
    %s86 = scalar_lea.vmem [#allocation1], 16
    %v87 = vld.sshfl [vmem:[%s86] sm:$0xff pattern:$0xb3a29180]
    %88 = vrot.lane.b32.xlu0 %v87, 64
    %v89 = vpop.permute.xlu0 %88
    %vm90 = vcmask 523264
    %s91 = scalar_lea.vmem [#allocation0], 33
    %92 = vst.msk [vmem:[%s91] ss:$2 sm:$0xff] %vm90, %v89
    %s93 = scalar_lea.vmem [#allocation1], 4
    %v94 = vld.sshfl [vmem:[%s93] sm:$0xff pattern:$0xb3a29180]
    %95 = vrot.lane.b32.xlu0 %v94, 64
    %v96 = vpop.permute.xlu0 %95
    %vm97 = vcmask 523264
    %s98 = scalar_lea.vmem [#allocation0], 17
    %99 = vst.msk [vmem:[%s98] ss:$2 sm:$0xff] %vm97, %v96
    %s100 = scalar_lea.vmem [#allocation1], 20
    %v101 = vld.sshfl [vmem:[%s100] sm:$0xff pattern:$0xb3a29180]
    %102 = vrot.lane.b32.xlu0 %v101, 64
    %v103 = vpop.permute.xlu0 %102
    %vm104 = vcmask 523264
    %s105 = scalar_lea.vmem [#allocation0], 49
    %106 = vst.msk [vmem:[%s105] ss:$2 sm:$0xff] %vm104, %v103
    %s108 = ssub.s32 256, 1
    %v109 = vld [vmem:[#allocation0] sm:%s108]
    %v110 = vpack.c.bf16 0.0, %v109
    %s112 = ssub.s32 16, 1
    %113 = vst [vmem:[%s1] sm:%s112] %v110
    %s114 = scalar_lea.vmem [#allocation0], 8
    %v115 = vld [vmem:[%s114] sm:%s108]
    %v116 = vpack.c.bf16 0.0, %v115
    %s118 = ssub.s32 16, 1
    %s119 = scalar_lea.vmem %s1, 4
    %120 = vst [vmem:[%s119] sm:%s118] %v116
    %s121 = scalar_lea.vmem [#allocation0], 16
    %v122 = vld [vmem:[%s121] sm:%s108]
    %v123 = vpack.c.bf16 0.0, %v122
    %s125 = ssub.s32 16, 1
    %s126 = scalar_lea.vmem %s1, 8
    %127 = vst [vmem:[%s126] sm:%s125] %v123
    %s128 = scalar_lea.vmem [#allocation0], 24
    %v129 = vld [vmem:[%s128] sm:%s108]
    %v130 = vpack.c.bf16 0.0, %v129
    %s132 = ssub.s32 16, 1
    %s133 = scalar_lea.vmem %s1, 12
    %134 = vst [vmem:[%s133] sm:%s132] %v130
    %s135 = scalar_lea.vmem [#allocation0], 32
    %v136 = vld [vmem:[%s135] sm:%s108]
    %v137 = vpack.c.bf16 0.0, %v136
    %s139 = ssub.s32 16, 1
    %s140 = scalar_lea.vmem %s1, 16
    %141 = vst [vmem:[%s140] sm:%s139] %v137
    %s142 = scalar_lea.vmem [#allocation0], 40
    %v143 = vld [vmem:[%s142] sm:%s108]
    %v144 = vpack.c.bf16 0.0, %v143
    %s146 = ssub.s32 16, 1
    %s147 = scalar_lea.vmem %s1, 20
    %148 = vst [vmem:[%s147] sm:%s146] %v144
    %s149 = scalar_lea.vmem [#allocation0], 48
    %v150 = vld [vmem:[%s149] sm:%s108]
    %v151 = vpack.c.bf16 0.0, %v150
    %s153 = ssub.s32 16, 1
    %s154 = scalar_lea.vmem %s1, 24
    %155 = vst [vmem:[%s154] sm:%s153] %v151
    %s156 = scalar_lea.vmem [#allocation0], 56
    %v157 = vld [vmem:[%s156] sm:%s108]
    %v158 = vpack.c.bf16 0.0, %v157
    %s160 = ssub.s32 16, 1
    %s161 = scalar_lea.vmem %s1, 28
    %162 = vst [vmem:[%s161] sm:%s160] %v158

// kernel: squeeze.7
$region0: #{squeeze.7}
  %s0 = inlined_call_operand.vmem [shape: bf16[2,1,8,256], index: 0, kind: input, shape index: {}]
  %s1 = inlined_call_operand.vmem [shape: bf16[2,4,2,64,4], index: 1, kind: output, shape index: {}]
  $region1: #{squeeze.7} parent=0
    #allocation0 [shape = 'u8[524288]{0}', space=vmem, size = 0x80000, scoped, tag = 'scoped mem for output reshape']
    #allocation1 [shape = 'u8[16384]{0}', space=vmem, size = 0x4000, scoped, tag = 'scoped mem for input reshape']
    %s3 = ssub.s32 256, 1
    %s4 = scalar_lea.vmem %s0, 12
    %s5 = sshrl.u32 %s3, 1
    %s6 = sor.u32 %s3, %s5
    %s7 = sand.u32 %s6, 85
    %s8 = sshrl.u32 %s7, 1
    %s9 = sor.u32 %s7, %s8
    %s10 = sand.u32 51, %s9
    %s11 = sshrl.u32 %s10, 2
    %s12 = sor.u32 %s10, %s11
    %s13 = sand.u32 15, %s12
    %v14 = vld [vmem:[%s4] sm:%s13]
    %v15 = vunpack.c.l.bf16 %v14
    %v16 = vunpack.c.h.bf16 %v14
    %s17 = scalar_lea.vmem [#allocation1], 24
    %18 = vst [vmem:[%s17] sm:%s3] %v15
    %s19 = scalar_lea.vmem %s0, 8
    %s20 = sshrl.u32 %s3, 1
    %s21 = sor.u32 %s3, %s20
    %s22 = sand.u32 %s21, 85
    %s23 = sshrl.u32 %s22, 1
    %s24 = sor.u32 %s22, %s23
    %s25 = sand.u32 51, %s24
    %s26 = sshrl.u32 %s25, 2
    %s27 = sor.u32 %s25, %s26
    %s28 = sand.u32 15, %s27
    %v29 = vld [vmem:[%s19] sm:%s28]
    %v30 = vunpack.c.l.bf16 %v29
    %v31 = vunpack.c.h.bf16 %v29
    %s32 = scalar_lea.vmem [#allocation1], 16
    %33 = vst [vmem:[%s32] sm:%s3] %v30
    %s34 = scalar_lea.vmem %s0, 4
    %s35 = sshrl.u32 %s3, 1
    %s36 = sor.u32 %s3, %s35
    %s37 = sand.u32 %s36, 85
    %s38 = sshrl.u32 %s37, 1
    %s39 = sor.u32 %s37, %s38
    %s40 = sand.u32 51, %s39
    %s41 = sshrl.u32 %s40, 2
    %s42 = sor.u32 %s40, %s41
    %s43 = sand.u32 15, %s42
    %v44 = vld [vmem:[%s34] sm:%s43]
    %v45 = vunpack.c.l.bf16 %v44
    %v46 = vunpack.c.h.bf16 %v44
    %s47 = scalar_lea.vmem [#allocation1], 8
    %48 = vst [vmem:[%s47] sm:%s3] %v45
    %s49 = sshrl.u32 %s3, 1
    %s50 = sor.u32 %s3, %s49
    %s51 = sand.u32 %s50, 85
    %s52 = sshrl.u32 %s51, 1
    %s53 = sor.u32 %s51, %s52
    %s54 = sand.u32 51, %s53
    %s55 = sshrl.u32 %s54, 2
    %s56 = sor.u32 %s54, %s55
    %s57 = sand.u32 15, %s56
    %v58 = vld [vmem:[%s0] sm:%s57]
    %v59 = vunpack.c.l.bf16 %v58
    %v60 = vunpack.c.h.bf16 %v58
    %61 = vst [vmem:[#allocation1] sm:%s3] %v59
    %v62 = vld [vmem:[#allocation1] sm:$0xff]
    %vm63 = vcmask 31744
    %64 = vst.msk [vmem:[#allocation0] sm:$0x1] %vm63, %v62
    %s65 = scalar_lea.vmem [#allocation0], 63
    %66 = vst.msk [vmem:[%s65] sm:$0x2] %vm63, %v62
    %s67 = scalar_lea.vmem [#allocation0], 126
    %68 = vst.msk [vmem:[%s67] sm:$0x4] %vm63, %v62
    %s69 = scalar_lea.vmem [#allocation0], 189
    %70 = vst.msk [vmem:[%s69] sm:$0x8] %vm63, %v62
    %s71 = scalar_lea.vmem [#allocation0], 252
    %72 = vst.msk [vmem:[%s71] sm:$0x10] %vm63, %v62
    %s73 = scalar_lea.vmem [#allocation0], 315
    %74 = vst.msk [vmem:[%s73] sm:$0x20] %vm63, %v62
    %s75 = scalar_lea.vmem [#allocation0], 378
    %76 = vst.msk [vmem:[%s75] sm:$0x40] %vm63, %v62
    %s77 = scalar_lea.vmem [#allocation0], 441
    %78 = vst.msk [vmem:[%s77] sm:$0x80] %vm63, %v62
    %s79 = scalar_lea.vmem [#allocation1], 8
    %v80 = vld [vmem:[%s79] sm:$0xff]
    %vm81 = vcmask 31744
    %s82 = scalar_lea.vmem [#allocation0], 32
    %83 = vst.msk [vmem:[%s82] sm:$0x1] %vm81, %v80
    %s84 = scalar_lea.vmem [#allocation0], 95
    %85 = vst.msk [vmem:[%s84] sm:$0x2] %vm81, %v80
    %s86 = scalar_lea.vmem [#allocation0], 158
    %87 = vst.msk [vmem:[%s86] sm:$0x4] %vm81, %v80
    %s88 = scalar_lea.vmem [#allocation0], 221
    %89 = vst.msk [vmem:[%s88] sm:$0x8] %vm81, %v80
    %s90 = scalar_lea.vmem [#allocation0], 284
    %91 = vst.msk [vmem:[%s90] sm:$0x10] %vm81, %v80
    %s92 = scalar_lea.vmem [#allocation0], 347
    %93 = vst.msk [vmem:[%s92] sm:$0x20] %vm81, %v80
    %s94 = scalar_lea.vmem [#allocation0], 410
    %95 = vst.msk [vmem:[%s94] sm:$0x40] %vm81, %v80
    %s96 = scalar_lea.vmem [#allocation0], 473
    %97 = vst.msk [vmem:[%s96] sm:$0x80] %vm81, %v80
    %s98 = scalar_lea.vmem [#allocation1], 16
    %v99 = vld [vmem:[%s98] sm:$0xff]
    %vm100 = vcmask 31744
    %s101 = scalar_lea.vmem [#allocation0], 512
    %102 = vst.msk [vmem:[%s101] sm:$0x1] %vm100, %v99
    %s103 = scalar_lea.vmem [#allocation0], 575
    %104 = vst.msk [vmem:[%s103] sm:$0x2] %vm100, %v99
    %s105 = scalar_lea.vmem [#allocation0], 638
    %106 = vst.msk [vmem:[%s105] sm:$0x4] %vm100, %v99
    %s107 = scalar_lea.vmem [#allocation0], 701
    %108 = vst.msk [vmem:[%s107] sm:$0x8] %vm100, %v99
    %s109 = scalar_lea.vmem [#allocation0], 764
    %110 = vst.msk [vmem:[%s109] sm:$0x10] %vm100, %v99
    %s111 = scalar_lea.vmem [#allocation0], 827
    %112 = vst.msk [vmem:[%s111] sm:$0x20] %vm100, %v99
    %s113 = scalar_lea.vmem [#allocation0], 890
    %114 = vst.msk [vmem:[%s113] sm:$0x40] %vm100, %v99
    %s115 = scalar_lea.vmem [#allocation0], 953
    %116 = vst.msk [vmem:[%s115] sm:$0x80] %vm100, %v99
    %s117 = scalar_lea.vmem [#allocation1], 24
    %v118 = vld [vmem:[%s117] sm:$0xff]
    %vm119 = vcmask 31744
    %s120 = scalar_lea.vmem [#allocation0], 544
    %121 = vst.msk [vmem:[%s120] sm:$0x1] %vm119, %v118
    %s122 = scalar_lea.vmem [#allocation0], 607
    %123 = vst.msk [vmem:[%s122] sm:$0x2] %vm119, %v118
    %s124 = scalar_lea.vmem [#allocation0], 670
    %125 = vst.msk [vmem:[%s124] sm:$0x4] %vm119, %v118
    %s126 = scalar_lea.vmem [#allocation0], 733
    %127 = vst.msk [vmem:[%s126] sm:$0x8] %vm119, %v118
    %s128 = scalar_lea.vmem [#allocation0], 796
    %129 = vst.msk [vmem:[%s128] sm:$0x10] %vm119, %v118
    %s130 = scalar_lea.vmem [#allocation0], 859
    %131 = vst.msk [vmem:[%s130] sm:$0x20] %vm119, %v118
    %s132 = scalar_lea.vmem [#allocation0], 922
    %133 = vst.msk [vmem:[%s132] sm:$0x40] %vm119, %v118
    %s134 = scalar_lea.vmem [#allocation0], 985
    %135 = vst.msk [vmem:[%s134] sm:$0x80] %vm119, %v118
    %v136 = vld [vmem:[#allocation1] sm:$0xff]
    %137 = vrot.lane.b32.xlu0 %v136, 124
    %v138 = vpop.permute.xlu0 %137
    %vm139 = vcmask 31744
    %s140 = scalar_lea.vmem [#allocation0], 1
    %141 = vst.msk [vmem:[%s140] sm:$0x1] %vm139, %v138
    %s142 = scalar_lea.vmem [#allocation0], 64
    %143 = vst.msk [vmem:[%s142] sm:$0x2] %vm139, %v138
    %s144 = scalar_lea.vmem [#allocation0], 127
    %145 = vst.msk [vmem:[%s144] sm:$0x4] %vm139, %v138
    %s146 = scalar_lea.vmem [#allocation0], 190
    %147 = vst.msk [vmem:[%s146] sm:$0x8] %vm139, %v138
    %s148 = scalar_lea.vmem [#allocation0], 253
    %149 = vst.msk [vmem:[%s148] sm:$0x10] %vm139, %v138
    %s150 = scalar_lea.vmem [#allocation0], 316
    %151 = vst.msk [vmem:[%s150] sm:$0x20] %vm139, %v138
    %s152 = scalar_lea.vmem [#allocation0], 379
    %153 = vst.msk [vmem:[%s152] sm:$0x40] %vm139, %v138
    %s154 = scalar_lea.vmem [#allocation0], 442
    %155 = vst.msk [vmem:[%s154] sm:$0x80] %vm139, %v138
    %s156 = scalar_lea.vmem [#allocation1], 8
    %v157 = vld [vmem:[%s156] sm:$0xff]
    %158 = vrot.lane.b32.xlu0 %v157, 124
    %v159 = vpop.permute.xlu0 %158
    %vm160 = vcmask 31744
    %s161 = scalar_lea.vmem [#allocation0], 33
    %162 = vst.msk [vmem:[%s161] sm:$0x1] %vm160, %v159
    %s163 = scalar_lea.vmem [#allocation0], 96
    %164 = vst.msk [vmem:[%s163] sm:$0x2] %vm160, %v159
    %s165 = scalar_lea.vmem [#allocation0], 159
    %166 = vst.msk [vmem:[%s165] sm:$0x4] %vm160, %v159
    %s167 = scalar_lea.vmem [#allocation0], 222
    %168 = vst.msk [vmem:[%s167] sm:$0x8] %vm160, %v159
    %s169 = scalar_lea.vmem [#allocation0], 285
    %170 = vst.msk [vmem:[%s169] sm:$0x10] %vm160, %v159
    %s171 = scalar_lea.vmem [#allocation0], 348
    %172 = vst.msk [vmem:[%s171] sm:$0x20] %vm160, %v159
    %s173 = scalar_lea.vmem [#allocation0], 411
    %174 = vst.msk [vmem:[%s173] sm:$0x40] %vm160, %v159
    %s175 = scalar_lea.vmem [#allocation0], 474
    %176 = vst.msk [vmem:[%s175] sm:$0x80] %vm160, %v159
    %s177 = scalar_lea.vmem [#allocation1], 16
    %v178 = vld [vmem:[%s177] sm:$0xff]
    %179 = vrot.lane.b32.xlu0 %v178, 124
    %v180 = vpop.permute.xlu0 %179
    %vm181 = vcmask 31744
    %s182 = scalar_lea.vmem [#allocation0], 513
    %183 = vst.msk [vmem:[%s182] sm:$0x1] %vm181, %v180
    %s184 = scalar_lea.vmem [#allocation0], 576
    %185 = vst.msk [vmem:[%s184] sm:$0x2] %vm181, %v180
    %s186 = scalar_lea.vmem [#allocation0], 639
    %187 = vst.msk [vmem:[%s186] sm:$0x4] %vm181, %v180
    %s188 = scalar_lea.vmem [#allocation0], 702
    %189 = vst.msk [vmem:[%s188] sm:$0x8] %vm181, %v180
    %s190 = scalar_lea.vmem [#allocation0], 765
    %191 = vst.msk [vmem:[%s190] sm:$0x10] %vm181, %v180
    %s192 = scalar_lea.vmem [#allocation0], 828
    %193 = vst.msk [vmem:[%s192] sm:$0x20] %vm181, %v180
    %s194 = scalar_lea.vmem [#allocation0], 891
    %195 = vst.msk [vmem:[%s194] sm:$0x40] %vm181, %v180
    %s196 = scalar_lea.vmem [#allocation0], 954
    %197 = vst.msk [vmem:[%s196] sm:$0x80] %vm181, %v180
    %s198 = scalar_lea.vmem [#allocation1], 24
    %v199 = vld [vmem:[%s198] sm:$0xff]
    %200 = vrot.lane.b32.xlu0 %v199, 124
    %v201 = vpop.permute.xlu0 %200
    %vm202 = vcmask 31744
    %s203 = scalar_lea.vmem [#allocation0], 545
    %204 = vst.msk [vmem:[%s203] sm:$0x1] %vm202, %v201
    %s205 = scalar_lea.vmem [#allocation0], 608
    %206 = vst.msk [vmem:[%s205] sm:$0x2] %vm202, %v201
    %s207 = scalar_lea.vmem [#allocation0], 671
    %208 = vst.msk [vmem:[%s207] sm:$0x4] %vm202, %v201
    %s209 = scalar_lea.vmem [#allocation0], 734
    %210 = vst.msk [vmem:[%s209] sm:$0x8] %vm202, %v201
    %s211 = scalar_lea.vmem [#allocation0], 797
    %212 = vst.msk [vmem:[%s211] sm:$0x10] %vm202, %v201
    %s213 = scalar_lea.vmem [#allocation0], 860
    %214 = vst.msk [vmem:[%s213] sm:$0x20] %vm202, %v201
    %s215 = scalar_lea.vmem [#allocation0], 923
    %216 = vst.msk [vmem:[%s215] sm:$0x40] %vm202, %v201
    %s217 = scalar_lea.vmem [#allocation0], 986
    %218 = vst.msk [vmem:[%s217] sm:$0x80] %vm202, %v201
    %v219 = vld [vmem:[#allocation1] sm:$0xff]
    %220 = vrot.lane.b32.xlu0 %v219, 120
    %v221 = vpop.permute.xlu0 %220
    %vm222 = vcmask 31744
    %s223 = scalar_lea.vmem [#allocation0], 2
    %224 = vst.msk [vmem:[%s223] sm:$0x1] %vm222, %v221
    %s225 = scalar_lea.vmem [#allocation0], 65
    %226 = vst.msk [vmem:[%s225] sm:$0x2] %vm222, %v221
    %s227 = scalar_lea.vmem [#allocation0], 128
    %228 = vst.msk [vmem:[%s227] sm:$0x4] %vm222, %v221
    %s229 = scalar_lea.vmem [#allocation0], 191
    %230 = vst.msk [vmem:[%s229] sm:$0x8] %vm222, %v221
    %s231 = scalar_lea.vmem [#allocation0], 254
    %232 = vst.msk [vmem:[%s231] sm:$0x10] %vm222, %v221
    %s233 = scalar_lea.vmem [#allocation0], 317
    %234 = vst.msk [vmem:[%s233] sm:$0x20] %vm222, %v221
    %s235 = scalar_lea.vmem [#allocation0], 380
    %236 = vst.msk [vmem:[%s235] sm:$0x40] %vm222, %v221
    %s237 = scalar_lea.vmem [#allocation0], 443
    %238 = vst.msk [vmem:[%s237] sm:$0x80] %vm222, %v221
    %s239 = scalar_lea.vmem [#allocation1], 8
    %v240 = vld [vmem:[%s239] sm:$0xff]
    %241 = vrot.lane.b32.xlu0 %v240, 120
    %v242 = vpop.permute.xlu0 %241
    %vm243 = vcmask 31744
    %s244 = scalar_lea.vmem [#allocation0], 34
    %245 = vst.msk [vmem:[%s244] sm:$0x1] %vm243, %v242
    %s246 = scalar_lea.vmem [#allocation0], 97
    %247 = vst.msk [vmem:[%s246] sm:$0x2] %vm243, %v242
    %s248 = scalar_lea.vmem [#allocation0], 160
    %249 = vst.msk [vmem:[%s248] sm:$0x4] %vm243, %v242
    %s250 = scalar_lea.vmem [#allocation0], 223
    %251 = vst.msk [vmem:[%s250] sm:$0x8] %vm243, %v242
    %s252 = scalar_lea.vmem [#allocation0], 286
    %253 = vst.msk [vmem:[%s252] sm:$0x10] %vm243, %v242
    %s254 = scalar_lea.vmem [#allocation0], 349
    %255 = vst.msk [vmem:[%s254] sm:$0x20] %vm243, %v242
    %s256 = scalar_lea.vmem [#allocation0], 412
    %257 = vst.msk [vmem:[%s256] sm:$0x40] %vm243, %v242
    %s258 = scalar_lea.vmem [#allocation0], 475
    %259 = vst.msk [vmem:[%s258] sm:$0x80] %vm243, %v242
    %s260 = scalar_lea.vmem [#allocation1], 16
    %v261 = vld [vmem:[%s260] sm:$0xff]
    %262 = vrot.lane.b32.xlu0 %v261, 120
    %v263 = vpop.permute.xlu0 %262
    %vm264 = vcmask 31744
    %s265 = scalar_lea.vmem [#allocation0], 514
    %266 = vst.msk [vmem:[%s265] sm:$0x1] %vm264, %v263
    %s267 = scalar_lea.vmem [#allocation0], 577
    %268 = vst.msk [vmem:[%s267] sm:$0x2] %vm264, %v263
    %s269 = scalar_lea.vmem [#allocation0], 640
    %270 = vst.msk [vmem:[%s269] sm:$0x4] %vm264, %v263
    %s271 = scalar_lea.vmem [#allocation0], 703
    %272 = vst.msk [vmem:[%s271] sm:$0x8] %vm264, %v263
    %s273 = scalar_lea.vmem [#allocation0], 766
    %274 = vst.msk [vmem:[%s273] sm:$0x10] %vm264, %v263
    %s275 = scalar_lea.vmem [#allocation0], 829
    %276 = vst.msk [vmem:[%s275] sm:$0x20] %vm264, %v263
    %s277 = scalar_lea.vmem [#allocation0], 892
    %278 = vst.msk [vmem:[%s277] sm:$0x40] %vm264, %v263
    %s279 = scalar_lea.vmem [#allocation0], 955
    %280 = vst.msk [vmem:[%s279] sm:$0x80] %vm264, %v263
    %s281 = scalar_lea.vmem [#allocation1], 24
    %v282 = vld [vmem:[%s281] sm:$0xff]
    %283 = vrot.lane.b32.xlu0 %v282, 120
    %v284 = vpop.permute.xlu0 %283
    %vm285 = vcmask 31744
    %s286 = scalar_lea.vmem [#allocation0], 546
    %287 = vst.msk [vmem:[%s286] sm:$0x1] %vm285, %v284
    %s288 = scalar_lea.vmem [#allocation0], 609
    %289 = vst.msk [vmem:[%s288] sm:$0x2] %vm285, %v284
    %s290 = scalar_lea.vmem [#allocation0], 672
    %291 = vst.msk [vmem:[%s290] sm:$0x4] %vm285, %v284
    %s292 = scalar_lea.vmem [#allocation0], 735
    %293 = vst.msk [vmem:[%s292] sm:$0x8] %vm285, %v284
    %s294 = scalar_lea.vmem [#allocation0], 798
    %295 = vst.msk [vmem:[%s294] sm:$0x10] %vm285, %v284
    %s296 = scalar_lea.vmem [#allocation0], 861
    %297 = vst.msk [vmem:[%s296] sm:$0x20] %vm285, %v284
    %s298 = scalar_lea.vmem [#allocation0], 924
    %299 = vst.msk [vmem:[%s298] sm:$0x40] %vm285, %v284
    %s300 = scalar_lea.vmem [#allocation0], 987
    %301 = vst.msk [vmem:[%s300] sm:$0x80] %vm285, %v284
    %v302 = vld [vmem:[#allocation1] sm:$0xff]
    %303 = vrot.lane.b32.xlu0 %v302, 116
    %v304 = vpop.permute.xlu0 %303
    %vm305 = vcmask 31744
    %s306 = scalar_lea.vmem [#allocation0], 3
    %307 = vst.msk [vmem:[%s306] sm:$0x1] %vm305, %v304
    %s308 = scalar_lea.vmem [#allocation0], 66
    %309 = vst.msk [vmem:[%s308] sm:$0x2] %vm305, %v304
    %s310 = scalar_lea.vmem [#allocation0], 129
    %311 = vst.msk [vmem:[%s310] sm:$0x4] %vm305, %v304
    %s312 = scalar_lea.vmem [#allocation0], 192
    %313 = vst.msk [vmem:[%s312] sm:$0x8] %vm305, %v304
    %s314 = scalar_lea.vmem [#allocation0], 255
    %315 = vst.msk [vmem:[%s314] sm:$0x10] %vm305, %v304
    %s316 = scalar_lea.vmem [#allocation0], 318
    %317 = vst.msk [vmem:[%s316] sm:$0x20] %vm305, %v304
    %s318 = scalar_lea.vmem [#allocation0], 381
    %319 = vst.msk [vmem:[%s318] sm:$0x40] %vm305, %v304
    %s320 = scalar_lea.vmem [#allocation0], 444
    %321 = vst.msk [vmem:[%s320] sm:$0x80] %vm305, %v304
    %s322 = scalar_lea.vmem [#allocation1], 8
    %v323 = vld [vmem:[%s322] sm:$0xff]
    %324 = vrot.lane.b32.xlu0 %v323, 116
    %v325 = vpop.permute.xlu0 %324
    %vm326 = vcmask 31744
    %s327 = scalar_lea.vmem [#allocation0], 35
    %328 = vst.msk [vmem:[%s327] sm:$0x1] %vm326, %v325
    %s329 = scalar_lea.vmem [#allocation0], 98
    %330 = vst.msk [vmem:[%s329] sm:$0x2] %vm326, %v325
    %s331 = scalar_lea.vmem [#allocation0], 161
    %332 = vst.msk [vmem:[%s331] sm:$0x4] %vm326, %v325
    %s333 = scalar_lea.vmem [#allocation0], 224
    %334 = vst.msk [vmem:[%s333] sm:$0x8] %vm326, %v325
    %s335 = scalar_lea.vmem [#allocation0], 287
    %336 = vst.msk [vmem:[%s335] sm:$0x10] %vm326, %v325
    %s337 = scalar_lea.vmem [#allocation0], 350
    %338 = vst.msk [vmem:[%s337] sm:$0x20] %vm326, %v325
    %s339 = scalar_lea.vmem [#allocation0], 413
    %340 = vst.msk [vmem:[%s339] sm:$0x40] %vm326, %v325
    %s341 = scalar_lea.vmem [#allocation0], 476
    %342 = vst.msk [vmem:[%s341] sm:$0x80] %vm326, %v325
    %s343 = scalar_lea.vmem [#allocation1], 16
    %v344 = vld [vmem:[%s343] sm:$0xff]
    %345 = vrot.lane.b32.xlu0 %v344, 116
    %v346 = vpop.permute.xlu0 %345
    %vm347 = vcmask 31744
    %s348 = scalar_lea.vmem [#allocation0], 515
    %349 = vst.msk [vmem:[%s348] sm:$0x1] %vm347, %v346
    %s350 = scalar_lea.vmem [#allocation0], 578
    %351 = vst.msk [vmem:[%s350] sm:$0x2] %vm347, %v346
    %s352 = scalar_lea.vmem [#allocation0], 641
    %353 = vst.msk [vmem:[%s352] sm:$0x4] %vm347, %v346
    %s354 = scalar_lea.vmem [#allocation0], 704
    %355 = vst.msk [vmem:[%s354] sm:$0x8] %vm347, %v346
    %s356 = scalar_lea.vmem [#allocation0], 767
    %357 = vst.msk [vmem:[%s356] sm:$0x10] %vm347, %v346
    %s358 = scalar_lea.vmem [#allocation0], 830
    %359 = vst.msk [vmem:[%s358] sm:$0x20] %vm347, %v346
    %s360 = scalar_lea.vmem [#allocation0], 893
    %361 = vst.msk [vmem:[%s360] sm:$0x40] %vm347, %v346
    %s362 = scalar_lea.vmem [#allocation0], 956
    %363 = vst.msk [vmem:[%s362] sm:$0x80] %vm347, %v346
    %s364 = scalar_lea.vmem [#allocation1], 24
    %v365 = vld [vmem:[%s364] sm:$0xff]
    %366 = vrot.lane.b32.xlu0 %v365, 116
    %v367 = vpop.permute.xlu0 %366
    %vm368 = vcmask 31744
    %s369 = scalar_lea.vmem [#allocation0], 547
    %370 = vst.msk [vmem:[%s369] sm:$0x1] %vm368, %v367
    %s371 = scalar_lea.vmem [#allocation0], 610
    %372 = vst.msk [vmem:[%s371] sm:$0x2] %vm368, %v367
    %s373 = scalar_lea.vmem [#allocation0], 673
    %374 = vst.msk [vmem:[%s373] sm:$0x4] %vm368, %v367
    %s375 = scalar_lea.vmem [#allocation0], 736
    %376 = vst.msk [vmem:[%s375] sm:$0x8] %vm368, %v367
    %s377 = scalar_lea.vmem [#allocation0], 799
    %378 = vst.msk [vmem:[%s377] sm:$0x10] %vm368, %v367
    %s379 = scalar_lea.vmem [#allocation0], 862
    %380 = vst.msk [vmem:[%s379] sm:$0x20] %vm368, %v367
    %s381 = scalar_lea.vmem [#allocation0], 925
    %382 = vst.msk [vmem:[%s381] sm:$0x40] %vm368, %v367
    %s383 = scalar_lea.vmem [#allocation0], 988
    %384 = vst.msk [vmem:[%s383] sm:$0x80] %vm368, %v367
    %v385 = vld [vmem:[#allocation1] sm:$0xff]
    %386 = vrot.lane.b32.xlu0 %v385, 112
    %v387 = vpop.permute.xlu0 %386
    %vm388 = vcmask 31744
    %s389 = scalar_lea.vmem [#allocation0], 4
    %390 = vst.msk [vmem:[%s389] sm:$0x1] %vm388, %v387
    %s391 = scalar_lea.vmem [#allocation0], 67
    %392 = vst.msk [vmem:[%s391] sm:$0x2] %vm388, %v387
    %s393 = scalar_lea.vmem [#allocation0], 130
    %394 = vst.msk [vmem:[%s393] sm:$0x4] %vm388, %v387
    %s395 = scalar_lea.vmem [#allocation0], 193
    %396 = vst.msk [vmem:[%s395] sm:$0x8] %vm388, %v387
    %s397 = scalar_lea.vmem [#allocation0], 256
    %398 = vst.msk [vmem:[%s397] sm:$0x10] %vm388, %v387
    %s399 = scalar_lea.vmem [#allocation0], 319
    %400 = vst.msk [vmem:[%s399] sm:$0x20] %vm388, %v387
    %s401 = scalar_lea.vmem [#allocation0], 382
    %402 = vst.msk [vmem:[%s401] sm:$0x40] %vm388, %v387
    %s403 = scalar_lea.vmem [#allocation0], 445
    %404 = vst.msk [vmem:[%s403] sm:$0x80] %vm388, %v387
    %s405 = scalar_lea.vmem [#allocation1], 8
    %v406 = vld [vmem:[%s405] sm:$0xff]
    %407 = vrot.lane.b32.xlu0 %v406, 112
    %v408 = vpop.permute.xlu0 %407
    %vm409 = vcmask 31744
    %s410 = scalar_lea.vmem [#allocation0], 36
    %411 = vst.msk [vmem:[%s410] sm:$0x1] %vm409, %v408
    %s412 = scalar_lea.vmem [#allocation0], 99
    %413 = vst.msk [vmem:[%s412] sm:$0x2] %vm409, %v408
    %s414 = scalar_lea.vmem [#allocation0], 162
    %415 = vst.msk [vmem:[%s414] sm:$0x4] %vm409, %v408
    %s416 = scalar_lea.vmem [#allocation0], 225
    %417 = vst.msk [vmem:[%s416] sm:$0x8] %vm409, %v408
    %s418 = scalar_lea.vmem [#allocation0], 288
    %419 = vst.msk [vmem:[%s418] sm:$0x10] %vm409, %v408
    %s420 = scalar_lea.vmem [#allocation0], 351
    %421 = vst.msk [vmem:[%s420] sm:$0x20] %vm409, %v408
    %s422 = scalar_lea.vmem [#allocation0], 414
    %423 = vst.msk [vmem:[%s422] sm:$0x40] %vm409, %v408
    %s424 = scalar_lea.vmem [#allocation0], 477
    %425 = vst.msk [vmem:[%s424] sm:$0x80] %vm409, %v408
    %s426 = scalar_lea.vmem [#allocation1], 16
    %v427 = vld [vmem:[%s426] sm:$0xff]
    %428 = vrot.lane.b32.xlu0 %v427, 112
    %v429 = vpop.permute.xlu0 %428
    %vm430 = vcmask 31744
    %s431 = scalar_lea.vmem [#allocation0], 516
    %432 = vst.msk [vmem:[%s431] sm:$0x1] %vm430, %v429
    %s433 = scalar_lea.vmem [#allocation0], 579
    %434 = vst.msk [vmem:[%s433] sm:$0x2] %vm430, %v429
    %s435 = scalar_lea.vmem [#allocation0], 642
    %436 = vst.msk [vmem:[%s435] sm:$0x4] %vm430, %v429
    %s437 = scalar_lea.vmem [#allocation0], 705
    %438 = vst.msk [vmem:[%s437] sm:$0x8] %vm430, %v429
    %s439 = scalar_lea.vmem [#allocation0], 768
    %440 = vst.msk [vmem:[%s439] sm:$0x10] %vm430, %v429
    %s441 = scalar_lea.vmem [#allocation0], 831
    %442 = vst.msk [vmem:[%s441] sm:$0x20] %vm430, %v429
    %s443 = scalar_lea.vmem [#allocation0], 894
    %444 = vst.msk [vmem:[%s443] sm:$0x40] %vm430, %v429
    %s445 = scalar_lea.vmem [#allocation0], 957
    %446 = vst.msk [vmem:[%s445] sm:$0x80] %vm430, %v429
    %s447 = scalar_lea.vmem [#allocation1], 24
    %v448 = vld [vmem:[%s447] sm:$0xff]
    %449 = vrot.lane.b32.xlu0 %v448, 112
    %v450 = vpop.permute.xlu0 %449
    %vm451 = vcmask 31744
    %s452 = scalar_lea.vmem [#allocation0], 548
    %453 = vst.msk [vmem:[%s452] sm:$0x1] %vm451, %v450
    %s454 = scalar_lea.vmem [#allocation0], 611
    %455 = vst.msk [vmem:[%s454] sm:$0x2] %vm451, %v450
    %s456 = scalar_lea.vmem [#allocation0], 674
    %457 = vst.msk [vmem:[%s456] sm:$0x4] %vm451, %v450
    %s458 = scalar_lea.vmem [#allocation0], 737
    %459 = vst.msk [vmem:[%s458] sm:$0x8] %vm451, %v450
    %s460 = scalar_lea.vmem [#allocation0], 800
    %461 = vst.msk [vmem:[%s460] sm:$0x10] %vm451, %v450
    %s462 = scalar_lea.vmem [#allocation0], 863
    %463 = vst.msk [vmem:[%s462] sm:$0x20] %vm451, %v450
    %s464 = scalar_lea.vmem [#allocation0], 926
    %465 = vst.msk [vmem:[%s464] sm:$0x40] %vm451, %v450
    %s466 = scalar_lea.vmem [#allocation0], 989
    %467 = vst.msk [vmem:[%s466] sm:$0x80] %vm451, %v450
    %v468 = vld [vmem:[#allocation1] sm:$0xff]
    %469 = vrot.lane.b32.xlu0 %v468, 108
    %v470 = vpop.permute.xlu0 %469
    %vm471 = vcmask 31744
    %s472 = scalar_lea.vmem [#allocation0], 5
    %473 = vst.msk [vmem:[%s472] sm:$0x1] %vm471, %v470
    %s474 = scalar_lea.vmem [#allocation0], 68
    %475 = vst.msk [vmem:[%s474] sm:$0x2] %vm471, %v470
    %s476 = scalar_lea.vmem [#allocation0], 131
    %477 = vst.msk [vmem:[%s476] sm:$0x4] %vm471, %v470
    %s478 = scalar_lea.vmem [#allocation0], 194
    %479 = vst.msk [vmem:[%s478] sm:$0x8] %vm471, %v470
    %s480 = scalar_lea.vmem [#allocation0], 257
    %481 = vst.msk [vmem:[%s480] sm:$0x10] %vm471, %v470
    %s482 = scalar_lea.vmem [#allocation0], 320
    %483 = vst.msk [vmem:[%s482] sm:$0x20] %vm471, %v470
    %s484 = scalar_lea.vmem [#allocation0], 383
    %485 = vst.msk [vmem:[%s484] sm:$0x40] %vm471, %v470
    %s486 = scalar_lea.vmem [#allocation0], 446
    %487 = vst.msk [vmem:[%s486] sm:$0x80] %vm471, %v470
    %s488 = scalar_lea.vmem [#allocation1], 8
    %v489 = vld [vmem:[%s488] sm:$0xff]
    %490 = vrot.lane.b32.xlu0 %v489, 108
    %v491 = vpop.permute.xlu0 %490
    %vm492 = vcmask 31744
    %s493 = scalar_lea.vmem [#allocation0], 37
    %494 = vst.msk [vmem:[%s493] sm:$0x1] %vm492, %v491
    %s495 = scalar_lea.vmem [#allocation0], 100
    %496 = vst.msk [vmem:[%s495] sm:$0x2] %vm492, %v491
    %s497 = scalar_lea.vmem [#allocation0], 163
    %498 = vst.msk [vmem:[%s497] sm:$0x4] %vm492, %v491
    %s499 = scalar_lea.vmem [#allocation0], 226
    %500 = vst.msk [vmem:[%s499] sm:$0x8] %vm492, %v491
    %s501 = scalar_lea.vmem [#allocation0], 289
    %502 = vst.msk [vmem:[%s501] sm:$0x10] %vm492, %v491
    %s503 = scalar_lea.vmem [#allocation0], 352
    %504 = vst.msk [vmem:[%s503] sm:$0x20] %vm492, %v491
    %s505 = scalar_lea.vmem [#allocation0], 415
    %506 = vst.msk [vmem:[%s505] sm:$0x40] %vm492, %v491
    %s507 = scalar_lea.vmem [#allocation0], 478
    %508 = vst.msk [vmem:[%s507] sm:$0x80] %vm492, %v491
    %s509 = scalar_lea.vmem [#allocation1], 16
    %v510 = vld [vmem:[%s509] sm:$0xff]
    %511 = vrot.lane.b32.xlu0 %v510, 108
    %v512 = vpop.permute.xlu0 %511
    %vm513 = vcmask 31744
    %s514 = scalar_lea.vmem [#allocation0], 517
    %515 = vst.msk [vmem:[%s514] sm:$0x1] %vm513, %v512
    %s516 = scalar_lea.vmem [#allocation0], 580
    %517 = vst.msk [vmem:[%s516] sm:$0x2] %vm513, %v512
    %s518 = scalar_lea.vmem [#allocation0], 643
    %519 = vst.msk [vmem:[%s518] sm:$0x4] %vm513, %v512
    %s520 = scalar_lea.vmem [#allocation0], 706
    %521 = vst.msk [vmem:[%s520] sm:$0x8] %vm513, %v512
    %s522 = scalar_lea.vmem [#allocation0], 769
    %523 = vst.msk [vmem:[%s522] sm:$0x10] %vm513, %v512
    %s524 = scalar_lea.vmem [#allocation0], 832
    %525 = vst.msk [vmem:[%s524] sm:$0x20] %vm513, %v512
    %s526 = scalar_lea.vmem [#allocation0], 895
    %527 = vst.msk [vmem:[%s526] sm:$0x40] %vm513, %v512
    %s528 = scalar_lea.vmem [#allocation0], 958
    %529 = vst.msk [vmem:[%s528] sm:$0x80] %vm513, %v512
    %s530 = scalar_lea.vmem [#allocation1], 24
    %v531 = vld [vmem:[%s530] sm:$0xff]
    %532 = vrot.lane.b32.xlu0 %v531, 108
    %v533 = vpop.permute.xlu0 %532
    %vm534 = vcmask 31744
    %s535 = scalar_lea.vmem [#allocation0], 549
    %536 = vst.msk [vmem:[%s535] sm:$0x1] %vm534, %v533
    %s537 = scalar_lea.vmem [#allocation0], 612
    %538 = vst.msk [vmem:[%s537] sm:$0x2] %vm534, %v533
    %s539 = scalar_lea.vmem [#allocation0], 675
    %540 = vst.msk [vmem:[%s539] sm:$0x4] %vm534, %v533
    %s541 = scalar_lea.vmem [#allocation0], 738
    %542 = vst.msk [vmem:[%s541] sm:$0x8] %vm534, %v533
    %s543 = scalar_lea.vmem [#allocation0], 801
    %544 = vst.msk [vmem:[%s543] sm:$0x10] %vm534, %v533
    %s545 = scalar_lea.vmem [#allocation0], 864
    %546 = vst.msk [vmem:[%s545] sm:$0x20] %vm534, %v533
    %s547 = scalar_lea.vmem [#allocation0], 927
    %548 = vst.msk [vmem:[%s547] sm:$0x40] %vm534, %v533
    %s549 = scalar_lea.vmem [#allocation0], 990
    %550 = vst.msk [vmem:[%s549] sm:$0x80] %vm534, %v533
    %v551 = vld [vmem:[#allocation1] sm:$0xff]
    %552 = vrot.lane.b32.xlu0 %v551, 104
    %v553 = vpop.permute.xlu0 %552
    %vm554 = vcmask 31744
    %s555 = scalar_lea.vmem [#allocation0], 6
    %556 = vst.msk [vmem:[%s555] sm:$0x1] %vm554, %v553
    %s557 = scalar_lea.vmem [#allocation0], 69
    %558 = vst.msk [vmem:[%s557] sm:$0x2] %vm554, %v553
    %s559 = scalar_lea.vmem [#allocation0], 132
    %560 = vst.msk [vmem:[%s559] sm:$0x4] %vm554, %v553
    %s561 = scalar_lea.vmem [#allocation0], 195
    %562 = vst.msk [vmem:[%s561] sm:$0x8] %vm554, %v553
    %s563 = scalar_lea.vmem [#allocation0], 258
    %564 = vst.msk [vmem:[%s563] sm:$0x10] %vm554, %v553
    %s565 = scalar_lea.vmem [#allocation0], 321
    %566 = vst.msk [vmem:[%s565] sm:$0x20] %vm554, %v553
    %s567 = scalar_lea.vmem [#allocation0], 384
    %568 = vst.msk [vmem:[%s567] sm:$0x40] %vm554, %v553
    %s569 = scalar_lea.vmem [#allocation0], 447
    %570 = vst.msk [vmem:[%s569] sm:$0x80] %vm554, %v553
    %s571 = scalar_lea.vmem [#allocation1], 8
    %v572 = vld [vmem:[%s571] sm:$0xff]
    %573 = vrot.lane.b32.xlu0 %v572, 104
    %v574 = vpop.permute.xlu0 %573
    %vm575 = vcmask 31744
    %s576 = scalar_lea.vmem [#allocation0], 38
    %577 = vst.msk [vmem:[%s576] sm:$0x1] %vm575, %v574
    %s578 = scalar_lea.vmem [#allocation0], 101
    %579 = vst.msk [vmem:[%s578] sm:$0x2] %vm575, %v574
    %s580 = scalar_lea.vmem [#allocation0], 164
    %581 = vst.msk [vmem:[%s580] sm:$0x4] %vm575, %v574
    %s582 = scalar_lea.vmem [#allocation0], 227
    %583 = vst.msk [vmem:[%s582] sm:$0x8] %vm575, %v574
    %s584 = scalar_lea.vmem [#allocation0], 290
    %585 = vst.msk [vmem:[%s584] sm:$0x10] %vm575, %v574
    %s586 = scalar_lea.vmem [#allocation0], 353
    %587 = vst.msk [vmem:[%s586] sm:$0x20] %vm575, %v574
    %s588 = scalar_lea.vmem [#allocation0], 416
    %589 = vst.msk [vmem:[%s588] sm:$0x40] %vm575, %v574
    %s590 = scalar_lea.vmem [#allocation0], 479
    %591 = vst.msk [vmem:[%s590] sm:$0x80] %vm575, %v574
    %s592 = scalar_lea.vmem [#allocation1], 16
    %v593 = vld [vmem:[%s592] sm:$0xff]
    %594 = vrot.lane.b32.xlu0 %v593, 104
    %v595 = vpop.permute.xlu0 %594
    %vm596 = vcmask 31744
    %s597 = scalar_lea.vmem [#allocation0], 518
    %598 = vst.msk [vmem:[%s597] sm:$0x1] %vm596, %v595
    %s599 = scalar_lea.vmem [#allocation0], 581
    %600 = vst.msk [vmem:[%s599] sm:$0x2] %vm596, %v595
    %s601 = scalar_lea.vmem [#allocation0], 644
    %602 = vst.msk [vmem:[%s601] sm:$0x4] %vm596, %v595
    %s603 = scalar_lea.vmem [#allocation0], 707
    %604 = vst.msk [vmem:[%s603] sm:$0x8] %vm596, %v595
    %s605 = scalar_lea.vmem [#allocation0], 770
    %606 = vst.msk [vmem:[%s605] sm:$0x10] %vm596, %v595
    %s607 = scalar_lea.vmem [#allocation0], 833
    %608 = vst.msk [vmem:[%s607] sm:$0x20] %vm596, %v595
    %s609 = scalar_lea.vmem [#allocation0], 896
    %610 = vst.msk [vmem:[%s609] sm:$0x40] %vm596, %v595
    %s611 = scalar_lea.vmem [#allocation0], 959
    %612 = vst.msk [vmem:[%s611] sm:$0x80] %vm596, %v595
    %s613 = scalar_lea.vmem [#allocation1], 24
    %v614 = vld [vmem:[%s613] sm:$0xff]
    %615 = vrot.lane.b32.xlu0 %v614, 104
    %v616 = vpop.permute.xlu0 %615
    %vm617 = vcmask 31744
    %s618 = scalar_lea.vmem [#allocation0], 550
    %619 = vst.msk [vmem:[%s618] sm:$0x1] %vm617, %v616
    %s620 = scalar_lea.vmem [#allocation0], 613
    %621 = vst.msk [vmem:[%s620] sm:$0x2] %vm617, %v616
    %s622 = scalar_lea.vmem [#allocation0], 676
    %623 = vst.msk [vmem:[%s622] sm:$0x4] %vm617, %v616
    %s624 = scalar_lea.vmem [#allocation0], 739
    %625 = vst.msk [vmem:[%s624] sm:$0x8] %vm617, %v616
    %s626 = scalar_lea.vmem [#allocation0], 802
    %627 = vst.msk [vmem:[%s626] sm:$0x10] %vm617, %v616
    %s628 = scalar_lea.vmem [#allocation0], 865
    %629 = vst.msk [vmem:[%s628] sm:$0x20] %vm617, %v616
    %s630 = scalar_lea.vmem [#allocation0], 928
    %631 = vst.msk [vmem:[%s630] sm:$0x40] %vm617, %v616
    %s632 = scalar_lea.vmem [#allocation0], 991
    %633 = vst.msk [vmem:[%s632] sm:$0x80] %vm617, %v616
    %v634 = vld [vmem:[#allocation1] sm:$0xff]
    %635 = vrot.lane.b32.xlu0 %v634, 100
    %v636 = vpop.permute.xlu0 %635
    %vm637 = vcmask 31744
    %s638 = scalar_lea.vmem [#allocation0], 7
    %639 = vst.msk [vmem:[%s638] sm:$0x1] %vm637, %v636
    %s640 = scalar_lea.vmem [#allocation0], 70
    %641 = vst.msk [vmem:[%s640] sm:$0x2] %vm637, %v636
    %s642 = scalar_lea.vmem [#allocation0], 133
    %643 = vst.msk [vmem:[%s642] sm:$0x4] %vm637, %v636
    %s644 = scalar_lea.vmem [#allocation0], 196
    %645 = vst.msk [vmem:[%s644] sm:$0x8] %vm637, %v636
    %s646 = scalar_lea.vmem [#allocation0], 259
    %647 = vst.msk [vmem:[%s646] sm:$0x10] %vm637, %v636
    %s648 = scalar_lea.vmem [#allocation0], 322
    %649 = vst.msk [vmem:[%s648] sm:$0x20] %vm637, %v636
    %s650 = scalar_lea.vmem [#allocation0], 385
    %651 = vst.msk [vmem:[%s650] sm:$0x40] %vm637, %v636
    %s652 = scalar_lea.vmem [#allocation0], 448
    %653 = vst.msk [vmem:[%s652] sm:$0x80] %vm637, %v636
    %s654 = scalar_lea.vmem [#allocation1], 8
    %v655 = vld [vmem:[%s654] sm:$0xff]
    %656 = vrot.lane.b32.xlu0 %v655, 100
    %v657 = vpop.permute.xlu0 %656
    %vm658 = vcmask 31744
    %s659 = scalar_lea.vmem [#allocation0], 39
    %660 = vst.msk [vmem:[%s659] sm:$0x1] %vm658, %v657
    %s661 = scalar_lea.vmem [#allocation0], 102
    %662 = vst.msk [vmem:[%s661] sm:$0x2] %vm658, %v657
    %s663 = scalar_lea.vmem [#allocation0], 165
    %664 = vst.msk [vmem:[%s663] sm:$0x4] %vm658, %v657
    %s665 = scalar_lea.vmem [#allocation0], 228
    %666 = vst.msk [vmem:[%s665] sm:$0x8] %vm658, %v657
    %s667 = scalar_lea.vmem [#allocation0], 291
    %668 = vst.msk [vmem:[%s667] sm:$0x10] %vm658, %v657
    %s669 = scalar_lea.vmem [#allocation0], 354
    %670 = vst.msk [vmem:[%s669] sm:$0x20] %vm658, %v657
    %s671 = scalar_lea.vmem [#allocation0], 417
    %672 = vst.msk [vmem:[%s671] sm:$0x40] %vm658, %v657
    %s673 = scalar_lea.vmem [#allocation0], 480
    %674 = vst.msk [vmem:[%s673] sm:$0x80] %vm658, %v657
    %s675 = scalar_lea.vmem [#allocation1], 16
    %v676 = vld [vmem:[%s675] sm:$0xff]
    %677 = vrot.lane.b32.xlu0 %v676, 100
    %v678 = vpop.permute.xlu0 %677
    %vm679 = vcmask 31744
    %s680 = scalar_lea.vmem [#allocation0], 519
    %681 = vst.msk [vmem:[%s680] sm:$0x1] %vm679, %v678
    %s682 = scalar_lea.vmem [#allocation0], 582
    %683 = vst.msk [vmem:[%s682] sm:$0x2] %vm679, %v678
    %s684 = scalar_lea.vmem [#allocation0], 645
    %685 = vst.msk [vmem:[%s684] sm:$0x4] %vm679, %v678
    %s686 = scalar_lea.vmem [#allocation0], 708
    %687 = vst.msk [vmem:[%s686] sm:$0x8] %vm679, %v678
    %s688 = scalar_lea.vmem [#allocation0], 771
    %689 = vst.msk [vmem:[%s688] sm:$0x10] %vm679, %v678
    %s690 = scalar_lea.vmem [#allocation0], 834
    %691 = vst.msk [vmem:[%s690] sm:$0x20] %vm679, %v678
    %s692 = scalar_lea.vmem [#allocation0], 897
    %693 = vst.msk [vmem:[%s692] sm:$0x40] %vm679, %v678
    %s694 = scalar_lea.vmem [#allocation0], 960
    %695 = vst.msk [vmem:[%s694] sm:$0x80] %vm679, %v678
    %s696 = scalar_lea.vmem [#allocation1], 24
    %v697 = vld [vmem:[%s696] sm:$0xff]
    %698 = vrot.lane.b32.xlu0 %v697, 100
    %v699 = vpop.permute.xlu0 %698
    %vm700 = vcmask 31744
    %s701 = scalar_lea.vmem [#allocation0], 551
    %702 = vst.msk [vmem:[%s701] sm:$0x1] %vm700, %v699
    %s703 = scalar_lea.vmem [#allocation0], 614
    %704 = vst.msk [vmem:[%s703] sm:$0x2] %vm700, %v699
    %s705 = scalar_lea.vmem [#allocation0], 677
    %706 = vst.msk [vmem:[%s705] sm:$0x4] %vm700, %v699
    %s707 = scalar_lea.vmem [#allocation0], 740
    %708 = vst.msk [vmem:[%s707] sm:$0x8] %vm700, %v699
    %s709 = scalar_lea.vmem [#allocation0], 803
    %710 = vst.msk [vmem:[%s709] sm:$0x10] %vm700, %v699
    %s711 = scalar_lea.vmem [#allocation0], 866
    %712 = vst.msk [vmem:[%s711] sm:$0x20] %vm700, %v699
    %s713 = scalar_lea.vmem [#allocation0], 929
    %714 = vst.msk [vmem:[%s713] sm:$0x40] %vm700, %v699
    %s715 = scalar_lea.vmem [#allocation0], 992
    %716 = vst.msk [vmem:[%s715] sm:$0x80] %vm700, %v699
    %v717 = vld [vmem:[#allocation1] sm:$0xff]
    %718 = vrot.lane.b32.xlu0 %v717, 96
    %v719 = vpop.permute.xlu0 %718
    %vm720 = vcmask 31744
    %s721 = scalar_lea.vmem [#allocation0], 8
    %722 = vst.msk [vmem:[%s721] sm:$0x1] %vm720, %v719
    %s723 = scalar_lea.vmem [#allocation0], 71
    %724 = vst.msk [vmem:[%s723] sm:$0x2] %vm720, %v719
    %s725 = scalar_lea.vmem [#allocation0], 134
    %726 = vst.msk [vmem:[%s725] sm:$0x4] %vm720, %v719
    %s727 = scalar_lea.vmem [#allocation0], 197
    %728 = vst.msk [vmem:[%s727] sm:$0x8] %vm720, %v719
    %s729 = scalar_lea.vmem [#allocation0], 260
    %730 = vst.msk [vmem:[%s729] sm:$0x10] %vm720, %v719
    %s731 = scalar_lea.vmem [#allocation0], 323
    %732 = vst.msk [vmem:[%s731] sm:$0x20] %vm720, %v719
    %s733 = scalar_lea.vmem [#allocation0], 386
    %734 = vst.msk [vmem:[%s733] sm:$0x40] %vm720, %v719
    %s735 = scalar_lea.vmem [#allocation0], 449
    %736 = vst.msk [vmem:[%s735] sm:$0x80] %vm720, %v719
    %s737 = scalar_lea.vmem [#allocation1], 8
    %v738 = vld [vmem:[%s737] sm:$0xff]
    %739 = vrot.lane.b32.xlu0 %v738, 96
    %v740 = vpop.permute.xlu0 %739
    %vm741 = vcmask 31744
    %s742 = scalar_lea.vmem [#allocation0], 40
    %743 = vst.msk [vmem:[%s742] sm:$0x1] %vm741, %v740
    %s744 = scalar_lea.vmem [#allocation0], 103
    %745 = vst.msk [vmem:[%s744] sm:$0x2] %vm741, %v740
    %s746 = scalar_lea.vmem [#allocation0], 166
    %747 = vst.msk [vmem:[%s746] sm:$0x4] %vm741, %v740
    %s748 = scalar_lea.vmem [#allocation0], 229
    %749 = vst.msk [vmem:[%s748] sm:$0x8] %vm741, %v740
    %s750 = scalar_lea.vmem [#allocation0], 292
    %751 = vst.msk [vmem:[%s750] sm:$0x10] %vm741, %v740
    %s752 = scalar_lea.vmem [#allocation0], 355
    %753 = vst.msk [vmem:[%s752] sm:$0x20] %vm741, %v740
    %s754 = scalar_lea.vmem [#allocation0], 418
    %755 = vst.msk [vmem:[%s754] sm:$0x40] %vm741, %v740
    %s756 = scalar_lea.vmem [#allocation0], 481
    %757 = vst.msk [vmem:[%s756] sm:$0x80] %vm741, %v740
    %s758 = scalar_lea.vmem [#allocation1], 16
    %v759 = vld [vmem:[%s758] sm:$0xff]
    %760 = vrot.lane.b32.xlu0 %v759, 96
    %v761 = vpop.permute.xlu0 %760
    %vm762 = vcmask 31744
    %s763 = scalar_lea.vmem [#allocation0], 520
    %764 = vst.msk [vmem:[%s763] sm:$0x1] %vm762, %v761
    %s765 = scalar_lea.vmem [#allocation0], 583
    %766 = vst.msk [vmem:[%s765] sm:$0x2] %vm762, %v761
    %s767 = scalar_lea.vmem [#allocation0], 646
    %768 = vst.msk [vmem:[%s767] sm:$0x4] %vm762, %v761
    %s769 = scalar_lea.vmem [#allocation0], 709
    %770 = vst.msk [vmem:[%s769] sm:$0x8] %vm762, %v761
    %s771 = scalar_lea.vmem [#allocation0], 772
    %772 = vst.msk [vmem:[%s771] sm:$0x10] %vm762, %v761
    %s773 = scalar_lea.vmem [#allocation0], 835
    %774 = vst.msk [vmem:[%s773] sm:$0x20] %vm762, %v761
    %s775 = scalar_lea.vmem [#allocation0], 898
    %776 = vst.msk [vmem:[%s775] sm:$0x40] %vm762, %v761
    %s777 = scalar_lea.vmem [#allocation0], 961
    %778 = vst.msk [vmem:[%s777] sm:$0x80] %vm762, %v761
    %s779 = scalar_lea.vmem [#allocation1], 24
    %v780 = vld [vmem:[%s779] sm:$0xff]
    %781 = vrot.lane.b32.xlu0 %v780, 96
    %v782 = vpop.permute.xlu0 %781
    %vm783 = vcmask 31744
    %s784 = scalar_lea.vmem [#allocation0], 552
    %785 = vst.msk [vmem:[%s784] sm:$0x1] %vm783, %v782
    %s786 = scalar_lea.vmem [#allocation0], 615
    %787 = vst.msk [vmem:[%s786] sm:$0x2] %vm783, %v782
    %s788 = scalar_lea.vmem [#allocation0], 678
    %789 = vst.msk [vmem:[%s788] sm:$0x4] %vm783, %v782
    %s790 = scalar_lea.vmem [#allocation0], 741
    %791 = vst.msk [vmem:[%s790] sm:$0x8] %vm783, %v782
    %s792 = scalar_lea.vmem [#allocation0], 804
    %793 = vst.msk [vmem:[%s792] sm:$0x10] %vm783, %v782
    %s794 = scalar_lea.vmem [#allocation0], 867
    %795 = vst.msk [vmem:[%s794] sm:$0x20] %vm783, %v782
    %s796 = scalar_lea.vmem [#allocation0], 930
    %797 = vst.msk [vmem:[%s796] sm:$0x40] %vm783, %v782
    %s798 = scalar_lea.vmem [#allocation0], 993
    %799 = vst.msk [vmem:[%s798] sm:$0x80] %vm783, %v782
    %v800 = vld [vmem:[#allocation1] sm:$0xff]
    %801 = vrot.lane.b32.xlu0 %v800, 92
    %v802 = vpop.permute.xlu0 %801
    %vm803 = vcmask 31744
    %s804 = scalar_lea.vmem [#allocation0], 9
    %805 = vst.msk [vmem:[%s804] sm:$0x1] %vm803, %v802
    %s806 = scalar_lea.vmem [#allocation0], 72
    %807 = vst.msk [vmem:[%s806] sm:$0x2] %vm803, %v802
    %s808 = scalar_lea.vmem [#allocation0], 135
    %809 = vst.msk [vmem:[%s808] sm:$0x4] %vm803, %v802
    %s810 = scalar_lea.vmem [#allocation0], 198
    %811 = vst.msk [vmem:[%s810] sm:$0x8] %vm803, %v802
    %s812 = scalar_lea.vmem [#allocation0], 261
    %813 = vst.msk [vmem:[%s812] sm:$0x10] %vm803, %v802
    %s814 = scalar_lea.vmem [#allocation0], 324
    %815 = vst.msk [vmem:[%s814] sm:$0x20] %vm803, %v802
    %s816 = scalar_lea.vmem [#allocation0], 387
    %817 = vst.msk [vmem:[%s816] sm:$0x40] %vm803, %v802
    %s818 = scalar_lea.vmem [#allocation0], 450
    %819 = vst.msk [vmem:[%s818] sm:$0x80] %vm803, %v802
    %s820 = scalar_lea.vmem [#allocation1], 8
    %v821 = vld [vmem:[%s820] sm:$0xff]
    %822 = vrot.lane.b32.xlu0 %v821, 92
    %v823 = vpop.permute.xlu0 %822
    %vm824 = vcmask 31744
    %s825 = scalar_lea.vmem [#allocation0], 41
    %826 = vst.msk [vmem:[%s825] sm:$0x1] %vm824, %v823
    %s827 = scalar_lea.vmem [#allocation0], 104
    %828 = vst.msk [vmem:[%s827] sm:$0x2] %vm824, %v823
    %s829 = scalar_lea.vmem [#allocation0], 167
    %830 = vst.msk [vmem:[%s829] sm:$0x4] %vm824, %v823
    %s831 = scalar_lea.vmem [#allocation0], 230
    %832 = vst.msk [vmem:[%s831] sm:$0x8] %vm824, %v823
    %s833 = scalar_lea.vmem [#allocation0], 293
    %834 = vst.msk [vmem:[%s833] sm:$0x10] %vm824, %v823
    %s835 = scalar_lea.vmem [#allocation0], 356
    %836 = vst.msk [vmem:[%s835] sm:$0x20] %vm824, %v823
    %s837 = scalar_lea.vmem [#allocation0], 419
    %838 = vst.msk [vmem:[%s837] sm:$0x40] %vm824, %v823
    %s839 = scalar_lea.vmem [#allocation0], 482
    %840 = vst.msk [vmem:[%s839] sm:$0x80] %vm824, %v823
    %s841 = scalar_lea.vmem [#allocation1], 16
    %v842 = vld [vmem:[%s841] sm:$0xff]
    %843 = vrot.lane.b32.xlu0 %v842, 92
    %v844 = vpop.permute.xlu0 %843
    %vm845 = vcmask 31744
    %s846 = scalar_lea.vmem [#allocation0], 521
    %847 = vst.msk [vmem:[%s846] sm:$0x1] %vm845, %v844
    %s848 = scalar_lea.vmem [#allocation0], 584
    %849 = vst.msk [vmem:[%s848] sm:$0x2] %vm845, %v844
    %s850 = scalar_lea.vmem [#allocation0], 647
    %851 = vst.msk [vmem:[%s850] sm:$0x4] %vm845, %v844
    %s852 = scalar_lea.vmem [#allocation0], 710
    %853 = vst.msk [vmem:[%s852] sm:$0x8] %vm845, %v844
    %s854 = scalar_lea.vmem [#allocation0], 773
    %855 = vst.msk [vmem:[%s854] sm:$0x10] %vm845, %v844
    %s856 = scalar_lea.vmem [#allocation0], 836
    %857 = vst.msk [vmem:[%s856] sm:$0x20] %vm845, %v844
    %s858 = scalar_lea.vmem [#allocation0], 899
    %859 = vst.msk [vmem:[%s858] sm:$0x40] %vm845, %v844
    %s860 = scalar_lea.vmem [#allocation0], 962
    %861 = vst.msk [vmem:[%s860] sm:$0x80] %vm845, %v844
    %s862 = scalar_lea.vmem [#allocation1], 24
    %v863 = vld [vmem:[%s862] sm:$0xff]
    %864 = vrot.lane.b32.xlu0 %v863, 92
    %v865 = vpop.permute.xlu0 %864
    %vm866 = vcmask 31744
    %s867 = scalar_lea.vmem [#allocation0], 553
    %868 = vst.msk [vmem:[%s867] sm:$0x1] %vm866, %v865
    %s869 = scalar_lea.vmem [#allocation0], 616
    %870 = vst.msk [vmem:[%s869] sm:$0x2] %vm866, %v865
    %s871 = scalar_lea.vmem [#allocation0], 679
    %872 = vst.msk [vmem:[%s871] sm:$0x4] %vm866, %v865
    %s873 = scalar_lea.vmem [#allocation0], 742
    %874 = vst.msk [vmem:[%s873] sm:$0x8] %vm866, %v865
    %s875 = scalar_lea.vmem [#allocation0], 805
    %876 = vst.msk [vmem:[%s875] sm:$0x10] %vm866, %v865
    %s877 = scalar_lea.vmem [#allocation0], 868
    %878 = vst.msk [vmem:[%s877] sm:$0x20] %vm866, %v865
    %s879 = scalar_lea.vmem [#allocation0], 931
    %880 = vst.msk [vmem:[%s879] sm:$0x40] %vm866, %v865
    %s881 = scalar_lea.vmem [#allocation0], 994
    %882 = vst.msk [vmem:[%s881] sm:$0x80] %vm866, %v865
    %v883 = vld [vmem:[#allocation1] sm:$0xff]
    %884 = vrot.lane.b32.xlu0 %v883, 88
    %v885 = vpop.permute.xlu0 %884
    %vm886 = vcmask 31744
    %s887 = scalar_lea.vmem [#allocation0], 10
    %888 = vst.msk [vmem:[%s887] sm:$0x1] %vm886, %v885
    %s889 = scalar_lea.vmem [#allocation0], 73
    %890 = vst.msk [vmem:[%s889] sm:$0x2] %vm886, %v885
    %s891 = scalar_lea.vmem [#allocation0], 136
    %892 = vst.msk [vmem:[%s891] sm:$0x4] %vm886, %v885
    %s893 = scalar_lea.vmem [#allocation0], 199
    %894 = vst.msk [vmem:[%s893] sm:$0x8] %vm886, %v885
    %s895 = scalar_lea.vmem [#allocation0], 262
    %896 = vst.msk [vmem:[%s895] sm:$0x10] %vm886, %v885
    %s897 = scalar_lea.vmem [#allocation0], 325
    %898 = vst.msk [vmem:[%s897] sm:$0x20] %vm886, %v885
    %s899 = scalar_lea.vmem [#allocation0], 388
    %900 = vst.msk [vmem:[%s899] sm:$0x40] %vm886, %v885
    %s901 = scalar_lea.vmem [#allocation0], 451
    %902 = vst.msk [vmem:[%s901] sm:$0x80] %vm886, %v885
    %s903 = scalar_lea.vmem [#allocation1], 8
    %v904 = vld [vmem:[%s903] sm:$0xff]
    %905 = vrot.lane.b32.xlu0 %v904, 88
    %v906 = vpop.permute.xlu0 %905
    %vm907 = vcmask 31744
    %s908 = scalar_lea.vmem [#allocation0], 42
    %909 = vst.msk [vmem:[%s908] sm:$0x1] %vm907, %v906
    %s910 = scalar_lea.vmem [#allocation0], 105
    %911 = vst.msk [vmem:[%s910] sm:$0x2] %vm907, %v906
    %s912 = scalar_lea.vmem [#allocation0], 168
    %913 = vst.msk [vmem:[%s912] sm:$0x4] %vm907, %v906
    %s914 = scalar_lea.vmem [#allocation0], 231
    %915 = vst.msk [vmem:[%s914] sm:$0x8] %vm907, %v906
    %s916 = scalar_lea.vmem [#allocation0], 294
    %917 = vst.msk [vmem:[%s916] sm:$0x10] %vm907, %v906
    %s918 = scalar_lea.vmem [#allocation0], 357
    %919 = vst.msk [vmem:[%s918] sm:$0x20] %vm907, %v906
    %s920 = scalar_lea.vmem [#allocation0], 420
    %921 = vst.msk [vmem:[%s920] sm:$0x40] %vm907, %v906
    %s922 = scalar_lea.vmem [#allocation0], 483
    %923 = vst.msk [vmem:[%s922] sm:$0x80] %vm907, %v906
    %s924 = scalar_lea.vmem [#allocation1], 16
    %v925 = vld [vmem:[%s924] sm:$0xff]
    %926 = vrot.lane.b32.xlu0 %v925, 88
    %v927 = vpop.permute.xlu0 %926
    %vm928 = vcmask 31744
    %s929 = scalar_lea.vmem [#allocation0], 522
    %930 = vst.msk [vmem:[%s929] sm:$0x1] %vm928, %v927
    %s931 = scalar_lea.vmem [#allocation0], 585
    %932 = vst.msk [vmem:[%s931] sm:$0x2] %vm928, %v927
    %s933 = scalar_lea.vmem [#allocation0], 648
    %934 = vst.msk [vmem:[%s933] sm:$0x4] %vm928, %v927
    %s935 = scalar_lea.vmem [#allocation0], 711
    %936 = vst.msk [vmem:[%s935] sm:$0x8] %vm928, %v927
    %s937 = scalar_lea.vmem [#allocation0], 774
    %938 = vst.msk [vmem:[%s937] sm:$0x10] %vm928, %v927
    %s939 = scalar_lea.vmem [#allocation0], 837
    %940 = vst.msk [vmem:[%s939] sm:$0x20] %vm928, %v927
    %s941 = scalar_lea.vmem [#allocation0], 900
    %942 = vst.msk [vmem:[%s941] sm:$0x40] %vm928, %v927
    %s943 = scalar_lea.vmem [#allocation0], 963
    %944 = vst.msk [vmem:[%s943] sm:$0x80] %vm928, %v927
    %s945 = scalar_lea.vmem [#allocation1], 24
    %v946 = vld [vmem:[%s945] sm:$0xff]
    %947 = vrot.lane.b32.xlu0 %v946, 88
    %v948 = vpop.permute.xlu0 %947
    %vm949 = vcmask 31744
    %s950 = scalar_lea.vmem [#allocation0], 554
    %951 = vst.msk [vmem:[%s950] sm:$0x1] %vm949, %v948
    %s952 = scalar_lea.vmem [#allocation0], 617
    %953 = vst.msk [vmem:[%s952] sm:$0x2] %vm949, %v948
    %s954 = scalar_lea.vmem [#allocation0], 680
    %955 = vst.msk [vmem:[%s954] sm:$0x4] %vm949, %v948
    %s956 = scalar_lea.vmem [#allocation0], 743
    %957 = vst.msk [vmem:[%s956] sm:$0x8] %vm949, %v948
    %s958 = scalar_lea.vmem [#allocation0], 806
    %959 = vst.msk [vmem:[%s958] sm:$0x10] %vm949, %v948
    %s960 = scalar_lea.vmem [#allocation0], 869
    %961 = vst.msk [vmem:[%s960] sm:$0x20] %vm949, %v948
    %s962 = scalar_lea.vmem [#allocation0], 932
    %963 = vst.msk [vmem:[%s962] sm:$0x40] %vm949, %v948
    %s964 = scalar_lea.vmem [#allocation0], 995
    %965 = vst.msk [vmem:[%s964] sm:$0x80] %vm949, %v948
    %v966 = vld [vmem:[#allocation1] sm:$0xff]
    %967 = vrot.lane.b32.xlu0 %v966, 84
    %v968 = vpop.permute.xlu0 %967
    %vm969 = vcmask 31744
    %s970 = scalar_lea.vmem [#allocation0], 11
    %971 = vst.msk [vmem:[%s970] sm:$0x1] %vm969, %v968
    %s972 = scalar_lea.vmem [#allocation0], 74
    %973 = vst.msk [vmem:[%s972] sm:$0x2] %vm969, %v968
    %s974 = scalar_lea.vmem [#allocation0], 137
    %975 = vst.msk [vmem:[%s974] sm:$0x4] %vm969, %v968
    %s976 = scalar_lea.vmem [#allocation0], 200
    %977 = vst.msk [vmem:[%s976] sm:$0x8] %vm969, %v968
    %s978 = scalar_lea.vmem [#allocation0], 263
    %979 = vst.msk [vmem:[%s978] sm:$0x10] %vm969, %v968
    %s980 = scalar_lea.vmem [#allocation0], 326
    %981 = vst.msk [vmem:[%s980] sm:$0x20] %vm969, %v968
    %s982 = scalar_lea.vmem [#allocation0], 389
    %983 = vst.msk [vmem:[%s982] sm:$0x40] %vm969, %v968
    %s984 = scalar_lea.vmem [#allocation0], 452
    %985 = vst.msk [vmem:[%s984] sm:$0x80] %vm969, %v968
    %s986 = scalar_lea.vmem [#allocation1], 8
    %v987 = vld [vmem:[%s986] sm:$0xff]
    %988 = vrot.lane.b32.xlu0 %v987, 84
    %v989 = vpop.permute.xlu0 %988
    %vm990 = vcmask 31744
    %s991 = scalar_lea.vmem [#allocation0], 43
    %992 = vst.msk [vmem:[%s991] sm:$0x1] %vm990, %v989
    %s993 = scalar_lea.vmem [#allocation0], 106
    %994 = vst.msk [vmem:[%s993] sm:$0x2] %vm990, %v989
    %s995 = scalar_lea.vmem [#allocation0], 169
    %996 = vst.msk [vmem:[%s995] sm:$0x4] %vm990, %v989
    %s997 = scalar_lea.vmem [#allocation0], 232
    %998 = vst.msk [vmem:[%s997] sm:$0x8] %vm990, %v989
    %s999 = scalar_lea.vmem [#allocation0], 295
    %1000 = vst.msk [vmem:[%s999] sm:$0x10] %vm990, %v989
    %s1001 = scalar_lea.vmem [#allocation0], 358
    %1002 = vst.msk [vmem:[%s1001] sm:$0x20] %vm990, %v989
    %s1003 = scalar_lea.vmem [#allocation0], 421
    %1004 = vst.msk [vmem:[%s1003] sm:$0x40] %vm990, %v989
    %s1005 = scalar_lea.vmem [#allocation0], 484
    %1006 = vst.msk [vmem:[%s1005] sm:$0x80] %vm990, %v989
    %s1007 = scalar_lea.vmem [#allocation1], 16
    %v1008 = vld [vmem:[%s1007] sm:$0xff]
    %1009 = vrot.lane.b32.xlu0 %v1008, 84
    %v1010 = vpop.permute.xlu0 %1009
    %vm1011 = vcmask 31744
    %s1012 = scalar_lea.vmem [#allocation0], 523
    %1013 = vst.msk [vmem:[%s1012] sm:$0x1] %vm1011, %v1010
    %s1014 = scalar_lea.vmem [#allocation0], 586
    %1015 = vst.msk [vmem:[%s1014] sm:$0x2] %vm1011, %v1010
    %s1016 = scalar_lea.vmem [#allocation0], 649
    %1017 = vst.msk [vmem:[%s1016] sm:$0x4] %vm1011, %v1010
    %s1018 = scalar_lea.vmem [#allocation0], 712
    %1019 = vst.msk [vmem:[%s1018] sm:$0x8] %vm1011, %v1010
    %s1020 = scalar_lea.vmem [#allocation0], 775
    %1021 = vst.msk [vmem:[%s1020] sm:$0x10] %vm1011, %v1010
    %s1022 = scalar_lea.vmem [#allocation0], 838
    %1023 = vst.msk [vmem:[%s1022] sm:$0x20] %vm1011, %v1010
    %s1024 = scalar_lea.vmem [#allocation0], 901
    %1025 = vst.msk [vmem:[%s1024] sm:$0x40] %vm1011, %v1010
    %s1026 = scalar_lea.vmem [#allocation0], 964
    %1027 = vst.msk [vmem:[%s1026] sm:$0x80] %vm1011, %v1010
    %s1028 = scalar_lea.vmem [#allocation1], 24
    %v1029 = vld [vmem:[%s1028] sm:$0xff]
    %1030 = vrot.lane.b32.xlu0 %v1029, 84
    %v1031 = vpop.permute.xlu0 %1030
    %vm1032 = vcmask 31744
    %s1033 = scalar_lea.vmem [#allocation0], 555
    %1034 = vst.msk [vmem:[%s1033] sm:$0x1] %vm1032, %v1031
    %s1035 = scalar_lea.vmem [#allocation0], 618
    %1036 = vst.msk [vmem:[%s1035] sm:$0x2] %vm1032, %v1031
    %s1037 = scalar_lea.vmem [#allocation0], 681
    %1038 = vst.msk [vmem:[%s1037] sm:$0x4] %vm1032, %v1031
    %s1039 = scalar_lea.vmem [#allocation0], 744
    %1040 = vst.msk [vmem:[%s1039] sm:$0x8] %vm1032, %v1031
    %s1041 = scalar_lea.vmem [#allocation0], 807
    %1042 = vst.msk [vmem:[%s1041] sm:$0x10] %vm1032, %v1031
    %s1043 = scalar_lea.vmem [#allocation0], 870
    %1044 = vst.msk [vmem:[%s1043] sm:$0x20] %vm1032, %v1031
    %s1045 = scalar_lea.vmem [#allocation0], 933
    %1046 = vst.msk [vmem:[%s1045] sm:$0x40] %vm1032, %v1031
    %s1047 = scalar_lea.vmem [#allocation0], 996
    %1048 = vst.msk [vmem:[%s1047] sm:$0x80] %vm1032, %v1031
    %v1049 = vld [vmem:[#allocation1] sm:$0xff]
    %1050 = vrot.lane.b32.xlu0 %v1049, 80
    %v1051 = vpop.permute.xlu0 %1050
    %vm1052 = vcmask 31744
    %s1053 = scalar_lea.vmem [#allocation0], 12
    %1054 = vst.msk [vmem:[%s1053] sm:$0x1] %vm1052, %v1051
    %s1055 = scalar_lea.vmem [#allocation0], 75
    %1056 = vst.msk [vmem:[%s1055] sm:$0x2] %vm1052, %v1051
    %s1057 = scalar_lea.vmem [#allocation0], 138
    %1058 = vst.msk [vmem:[%s1057] sm:$0x4] %vm1052, %v1051
    %s1059 = scalar_lea.vmem [#allocation0], 201
    %1060 = vst.msk [vmem:[%s1059] sm:$0x8] %vm1052, %v1051
    %s1061 = scalar_lea.vmem [#allocation0], 264
    %1062 = vst.msk [vmem:[%s1061] sm:$0x10] %vm1052, %v1051
    %s1063 = scalar_lea.vmem [#allocation0], 327
    %1064 = vst.msk [vmem:[%s1063] sm:$0x20] %vm1052, %v1051
    %s1065 = scalar_lea.vmem [#allocation0], 390
    %1066 = vst.msk [vmem:[%s1065] sm:$0x40] %vm1052, %v1051
    %s1067 = scalar_lea.vmem [#allocation0], 453
    %1068 = vst.msk [vmem:[%s1067] sm:$0x80] %vm1052, %v1051
    %s1069 = scalar_lea.vmem [#allocation1], 8
    %v1070 = vld [vmem:[%s1069] sm:$0xff]
    %1071 = vrot.lane.b32.xlu0 %v1070, 80
    %v1072 = vpop.permute.xlu0 %1071
    %vm1073 = vcmask 31744
    %s1074 = scalar_lea.vmem [#allocation0], 44
    %1075 = vst.msk [vmem:[%s1074] sm:$0x1] %vm1073, %v1072
    %s1076 = scalar_lea.vmem [#allocation0], 107
    %1077 = vst.msk [vmem:[%s1076] sm:$0x2] %vm1073, %v1072
    %s1078 = scalar_lea.vmem [#allocation0], 170
    %1079 = vst.msk [vmem:[%s1078] sm:$0x4] %vm1073, %v1072
    %s1080 = scalar_lea.vmem [#allocation0], 233
    %1081 = vst.msk [vmem:[%s1080] sm:$0x8] %vm1073, %v1072
    %s1082 = scalar_lea.vmem [#allocation0], 296
    %1083 = vst.msk [vmem:[%s1082] sm:$0x10] %vm1073, %v1072
    %s1084 = scalar_lea.vmem [#allocation0], 359
    %1085 = vst.msk [vmem:[%s1084] sm:$0x20] %vm1073, %v1072
    %s1086 = scalar_lea.vmem [#allocation0], 422
    %1087 = vst.msk [vmem:[%s1086] sm:$0x40] %vm1073, %v1072
    %s1088 = scalar_lea.vmem [#allocation0], 485
    %1089 = vst.msk [vmem:[%s1088] sm:$0x80] %vm1073, %v1072
    %s1090 = scalar_lea.vmem [#allocation1], 16
    %v1091 = vld [vmem:[%s1090] sm:$0xff]
    %1092 = vrot.lane.b32.xlu0 %v1091, 80
    %v1093 = vpop.permute.xlu0 %1092
    %vm1094 = vcmask 31744
    %s1095 = scalar_lea.vmem [#allocation0], 524
    %1096 = vst.msk [vmem:[%s1095] sm:$0x1] %vm1094, %v1093
    %s1097 = scalar_lea.vmem [#allocation0], 587
    %1098 = vst.msk [vmem:[%s1097] sm:$0x2] %vm1094, %v1093
    %s1099 = scalar_lea.vmem [#allocation0], 650
    %1100 = vst.msk [vmem:[%s1099] sm:$0x4] %vm1094, %v1093
    %s1101 = scalar_lea.vmem [#allocation0], 713
    %1102 = vst.msk [vmem:[%s1101] sm:$0x8] %vm1094, %v1093
    %s1103 = scalar_lea.vmem [#allocation0], 776
    %1104 = vst.msk [vmem:[%s1103] sm:$0x10] %vm1094, %v1093
    %s1105 = scalar_lea.vmem [#allocation0], 839
    %1106 = vst.msk [vmem:[%s1105] sm:$0x20] %vm1094, %v1093
    %s1107 = scalar_lea.vmem [#allocation0], 902
    %1108 = vst.msk [vmem:[%s1107] sm:$0x40] %vm1094, %v1093
    %s1109 = scalar_lea.vmem [#allocation0], 965
    %1110 = vst.msk [vmem:[%s1109] sm:$0x80] %vm1094, %v1093
    %s1111 = scalar_lea.vmem [#allocation1], 24
    %v1112 = vld [vmem:[%s1111] sm:$0xff]
    %1113 = vrot.lane.b32.xlu0 %v1112, 80
    %v1114 = vpop.permute.xlu0 %1113
    %vm1115 = vcmask 31744
    %s1116 = scalar_lea.vmem [#allocation0], 556
    %1117 = vst.msk [vmem:[%s1116] sm:$0x1] %vm1115, %v1114
    %s1118 = scalar_lea.vmem [#allocation0], 619
    %1119 = vst.msk [vmem:[%s1118] sm:$0x2] %vm1115, %v1114
    %s1120 = scalar_lea.vmem [#allocation0], 682
    %1121 = vst.msk [vmem:[%s1120] sm:$0x4] %vm1115, %v1114
    %s1122 = scalar_lea.vmem [#allocation0], 745
    %1123 = vst.msk [vmem:[%s1122] sm:$0x8] %vm1115, %v1114
    %s1124 = scalar_lea.vmem [#allocation0], 808
    %1125 = vst.msk [vmem:[%s1124] sm:$0x10] %vm1115, %v1114
    %s1126 = scalar_lea.vmem [#allocation0], 871
    %1127 = vst.msk [vmem:[%s1126] sm:$0x20] %vm1115, %v1114
    %s1128 = scalar_lea.vmem [#allocation0], 934
    %1129 = vst.msk [vmem:[%s1128] sm:$0x40] %vm1115, %v1114
    %s1130 = scalar_lea.vmem [#allocation0], 997
    %1131 = vst.msk [vmem:[%s1130] sm:$0x80] %vm1115, %v1114
    %v1132 = vld [vmem:[#allocation1] sm:$0xff]
    %1133 = vrot.lane.b32.xlu0 %v1132, 76
    %v1134 = vpop.permute.xlu0 %1133
    %vm1135 = vcmask 31744
    %s1136 = scalar_lea.vmem [#allocation0], 13
    %1137 = vst.msk [vmem:[%s1136] sm:$0x1] %vm1135, %v1134
    %s1138 = scalar_lea.vmem [#allocation0], 76
    %1139 = vst.msk [vmem:[%s1138] sm:$0x2] %vm1135, %v1134
    %s1140 = scalar_lea.vmem [#allocation0], 139
    %1141 = vst.msk [vmem:[%s1140] sm:$0x4] %vm1135, %v1134
    %s1142 = scalar_lea.vmem [#allocation0], 202
    %1143 = vst.msk [vmem:[%s1142] sm:$0x8] %vm1135, %v1134
    %s1144 = scalar_lea.vmem [#allocation0], 265
    %1145 = vst.msk [vmem:[%s1144] sm:$0x10] %vm1135, %v1134
    %s1146 = scalar_lea.vmem [#allocation0], 328
    %1147 = vst.msk [vmem:[%s1146] sm:$0x20] %vm1135, %v1134
    %s1148 = scalar_lea.vmem [#allocation0], 391
    %1149 = vst.msk [vmem:[%s1148] sm:$0x40] %vm1135, %v1134
    %s1150 = scalar_lea.vmem [#allocation0], 454
    %1151 = vst.msk [vmem:[%s1150] sm:$0x80] %vm1135, %v1134
    %s1152 = scalar_lea.vmem [#allocation1], 8
    %v1153 = vld [vmem:[%s1152] sm:$0xff]
    %1154 = vrot.lane.b32.xlu0 %v1153, 76
    %v1155 = vpop.permute.xlu0 %1154
    %vm1156 = vcmask 31744
    %s1157 = scalar_lea.vmem [#allocation0], 45
    %1158 = vst.msk [vmem:[%s1157] sm:$0x1] %vm1156, %v1155
    %s1159 = scalar_lea.vmem [#allocation0], 108
    %1160 = vst.msk [vmem:[%s1159] sm:$0x2] %vm1156, %v1155
    %s1161 = scalar_lea.vmem [#allocation0], 171
    %1162 = vst.msk [vmem:[%s1161] sm:$0x4] %vm1156, %v1155
    %s1163 = scalar_lea.vmem [#allocation0], 234
    %1164 = vst.msk [vmem:[%s1163] sm:$0x8] %vm1156, %v1155
    %s1165 = scalar_lea.vmem [#allocation0], 297
    %1166 = vst.msk [vmem:[%s1165] sm:$0x10] %vm1156, %v1155
    %s1167 = scalar_lea.vmem [#allocation0], 360
    %1168 = vst.msk [vmem:[%s1167] sm:$0x20] %vm1156, %v1155
    %s1169 = scalar_lea.vmem [#allocation0], 423
    %1170 = vst.msk [vmem:[%s1169] sm:$0x40] %vm1156, %v1155
    %s1171 = scalar_lea.vmem [#allocation0], 486
    %1172 = vst.msk [vmem:[%s1171] sm:$0x80] %vm1156, %v1155
    %s1173 = scalar_lea.vmem [#allocation1], 16
    %v1174 = vld [vmem:[%s1173] sm:$0xff]
    %1175 = vrot.lane.b32.xlu0 %v1174, 76
    %v1176 = vpop.permute.xlu0 %1175
    %vm1177 = vcmask 31744
    %s1178 = scalar_lea.vmem [#allocation0], 525
    %1179 = vst.msk [vmem:[%s1178] sm:$0x1] %vm1177, %v1176
    %s1180 = scalar_lea.vmem [#allocation0], 588
    %1181 = vst.msk [vmem:[%s1180] sm:$0x2] %vm1177, %v1176
    %s1182 = scalar_lea.vmem [#allocation0], 651
    %1183 = vst.msk [vmem:[%s1182] sm:$0x4] %vm1177, %v1176
    %s1184 = scalar_lea.vmem [#allocation0], 714
    %1185 = vst.msk [vmem:[%s1184] sm:$0x8] %vm1177, %v1176
    %s1186 = scalar_lea.vmem [#allocation0], 777
    %1187 = vst.msk [vmem:[%s1186] sm:$0x10] %vm1177, %v1176
    %s1188 = scalar_lea.vmem [#allocation0], 840
    %1189 = vst.msk [vmem:[%s1188] sm:$0x20] %vm1177, %v1176
    %s1190 = scalar_lea.vmem [#allocation0], 903
    %1191 = vst.msk [vmem:[%s1190] sm:$0x40] %vm1177, %v1176
    %s1192 = scalar_lea.vmem [#allocation0], 966
    %1193 = vst.msk [vmem:[%s1192] sm:$0x80] %vm1177, %v1176
    %s1194 = scalar_lea.vmem [#allocation1], 24
    %v1195 = vld [vmem:[%s1194] sm:$0xff]
    %1196 = vrot.lane.b32.xlu0 %v1195, 76
    %v1197 = vpop.permute.xlu0 %1196
    %vm1198 = vcmask 31744
    %s1199 = scalar_lea.vmem [#allocation0], 557
    %1200 = vst.msk [vmem:[%s1199] sm:$0x1] %vm1198, %v1197
    %s1201 = scalar_lea.vmem [#allocation0], 620
    %1202 = vst.msk [vmem:[%s1201] sm:$0x2] %vm1198, %v1197
    %s1203 = scalar_lea.vmem [#allocation0], 683
    %1204 = vst.msk [vmem:[%s1203] sm:$0x4] %vm1198, %v1197
    %s1205 = scalar_lea.vmem [#allocation0], 746
    %1206 = vst.msk [vmem:[%s1205] sm:$0x8] %vm1198, %v1197
    %s1207 = scalar_lea.vmem [#allocation0], 809
    %1208 = vst.msk [vmem:[%s1207] sm:$0x10] %vm1198, %v1197
    %s1209 = scalar_lea.vmem [#allocation0], 872
    %1210 = vst.msk [vmem:[%s1209] sm:$0x20] %vm1198, %v1197
    %s1211 = scalar_lea.vmem [#allocation0], 935
    %1212 = vst.msk [vmem:[%s1211] sm:$0x40] %vm1198, %v1197
    %s1213 = scalar_lea.vmem [#allocation0], 998
    %1214 = vst.msk [vmem:[%s1213] sm:$0x80] %vm1198, %v1197
    %v1215 = vld [vmem:[#allocation1] sm:$0xff]
    %1216 = vrot.lane.b32.xlu0 %v1215, 72
    %v1217 = vpop.permute.xlu0 %1216
    %vm1218 = vcmask 31744
    %s1219 = scalar_lea.vmem [#allocation0], 14
    %1220 = vst.msk [vmem:[%s1219] sm:$0x1] %vm1218, %v1217
    %s1221 = scalar_lea.vmem [#allocation0], 77
    %1222 = vst.msk [vmem:[%s1221] sm:$0x2] %vm1218, %v1217
    %s1223 = scalar_lea.vmem [#allocation0], 140
    %1224 = vst.msk [vmem:[%s1223] sm:$0x4] %vm1218, %v1217
    %s1225 = scalar_lea.vmem [#allocation0], 203
    %1226 = vst.msk [vmem:[%s1225] sm:$0x8] %vm1218, %v1217
    %s1227 = scalar_lea.vmem [#allocation0], 266
    %1228 = vst.msk [vmem:[%s1227] sm:$0x10] %vm1218, %v1217
    %s1229 = scalar_lea.vmem [#allocation0], 329
    %1230 = vst.msk [vmem:[%s1229] sm:$0x20] %vm1218, %v1217
    %s1231 = scalar_lea.vmem [#allocation0], 392
    %1232 = vst.msk [vmem:[%s1231] sm:$0x40] %vm1218, %v1217
    %s1233 = scalar_lea.vmem [#allocation0], 455
    %1234 = vst.msk [vmem:[%s1233] sm:$0x80] %vm1218, %v1217
    %s1235 = scalar_lea.vmem [#allocation1], 8
    %v1236 = vld [vmem:[%s1235] sm:$0xff]
    %1237 = vrot.lane.b32.xlu0 %v1236, 72
    %v1238 = vpop.permute.xlu0 %1237
    %vm1239 = vcmask 31744
    %s1240 = scalar_lea.vmem [#allocation0], 46
    %1241 = vst.msk [vmem:[%s1240] sm:$0x1] %vm1239, %v1238
    %s1242 = scalar_lea.vmem [#allocation0], 109
    %1243 = vst.msk [vmem:[%s1242] sm:$0x2] %vm1239, %v1238
    %s1244 = scalar_lea.vmem [#allocation0], 172
    %1245 = vst.msk [vmem:[%s1244] sm:$0x4] %vm1239, %v1238
    %s1246 = scalar_lea.vmem [#allocation0], 235
    %1247 = vst.msk [vmem:[%s1246] sm:$0x8] %vm1239, %v1238
    %s1248 = scalar_lea.vmem [#allocation0], 298
    %1249 = vst.msk [vmem:[%s1248] sm:$0x10] %vm1239, %v1238
    %s1250 = scalar_lea.vmem [#allocation0], 361
    %1251 = vst.msk [vmem:[%s1250] sm:$0x20] %vm1239, %v1238
    %s1252 = scalar_lea.vmem [#allocation0], 424
    %1253 = vst.msk [vmem:[%s1252] sm:$0x40] %vm1239, %v1238
    %s1254 = scalar_lea.vmem [#allocation0], 487
    %1255 = vst.msk [vmem:[%s1254] sm:$0x80] %vm1239, %v1238
    %s1256 = scalar_lea.vmem [#allocation1], 16
    %v1257 = vld [vmem:[%s1256] sm:$0xff]
    %1258 = vrot.lane.b32.xlu0 %v1257, 72
    %v1259 = vpop.permute.xlu0 %1258
    %vm1260 = vcmask 31744
    %s1261 = scalar_lea.vmem [#allocation0], 526
    %1262 = vst.msk [vmem:[%s1261] sm:$0x1] %vm1260, %v1259
    %s1263 = scalar_lea.vmem [#allocation0], 589
    %1264 = vst.msk [vmem:[%s1263] sm:$0x2] %vm1260, %v1259
    %s1265 = scalar_lea.vmem [#allocation0], 652
    %1266 = vst.msk [vmem:[%s1265] sm:$0x4] %vm1260, %v1259
    %s1267 = scalar_lea.vmem [#allocation0], 715
    %1268 = vst.msk [vmem:[%s1267] sm:$0x8] %vm1260, %v1259
    %s1269 = scalar_lea.vmem [#allocation0], 778
    %1270 = vst.msk [vmem:[%s1269] sm:$0x10] %vm1260, %v1259
    %s1271 = scalar_lea.vmem [#allocation0], 841
    %1272 = vst.msk [vmem:[%s1271] sm:$0x20] %vm1260, %v1259
    %s1273 = scalar_lea.vmem [#allocation0], 904
    %1274 = vst.msk [vmem:[%s1273] sm:$0x40] %vm1260, %v1259
    %s1275 = scalar_lea.vmem [#allocation0], 967
    %1276 = vst.msk [vmem:[%s1275] sm:$0x80] %vm1260, %v1259
    %s1277 = scalar_lea.vmem [#allocation1], 24
    %v1278 = vld [vmem:[%s1277] sm:$0xff]
    %1279 = vrot.lane.b32.xlu0 %v1278, 72
    %v1280 = vpop.permute.xlu0 %1279
    %vm1281 = vcmask 31744
    %s1282 = scalar_lea.vmem [#allocation0], 558
    %1283 = vst.msk [vmem:[%s1282] sm:$0x1] %vm1281, %v1280
    %s1284 = scalar_lea.vmem [#allocation0], 621
    %1285 = vst.msk [vmem:[%s1284] sm:$0x2] %vm1281, %v1280
    %s1286 = scalar_lea.vmem [#allocation0], 684
    %1287 = vst.msk [vmem:[%s1286] sm:$0x4] %vm1281, %v1280
    %s1288 = scalar_lea.vmem [#allocation0], 747
    %1289 = vst.msk [vmem:[%s1288] sm:$0x8] %vm1281, %v1280
    %s1290 = scalar_lea.vmem [#allocation0], 810
    %1291 = vst.msk [vmem:[%s1290] sm:$0x10] %vm1281, %v1280
    %s1292 = scalar_lea.vmem [#allocation0], 873
    %1293 = vst.msk [vmem:[%s1292] sm:$0x20] %vm1281, %v1280
    %s1294 = scalar_lea.vmem [#allocation0], 936
    %1295 = vst.msk [vmem:[%s1294] sm:$0x40] %vm1281, %v1280
    %s1296 = scalar_lea.vmem [#allocation0], 999
    %1297 = vst.msk [vmem:[%s1296] sm:$0x80] %vm1281, %v1280
    %v1298 = vld [vmem:[#allocation1] sm:$0xff]
    %1299 = vrot.lane.b32.xlu0 %v1298, 68
    %v1300 = vpop.permute.xlu0 %1299
    %vm1301 = vcmask 31744
    %s1302 = scalar_lea.vmem [#allocation0], 15
    %1303 = vst.msk [vmem:[%s1302] sm:$0x1] %vm1301, %v1300
    %s1304 = scalar_lea.vmem [#allocation0], 78
    %1305 = vst.msk [vmem:[%s1304] sm:$0x2] %vm1301, %v1300
    %s1306 = scalar_lea.vmem [#allocation0], 141
    %1307 = vst.msk [vmem:[%s1306] sm:$0x4] %vm1301, %v1300
    %s1308 = scalar_lea.vmem [#allocation0], 204
    %1309 = vst.msk [vmem:[%s1308] sm:$0x8] %vm1301, %v1300
    %s1310 = scalar_lea.vmem [#allocation0], 267
    %1311 = vst.msk [vmem:[%s1310] sm:$0x10] %vm1301, %v1300
    %s1312 = scalar_lea.vmem [#allocation0], 330
    %1313 = vst.msk [vmem:[%s1312] sm:$0x20] %vm1301, %v1300
    %s1314 = scalar_lea.vmem [#allocation0], 393
    %1315 = vst.msk [vmem:[%s1314] sm:$0x40] %vm1301, %v1300
    %s1316 = scalar_lea.vmem [#allocation0], 456
    %1317 = vst.msk [vmem:[%s1316] sm:$0x80] %vm1301, %v1300
    %s1318 = scalar_lea.vmem [#allocation1], 8
    %v1319 = vld [vmem:[%s1318] sm:$0xff]
    %1320 = vrot.lane.b32.xlu0 %v1319, 68
    %v1321 = vpop.permute.xlu0 %1320
    %vm1322 = vcmask 31744
    %s1323 = scalar_lea.vmem [#allocation0], 47
    %1324 = vst.msk [vmem:[%s1323] sm:$0x1] %vm1322, %v1321
    %s1325 = scalar_lea.vmem [#allocation0], 110
    %1326 = vst.msk [vmem:[%s1325] sm:$0x2] %vm1322, %v1321
    %s1327 = scalar_lea.vmem [#allocation0], 173
    %1328 = vst.msk [vmem:[%s1327] sm:$0x4] %vm1322, %v1321
    %s1329 = scalar_lea.vmem [#allocation0], 236
    %1330 = vst.msk [vmem:[%s1329] sm:$0x8] %vm1322, %v1321
    %s1331 = scalar_lea.vmem [#allocation0], 299
    %1332 = vst.msk [vmem:[%s1331] sm:$0x10] %vm1322, %v1321
    %s1333 = scalar_lea.vmem [#allocation0], 362
    %1334 = vst.msk [vmem:[%s1333] sm:$0x20] %vm1322, %v1321
    %s1335 = scalar_lea.vmem [#allocation0], 425
    %1336 = vst.msk [vmem:[%s1335] sm:$0x40] %vm1322, %v1321
    %s1337 = scalar_lea.vmem [#allocation0], 488
    %1338 = vst.msk [vmem:[%s1337] sm:$0x80] %vm1322, %v1321
    %s1339 = scalar_lea.vmem [#allocation1], 16
    %v1340 = vld [vmem:[%s1339] sm:$0xff]
    %1341 = vrot.lane.b32.xlu0 %v1340, 68
    %v1342 = vpop.permute.xlu0 %1341
    %vm1343 = vcmask 31744
    %s1344 = scalar_lea.vmem [#allocation0], 527
    %1345 = vst.msk [vmem:[%s1344] sm:$0x1] %vm1343, %v1342
    %s1346 = scalar_lea.vmem [#allocation0], 590
    %1347 = vst.msk [vmem:[%s1346] sm:$0x2] %vm1343, %v1342
    %s1348 = scalar_lea.vmem [#allocation0], 653
    %1349 = vst.msk [vmem:[%s1348] sm:$0x4] %vm1343, %v1342
    %s1350 = scalar_lea.vmem [#allocation0], 716
    %1351 = vst.msk [vmem:[%s1350] sm:$0x8] %vm1343, %v1342
    %s1352 = scalar_lea.vmem [#allocation0], 779
    %1353 = vst.msk [vmem:[%s1352] sm:$0x10] %vm1343, %v1342
    %s1354 = scalar_lea.vmem [#allocation0], 842
    %1355 = vst.msk [vmem:[%s1354] sm:$0x20] %vm1343, %v1342
    %s1356 = scalar_lea.vmem [#allocation0], 905
    %1357 = vst.msk [vmem:[%s1356] sm:$0x40] %vm1343, %v1342
    %s1358 = scalar_lea.vmem [#allocation0], 968
    %1359 = vst.msk [vmem:[%s1358] sm:$0x80] %vm1343, %v1342
    %s1360 = scalar_lea.vmem [#allocation1], 24
    %v1361 = vld [vmem:[%s1360] sm:$0xff]
    %1362 = vrot.lane.b32.xlu0 %v1361, 68
    %v1363 = vpop.permute.xlu0 %1362
    %vm1364 = vcmask 31744
    %s1365 = scalar_lea.vmem [#allocation0], 559
    %1366 = vst.msk [vmem:[%s1365] sm:$0x1] %vm1364, %v1363
    %s1367 = scalar_lea.vmem [#allocation0], 622
    %1368 = vst.msk [vmem:[%s1367] sm:$0x2] %vm1364, %v1363
    %s1369 = scalar_lea.vmem [#allocation0], 685
    %1370 = vst.msk [vmem:[%s1369] sm:$0x4] %vm1364, %v1363
    %s1371 = scalar_lea.vmem [#allocation0], 748
    %1372 = vst.msk [vmem:[%s1371] sm:$0x8] %vm1364, %v1363
    %s1373 = scalar_lea.vmem [#allocation0], 811
    %1374 = vst.msk [vmem:[%s1373] sm:$0x10] %vm1364, %v1363
    %s1375 = scalar_lea.vmem [#allocation0], 874
    %1376 = vst.msk [vmem:[%s1375] sm:$0x20] %vm1364, %v1363
    %s1377 = scalar_lea.vmem [#allocation0], 937
    %1378 = vst.msk [vmem:[%s1377] sm:$0x40] %vm1364, %v1363
    %s1379 = scalar_lea.vmem [#allocation0], 1000
    %1380 = vst.msk [vmem:[%s1379] sm:$0x80] %vm1364, %v1363
    %v1381 = vld [vmem:[#allocation1] sm:$0xff]
    %1382 = vrot.lane.b32.xlu0 %v1381, 64
    %v1383 = vpop.permute.xlu0 %1382
    %vm1384 = vcmask 31744
    %s1385 = scalar_lea.vmem [#allocation0], 16
    %1386 = vst.msk [vmem:[%s1385] sm:$0x1] %vm1384, %v1383
    %s1387 = scalar_lea.vmem [#allocation0], 79
    %1388 = vst.msk [vmem:[%s1387] sm:$0x2] %vm1384, %v1383
    %s1389 = scalar_lea.vmem [#allocation0], 142
    %1390 = vst.msk [vmem:[%s1389] sm:$0x4] %vm1384, %v1383
    %s1391 = scalar_lea.vmem [#allocation0], 205
    %1392 = vst.msk [vmem:[%s1391] sm:$0x8] %vm1384, %v1383
    %s1393 = scalar_lea.vmem [#allocation0], 268
    %1394 = vst.msk [vmem:[%s1393] sm:$0x10] %vm1384, %v1383
    %s1395 = scalar_lea.vmem [#allocation0], 331
    %1396 = vst.msk [vmem:[%s1395] sm:$0x20] %vm1384, %v1383
    %s1397 = scalar_lea.vmem [#allocation0], 394
    %1398 = vst.msk [vmem:[%s1397] sm:$0x40] %vm1384, %v1383
    %s1399 = scalar_lea.vmem [#allocation0], 457
    %1400 = vst.msk [vmem:[%s1399] sm:$0x80] %vm1384, %v1383
    %s1401 = scalar_lea.vmem [#allocation1], 8
    %v1402 = vld [vmem:[%s1401] sm:$0xff]
    %1403 = vrot.lane.b32.xlu0 %v1402, 64
    %v1404 = vpop.permute.xlu0 %1403
    %vm1405 = vcmask 31744
    %s1406 = scalar_lea.vmem [#allocation0], 48
    %1407 = vst.msk [vmem:[%s1406] sm:$0x1] %vm1405, %v1404
    %s1408 = scalar_lea.vmem [#allocation0], 111
    %1409 = vst.msk [vmem:[%s1408] sm:$0x2] %vm1405, %v1404
    %s1410 = scalar_lea.vmem [#allocation0], 174
    %1411 = vst.msk [vmem:[%s1410] sm:$0x4] %vm1405, %v1404
    %s1412 = scalar_lea.vmem [#allocation0], 237
    %1413 = vst.msk [vmem:[%s1412] sm:$0x8] %vm1405, %v1404
    %s1414 = scalar_lea.vmem [#allocation0], 300
    %1415 = vst.msk [vmem:[%s1414] sm:$0x10] %vm1405, %v1404
    %s1416 = scalar_lea.vmem [#allocation0], 363
    %1417 = vst.msk [vmem:[%s1416] sm:$0x20] %vm1405, %v1404
    %s1418 = scalar_lea.vmem [#allocation0], 426
    %1419 = vst.msk [vmem:[%s1418] sm:$0x40] %vm1405, %v1404
    %s1420 = scalar_lea.vmem [#allocation0], 489
    %1421 = vst.msk [vmem:[%s1420] sm:$0x80] %vm1405, %v1404
    %s1422 = scalar_lea.vmem [#allocation1], 16
    %v1423 = vld [vmem:[%s1422] sm:$0xff]
    %1424 = vrot.lane.b32.xlu0 %v1423, 64
    %v1425 = vpop.permute.xlu0 %1424
    %vm1426 = vcmask 31744
    %s1427 = scalar_lea.vmem [#allocation0], 528
    %1428 = vst.msk [vmem:[%s1427] sm:$0x1] %vm1426, %v1425
    %s1429 = scalar_lea.vmem [#allocation0], 591
    %1430 = vst.msk [vmem:[%s1429] sm:$0x2] %vm1426, %v1425
    %s1431 = scalar_lea.vmem [#allocation0], 654
    %1432 = vst.msk [vmem:[%s1431] sm:$0x4] %vm1426, %v1425
    %s1433 = scalar_lea.vmem [#allocation0], 717
    %1434 = vst.msk [vmem:[%s1433] sm:$0x8] %vm1426, %v1425
    %s1435 = scalar_lea.vmem [#allocation0], 780
    %1436 = vst.msk [vmem:[%s1435] sm:$0x10] %vm1426, %v1425
    %s1437 = scalar_lea.vmem [#allocation0], 843
    %1438 = vst.msk [vmem:[%s1437] sm:$0x20] %vm1426, %v1425
    %s1439 = scalar_lea.vmem [#allocation0], 906
    %1440 = vst.msk [vmem:[%s1439] sm:$0x40] %vm1426, %v1425
    %s1441 = scalar_lea.vmem [#allocation0], 969
    %1442 = vst.msk [vmem:[%s1441] sm:$0x80] %vm1426, %v1425
    %s1443 = scalar_lea.vmem [#allocation1], 24
    %v1444 = vld [vmem:[%s1443] sm:$0xff]
    %1445 = vrot.lane.b32.xlu0 %v1444, 64
    %v1446 = vpop.permute.xlu0 %1445
    %vm1447 = vcmask 31744
    %s1448 = scalar_lea.vmem [#allocation0], 560
    %1449 = vst.msk [vmem:[%s1448] sm:$0x1] %vm1447, %v1446
    %s1450 = scalar_lea.vmem [#allocation0], 623
    %1451 = vst.msk [vmem:[%s1450] sm:$0x2] %vm1447, %v1446
    %s1452 = scalar_lea.vmem [#allocation0], 686
    %1453 = vst.msk [vmem:[%s1452] sm:$0x4] %vm1447, %v1446
    %s1454 = scalar_lea.vmem [#allocation0], 749
    %1455 = vst.msk [vmem:[%s1454] sm:$0x8] %vm1447, %v1446
    %s1456 = scalar_lea.vmem [#allocation0], 812
    %1457 = vst.msk [vmem:[%s1456] sm:$0x10] %vm1447, %v1446
    %s1458 = scalar_lea.vmem [#allocation0], 875
    %1459 = vst.msk [vmem:[%s1458] sm:$0x20] %vm1447, %v1446
    %s1460 = scalar_lea.vmem [#allocation0], 938
    %1461 = vst.msk [vmem:[%s1460] sm:$0x40] %vm1447, %v1446
    %s1462 = scalar_lea.vmem [#allocation0], 1001
    %1463 = vst.msk [vmem:[%s1462] sm:$0x80] %vm1447, %v1446
    %v1464 = vld [vmem:[#allocation1] sm:$0xff]
    %1465 = vrot.lane.b32.xlu0 %v1464, 60
    %v1466 = vpop.permute.xlu0 %1465
    %vm1467 = vcmask 31744
    %s1468 = scalar_lea.vmem [#allocation0], 17
    %1469 = vst.msk [vmem:[%s1468] sm:$0x1] %vm1467, %v1466
    %s1470 = scalar_lea.vmem [#allocation0], 80
    %1471 = vst.msk [vmem:[%s1470] sm:$0x2] %vm1467, %v1466
    %s1472 = scalar_lea.vmem [#allocation0], 143
    %1473 = vst.msk [vmem:[%s1472] sm:$0x4] %vm1467, %v1466
    %s1474 = scalar_lea.vmem [#allocation0], 206
    %1475 = vst.msk [vmem:[%s1474] sm:$0x8] %vm1467, %v1466
    %s1476 = scalar_lea.vmem [#allocation0], 269
    %1477 = vst.msk [vmem:[%s1476] sm:$0x10] %vm1467, %v1466
    %s1478 = scalar_lea.vmem [#allocation0], 332
    %1479 = vst.msk [vmem:[%s1478] sm:$0x20] %vm1467, %v1466
    %s1480 = scalar_lea.vmem [#allocation0], 395
    %1481 = vst.msk [vmem:[%s1480] sm:$0x40] %vm1467, %v1466
    %s1482 = scalar_lea.vmem [#allocation0], 458
    %1483 = vst.msk [vmem:[%s1482] sm:$0x80] %vm1467, %v1466
    %s1484 = scalar_lea.vmem [#allocation1], 8
    %v1485 = vld [vmem:[%s1484] sm:$0xff]
    %1486 = vrot.lane.b32.xlu0 %v1485, 60
    %v1487 = vpop.permute.xlu0 %1486
    %vm1488 = vcmask 31744
    %s1489 = scalar_lea.vmem [#allocation0], 49
    %1490 = vst.msk [vmem:[%s1489] sm:$0x1] %vm1488, %v1487
    %s1491 = scalar_lea.vmem [#allocation0], 112
    %1492 = vst.msk [vmem:[%s1491] sm:$0x2] %vm1488, %v1487
    %s1493 = scalar_lea.vmem [#allocation0], 175
    %1494 = vst.msk [vmem:[%s1493] sm:$0x4] %vm1488, %v1487
    %s1495 = scalar_lea.vmem [#allocation0], 238
    %1496 = vst.msk [vmem:[%s1495] sm:$0x8] %vm1488, %v1487
    %s1497 = scalar_lea.vmem [#allocation0], 301
    %1498 = vst.msk [vmem:[%s1497] sm:$0x10] %vm1488, %v1487
    %s1499 = scalar_lea.vmem [#allocation0], 364
    %1500 = vst.msk [vmem:[%s1499] sm:$0x20] %vm1488, %v1487
    %s1501 = scalar_lea.vmem [#allocation0], 427
    %1502 = vst.msk [vmem:[%s1501] sm:$0x40] %vm1488, %v1487
    %s1503 = scalar_lea.vmem [#allocation0], 490
    %1504 = vst.msk [vmem:[%s1503] sm:$0x80] %vm1488, %v1487
    %s1505 = scalar_lea.vmem [#allocation1], 16
    %v1506 = vld [vmem:[%s1505] sm:$0xff]
    %1507 = vrot.lane.b32.xlu0 %v1506, 60
    %v1508 = vpop.permute.xlu0 %1507
    %vm1509 = vcmask 31744
    %s1510 = scalar_lea.vmem [#allocation0], 529
    %1511 = vst.msk [vmem:[%s1510] sm:$0x1] %vm1509, %v1508
    %s1512 = scalar_lea.vmem [#allocation0], 592
    %1513 = vst.msk [vmem:[%s1512] sm:$0x2] %vm1509, %v1508
    %s1514 = scalar_lea.vmem [#allocation0], 655
    %1515 = vst.msk [vmem:[%s1514] sm:$0x4] %vm1509, %v1508
    %s1516 = scalar_lea.vmem [#allocation0], 718
    %1517 = vst.msk [vmem:[%s1516] sm:$0x8] %vm1509, %v1508
    %s1518 = scalar_lea.vmem [#allocation0], 781
    %1519 = vst.msk [vmem:[%s1518] sm:$0x10] %vm1509, %v1508
    %s1520 = scalar_lea.vmem [#allocation0], 844
    %1521 = vst.msk [vmem:[%s1520] sm:$0x20] %vm1509, %v1508
    %s1522 = scalar_lea.vmem [#allocation0], 907
    %1523 = vst.msk [vmem:[%s1522] sm:$0x40] %vm1509, %v1508
    %s1524 = scalar_lea.vmem [#allocation0], 970
    %1525 = vst.msk [vmem:[%s1524] sm:$0x80] %vm1509, %v1508
    %s1526 = scalar_lea.vmem [#allocation1], 24
    %v1527 = vld [vmem:[%s1526] sm:$0xff]
    %1528 = vrot.lane.b32.xlu0 %v1527, 60
    %v1529 = vpop.permute.xlu0 %1528
    %vm1530 = vcmask 31744
    %s1531 = scalar_lea.vmem [#allocation0], 561
    %1532 = vst.msk [vmem:[%s1531] sm:$0x1] %vm1530, %v1529
    %s1533 = scalar_lea.vmem [#allocation0], 624
    %1534 = vst.msk [vmem:[%s1533] sm:$0x2] %vm1530, %v1529
    %s1535 = scalar_lea.vmem [#allocation0], 687
    %1536 = vst.msk [vmem:[%s1535] sm:$0x4] %vm1530, %v1529
    %s1537 = scalar_lea.vmem [#allocation0], 750
    %1538 = vst.msk [vmem:[%s1537] sm:$0x8] %vm1530, %v1529
    %s1539 = scalar_lea.vmem [#allocation0], 813
    %1540 = vst.msk [vmem:[%s1539] sm:$0x10] %vm1530, %v1529
    %s1541 = scalar_lea.vmem [#allocation0], 876
    %1542 = vst.msk [vmem:[%s1541] sm:$0x20] %vm1530, %v1529
    %s1543 = scalar_lea.vmem [#allocation0], 939
    %1544 = vst.msk [vmem:[%s1543] sm:$0x40] %vm1530, %v1529
    %s1545 = scalar_lea.vmem [#allocation0], 1002
    %1546 = vst.msk [vmem:[%s1545] sm:$0x80] %vm1530, %v1529
    %v1547 = vld [vmem:[#allocation1] sm:$0xff]
    %1548 = vrot.lane.b32.xlu0 %v1547, 56
    %v1549 = vpop.permute.xlu0 %1548
    %vm1550 = vcmask 31744
    %s1551 = scalar_lea.vmem [#allocation0], 18
    %1552 = vst.msk [vmem:[%s1551] sm:$0x1] %vm1550, %v1549
    %s1553 = scalar_lea.vmem [#allocation0], 81
    %1554 = vst.msk [vmem:[%s1553] sm:$0x2] %vm1550, %v1549
    %s1555 = scalar_lea.vmem [#allocation0], 144
    %1556 = vst.msk [vmem:[%s1555] sm:$0x4] %vm1550, %v1549
    %s1557 = scalar_lea.vmem [#allocation0], 207
    %1558 = vst.msk [vmem:[%s1557] sm:$0x8] %vm1550, %v1549
    %s1559 = scalar_lea.vmem [#allocation0], 270
    %1560 = vst.msk [vmem:[%s1559] sm:$0x10] %vm1550, %v1549
    %s1561 = scalar_lea.vmem [#allocation0], 333
    %1562 = vst.msk [vmem:[%s1561] sm:$0x20] %vm1550, %v1549
    %s1563 = scalar_lea.vmem [#allocation0], 396
    %1564 = vst.msk [vmem:[%s1563] sm:$0x40] %vm1550, %v1549
    %s1565 = scalar_lea.vmem [#allocation0], 459
    %1566 = vst.msk [vmem:[%s1565] sm:$0x80] %vm1550, %v1549
    %s1567 = scalar_lea.vmem [#allocation1], 8
    %v1568 = vld [vmem:[%s1567] sm:$0xff]
    %1569 = vrot.lane.b32.xlu0 %v1568, 56
    %v1570 = vpop.permute.xlu0 %1569
    %vm1571 = vcmask 31744
    %s1572 = scalar_lea.vmem [#allocation0], 50
    %1573 = vst.msk [vmem:[%s1572] sm:$0x1] %vm1571, %v1570
    %s1574 = scalar_lea.vmem [#allocation0], 113
    %1575 = vst.msk [vmem:[%s1574] sm:$0x2] %vm1571, %v1570
    %s1576 = scalar_lea.vmem [#allocation0], 176
    %1577 = vst.msk [vmem:[%s1576] sm:$0x4] %vm1571, %v1570
    %s1578 = scalar_lea.vmem [#allocation0], 239
    %1579 = vst.msk [vmem:[%s1578] sm:$0x8] %vm1571, %v1570
    %s1580 = scalar_lea.vmem [#allocation0], 302
    %1581 = vst.msk [vmem:[%s1580] sm:$0x10] %vm1571, %v1570
    %s1582 = scalar_lea.vmem [#allocation0], 365
    %1583 = vst.msk [vmem:[%s1582] sm:$0x20] %vm1571, %v1570
    %s1584 = scalar_lea.vmem [#allocation0], 428
    %1585 = vst.msk [vmem:[%s1584] sm:$0x40] %vm1571, %v1570
    %s1586 = scalar_lea.vmem [#allocation0], 491
    %1587 = vst.msk [vmem:[%s1586] sm:$0x80] %vm1571, %v1570
    %s1588 = scalar_lea.vmem [#allocation1], 16
    %v1589 = vld [vmem:[%s1588] sm:$0xff]
    %1590 = vrot.lane.b32.xlu0 %v1589, 56
    %v1591 = vpop.permute.xlu0 %1590
    %vm1592 = vcmask 31744
    %s1593 = scalar_lea.vmem [#allocation0], 530
    %1594 = vst.msk [vmem:[%s1593] sm:$0x1] %vm1592, %v1591
    %s1595 = scalar_lea.vmem [#allocation0], 593
    %1596 = vst.msk [vmem:[%s1595] sm:$0x2] %vm1592, %v1591
    %s1597 = scalar_lea.vmem [#allocation0], 656
    %1598 = vst.msk [vmem:[%s1597] sm:$0x4] %vm1592, %v1591
    %s1599 = scalar_lea.vmem [#allocation0], 719
    %1600 = vst.msk [vmem:[%s1599] sm:$0x8] %vm1592, %v1591
    %s1601 = scalar_lea.vmem [#allocation0], 782
    %1602 = vst.msk [vmem:[%s1601] sm:$0x10] %vm1592, %v1591
    %s1603 = scalar_lea.vmem [#allocation0], 845
    %1604 = vst.msk [vmem:[%s1603] sm:$0x20] %vm1592, %v1591
    %s1605 = scalar_lea.vmem [#allocation0], 908
    %1606 = vst.msk [vmem:[%s1605] sm:$0x40] %vm1592, %v1591
    %s1607 = scalar_lea.vmem [#allocation0], 971
    %1608 = vst.msk [vmem:[%s1607] sm:$0x80] %vm1592, %v1591
    %s1609 = scalar_lea.vmem [#allocation1], 24
    %v1610 = vld [vmem:[%s1609] sm:$0xff]
    %1611 = vrot.lane.b32.xlu0 %v1610, 56
    %v1612 = vpop.permute.xlu0 %1611
    %vm1613 = vcmask 31744
    %s1614 = scalar_lea.vmem [#allocation0], 562
    %1615 = vst.msk [vmem:[%s1614] sm:$0x1] %vm1613, %v1612
    %s1616 = scalar_lea.vmem [#allocation0], 625
    %1617 = vst.msk [vmem:[%s1616] sm:$0x2] %vm1613, %v1612
    %s1618 = scalar_lea.vmem [#allocation0], 688
    %1619 = vst.msk [vmem:[%s1618] sm:$0x4] %vm1613, %v1612
    %s1620 = scalar_lea.vmem [#allocation0], 751
    %1621 = vst.msk [vmem:[%s1620] sm:$0x8] %vm1613, %v1612
    %s1622 = scalar_lea.vmem [#allocation0], 814
    %1623 = vst.msk [vmem:[%s1622] sm:$0x10] %vm1613, %v1612
    %s1624 = scalar_lea.vmem [#allocation0], 877
    %1625 = vst.msk [vmem:[%s1624] sm:$0x20] %vm1613, %v1612
    %s1626 = scalar_lea.vmem [#allocation0], 940
    %1627 = vst.msk [vmem:[%s1626] sm:$0x40] %vm1613, %v1612
    %s1628 = scalar_lea.vmem [#allocation0], 1003
    %1629 = vst.msk [vmem:[%s1628] sm:$0x80] %vm1613, %v1612
    %v1630 = vld [vmem:[#allocation1] sm:$0xff]
    %1631 = vrot.lane.b32.xlu0 %v1630, 52
    %v1632 = vpop.permute.xlu0 %1631
    %vm1633 = vcmask 31744
    %s1634 = scalar_lea.vmem [#allocation0], 19
    %1635 = vst.msk [vmem:[%s1634] sm:$0x1] %vm1633, %v1632
    %s1636 = scalar_lea.vmem [#allocation0], 82
    %1637 = vst.msk [vmem:[%s1636] sm:$0x2] %vm1633, %v1632
    %s1638 = scalar_lea.vmem [#allocation0], 145
    %1639 = vst.msk [vmem:[%s1638] sm:$0x4] %vm1633, %v1632
    %s1640 = scalar_lea.vmem [#allocation0], 208
    %1641 = vst.msk [vmem:[%s1640] sm:$0x8] %vm1633, %v1632
    %s1642 = scalar_lea.vmem [#allocation0], 271
    %1643 = vst.msk [vmem:[%s1642] sm:$0x10] %vm1633, %v1632
    %s1644 = scalar_lea.vmem [#allocation0], 334
    %1645 = vst.msk [vmem:[%s1644] sm:$0x20] %vm1633, %v1632
    %s1646 = scalar_lea.vmem [#allocation0], 397
    %1647 = vst.msk [vmem:[%s1646] sm:$0x40] %vm1633, %v1632
    %s1648 = scalar_lea.vmem [#allocation0], 460
    %1649 = vst.msk [vmem:[%s1648] sm:$0x80] %vm1633, %v1632
    %s1650 = scalar_lea.vmem [#allocation1], 8
    %v1651 = vld [vmem:[%s1650] sm:$0xff]
    %1652 = vrot.lane.b32.xlu0 %v1651, 52
    %v1653 = vpop.permute.xlu0 %1652
    %vm1654 = vcmask 31744
    %s1655 = scalar_lea.vmem [#allocation0], 51
    %1656 = vst.msk [vmem:[%s1655] sm:$0x1] %vm1654, %v1653
    %s1657 = scalar_lea.vmem [#allocation0], 114
    %1658 = vst.msk [vmem:[%s1657] sm:$0x2] %vm1654, %v1653
    %s1659 = scalar_lea.vmem [#allocation0], 177
    %1660 = vst.msk [vmem:[%s1659] sm:$0x4] %vm1654, %v1653
    %s1661 = scalar_lea.vmem [#allocation0], 240
    %1662 = vst.msk [vmem:[%s1661] sm:$0x8] %vm1654, %v1653
    %s1663 = scalar_lea.vmem [#allocation0], 303
    %1664 = vst.msk [vmem:[%s1663] sm:$0x10] %vm1654, %v1653
    %s1665 = scalar_lea.vmem [#allocation0], 366
    %1666 = vst.msk [vmem:[%s1665] sm:$0x20] %vm1654, %v1653
    %s1667 = scalar_lea.vmem [#allocation0], 429
    %1668 = vst.msk [vmem:[%s1667] sm:$0x40] %vm1654, %v1653
    %s1669 = scalar_lea.vmem [#allocation0], 492
    %1670 = vst.msk [vmem:[%s1669] sm:$0x80] %vm1654, %v1653
    %s1671 = scalar_lea.vmem [#allocation1], 16
    %v1672 = vld [vmem:[%s1671] sm:$0xff]
    %1673 = vrot.lane.b32.xlu0 %v1672, 52
    %v1674 = vpop.permute.xlu0 %1673
    %vm1675 = vcmask 31744
    %s1676 = scalar_lea.vmem [#allocation0], 531
    %1677 = vst.msk [vmem:[%s1676] sm:$0x1] %vm1675, %v1674
    %s1678 = scalar_lea.vmem [#allocation0], 594
    %1679 = vst.msk [vmem:[%s1678] sm:$0x2] %vm1675, %v1674
    %s1680 = scalar_lea.vmem [#allocation0], 657
    %1681 = vst.msk [vmem:[%s1680] sm:$0x4] %vm1675, %v1674
    %s1682 = scalar_lea.vmem [#allocation0], 720
    %1683 = vst.msk [vmem:[%s1682] sm:$0x8] %vm1675, %v1674
    %s1684 = scalar_lea.vmem [#allocation0], 783
    %1685 = vst.msk [vmem:[%s1684] sm:$0x10] %vm1675, %v1674
    %s1686 = scalar_lea.vmem [#allocation0], 846
    %1687 = vst.msk [vmem:[%s1686] sm:$0x20] %vm1675, %v1674
    %s1688 = scalar_lea.vmem [#allocation0], 909
    %1689 = vst.msk [vmem:[%s1688] sm:$0x40] %vm1675, %v1674
    %s1690 = scalar_lea.vmem [#allocation0], 972
    %1691 = vst.msk [vmem:[%s1690] sm:$0x80] %vm1675, %v1674
    %s1692 = scalar_lea.vmem [#allocation1], 24
    %v1693 = vld [vmem:[%s1692] sm:$0xff]
    %1694 = vrot.lane.b32.xlu0 %v1693, 52
    %v1695 = vpop.permute.xlu0 %1694
    %vm1696 = vcmask 31744
    %s1697 = scalar_lea.vmem [#allocation0], 563
    %1698 = vst.msk [vmem:[%s1697] sm:$0x1] %vm1696, %v1695
    %s1699 = scalar_lea.vmem [#allocation0], 626
    %1700 = vst.msk [vmem:[%s1699] sm:$0x2] %vm1696, %v1695
    %s1701 = scalar_lea.vmem [#allocation0], 689
    %1702 = vst.msk [vmem:[%s1701] sm:$0x4] %vm1696, %v1695
    %s1703 = scalar_lea.vmem [#allocation0], 752
    %1704 = vst.msk [vmem:[%s1703] sm:$0x8] %vm1696, %v1695
    %s1705 = scalar_lea.vmem [#allocation0], 815
    %1706 = vst.msk [vmem:[%s1705] sm:$0x10] %vm1696, %v1695
    %s1707 = scalar_lea.vmem [#allocation0], 878
    %1708 = vst.msk [vmem:[%s1707] sm:$0x20] %vm1696, %v1695
    %s1709 = scalar_lea.vmem [#allocation0], 941
    %1710 = vst.msk [vmem:[%s1709] sm:$0x40] %vm1696, %v1695
    %s1711 = scalar_lea.vmem [#allocation0], 1004
    %1712 = vst.msk [vmem:[%s1711] sm:$0x80] %vm1696, %v1695
    %v1713 = vld [vmem:[#allocation1] sm:$0xff]
    %1714 = vrot.lane.b32.xlu0 %v1713, 48
    %v1715 = vpop.permute.xlu0 %1714
    %vm1716 = vcmask 31744
    %s1717 = scalar_lea.vmem [#allocation0], 20
    %1718 = vst.msk [vmem:[%s1717] sm:$0x1] %vm1716, %v1715
    %s1719 = scalar_lea.vmem [#allocation0], 83
    %1720 = vst.msk [vmem:[%s1719] sm:$0x2] %vm1716, %v1715
    %s1721 = scalar_lea.vmem [#allocation0], 146
    %1722 = vst.msk [vmem:[%s1721] sm:$0x4] %vm1716, %v1715
    %s1723 = scalar_lea.vmem [#allocation0], 209
    %1724 = vst.msk [vmem:[%s1723] sm:$0x8] %vm1716, %v1715
    %s1725 = scalar_lea.vmem [#allocation0], 272
    %1726 = vst.msk [vmem:[%s1725] sm:$0x10] %vm1716, %v1715
    %s1727 = scalar_lea.vmem [#allocation0], 335
    %1728 = vst.msk [vmem:[%s1727] sm:$0x20] %vm1716, %v1715
    %s1729 = scalar_lea.vmem [#allocation0], 398
    %1730 = vst.msk [vmem:[%s1729] sm:$0x40] %vm1716, %v1715
    %s1731 = scalar_lea.vmem [#allocation0], 461
    %1732 = vst.msk [vmem:[%s1731] sm:$0x80] %vm1716, %v1715
    %s1733 = scalar_lea.vmem [#allocation1], 8
    %v1734 = vld [vmem:[%s1733] sm:$0xff]
    %1735 = vrot.lane.b32.xlu0 %v1734, 48
    %v1736 = vpop.permute.xlu0 %1735
    %vm1737 = vcmask 31744
    %s1738 = scalar_lea.vmem [#allocation0], 52
    %1739 = vst.msk [vmem:[%s1738] sm:$0x1] %vm1737, %v1736
    %s1740 = scalar_lea.vmem [#allocation0], 115
    %1741 = vst.msk [vmem:[%s1740] sm:$0x2] %vm1737, %v1736
    %s1742 = scalar_lea.vmem [#allocation0], 178
    %1743 = vst.msk [vmem:[%s1742] sm:$0x4] %vm1737, %v1736
    %s1744 = scalar_lea.vmem [#allocation0], 241
    %1745 = vst.msk [vmem:[%s1744] sm:$0x8] %vm1737, %v1736
    %s1746 = scalar_lea.vmem [#allocation0], 304
    %1747 = vst.msk [vmem:[%s1746] sm:$0x10] %vm1737, %v1736
    %s1748 = scalar_lea.vmem [#allocation0], 367
    %1749 = vst.msk [vmem:[%s1748] sm:$0x20] %vm1737, %v1736
    %s1750 = scalar_lea.vmem [#allocation0], 430
    %1751 = vst.msk [vmem:[%s1750] sm:$0x40] %vm1737, %v1736
    %s1752 = scalar_lea.vmem [#allocation0], 493
    %1753 = vst.msk [vmem:[%s1752] sm:$0x80] %vm1737, %v1736
    %s1754 = scalar_lea.vmem [#allocation1], 16
    %v1755 = vld [vmem:[%s1754] sm:$0xff]
    %1756 = vrot.lane.b32.xlu0 %v1755, 48
    %v1757 = vpop.permute.xlu0 %1756
    %vm1758 = vcmask 31744
    %s1759 = scalar_lea.vmem [#allocation0], 532
    %1760 = vst.msk [vmem:[%s1759] sm:$0x1] %vm1758, %v1757
    %s1761 = scalar_lea.vmem [#allocation0], 595
    %1762 = vst.msk [vmem:[%s1761] sm:$0x2] %vm1758, %v1757
    %s1763 = scalar_lea.vmem [#allocation0], 658
    %1764 = vst.msk [vmem:[%s1763] sm:$0x4] %vm1758, %v1757
    %s1765 = scalar_lea.vmem [#allocation0], 721
    %1766 = vst.msk [vmem:[%s1765] sm:$0x8] %vm1758, %v1757
    %s1767 = scalar_lea.vmem [#allocation0], 784
    %1768 = vst.msk [vmem:[%s1767] sm:$0x10] %vm1758, %v1757
    %s1769 = scalar_lea.vmem [#allocation0], 847
    %1770 = vst.msk [vmem:[%s1769] sm:$0x20] %vm1758, %v1757
    %s1771 = scalar_lea.vmem [#allocation0], 910
    %1772 = vst.msk [vmem:[%s1771] sm:$0x40] %vm1758, %v1757
    %s1773 = scalar_lea.vmem [#allocation0], 973
    %1774 = vst.msk [vmem:[%s1773] sm:$0x80] %vm1758, %v1757
    %s1775 = scalar_lea.vmem [#allocation1], 24
    %v1776 = vld [vmem:[%s1775] sm:$0xff]
    %1777 = vrot.lane.b32.xlu0 %v1776, 48
    %v1778 = vpop.permute.xlu0 %1777
    %vm1779 = vcmask 31744
    %s1780 = scalar_lea.vmem [#allocation0], 564
    %1781 = vst.msk [vmem:[%s1780] sm:$0x1] %vm1779, %v1778
    %s1782 = scalar_lea.vmem [#allocation0], 627
    %1783 = vst.msk [vmem:[%s1782] sm:$0x2] %vm1779, %v1778
    %s1784 = scalar_lea.vmem [#allocation0], 690
    %1785 = vst.msk [vmem:[%s1784] sm:$0x4] %vm1779, %v1778
    %s1786 = scalar_lea.vmem [#allocation0], 753
    %1787 = vst.msk [vmem:[%s1786] sm:$0x8] %vm1779, %v1778
    %s1788 = scalar_lea.vmem [#allocation0], 816
    %1789 = vst.msk [vmem:[%s1788] sm:$0x10] %vm1779, %v1778
    %s1790 = scalar_lea.vmem [#allocation0], 879
    %1791 = vst.msk [vmem:[%s1790] sm:$0x20] %vm1779, %v1778
    %s1792 = scalar_lea.vmem [#allocation0], 942
    %1793 = vst.msk [vmem:[%s1792] sm:$0x40] %vm1779, %v1778
    %s1794 = scalar_lea.vmem [#allocation0], 1005
    %1795 = vst.msk [vmem:[%s1794] sm:$0x80] %vm1779, %v1778
    %v1796 = vld [vmem:[#allocation1] sm:$0xff]
    %1797 = vrot.lane.b32.xlu0 %v1796, 44
    %v1798 = vpop.permute.xlu0 %1797
    %vm1799 = vcmask 31744
    %s1800 = scalar_lea.vmem [#allocation0], 21
    %1801 = vst.msk [vmem:[%s1800] sm:$0x1] %vm1799, %v1798
    %s1802 = scalar_lea.vmem [#allocation0], 84
    %1803 = vst.msk [vmem:[%s1802] sm:$0x2] %vm1799, %v1798
    %s1804 = scalar_lea.vmem [#allocation0], 147
    %1805 = vst.msk [vmem:[%s1804] sm:$0x4] %vm1799, %v1798
    %s1806 = scalar_lea.vmem [#allocation0], 210
    %1807 = vst.msk [vmem:[%s1806] sm:$0x8] %vm1799, %v1798
    %s1808 = scalar_lea.vmem [#allocation0], 273
    %1809 = vst.msk [vmem:[%s1808] sm:$0x10] %vm1799, %v1798
    %s1810 = scalar_lea.vmem [#allocation0], 336
    %1811 = vst.msk [vmem:[%s1810] sm:$0x20] %vm1799, %v1798
    %s1812 = scalar_lea.vmem [#allocation0], 399
    %1813 = vst.msk [vmem:[%s1812] sm:$0x40] %vm1799, %v1798
    %s1814 = scalar_lea.vmem [#allocation0], 462
    %1815 = vst.msk [vmem:[%s1814] sm:$0x80] %vm1799, %v1798
    %s1816 = scalar_lea.vmem [#allocation1], 8
    %v1817 = vld [vmem:[%s1816] sm:$0xff]
    %1818 = vrot.lane.b32.xlu0 %v1817, 44
    %v1819 = vpop.permute.xlu0 %1818
    %vm1820 = vcmask 31744
    %s1821 = scalar_lea.vmem [#allocation0], 53
    %1822 = vst.msk [vmem:[%s1821] sm:$0x1] %vm1820, %v1819
    %s1823 = scalar_lea.vmem [#allocation0], 116
    %1824 = vst.msk [vmem:[%s1823] sm:$0x2] %vm1820, %v1819
    %s1825 = scalar_lea.vmem [#allocation0], 179
    %1826 = vst.msk [vmem:[%s1825] sm:$0x4] %vm1820, %v1819
    %s1827 = scalar_lea.vmem [#allocation0], 242
    %1828 = vst.msk [vmem:[%s1827] sm:$0x8] %vm1820, %v1819
    %s1829 = scalar_lea.vmem [#allocation0], 305
    %1830 = vst.msk [vmem:[%s1829] sm:$0x10] %vm1820, %v1819
    %s1831 = scalar_lea.vmem [#allocation0], 368
    %1832 = vst.msk [vmem:[%s1831] sm:$0x20] %vm1820, %v1819
    %s1833 = scalar_lea.vmem [#allocation0], 431
    %1834 = vst.msk [vmem:[%s1833] sm:$0x40] %vm1820, %v1819
    %s1835 = scalar_lea.vmem [#allocation0], 494
    %1836 = vst.msk [vmem:[%s1835] sm:$0x80] %vm1820, %v1819
    %s1837 = scalar_lea.vmem [#allocation1], 16
    %v1838 = vld [vmem:[%s1837] sm:$0xff]
    %1839 = vrot.lane.b32.xlu0 %v1838, 44
    %v1840 = vpop.permute.xlu0 %1839
    %vm1841 = vcmask 31744
    %s1842 = scalar_lea.vmem [#allocation0], 533
    %1843 = vst.msk [vmem:[%s1842] sm:$0x1] %vm1841, %v1840
    %s1844 = scalar_lea.vmem [#allocation0], 596
    %1845 = vst.msk [vmem:[%s1844] sm:$0x2] %vm1841, %v1840
    %s1846 = scalar_lea.vmem [#allocation0], 659
    %1847 = vst.msk [vmem:[%s1846] sm:$0x4] %vm1841, %v1840
    %s1848 = scalar_lea.vmem [#allocation0], 722
    %1849 = vst.msk [vmem:[%s1848] sm:$0x8] %vm1841, %v1840
    %s1850 = scalar_lea.vmem [#allocation0], 785
    %1851 = vst.msk [vmem:[%s1850] sm:$0x10] %vm1841, %v1840
    %s1852 = scalar_lea.vmem [#allocation0], 848
    %1853 = vst.msk [vmem:[%s1852] sm:$0x20] %vm1841, %v1840
    %s1854 = scalar_lea.vmem [#allocation0], 911
    %1855 = vst.msk [vmem:[%s1854] sm:$0x40] %vm1841, %v1840
    %s1856 = scalar_lea.vmem [#allocation0], 974
    %1857 = vst.msk [vmem:[%s1856] sm:$0x80] %vm1841, %v1840
    %s1858 = scalar_lea.vmem [#allocation1], 24
    %v1859 = vld [vmem:[%s1858] sm:$0xff]
    %1860 = vrot.lane.b32.xlu0 %v1859, 44
    %v1861 = vpop.permute.xlu0 %1860
    %vm1862 = vcmask 31744
    %s1863 = scalar_lea.vmem [#allocation0], 565
    %1864 = vst.msk [vmem:[%s1863] sm:$0x1] %vm1862, %v1861
    %s1865 = scalar_lea.vmem [#allocation0], 628
    %1866 = vst.msk [vmem:[%s1865] sm:$0x2] %vm1862, %v1861
    %s1867 = scalar_lea.vmem [#allocation0], 691
    %1868 = vst.msk [vmem:[%s1867] sm:$0x4] %vm1862, %v1861
    %s1869 = scalar_lea.vmem [#allocation0], 754
    %1870 = vst.msk [vmem:[%s1869] sm:$0x8] %vm1862, %v1861
    %s1871 = scalar_lea.vmem [#allocation0], 817
    %1872 = vst.msk [vmem:[%s1871] sm:$0x10] %vm1862, %v1861
    %s1873 = scalar_lea.vmem [#allocation0], 880
    %1874 = vst.msk [vmem:[%s1873] sm:$0x20] %vm1862, %v1861
    %s1875 = scalar_lea.vmem [#allocation0], 943
    %1876 = vst.msk [vmem:[%s1875] sm:$0x40] %vm1862, %v1861
    %s1877 = scalar_lea.vmem [#allocation0], 1006
    %1878 = vst.msk [vmem:[%s1877] sm:$0x80] %vm1862, %v1861
    %v1879 = vld [vmem:[#allocation1] sm:$0xff]
    %1880 = vrot.lane.b32.xlu0 %v1879, 40
    %v1881 = vpop.permute.xlu0 %1880
    %vm1882 = vcmask 31744
    %s1883 = scalar_lea.vmem [#allocation0], 22
    %1884 = vst.msk [vmem:[%s1883] sm:$0x1] %vm1882, %v1881
    %s1885 = scalar_lea.vmem [#allocation0], 85
    %1886 = vst.msk [vmem:[%s1885] sm:$0x2] %vm1882, %v1881
    %s1887 = scalar_lea.vmem [#allocation0], 148
    %1888 = vst.msk [vmem:[%s1887] sm:$0x4] %vm1882, %v1881
    %s1889 = scalar_lea.vmem [#allocation0], 211
    %1890 = vst.msk [vmem:[%s1889] sm:$0x8] %vm1882, %v1881
    %s1891 = scalar_lea.vmem [#allocation0], 274
    %1892 = vst.msk [vmem:[%s1891] sm:$0x10] %vm1882, %v1881
    %s1893 = scalar_lea.vmem [#allocation0], 337
    %1894 = vst.msk [vmem:[%s1893] sm:$0x20] %vm1882, %v1881
    %s1895 = scalar_lea.vmem [#allocation0], 400
    %1896 = vst.msk [vmem:[%s1895] sm:$0x40] %vm1882, %v1881
    %s1897 = scalar_lea.vmem [#allocation0], 463
    %1898 = vst.msk [vmem:[%s1897] sm:$0x80] %vm1882, %v1881
    %s1899 = scalar_lea.vmem [#allocation1], 8
    %v1900 = vld [vmem:[%s1899] sm:$0xff]
    %1901 = vrot.lane.b32.xlu0 %v1900, 40
    %v1902 = vpop.permute.xlu0 %1901
    %vm1903 = vcmask 31744
    %s1904 = scalar_lea.vmem [#allocation0], 54
    %1905 = vst.msk [vmem:[%s1904] sm:$0x1] %vm1903, %v1902
    %s1906 = scalar_lea.vmem [#allocation0], 117
    %1907 = vst.msk [vmem:[%s1906] sm:$0x2] %vm1903, %v1902
    %s1908 = scalar_lea.vmem [#allocation0], 180
    %1909 = vst.msk [vmem:[%s1908] sm:$0x4] %vm1903, %v1902
    %s1910 = scalar_lea.vmem [#allocation0], 243
    %1911 = vst.msk [vmem:[%s1910] sm:$0x8] %vm1903, %v1902
    %s1912 = scalar_lea.vmem [#allocation0], 306
    %1913 = vst.msk [vmem:[%s1912] sm:$0x10] %vm1903, %v1902
    %s1914 = scalar_lea.vmem [#allocation0], 369
    %1915 = vst.msk [vmem:[%s1914] sm:$0x20] %vm1903, %v1902
    %s1916 = scalar_lea.vmem [#allocation0], 432
    %1917 = vst.msk [vmem:[%s1916] sm:$0x40] %vm1903, %v1902
    %s1918 = scalar_lea.vmem [#allocation0], 495
    %1919 = vst.msk [vmem:[%s1918] sm:$0x80] %vm1903, %v1902
    %s1920 = scalar_lea.vmem [#allocation1], 16
    %v1921 = vld [vmem:[%s1920] sm:$0xff]
    %1922 = vrot.lane.b32.xlu0 %v1921, 40
    %v1923 = vpop.permute.xlu0 %1922
    %vm1924 = vcmask 31744
    %s1925 = scalar_lea.vmem [#allocation0], 534
    %1926 = vst.msk [vmem:[%s1925] sm:$0x1] %vm1924, %v1923
    %s1927 = scalar_lea.vmem [#allocation0], 597
    %1928 = vst.msk [vmem:[%s1927] sm:$0x2] %vm1924, %v1923
    %s1929 = scalar_lea.vmem [#allocation0], 660
    %1930 = vst.msk [vmem:[%s1929] sm:$0x4] %vm1924, %v1923
    %s1931 = scalar_lea.vmem [#allocation0], 723
    %1932 = vst.msk [vmem:[%s1931] sm:$0x8] %vm1924, %v1923
    %s1933 = scalar_lea.vmem [#allocation0], 786
    %1934 = vst.msk [vmem:[%s1933] sm:$0x10] %vm1924, %v1923
    %s1935 = scalar_lea.vmem [#allocation0], 849
    %1936 = vst.msk [vmem:[%s1935] sm:$0x20] %vm1924, %v1923
    %s1937 = scalar_lea.vmem [#allocation0], 912
    %1938 = vst.msk [vmem:[%s1937] sm:$0x40] %vm1924, %v1923
    %s1939 = scalar_lea.vmem [#allocation0], 975
    %1940 = vst.msk [vmem:[%s1939] sm:$0x80] %vm1924, %v1923
    %s1941 = scalar_lea.vmem [#allocation1], 24
    %v1942 = vld [vmem:[%s1941] sm:$0xff]
    %1943 = vrot.lane.b32.xlu0 %v1942, 40
    %v1944 = vpop.permute.xlu0 %1943
    %vm1945 = vcmask 31744
    %s1946 = scalar_lea.vmem [#allocation0], 566
    %1947 = vst.msk [vmem:[%s1946] sm:$0x1] %vm1945, %v1944
    %s1948 = scalar_lea.vmem [#allocation0], 629
    %1949 = vst.msk [vmem:[%s1948] sm:$0x2] %vm1945, %v1944
    %s1950 = scalar_lea.vmem [#allocation0], 692
    %1951 = vst.msk [vmem:[%s1950] sm:$0x4] %vm1945, %v1944
    %s1952 = scalar_lea.vmem [#allocation0], 755
    %1953 = vst.msk [vmem:[%s1952] sm:$0x8] %vm1945, %v1944
    %s1954 = scalar_lea.vmem [#allocation0], 818
    %1955 = vst.msk [vmem:[%s1954] sm:$0x10] %vm1945, %v1944
    %s1956 = scalar_lea.vmem [#allocation0], 881
    %1957 = vst.msk [vmem:[%s1956] sm:$0x20] %vm1945, %v1944
    %s1958 = scalar_lea.vmem [#allocation0], 944
    %1959 = vst.msk [vmem:[%s1958] sm:$0x40] %vm1945, %v1944
    %s1960 = scalar_lea.vmem [#allocation0], 1007
    %1961 = vst.msk [vmem:[%s1960] sm:$0x80] %vm1945, %v1944
    %v1962 = vld [vmem:[#allocation1] sm:$0xff]
    %1963 = vrot.lane.b32.xlu0 %v1962, 36
    %v1964 = vpop.permute.xlu0 %1963
    %vm1965 = vcmask 31744
    %s1966 = scalar_lea.vmem [#allocation0], 23
    %1967 = vst.msk [vmem:[%s1966] sm:$0x1] %vm1965, %v1964
    %s1968 = scalar_lea.vmem [#allocation0], 86
    %1969 = vst.msk [vmem:[%s1968] sm:$0x2] %vm1965, %v1964
    %s1970 = scalar_lea.vmem [#allocation0], 149
    %1971 = vst.msk [vmem:[%s1970] sm:$0x4] %vm1965, %v1964
    %s1972 = scalar_lea.vmem [#allocation0], 212
    %1973 = vst.msk [vmem:[%s1972] sm:$0x8] %vm1965, %v1964
    %s1974 = scalar_lea.vmem [#allocation0], 275
    %1975 = vst.msk [vmem:[%s1974] sm:$0x10] %vm1965, %v1964
    %s1976 = scalar_lea.vmem [#allocation0], 338
    %1977 = vst.msk [vmem:[%s1976] sm:$0x20] %vm1965, %v1964
    %s1978 = scalar_lea.vmem [#allocation0], 401
    %1979 = vst.msk [vmem:[%s1978] sm:$0x40] %vm1965, %v1964
    %s1980 = scalar_lea.vmem [#allocation0], 464
    %1981 = vst.msk [vmem:[%s1980] sm:$0x80] %vm1965, %v1964
    %s1982 = scalar_lea.vmem [#allocation1], 8
    %v1983 = vld [vmem:[%s1982] sm:$0xff]
    %1984 = vrot.lane.b32.xlu0 %v1983, 36
    %v1985 = vpop.permute.xlu0 %1984
    %vm1986 = vcmask 31744
    %s1987 = scalar_lea.vmem [#allocation0], 55
    %1988 = vst.msk [vmem:[%s1987] sm:$0x1] %vm1986, %v1985
    %s1989 = scalar_lea.vmem [#allocation0], 118
    %1990 = vst.msk [vmem:[%s1989] sm:$0x2] %vm1986, %v1985
    %s1991 = scalar_lea.vmem [#allocation0], 181
    %1992 = vst.msk [vmem:[%s1991] sm:$0x4] %vm1986, %v1985
    %s1993 = scalar_lea.vmem [#allocation0], 244
    %1994 = vst.msk [vmem:[%s1993] sm:$0x8] %vm1986, %v1985
    %s1995 = scalar_lea.vmem [#allocation0], 307
    %1996 = vst.msk [vmem:[%s1995] sm:$0x10] %vm1986, %v1985
    %s1997 = scalar_lea.vmem [#allocation0], 370
    %1998 = vst.msk [vmem:[%s1997] sm:$0x20] %vm1986, %v1985
    %s1999 = scalar_lea.vmem [#allocation0], 433
    %2000 = vst.msk [vmem:[%s1999] sm:$0x40] %vm1986, %v1985
    %s2001 = scalar_lea.vmem [#allocation0], 496
    %2002 = vst.msk [vmem:[%s2001] sm:$0x80] %vm1986, %v1985
    %s2003 = scalar_lea.vmem [#allocation1], 16
    %v2004 = vld [vmem:[%s2003] sm:$0xff]
    %2005 = vrot.lane.b32.xlu0 %v2004, 36
    %v2006 = vpop.permute.xlu0 %2005
    %vm2007 = vcmask 31744
    %s2008 = scalar_lea.vmem [#allocation0], 535
    %2009 = vst.msk [vmem:[%s2008] sm:$0x1] %vm2007, %v2006
    %s2010 = scalar_lea.vmem [#allocation0], 598
    %2011 = vst.msk [vmem:[%s2010] sm:$0x2] %vm2007, %v2006
    %s2012 = scalar_lea.vmem [#allocation0], 661
    %2013 = vst.msk [vmem:[%s2012] sm:$0x4] %vm2007, %v2006
    %s2014 = scalar_lea.vmem [#allocation0], 724
    %2015 = vst.msk [vmem:[%s2014] sm:$0x8] %vm2007, %v2006
    %s2016 = scalar_lea.vmem [#allocation0], 787
    %2017 = vst.msk [vmem:[%s2016] sm:$0x10] %vm2007, %v2006
    %s2018 = scalar_lea.vmem [#allocation0], 850
    %2019 = vst.msk [vmem:[%s2018] sm:$0x20] %vm2007, %v2006
    %s2020 = scalar_lea.vmem [#allocation0], 913
    %2021 = vst.msk [vmem:[%s2020] sm:$0x40] %vm2007, %v2006
    %s2022 = scalar_lea.vmem [#allocation0], 976
    %2023 = vst.msk [vmem:[%s2022] sm:$0x80] %vm2007, %v2006
    %s2024 = scalar_lea.vmem [#allocation1], 24
    %v2025 = vld [vmem:[%s2024] sm:$0xff]
    %2026 = vrot.lane.b32.xlu0 %v2025, 36
    %v2027 = vpop.permute.xlu0 %2026
    %vm2028 = vcmask 31744
    %s2029 = scalar_lea.vmem [#allocation0], 567
    %2030 = vst.msk [vmem:[%s2029] sm:$0x1] %vm2028, %v2027
    %s2031 = scalar_lea.vmem [#allocation0], 630
    %2032 = vst.msk [vmem:[%s2031] sm:$0x2] %vm2028, %v2027
    %s2033 = scalar_lea.vmem [#allocation0], 693
    %2034 = vst.msk [vmem:[%s2033] sm:$0x4] %vm2028, %v2027
    %s2035 = scalar_lea.vmem [#allocation0], 756
    %2036 = vst.msk [vmem:[%s2035] sm:$0x8] %vm2028, %v2027
    %s2037 = scalar_lea.vmem [#allocation0], 819
    %2038 = vst.msk [vmem:[%s2037] sm:$0x10] %vm2028, %v2027
    %s2039 = scalar_lea.vmem [#allocation0], 882
    %2040 = vst.msk [vmem:[%s2039] sm:$0x20] %vm2028, %v2027
    %s2041 = scalar_lea.vmem [#allocation0], 945
    %2042 = vst.msk [vmem:[%s2041] sm:$0x40] %vm2028, %v2027
    %s2043 = scalar_lea.vmem [#allocation0], 1008
    %2044 = vst.msk [vmem:[%s2043] sm:$0x80] %vm2028, %v2027
    %v2045 = vld [vmem:[#allocation1] sm:$0xff]
    %2046 = vrot.lane.b32.xlu0 %v2045, 32
    %v2047 = vpop.permute.xlu0 %2046
    %vm2048 = vcmask 31744
    %s2049 = scalar_lea.vmem [#allocation0], 24
    %2050 = vst.msk [vmem:[%s2049] sm:$0x1] %vm2048, %v2047
    %s2051 = scalar_lea.vmem [#allocation0], 87
    %2052 = vst.msk [vmem:[%s2051] sm:$0x2] %vm2048, %v2047
    %s2053 = scalar_lea.vmem [#allocation0], 150
    %2054 = vst.msk [vmem:[%s2053] sm:$0x4] %vm2048, %v2047
    %s2055 = scalar_lea.vmem [#allocation0], 213
    %2056 = vst.msk [vmem:[%s2055] sm:$0x8] %vm2048, %v2047
    %s2057 = scalar_lea.vmem [#allocation0], 276
    %2058 = vst.msk [vmem:[%s2057] sm:$0x10] %vm2048, %v2047
    %s2059 = scalar_lea.vmem [#allocation0], 339
    %2060 = vst.msk [vmem:[%s2059] sm:$0x20] %vm2048, %v2047
    %s2061 = scalar_lea.vmem [#allocation0], 402
    %2062 = vst.msk [vmem:[%s2061] sm:$0x40] %vm2048, %v2047
    %s2063 = scalar_lea.vmem [#allocation0], 465
    %2064 = vst.msk [vmem:[%s2063] sm:$0x80] %vm2048, %v2047
    %s2065 = scalar_lea.vmem [#allocation1], 8
    %v2066 = vld [vmem:[%s2065] sm:$0xff]
    %2067 = vrot.lane.b32.xlu0 %v2066, 32
    %v2068 = vpop.permute.xlu0 %2067
    %vm2069 = vcmask 31744
    %s2070 = scalar_lea.vmem [#allocation0], 56
    %2071 = vst.msk [vmem:[%s2070] sm:$0x1] %vm2069, %v2068
    %s2072 = scalar_lea.vmem [#allocation0], 119
    %2073 = vst.msk [vmem:[%s2072] sm:$0x2] %vm2069, %v2068
    %s2074 = scalar_lea.vmem [#allocation0], 182
    %2075 = vst.msk [vmem:[%s2074] sm:$0x4] %vm2069, %v2068
    %s2076 = scalar_lea.vmem [#allocation0], 245
    %2077 = vst.msk [vmem:[%s2076] sm:$0x8] %vm2069, %v2068
    %s2078 = scalar_lea.vmem [#allocation0], 308
    %2079 = vst.msk [vmem:[%s2078] sm:$0x10] %vm2069, %v2068
    %s2080 = scalar_lea.vmem [#allocation0], 371
    %2081 = vst.msk [vmem:[%s2080] sm:$0x20] %vm2069, %v2068
    %s2082 = scalar_lea.vmem [#allocation0], 434
    %2083 = vst.msk [vmem:[%s2082] sm:$0x40] %vm2069, %v2068
    %s2084 = scalar_lea.vmem [#allocation0], 497
    %2085 = vst.msk [vmem:[%s2084] sm:$0x80] %vm2069, %v2068
    %s2086 = scalar_lea.vmem [#allocation1], 16
    %v2087 = vld [vmem:[%s2086] sm:$0xff]
    %2088 = vrot.lane.b32.xlu0 %v2087, 32
    %v2089 = vpop.permute.xlu0 %2088
    %vm2090 = vcmask 31744
    %s2091 = scalar_lea.vmem [#allocation0], 536
    %2092 = vst.msk [vmem:[%s2091] sm:$0x1] %vm2090, %v2089
    %s2093 = scalar_lea.vmem [#allocation0], 599
    %2094 = vst.msk [vmem:[%s2093] sm:$0x2] %vm2090, %v2089
    %s2095 = scalar_lea.vmem [#allocation0], 662
    %2096 = vst.msk [vmem:[%s2095] sm:$0x4] %vm2090, %v2089
    %s2097 = scalar_lea.vmem [#allocation0], 725
    %2098 = vst.msk [vmem:[%s2097] sm:$0x8] %vm2090, %v2089
    %s2099 = scalar_lea.vmem [#allocation0], 788
    %2100 = vst.msk [vmem:[%s2099] sm:$0x10] %vm2090, %v2089
    %s2101 = scalar_lea.vmem [#allocation0], 851
    %2102 = vst.msk [vmem:[%s2101] sm:$0x20] %vm2090, %v2089
    %s2103 = scalar_lea.vmem [#allocation0], 914
    %2104 = vst.msk [vmem:[%s2103] sm:$0x40] %vm2090, %v2089
    %s2105 = scalar_lea.vmem [#allocation0], 977
    %2106 = vst.msk [vmem:[%s2105] sm:$0x80] %vm2090, %v2089
    %s2107 = scalar_lea.vmem [#allocation1], 24
    %v2108 = vld [vmem:[%s2107] sm:$0xff]
    %2109 = vrot.lane.b32.xlu0 %v2108, 32
    %v2110 = vpop.permute.xlu0 %2109
    %vm2111 = vcmask 31744
    %s2112 = scalar_lea.vmem [#allocation0], 568
    %2113 = vst.msk [vmem:[%s2112] sm:$0x1] %vm2111, %v2110
    %s2114 = scalar_lea.vmem [#allocation0], 631
    %2115 = vst.msk [vmem:[%s2114] sm:$0x2] %vm2111, %v2110
    %s2116 = scalar_lea.vmem [#allocation0], 694
    %2117 = vst.msk [vmem:[%s2116] sm:$0x4] %vm2111, %v2110
    %s2118 = scalar_lea.vmem [#allocation0], 757
    %2119 = vst.msk [vmem:[%s2118] sm:$0x8] %vm2111, %v2110
    %s2120 = scalar_lea.vmem [#allocation0], 820
    %2121 = vst.msk [vmem:[%s2120] sm:$0x10] %vm2111, %v2110
    %s2122 = scalar_lea.vmem [#allocation0], 883
    %2123 = vst.msk [vmem:[%s2122] sm:$0x20] %vm2111, %v2110
    %s2124 = scalar_lea.vmem [#allocation0], 946
    %2125 = vst.msk [vmem:[%s2124] sm:$0x40] %vm2111, %v2110
    %s2126 = scalar_lea.vmem [#allocation0], 1009
    %2127 = vst.msk [vmem:[%s2126] sm:$0x80] %vm2111, %v2110
    %v2128 = vld [vmem:[#allocation1] sm:$0xff]
    %2129 = vrot.lane.b32.xlu0 %v2128, 28
    %v2130 = vpop.permute.xlu0 %2129
    %vm2131 = vcmask 31744
    %s2132 = scalar_lea.vmem [#allocation0], 25
    %2133 = vst.msk [vmem:[%s2132] sm:$0x1] %vm2131, %v2130
    %s2134 = scalar_lea.vmem [#allocation0], 88
    %2135 = vst.msk [vmem:[%s2134] sm:$0x2] %vm2131, %v2130
    %s2136 = scalar_lea.vmem [#allocation0], 151
    %2137 = vst.msk [vmem:[%s2136] sm:$0x4] %vm2131, %v2130
    %s2138 = scalar_lea.vmem [#allocation0], 214
    %2139 = vst.msk [vmem:[%s2138] sm:$0x8] %vm2131, %v2130
    %s2140 = scalar_lea.vmem [#allocation0], 277
    %2141 = vst.msk [vmem:[%s2140] sm:$0x10] %vm2131, %v2130
    %s2142 = scalar_lea.vmem [#allocation0], 340
    %2143 = vst.msk [vmem:[%s2142] sm:$0x20] %vm2131, %v2130
    %s2144 = scalar_lea.vmem [#allocation0], 403
    %2145 = vst.msk [vmem:[%s2144] sm:$0x40] %vm2131, %v2130
    %s2146 = scalar_lea.vmem [#allocation0], 466
    %2147 = vst.msk [vmem:[%s2146] sm:$0x80] %vm2131, %v2130
    %s2148 = scalar_lea.vmem [#allocation1], 8
    %v2149 = vld [vmem:[%s2148] sm:$0xff]
    %2150 = vrot.lane.b32.xlu0 %v2149, 28
    %v2151 = vpop.permute.xlu0 %2150
    %vm2152 = vcmask 31744
    %s2153 = scalar_lea.vmem [#allocation0], 57
    %2154 = vst.msk [vmem:[%s2153] sm:$0x1] %vm2152, %v2151
    %s2155 = scalar_lea.vmem [#allocation0], 120
    %2156 = vst.msk [vmem:[%s2155] sm:$0x2] %vm2152, %v2151
    %s2157 = scalar_lea.vmem [#allocation0], 183
    %2158 = vst.msk [vmem:[%s2157] sm:$0x4] %vm2152, %v2151
    %s2159 = scalar_lea.vmem [#allocation0], 246
    %2160 = vst.msk [vmem:[%s2159] sm:$0x8] %vm2152, %v2151
    %s2161 = scalar_lea.vmem [#allocation0], 309
    %2162 = vst.msk [vmem:[%s2161] sm:$0x10] %vm2152, %v2151
    %s2163 = scalar_lea.vmem [#allocation0], 372
    %2164 = vst.msk [vmem:[%s2163] sm:$0x20] %vm2152, %v2151
    %s2165 = scalar_lea.vmem [#allocation0], 435
    %2166 = vst.msk [vmem:[%s2165] sm:$0x40] %vm2152, %v2151
    %s2167 = scalar_lea.vmem [#allocation0], 498
    %2168 = vst.msk [vmem:[%s2167] sm:$0x80] %vm2152, %v2151
    %s2169 = scalar_lea.vmem [#allocation1], 16
    %v2170 = vld [vmem:[%s2169] sm:$0xff]
    %2171 = vrot.lane.b32.xlu0 %v2170, 28
    %v2172 = vpop.permute.xlu0 %2171
    %vm2173 = vcmask 31744
    %s2174 = scalar_lea.vmem [#allocation0], 537
    %2175 = vst.msk [vmem:[%s2174] sm:$0x1] %vm2173, %v2172
    %s2176 = scalar_lea.vmem [#allocation0], 600
    %2177 = vst.msk [vmem:[%s2176] sm:$0x2] %vm2173, %v2172
    %s2178 = scalar_lea.vmem [#allocation0], 663
    %2179 = vst.msk [vmem:[%s2178] sm:$0x4] %vm2173, %v2172
    %s2180 = scalar_lea.vmem [#allocation0], 726
    %2181 = vst.msk [vmem:[%s2180] sm:$0x8] %vm2173, %v2172
    %s2182 = scalar_lea.vmem [#allocation0], 789
    %2183 = vst.msk [vmem:[%s2182] sm:$0x10] %vm2173, %v2172
    %s2184 = scalar_lea.vmem [#allocation0], 852
    %2185 = vst.msk [vmem:[%s2184] sm:$0x20] %vm2173, %v2172
    %s2186 = scalar_lea.vmem [#allocation0], 915
    %2187 = vst.msk [vmem:[%s2186] sm:$0x40] %vm2173, %v2172
    %s2188 = scalar_lea.vmem [#allocation0], 978
    %2189 = vst.msk [vmem:[%s2188] sm:$0x80] %vm2173, %v2172
    %s2190 = scalar_lea.vmem [#allocation1], 24
    %v2191 = vld [vmem:[%s2190] sm:$0xff]
    %2192 = vrot.lane.b32.xlu0 %v2191, 28
    %v2193 = vpop.permute.xlu0 %2192
    %vm2194 = vcmask 31744
    %s2195 = scalar_lea.vmem [#allocation0], 569
    %2196 = vst.msk [vmem:[%s2195] sm:$0x1] %vm2194, %v2193
    %s2197 = scalar_lea.vmem [#allocation0], 632
    %2198 = vst.msk [vmem:[%s2197] sm:$0x2] %vm2194, %v2193
    %s2199 = scalar_lea.vmem [#allocation0], 695
    %2200 = vst.msk [vmem:[%s2199] sm:$0x4] %vm2194, %v2193
    %s2201 = scalar_lea.vmem [#allocation0], 758
    %2202 = vst.msk [vmem:[%s2201] sm:$0x8] %vm2194, %v2193
    %s2203 = scalar_lea.vmem [#allocation0], 821
    %2204 = vst.msk [vmem:[%s2203] sm:$0x10] %vm2194, %v2193
    %s2205 = scalar_lea.vmem [#allocation0], 884
    %2206 = vst.msk [vmem:[%s2205] sm:$0x20] %vm2194, %v2193
    %s2207 = scalar_lea.vmem [#allocation0], 947
    %2208 = vst.msk [vmem:[%s2207] sm:$0x40] %vm2194, %v2193
    %s2209 = scalar_lea.vmem [#allocation0], 1010
    %2210 = vst.msk [vmem:[%s2209] sm:$0x80] %vm2194, %v2193
    %v2211 = vld [vmem:[#allocation1] sm:$0xff]
    %2212 = vrot.lane.b32.xlu0 %v2211, 24
    %v2213 = vpop.permute.xlu0 %2212
    %vm2214 = vcmask 31744
    %s2215 = scalar_lea.vmem [#allocation0], 26
    %2216 = vst.msk [vmem:[%s2215] sm:$0x1] %vm2214, %v2213
    %s2217 = scalar_lea.vmem [#allocation0], 89
    %2218 = vst.msk [vmem:[%s2217] sm:$0x2] %vm2214, %v2213
    %s2219 = scalar_lea.vmem [#allocation0], 152
    %2220 = vst.msk [vmem:[%s2219] sm:$0x4] %vm2214, %v2213
    %s2221 = scalar_lea.vmem [#allocation0], 215
    %2222 = vst.msk [vmem:[%s2221] sm:$0x8] %vm2214, %v2213
    %s2223 = scalar_lea.vmem [#allocation0], 278
    %2224 = vst.msk [vmem:[%s2223] sm:$0x10] %vm2214, %v2213
    %s2225 = scalar_lea.vmem [#allocation0], 341
    %2226 = vst.msk [vmem:[%s2225] sm:$0x20] %vm2214, %v2213
    %s2227 = scalar_lea.vmem [#allocation0], 404
    %2228 = vst.msk [vmem:[%s2227] sm:$0x40] %vm2214, %v2213
    %s2229 = scalar_lea.vmem [#allocation0], 467
    %2230 = vst.msk [vmem:[%s2229] sm:$0x80] %vm2214, %v2213
    %s2231 = scalar_lea.vmem [#allocation1], 8
    %v2232 = vld [vmem:[%s2231] sm:$0xff]
    %2233 = vrot.lane.b32.xlu0 %v2232, 24
    %v2234 = vpop.permute.xlu0 %2233
    %vm2235 = vcmask 31744
    %s2236 = scalar_lea.vmem [#allocation0], 58
    %2237 = vst.msk [vmem:[%s2236] sm:$0x1] %vm2235, %v2234
    %s2238 = scalar_lea.vmem [#allocation0], 121
    %2239 = vst.msk [vmem:[%s2238] sm:$0x2] %vm2235, %v2234
    %s2240 = scalar_lea.vmem [#allocation0], 184
    %2241 = vst.msk [vmem:[%s2240] sm:$0x4] %vm2235, %v2234
    %s2242 = scalar_lea.vmem [#allocation0], 247
    %2243 = vst.msk [vmem:[%s2242] sm:$0x8] %vm2235, %v2234
    %s2244 = scalar_lea.vmem [#allocation0], 310
    %2245 = vst.msk [vmem:[%s2244] sm:$0x10] %vm2235, %v2234
    %s2246 = scalar_lea.vmem [#allocation0], 373
    %2247 = vst.msk [vmem:[%s2246] sm:$0x20] %vm2235, %v2234
    %s2248 = scalar_lea.vmem [#allocation0], 436
    %2249 = vst.msk [vmem:[%s2248] sm:$0x40] %vm2235, %v2234
    %s2250 = scalar_lea.vmem [#allocation0], 499
    %2251 = vst.msk [vmem:[%s2250] sm:$0x80] %vm2235, %v2234
    %s2252 = scalar_lea.vmem [#allocation1], 16
    %v2253 = vld [vmem:[%s2252] sm:$0xff]
    %2254 = vrot.lane.b32.xlu0 %v2253, 24
    %v2255 = vpop.permute.xlu0 %2254
    %vm2256 = vcmask 31744
    %s2257 = scalar_lea.vmem [#allocation0], 538
    %2258 = vst.msk [vmem:[%s2257] sm:$0x1] %vm2256, %v2255
    %s2259 = scalar_lea.vmem [#allocation0], 601
    %2260 = vst.msk [vmem:[%s2259] sm:$0x2] %vm2256, %v2255
    %s2261 = scalar_lea.vmem [#allocation0], 664
    %2262 = vst.msk [vmem:[%s2261] sm:$0x4] %vm2256, %v2255
    %s2263 = scalar_lea.vmem [#allocation0], 727
    %2264 = vst.msk [vmem:[%s2263] sm:$0x8] %vm2256, %v2255
    %s2265 = scalar_lea.vmem [#allocation0], 790
    %2266 = vst.msk [vmem:[%s2265] sm:$0x10] %vm2256, %v2255
    %s2267 = scalar_lea.vmem [#allocation0], 853
    %2268 = vst.msk [vmem:[%s2267] sm:$0x20] %vm2256, %v2255
    %s2269 = scalar_lea.vmem [#allocation0], 916
    %2270 = vst.msk [vmem:[%s2269] sm:$0x40] %vm2256, %v2255
    %s2271 = scalar_lea.vmem [#allocation0], 979
    %2272 = vst.msk [vmem:[%s2271] sm:$0x80] %vm2256, %v2255
    %s2273 = scalar_lea.vmem [#allocation1], 24
    %v2274 = vld [vmem:[%s2273] sm:$0xff]
    %2275 = vrot.lane.b32.xlu0 %v2274, 24
    %v2276 = vpop.permute.xlu0 %2275
    %vm2277 = vcmask 31744
    %s2278 = scalar_lea.vmem [#allocation0], 570
    %2279 = vst.msk [vmem:[%s2278] sm:$0x1] %vm2277, %v2276
    %s2280 = scalar_lea.vmem [#allocation0], 633
    %2281 = vst.msk [vmem:[%s2280] sm:$0x2] %vm2277, %v2276
    %s2282 = scalar_lea.vmem [#allocation0], 696
    %2283 = vst.msk [vmem:[%s2282] sm:$0x4] %vm2277, %v2276
    %s2284 = scalar_lea.vmem [#allocation0], 759
    %2285 = vst.msk [vmem:[%s2284] sm:$0x8] %vm2277, %v2276
    %s2286 = scalar_lea.vmem [#allocation0], 822
    %2287 = vst.msk [vmem:[%s2286] sm:$0x10] %vm2277, %v2276
    %s2288 = scalar_lea.vmem [#allocation0], 885
    %2289 = vst.msk [vmem:[%s2288] sm:$0x20] %vm2277, %v2276
    %s2290 = scalar_lea.vmem [#allocation0], 948
    %2291 = vst.msk [vmem:[%s2290] sm:$0x40] %vm2277, %v2276
    %s2292 = scalar_lea.vmem [#allocation0], 1011
    %2293 = vst.msk [vmem:[%s2292] sm:$0x80] %vm2277, %v2276
    %v2294 = vld [vmem:[#allocation1] sm:$0xff]
    %2295 = vrot.lane.b32.xlu0 %v2294, 20
    %v2296 = vpop.permute.xlu0 %2295
    %vm2297 = vcmask 31744
    %s2298 = scalar_lea.vmem [#allocation0], 27
    %2299 = vst.msk [vmem:[%s2298] sm:$0x1] %vm2297, %v2296
    %s2300 = scalar_lea.vmem [#allocation0], 90
    %2301 = vst.msk [vmem:[%s2300] sm:$0x2] %vm2297, %v2296
    %s2302 = scalar_lea.vmem [#allocation0], 153
    %2303 = vst.msk [vmem:[%s2302] sm:$0x4] %vm2297, %v2296
    %s2304 = scalar_lea.vmem [#allocation0], 216
    %2305 = vst.msk [vmem:[%s2304] sm:$0x8] %vm2297, %v2296
    %s2306 = scalar_lea.vmem [#allocation0], 279
    %2307 = vst.msk [vmem:[%s2306] sm:$0x10] %vm2297, %v2296
    %s2308 = scalar_lea.vmem [#allocation0], 342
    %2309 = vst.msk [vmem:[%s2308] sm:$0x20] %vm2297, %v2296
    %s2310 = scalar_lea.vmem [#allocation0], 405
    %2311 = vst.msk [vmem:[%s2310] sm:$0x40] %vm2297, %v2296
    %s2312 = scalar_lea.vmem [#allocation0], 468
    %2313 = vst.msk [vmem:[%s2312] sm:$0x80] %vm2297, %v2296
    %s2314 = scalar_lea.vmem [#allocation1], 8
    %v2315 = vld [vmem:[%s2314] sm:$0xff]
    %2316 = vrot.lane.b32.xlu0 %v2315, 20
    %v2317 = vpop.permute.xlu0 %2316
    %vm2318 = vcmask 31744
    %s2319 = scalar_lea.vmem [#allocation0], 59
    %2320 = vst.msk [vmem:[%s2319] sm:$0x1] %vm2318, %v2317
    %s2321 = scalar_lea.vmem [#allocation0], 122
    %2322 = vst.msk [vmem:[%s2321] sm:$0x2] %vm2318, %v2317
    %s2323 = scalar_lea.vmem [#allocation0], 185
    %2324 = vst.msk [vmem:[%s2323] sm:$0x4] %vm2318, %v2317
    %s2325 = scalar_lea.vmem [#allocation0], 248
    %2326 = vst.msk [vmem:[%s2325] sm:$0x8] %vm2318, %v2317
    %s2327 = scalar_lea.vmem [#allocation0], 311
    %2328 = vst.msk [vmem:[%s2327] sm:$0x10] %vm2318, %v2317
    %s2329 = scalar_lea.vmem [#allocation0], 374
    %2330 = vst.msk [vmem:[%s2329] sm:$0x20] %vm2318, %v2317
    %s2331 = scalar_lea.vmem [#allocation0], 437
    %2332 = vst.msk [vmem:[%s2331] sm:$0x40] %vm2318, %v2317
    %s2333 = scalar_lea.vmem [#allocation0], 500
    %2334 = vst.msk [vmem:[%s2333] sm:$0x80] %vm2318, %v2317
    %s2335 = scalar_lea.vmem [#allocation1], 16
    %v2336 = vld [vmem:[%s2335] sm:$0xff]
    %2337 = vrot.lane.b32.xlu0 %v2336, 20
    %v2338 = vpop.permute.xlu0 %2337
    %vm2339 = vcmask 31744
    %s2340 = scalar_lea.vmem [#allocation0], 539
    %2341 = vst.msk [vmem:[%s2340] sm:$0x1] %vm2339, %v2338
    %s2342 = scalar_lea.vmem [#allocation0], 602
    %2343 = vst.msk [vmem:[%s2342] sm:$0x2] %vm2339, %v2338
    %s2344 = scalar_lea.vmem [#allocation0], 665
    %2345 = vst.msk [vmem:[%s2344] sm:$0x4] %vm2339, %v2338
    %s2346 = scalar_lea.vmem [#allocation0], 728
    %2347 = vst.msk [vmem:[%s2346] sm:$0x8] %vm2339, %v2338
    %s2348 = scalar_lea.vmem [#allocation0], 791
    %2349 = vst.msk [vmem:[%s2348] sm:$0x10] %vm2339, %v2338
    %s2350 = scalar_lea.vmem [#allocation0], 854
    %2351 = vst.msk [vmem:[%s2350] sm:$0x20] %vm2339, %v2338
    %s2352 = scalar_lea.vmem [#allocation0], 917
    %2353 = vst.msk [vmem:[%s2352] sm:$0x40] %vm2339, %v2338
    %s2354 = scalar_lea.vmem [#allocation0], 980
    %2355 = vst.msk [vmem:[%s2354] sm:$0x80] %vm2339, %v2338
    %s2356 = scalar_lea.vmem [#allocation1], 24
    %v2357 = vld [vmem:[%s2356] sm:$0xff]
    %2358 = vrot.lane.b32.xlu0 %v2357, 20
    %v2359 = vpop.permute.xlu0 %2358
    %vm2360 = vcmask 31744
    %s2361 = scalar_lea.vmem [#allocation0], 571
    %2362 = vst.msk [vmem:[%s2361] sm:$0x1] %vm2360, %v2359
    %s2363 = scalar_lea.vmem [#allocation0], 634
    %2364 = vst.msk [vmem:[%s2363] sm:$0x2] %vm2360, %v2359
    %s2365 = scalar_lea.vmem [#allocation0], 697
    %2366 = vst.msk [vmem:[%s2365] sm:$0x4] %vm2360, %v2359
    %s2367 = scalar_lea.vmem [#allocation0], 760
    %2368 = vst.msk [vmem:[%s2367] sm:$0x8] %vm2360, %v2359
    %s2369 = scalar_lea.vmem [#allocation0], 823
    %2370 = vst.msk [vmem:[%s2369] sm:$0x10] %vm2360, %v2359
    %s2371 = scalar_lea.vmem [#allocation0], 886
    %2372 = vst.msk [vmem:[%s2371] sm:$0x20] %vm2360, %v2359
    %s2373 = scalar_lea.vmem [#allocation0], 949
    %2374 = vst.msk [vmem:[%s2373] sm:$0x40] %vm2360, %v2359
    %s2375 = scalar_lea.vmem [#allocation0], 1012
    %2376 = vst.msk [vmem:[%s2375] sm:$0x80] %vm2360, %v2359
    %v2377 = vld [vmem:[#allocation1] sm:$0xff]
    %2378 = vrot.lane.b32.xlu0 %v2377, 16
    %v2379 = vpop.permute.xlu0 %2378
    %vm2380 = vcmask 31744
    %s2381 = scalar_lea.vmem [#allocation0], 28
    %2382 = vst.msk [vmem:[%s2381] sm:$0x1] %vm2380, %v2379
    %s2383 = scalar_lea.vmem [#allocation0], 91
    %2384 = vst.msk [vmem:[%s2383] sm:$0x2] %vm2380, %v2379
    %s2385 = scalar_lea.vmem [#allocation0], 154
    %2386 = vst.msk [vmem:[%s2385] sm:$0x4] %vm2380, %v2379
    %s2387 = scalar_lea.vmem [#allocation0], 217
    %2388 = vst.msk [vmem:[%s2387] sm:$0x8] %vm2380, %v2379
    %s2389 = scalar_lea.vmem [#allocation0], 280
    %2390 = vst.msk [vmem:[%s2389] sm:$0x10] %vm2380, %v2379
    %s2391 = scalar_lea.vmem [#allocation0], 343
    %2392 = vst.msk [vmem:[%s2391] sm:$0x20] %vm2380, %v2379
    %s2393 = scalar_lea.vmem [#allocation0], 406
    %2394 = vst.msk [vmem:[%s2393] sm:$0x40] %vm2380, %v2379
    %s2395 = scalar_lea.vmem [#allocation0], 469
    %2396 = vst.msk [vmem:[%s2395] sm:$0x80] %vm2380, %v2379
    %s2397 = scalar_lea.vmem [#allocation1], 8
    %v2398 = vld [vmem:[%s2397] sm:$0xff]
    %2399 = vrot.lane.b32.xlu0 %v2398, 16
    %v2400 = vpop.permute.xlu0 %2399
    %vm2401 = vcmask 31744
    %s2402 = scalar_lea.vmem [#allocation0], 60
    %2403 = vst.msk [vmem:[%s2402] sm:$0x1] %vm2401, %v2400
    %s2404 = scalar_lea.vmem [#allocation0], 123
    %2405 = vst.msk [vmem:[%s2404] sm:$0x2] %vm2401, %v2400
    %s2406 = scalar_lea.vmem [#allocation0], 186
    %2407 = vst.msk [vmem:[%s2406] sm:$0x4] %vm2401, %v2400
    %s2408 = scalar_lea.vmem [#allocation0], 249
    %2409 = vst.msk [vmem:[%s2408] sm:$0x8] %vm2401, %v2400
    %s2410 = scalar_lea.vmem [#allocation0], 312
    %2411 = vst.msk [vmem:[%s2410] sm:$0x10] %vm2401, %v2400
    %s2412 = scalar_lea.vmem [#allocation0], 375
    %2413 = vst.msk [vmem:[%s2412] sm:$0x20] %vm2401, %v2400
    %s2414 = scalar_lea.vmem [#allocation0], 438
    %2415 = vst.msk [vmem:[%s2414] sm:$0x40] %vm2401, %v2400
    %s2416 = scalar_lea.vmem [#allocation0], 501
    %2417 = vst.msk [vmem:[%s2416] sm:$0x80] %vm2401, %v2400
    %s2418 = scalar_lea.vmem [#allocation1], 16
    %v2419 = vld [vmem:[%s2418] sm:$0xff]
    %2420 = vrot.lane.b32.xlu0 %v2419, 16
    %v2421 = vpop.permute.xlu0 %2420
    %vm2422 = vcmask 31744
    %s2423 = scalar_lea.vmem [#allocation0], 540
    %2424 = vst.msk [vmem:[%s2423] sm:$0x1] %vm2422, %v2421
    %s2425 = scalar_lea.vmem [#allocation0], 603
    %2426 = vst.msk [vmem:[%s2425] sm:$0x2] %vm2422, %v2421
    %s2427 = scalar_lea.vmem [#allocation0], 666
    %2428 = vst.msk [vmem:[%s2427] sm:$0x4] %vm2422, %v2421
    %s2429 = scalar_lea.vmem [#allocation0], 729
    %2430 = vst.msk [vmem:[%s2429] sm:$0x8] %vm2422, %v2421
    %s2431 = scalar_lea.vmem [#allocation0], 792
    %2432 = vst.msk [vmem:[%s2431] sm:$0x10] %vm2422, %v2421
    %s2433 = scalar_lea.vmem [#allocation0], 855
    %2434 = vst.msk [vmem:[%s2433] sm:$0x20] %vm2422, %v2421
    %s2435 = scalar_lea.vmem [#allocation0], 918
    %2436 = vst.msk [vmem:[%s2435] sm:$0x40] %vm2422, %v2421
    %s2437 = scalar_lea.vmem [#allocation0], 981
    %2438 = vst.msk [vmem:[%s2437] sm:$0x80] %vm2422, %v2421
    %s2439 = scalar_lea.vmem [#allocation1], 24
    %v2440 = vld [vmem:[%s2439] sm:$0xff]
    %2441 = vrot.lane.b32.xlu0 %v2440, 16
    %v2442 = vpop.permute.xlu0 %2441
    %vm2443 = vcmask 31744
    %s2444 = scalar_lea.vmem [#allocation0], 572
    %2445 = vst.msk [vmem:[%s2444] sm:$0x1] %vm2443, %v2442
    %s2446 = scalar_lea.vmem [#allocation0], 635
    %2447 = vst.msk [vmem:[%s2446] sm:$0x2] %vm2443, %v2442
    %s2448 = scalar_lea.vmem [#allocation0], 698
    %2449 = vst.msk [vmem:[%s2448] sm:$0x4] %vm2443, %v2442
    %s2450 = scalar_lea.vmem [#allocation0], 761
    %2451 = vst.msk [vmem:[%s2450] sm:$0x8] %vm2443, %v2442
    %s2452 = scalar_lea.vmem [#allocation0], 824
    %2453 = vst.msk [vmem:[%s2452] sm:$0x10] %vm2443, %v2442
    %s2454 = scalar_lea.vmem [#allocation0], 887
    %2455 = vst.msk [vmem:[%s2454] sm:$0x20] %vm2443, %v2442
    %s2456 = scalar_lea.vmem [#allocation0], 950
    %2457 = vst.msk [vmem:[%s2456] sm:$0x40] %vm2443, %v2442
    %s2458 = scalar_lea.vmem [#allocation0], 1013
    %2459 = vst.msk [vmem:[%s2458] sm:$0x80] %vm2443, %v2442
    %v2460 = vld [vmem:[#allocation1] sm:$0xff]
    %2461 = vrot.lane.b32.xlu0 %v2460, 12
    %v2462 = vpop.permute.xlu0 %2461
    %vm2463 = vcmask 31744
    %s2464 = scalar_lea.vmem [#allocation0], 29
    %2465 = vst.msk [vmem:[%s2464] sm:$0x1] %vm2463, %v2462
    %s2466 = scalar_lea.vmem [#allocation0], 92
    %2467 = vst.msk [vmem:[%s2466] sm:$0x2] %vm2463, %v2462
    %s2468 = scalar_lea.vmem [#allocation0], 155
    %2469 = vst.msk [vmem:[%s2468] sm:$0x4] %vm2463, %v2462
    %s2470 = scalar_lea.vmem [#allocation0], 218
    %2471 = vst.msk [vmem:[%s2470] sm:$0x8] %vm2463, %v2462
    %s2472 = scalar_lea.vmem [#allocation0], 281
    %2473 = vst.msk [vmem:[%s2472] sm:$0x10] %vm2463, %v2462
    %s2474 = scalar_lea.vmem [#allocation0], 344
    %2475 = vst.msk [vmem:[%s2474] sm:$0x20] %vm2463, %v2462
    %s2476 = scalar_lea.vmem [#allocation0], 407
    %2477 = vst.msk [vmem:[%s2476] sm:$0x40] %vm2463, %v2462
    %s2478 = scalar_lea.vmem [#allocation0], 470
    %2479 = vst.msk [vmem:[%s2478] sm:$0x80] %vm2463, %v2462
    %s2480 = scalar_lea.vmem [#allocation1], 8
    %v2481 = vld [vmem:[%s2480] sm:$0xff]
    %2482 = vrot.lane.b32.xlu0 %v2481, 12
    %v2483 = vpop.permute.xlu0 %2482
    %vm2484 = vcmask 31744
    %s2485 = scalar_lea.vmem [#allocation0], 61
    %2486 = vst.msk [vmem:[%s2485] sm:$0x1] %vm2484, %v2483
    %s2487 = scalar_lea.vmem [#allocation0], 124
    %2488 = vst.msk [vmem:[%s2487] sm:$0x2] %vm2484, %v2483
    %s2489 = scalar_lea.vmem [#allocation0], 187
    %2490 = vst.msk [vmem:[%s2489] sm:$0x4] %vm2484, %v2483
    %s2491 = scalar_lea.vmem [#allocation0], 250
    %2492 = vst.msk [vmem:[%s2491] sm:$0x8] %vm2484, %v2483
    %s2493 = scalar_lea.vmem [#allocation0], 313
    %2494 = vst.msk [vmem:[%s2493] sm:$0x10] %vm2484, %v2483
    %s2495 = scalar_lea.vmem [#allocation0], 376
    %2496 = vst.msk [vmem:[%s2495] sm:$0x20] %vm2484, %v2483
    %s2497 = scalar_lea.vmem [#allocation0], 439
    %2498 = vst.msk [vmem:[%s2497] sm:$0x40] %vm2484, %v2483
    %s2499 = scalar_lea.vmem [#allocation0], 502
    %2500 = vst.msk [vmem:[%s2499] sm:$0x80] %vm2484, %v2483
    %s2501 = scalar_lea.vmem [#allocation1], 16
    %v2502 = vld [vmem:[%s2501] sm:$0xff]
    %2503 = vrot.lane.b32.xlu0 %v2502, 12
    %v2504 = vpop.permute.xlu0 %2503
    %vm2505 = vcmask 31744
    %s2506 = scalar_lea.vmem [#allocation0], 541
    %2507 = vst.msk [vmem:[%s2506] sm:$0x1] %vm2505, %v2504
    %s2508 = scalar_lea.vmem [#allocation0], 604
    %2509 = vst.msk [vmem:[%s2508] sm:$0x2] %vm2505, %v2504
    %s2510 = scalar_lea.vmem [#allocation0], 667
    %2511 = vst.msk [vmem:[%s2510] sm:$0x4] %vm2505, %v2504
    %s2512 = scalar_lea.vmem [#allocation0], 730
    %2513 = vst.msk [vmem:[%s2512] sm:$0x8] %vm2505, %v2504
    %s2514 = scalar_lea.vmem [#allocation0], 793
    %2515 = vst.msk [vmem:[%s2514] sm:$0x10] %vm2505, %v2504
    %s2516 = scalar_lea.vmem [#allocation0], 856
    %2517 = vst.msk [vmem:[%s2516] sm:$0x20] %vm2505, %v2504
    %s2518 = scalar_lea.vmem [#allocation0], 919
    %2519 = vst.msk [vmem:[%s2518] sm:$0x40] %vm2505, %v2504
    %s2520 = scalar_lea.vmem [#allocation0], 982
    %2521 = vst.msk [vmem:[%s2520] sm:$0x80] %vm2505, %v2504
    %s2522 = scalar_lea.vmem [#allocation1], 24
    %v2523 = vld [vmem:[%s2522] sm:$0xff]
    %2524 = vrot.lane.b32.xlu0 %v2523, 12
    %v2525 = vpop.permute.xlu0 %2524
    %vm2526 = vcmask 31744
    %s2527 = scalar_lea.vmem [#allocation0], 573
    %2528 = vst.msk [vmem:[%s2527] sm:$0x1] %vm2526, %v2525
    %s2529 = scalar_lea.vmem [#allocation0], 636
    %2530 = vst.msk [vmem:[%s2529] sm:$0x2] %vm2526, %v2525
    %s2531 = scalar_lea.vmem [#allocation0], 699
    %2532 = vst.msk [vmem:[%s2531] sm:$0x4] %vm2526, %v2525
    %s2533 = scalar_lea.vmem [#allocation0], 762
    %2534 = vst.msk [vmem:[%s2533] sm:$0x8] %vm2526, %v2525
    %s2535 = scalar_lea.vmem [#allocation0], 825
    %2536 = vst.msk [vmem:[%s2535] sm:$0x10] %vm2526, %v2525
    %s2537 = scalar_lea.vmem [#allocation0], 888
    %2538 = vst.msk [vmem:[%s2537] sm:$0x20] %vm2526, %v2525
    %s2539 = scalar_lea.vmem [#allocation0], 951
    %2540 = vst.msk [vmem:[%s2539] sm:$0x40] %vm2526, %v2525
    %s2541 = scalar_lea.vmem [#allocation0], 1014
    %2542 = vst.msk [vmem:[%s2541] sm:$0x80] %vm2526, %v2525
    %v2543 = vld [vmem:[#allocation1] sm:$0xff]
    %2544 = vrot.lane.b32.xlu0 %v2543, 8
    %v2545 = vpop.permute.xlu0 %2544
    %vm2546 = vcmask 31744
    %s2547 = scalar_lea.vmem [#allocation0], 30
    %2548 = vst.msk [vmem:[%s2547] sm:$0x1] %vm2546, %v2545
    %s2549 = scalar_lea.vmem [#allocation0], 93
    %2550 = vst.msk [vmem:[%s2549] sm:$0x2] %vm2546, %v2545
    %s2551 = scalar_lea.vmem [#allocation0], 156
    %2552 = vst.msk [vmem:[%s2551] sm:$0x4] %vm2546, %v2545
    %s2553 = scalar_lea.vmem [#allocation0], 219
    %2554 = vst.msk [vmem:[%s2553] sm:$0x8] %vm2546, %v2545
    %s2555 = scalar_lea.vmem [#allocation0], 282
    %2556 = vst.msk [vmem:[%s2555] sm:$0x10] %vm2546, %v2545
    %s2557 = scalar_lea.vmem [#allocation0], 345
    %2558 = vst.msk [vmem:[%s2557] sm:$0x20] %vm2546, %v2545
    %s2559 = scalar_lea.vmem [#allocation0], 408
    %2560 = vst.msk [vmem:[%s2559] sm:$0x40] %vm2546, %v2545
    %s2561 = scalar_lea.vmem [#allocation0], 471
    %2562 = vst.msk [vmem:[%s2561] sm:$0x80] %vm2546, %v2545
    %s2563 = scalar_lea.vmem [#allocation1], 8
    %v2564 = vld [vmem:[%s2563] sm:$0xff]
    %2565 = vrot.lane.b32.xlu0 %v2564, 8
    %v2566 = vpop.permute.xlu0 %2565
    %vm2567 = vcmask 31744
    %s2568 = scalar_lea.vmem [#allocation0], 62
    %2569 = vst.msk [vmem:[%s2568] sm:$0x1] %vm2567, %v2566
    %s2570 = scalar_lea.vmem [#allocation0], 125
    %2571 = vst.msk [vmem:[%s2570] sm:$0x2] %vm2567, %v2566
    %s2572 = scalar_lea.vmem [#allocation0], 188
    %2573 = vst.msk [vmem:[%s2572] sm:$0x4] %vm2567, %v2566
    %s2574 = scalar_lea.vmem [#allocation0], 251
    %2575 = vst.msk [vmem:[%s2574] sm:$0x8] %vm2567, %v2566
    %s2576 = scalar_lea.vmem [#allocation0], 314
    %2577 = vst.msk [vmem:[%s2576] sm:$0x10] %vm2567, %v2566
    %s2578 = scalar_lea.vmem [#allocation0], 377
    %2579 = vst.msk [vmem:[%s2578] sm:$0x20] %vm2567, %v2566
    %s2580 = scalar_lea.vmem [#allocation0], 440
    %2581 = vst.msk [vmem:[%s2580] sm:$0x40] %vm2567, %v2566
    %s2582 = scalar_lea.vmem [#allocation0], 503
    %2583 = vst.msk [vmem:[%s2582] sm:$0x80] %vm2567, %v2566
    %s2584 = scalar_lea.vmem [#allocation1], 16
    %v2585 = vld [vmem:[%s2584] sm:$0xff]
    %2586 = vrot.lane.b32.xlu0 %v2585, 8
    %v2587 = vpop.permute.xlu0 %2586
    %vm2588 = vcmask 31744
    %s2589 = scalar_lea.vmem [#allocation0], 542
    %2590 = vst.msk [vmem:[%s2589] sm:$0x1] %vm2588, %v2587
    %s2591 = scalar_lea.vmem [#allocation0], 605
    %2592 = vst.msk [vmem:[%s2591] sm:$0x2] %vm2588, %v2587
    %s2593 = scalar_lea.vmem [#allocation0], 668
    %2594 = vst.msk [vmem:[%s2593] sm:$0x4] %vm2588, %v2587
    %s2595 = scalar_lea.vmem [#allocation0], 731
    %2596 = vst.msk [vmem:[%s2595] sm:$0x8] %vm2588, %v2587
    %s2597 = scalar_lea.vmem [#allocation0], 794
    %2598 = vst.msk [vmem:[%s2597] sm:$0x10] %vm2588, %v2587
    %s2599 = scalar_lea.vmem [#allocation0], 857
    %2600 = vst.msk [vmem:[%s2599] sm:$0x20] %vm2588, %v2587
    %s2601 = scalar_lea.vmem [#allocation0], 920
    %2602 = vst.msk [vmem:[%s2601] sm:$0x40] %vm2588, %v2587
    %s2603 = scalar_lea.vmem [#allocation0], 983
    %2604 = vst.msk [vmem:[%s2603] sm:$0x80] %vm2588, %v2587
    %s2605 = scalar_lea.vmem [#allocation1], 24
    %v2606 = vld [vmem:[%s2605] sm:$0xff]
    %2607 = vrot.lane.b32.xlu0 %v2606, 8
    %v2608 = vpop.permute.xlu0 %2607
    %vm2609 = vcmask 31744
    %s2610 = scalar_lea.vmem [#allocation0], 574
    %2611 = vst.msk [vmem:[%s2610] sm:$0x1] %vm2609, %v2608
    %s2612 = scalar_lea.vmem [#allocation0], 637
    %2613 = vst.msk [vmem:[%s2612] sm:$0x2] %vm2609, %v2608
    %s2614 = scalar_lea.vmem [#allocation0], 700
    %2615 = vst.msk [vmem:[%s2614] sm:$0x4] %vm2609, %v2608
    %s2616 = scalar_lea.vmem [#allocation0], 763
    %2617 = vst.msk [vmem:[%s2616] sm:$0x8] %vm2609, %v2608
    %s2618 = scalar_lea.vmem [#allocation0], 826
    %2619 = vst.msk [vmem:[%s2618] sm:$0x10] %vm2609, %v2608
    %s2620 = scalar_lea.vmem [#allocation0], 889
    %2621 = vst.msk [vmem:[%s2620] sm:$0x20] %vm2609, %v2608
    %s2622 = scalar_lea.vmem [#allocation0], 952
    %2623 = vst.msk [vmem:[%s2622] sm:$0x40] %vm2609, %v2608
    %s2624 = scalar_lea.vmem [#allocation0], 1015
    %2625 = vst.msk [vmem:[%s2624] sm:$0x80] %vm2609, %v2608
    %v2626 = vld [vmem:[#allocation1] sm:$0xff]
    %2627 = vrot.lane.b32.xlu0 %v2626, 4
    %v2628 = vpop.permute.xlu0 %2627
    %vm2629 = vcmask 31744
    %s2630 = scalar_lea.vmem [#allocation0], 31
    %2631 = vst.msk [vmem:[%s2630] sm:$0x1] %vm2629, %v2628
    %s2632 = scalar_lea.vmem [#allocation0], 94
    %2633 = vst.msk [vmem:[%s2632] sm:$0x2] %vm2629, %v2628
    %s2634 = scalar_lea.vmem [#allocation0], 157
    %2635 = vst.msk [vmem:[%s2634] sm:$0x4] %vm2629, %v2628
    %s2636 = scalar_lea.vmem [#allocation0], 220
    %2637 = vst.msk [vmem:[%s2636] sm:$0x8] %vm2629, %v2628
    %s2638 = scalar_lea.vmem [#allocation0], 283
    %2639 = vst.msk [vmem:[%s2638] sm:$0x10] %vm2629, %v2628
    %s2640 = scalar_lea.vmem [#allocation0], 346
    %2641 = vst.msk [vmem:[%s2640] sm:$0x20] %vm2629, %v2628
    %s2642 = scalar_lea.vmem [#allocation0], 409
    %2643 = vst.msk [vmem:[%s2642] sm:$0x40] %vm2629, %v2628
    %s2644 = scalar_lea.vmem [#allocation0], 472
    %2645 = vst.msk [vmem:[%s2644] sm:$0x80] %vm2629, %v2628
    %s2646 = scalar_lea.vmem [#allocation1], 8
    %v2647 = vld [vmem:[%s2646] sm:$0xff]
    %2648 = vrot.lane.b32.xlu0 %v2647, 4
    %v2649 = vpop.permute.xlu0 %2648
    %vm2650 = vcmask 31744
    %s2651 = scalar_lea.vmem [#allocation0], 63
    %2652 = vst.msk [vmem:[%s2651] sm:$0x1] %vm2650, %v2649
    %s2653 = scalar_lea.vmem [#allocation0], 126
    %2654 = vst.msk [vmem:[%s2653] sm:$0x2] %vm2650, %v2649
    %s2655 = scalar_lea.vmem [#allocation0], 189
    %2656 = vst.msk [vmem:[%s2655] sm:$0x4] %vm2650, %v2649
    %s2657 = scalar_lea.vmem [#allocation0], 252
    %2658 = vst.msk [vmem:[%s2657] sm:$0x8] %vm2650, %v2649
    %s2659 = scalar_lea.vmem [#allocation0], 315
    %2660 = vst.msk [vmem:[%s2659] sm:$0x10] %vm2650, %v2649
    %s2661 = scalar_lea.vmem [#allocation0], 378
    %2662 = vst.msk [vmem:[%s2661] sm:$0x20] %vm2650, %v2649
    %s2663 = scalar_lea.vmem [#allocation0], 441
    %2664 = vst.msk [vmem:[%s2663] sm:$0x40] %vm2650, %v2649
    %s2665 = scalar_lea.vmem [#allocation0], 504
    %2666 = vst.msk [vmem:[%s2665] sm:$0x80] %vm2650, %v2649
    %s2667 = scalar_lea.vmem [#allocation1], 16
    %v2668 = vld [vmem:[%s2667] sm:$0xff]
    %2669 = vrot.lane.b32.xlu0 %v2668, 4
    %v2670 = vpop.permute.xlu0 %2669
    %vm2671 = vcmask 31744
    %s2672 = scalar_lea.vmem [#allocation0], 543
    %2673 = vst.msk [vmem:[%s2672] sm:$0x1] %vm2671, %v2670
    %s2674 = scalar_lea.vmem [#allocation0], 606
    %2675 = vst.msk [vmem:[%s2674] sm:$0x2] %vm2671, %v2670
    %s2676 = scalar_lea.vmem [#allocation0], 669
    %2677 = vst.msk [vmem:[%s2676] sm:$0x4] %vm2671, %v2670
    %s2678 = scalar_lea.vmem [#allocation0], 732
    %2679 = vst.msk [vmem:[%s2678] sm:$0x8] %vm2671, %v2670
    %s2680 = scalar_lea.vmem [#allocation0], 795
    %2681 = vst.msk [vmem:[%s2680] sm:$0x10] %vm2671, %v2670
    %s2682 = scalar_lea.vmem [#allocation0], 858
    %2683 = vst.msk [vmem:[%s2682] sm:$0x20] %vm2671, %v2670
    %s2684 = scalar_lea.vmem [#allocation0], 921
    %2685 = vst.msk [vmem:[%s2684] sm:$0x40] %vm2671, %v2670
    %s2686 = scalar_lea.vmem [#allocation0], 984
    %2687 = vst.msk [vmem:[%s2686] sm:$0x80] %vm2671, %v2670
    %s2688 = scalar_lea.vmem [#allocation1], 24
    %v2689 = vld [vmem:[%s2688] sm:$0xff]
    %2690 = vrot.lane.b32.xlu0 %v2689, 4
    %v2691 = vpop.permute.xlu0 %2690
    %vm2692 = vcmask 31744
    %s2693 = scalar_lea.vmem [#allocation0], 575
    %2694 = vst.msk [vmem:[%s2693] sm:$0x1] %vm2692, %v2691
    %s2695 = scalar_lea.vmem [#allocation0], 638
    %2696 = vst.msk [vmem:[%s2695] sm:$0x2] %vm2692, %v2691
    %s2697 = scalar_lea.vmem [#allocation0], 701
    %2698 = vst.msk [vmem:[%s2697] sm:$0x4] %vm2692, %v2691
    %s2699 = scalar_lea.vmem [#allocation0], 764
    %2700 = vst.msk [vmem:[%s2699] sm:$0x8] %vm2692, %v2691
    %s2701 = scalar_lea.vmem [#allocation0], 827
    %2702 = vst.msk [vmem:[%s2701] sm:$0x10] %vm2692, %v2691
    %s2703 = scalar_lea.vmem [#allocation0], 890
    %2704 = vst.msk [vmem:[%s2703] sm:$0x20] %vm2692, %v2691
    %s2705 = scalar_lea.vmem [#allocation0], 953
    %2706 = vst.msk [vmem:[%s2705] sm:$0x40] %vm2692, %v2691
    %s2707 = scalar_lea.vmem [#allocation0], 1016
    %2708 = vst.msk [vmem:[%s2707] sm:$0x80] %vm2692, %v2691
    %s2710 = ssub.s32 256, 1
    %v2711 = vld [vmem:[#allocation0] sm:%s2710]
    %v2712 = vpack.c.bf16 0.0, %v2711
    %s2714 = ssub.s32 16, 1
    %2715 = vst [vmem:[%s1] sm:%s2714] %v2712
    %s2716 = scalar_lea.vmem [#allocation0], 8
    %v2717 = vld [vmem:[%s2716] sm:%s2710]
    %v2718 = vpack.c.bf16 0.0, %v2717
    %s2720 = ssub.s32 16, 1
    %s2721 = scalar_lea.vmem %s1, 4
    %2722 = vst [vmem:[%s2721] sm:%s2720] %v2718
    %s2723 = scalar_lea.vmem [#allocation0], 16
    %v2724 = vld [vmem:[%s2723] sm:%s2710]
    %v2725 = vpack.c.bf16 0.0, %v2724
    %s2727 = ssub.s32 16, 1
    %s2728 = scalar_lea.vmem %s1, 8
    %2729 = vst [vmem:[%s2728] sm:%s2727] %v2725
    %s2730 = scalar_lea.vmem [#allocation0], 24
    %v2731 = vld [vmem:[%s2730] sm:%s2710]
    %v2732 = vpack.c.bf16 0.0, %v2731
    %s2734 = ssub.s32 16, 1
    %s2735 = scalar_lea.vmem %s1, 12
    %2736 = vst [vmem:[%s2735] sm:%s2734] %v2732
    %s2737 = scalar_lea.vmem [#allocation0], 32
    %v2738 = vld [vmem:[%s2737] sm:%s2710]
    %v2739 = vpack.c.bf16 0.0, %v2738
    %s2741 = ssub.s32 16, 1
    %s2742 = scalar_lea.vmem %s1, 16
    %2743 = vst [vmem:[%s2742] sm:%s2741] %v2739
    %s2744 = scalar_lea.vmem [#allocation0], 40
    %v2745 = vld [vmem:[%s2744] sm:%s2710]
    %v2746 = vpack.c.bf16 0.0, %v2745
    %s2748 = ssub.s32 16, 1
    %s2749 = scalar_lea.vmem %s1, 20
    %2750 = vst [vmem:[%s2749] sm:%s2748] %v2746
    %s2751 = scalar_lea.vmem [#allocation0], 48
    %v2752 = vld [vmem:[%s2751] sm:%s2710]
    %v2753 = vpack.c.bf16 0.0, %v2752
    %s2755 = ssub.s32 16, 1
    %s2756 = scalar_lea.vmem %s1, 24
    %2757 = vst [vmem:[%s2756] sm:%s2755] %v2753
    %s2758 = scalar_lea.vmem [#allocation0], 56
    %v2759 = vld [vmem:[%s2758] sm:%s2710]
    %v2760 = vpack.c.bf16 0.0, %v2759
    %s2762 = ssub.s32 16, 1
    %s2763 = scalar_lea.vmem %s1, 28
    %2764 = vst [vmem:[%s2763] sm:%s2762] %v2760
    %s2765 = scalar_lea.vmem [#allocation0], 64
    %v2766 = vld [vmem:[%s2765] sm:%s2710]
    %v2767 = vpack.c.bf16 0.0, %v2766
    %s2769 = ssub.s32 16, 1
    %s2770 = scalar_lea.vmem %s1, 32
    %2771 = vst [vmem:[%s2770] sm:%s2769] %v2767
    %s2772 = scalar_lea.vmem [#allocation0], 72
    %v2773 = vld [vmem:[%s2772] sm:%s2710]
    %v2774 = vpack.c.bf16 0.0, %v2773
    %s2776 = ssub.s32 16, 1
    %s2777 = scalar_lea.vmem %s1, 36
    %2778 = vst [vmem:[%s2777] sm:%s2776] %v2774
    %s2779 = scalar_lea.vmem [#allocation0], 80
    %v2780 = vld [vmem:[%s2779] sm:%s2710]
    %v2781 = vpack.c.bf16 0.0, %v2780
    %s2783 = ssub.s32 16, 1
    %s2784 = scalar_lea.vmem %s1, 40
    %2785 = vst [vmem:[%s2784] sm:%s2783] %v2781
    %s2786 = scalar_lea.vmem [#allocation0], 88
    %v2787 = vld [vmem:[%s2786] sm:%s2710]
    %v2788 = vpack.c.bf16 0.0, %v2787
    %s2790 = ssub.s32 16, 1
    %s2791 = scalar_lea.vmem %s1, 44
    %2792 = vst [vmem:[%s2791] sm:%s2790] %v2788
    %s2793 = scalar_lea.vmem [#allocation0], 96
    %v2794 = vld [vmem:[%s2793] sm:%s2710]
    %v2795 = vpack.c.bf16 0.0, %v2794
    %s2797 = ssub.s32 16, 1
    %s2798 = scalar_lea.vmem %s1, 48
    %2799 = vst [vmem:[%s2798] sm:%s2797] %v2795
    %s2800 = scalar_lea.vmem [#allocation0], 104
    %v2801 = vld [vmem:[%s2800] sm:%s2710]
    %v2802 = vpack.c.bf16 0.0, %v2801
    %s2804 = ssub.s32 16, 1
    %s2805 = scalar_lea.vmem %s1, 52
    %2806 = vst [vmem:[%s2805] sm:%s2804] %v2802
    %s2807 = scalar_lea.vmem [#allocation0], 112
    %v2808 = vld [vmem:[%s2807] sm:%s2710]
    %v2809 = vpack.c.bf16 0.0, %v2808
    %s2811 = ssub.s32 16, 1
    %s2812 = scalar_lea.vmem %s1, 56
    %2813 = vst [vmem:[%s2812] sm:%s2811] %v2809
    %s2814 = scalar_lea.vmem [#allocation0], 120
    %v2815 = vld [vmem:[%s2814] sm:%s2710]
    %v2816 = vpack.c.bf16 0.0, %v2815
    %s2818 = ssub.s32 16, 1
    %s2819 = scalar_lea.vmem %s1, 60
    %2820 = vst [vmem:[%s2819] sm:%s2818] %v2816
    %s2821 = scalar_lea.vmem [#allocation0], 128
    %v2822 = vld [vmem:[%s2821] sm:%s2710]
    %v2823 = vpack.c.bf16 0.0, %v2822
    %s2825 = ssub.s32 16, 1
    %s2826 = scalar_lea.vmem %s1, 64
    %2827 = vst [vmem:[%s2826] sm:%s2825] %v2823
    %s2828 = scalar_lea.vmem [#allocation0], 136
    %v2829 = vld [vmem:[%s2828] sm:%s2710]
    %v2830 = vpack.c.bf16 0.0, %v2829
    %s2832 = ssub.s32 16, 1
    %s2833 = scalar_lea.vmem %s1, 68
    %2834 = vst [vmem:[%s2833] sm:%s2832] %v2830
    %s2835 = scalar_lea.vmem [#allocation0], 144
    %v2836 = vld [vmem:[%s2835] sm:%s2710]
    %v2837 = vpack.c.bf16 0.0, %v2836
    %s2839 = ssub.s32 16, 1
    %s2840 = scalar_lea.vmem %s1, 72
    %2841 = vst [vmem:[%s2840] sm:%s2839] %v2837
    %s2842 = scalar_lea.vmem [#allocation0], 152
    %v2843 = vld [vmem:[%s2842] sm:%s2710]
    %v2844 = vpack.c.bf16 0.0, %v2843
    %s2846 = ssub.s32 16, 1
    %s2847 = scalar_lea.vmem %s1, 76
    %2848 = vst [vmem:[%s2847] sm:%s2846] %v2844
    %s2849 = scalar_lea.vmem [#allocation0], 160
    %v2850 = vld [vmem:[%s2849] sm:%s2710]
    %v2851 = vpack.c.bf16 0.0, %v2850
    %s2853 = ssub.s32 16, 1
    %s2854 = scalar_lea.vmem %s1, 80
    %2855 = vst [vmem:[%s2854] sm:%s2853] %v2851
    %s2856 = scalar_lea.vmem [#allocation0], 168
    %v2857 = vld [vmem:[%s2856] sm:%s2710]
    %v2858 = vpack.c.bf16 0.0, %v2857
    %s2860 = ssub.s32 16, 1
    %s2861 = scalar_lea.vmem %s1, 84
    %2862 = vst [vmem:[%s2861] sm:%s2860] %v2858
    %s2863 = scalar_lea.vmem [#allocation0], 176
    %v2864 = vld [vmem:[%s2863] sm:%s2710]
    %v2865 = vpack.c.bf16 0.0, %v2864
    %s2867 = ssub.s32 16, 1
    %s2868 = scalar_lea.vmem %s1, 88
    %2869 = vst [vmem:[%s2868] sm:%s2867] %v2865
    %s2870 = scalar_lea.vmem [#allocation0], 184
    %v2871 = vld [vmem:[%s2870] sm:%s2710]
    %v2872 = vpack.c.bf16 0.0, %v2871
    %s2874 = ssub.s32 16, 1
    %s2875 = scalar_lea.vmem %s1, 92
    %2876 = vst [vmem:[%s2875] sm:%s2874] %v2872
    %s2877 = scalar_lea.vmem [#allocation0], 192
    %v2878 = vld [vmem:[%s2877] sm:%s2710]
    %v2879 = vpack.c.bf16 0.0, %v2878
    %s2881 = ssub.s32 16, 1
    %s2882 = scalar_lea.vmem %s1, 96
    %2883 = vst [vmem:[%s2882] sm:%s2881] %v2879
    %s2884 = scalar_lea.vmem [#allocation0], 200
    %v2885 = vld [vmem:[%s2884] sm:%s2710]
    %v2886 = vpack.c.bf16 0.0, %v2885
    %s2888 = ssub.s32 16, 1
    %s2889 = scalar_lea.vmem %s1, 100
    %2890 = vst [vmem:[%s2889] sm:%s2888] %v2886
    %s2891 = scalar_lea.vmem [#allocation0], 208
    %v2892 = vld [vmem:[%s2891] sm:%s2710]
    %v2893 = vpack.c.bf16 0.0, %v2892
    %s2895 = ssub.s32 16, 1
    %s2896 = scalar_lea.vmem %s1, 104
    %2897 = vst [vmem:[%s2896] sm:%s2895] %v2893
    %s2898 = scalar_lea.vmem [#allocation0], 216
    %v2899 = vld [vmem:[%s2898] sm:%s2710]
    %v2900 = vpack.c.bf16 0.0, %v2899
    %s2902 = ssub.s32 16, 1
    %s2903 = scalar_lea.vmem %s1, 108
    %2904 = vst [vmem:[%s2903] sm:%s2902] %v2900
    %s2905 = scalar_lea.vmem [#allocation0], 224
    %v2906 = vld [vmem:[%s2905] sm:%s2710]
    %v2907 = vpack.c.bf16 0.0, %v2906
    %s2909 = ssub.s32 16, 1
    %s2910 = scalar_lea.vmem %s1, 112
    %2911 = vst [vmem:[%s2910] sm:%s2909] %v2907
    %s2912 = scalar_lea.vmem [#allocation0], 232
    %v2913 = vld [vmem:[%s2912] sm:%s2710]
    %v2914 = vpack.c.bf16 0.0, %v2913
    %s2916 = ssub.s32 16, 1
    %s2917 = scalar_lea.vmem %s1, 116
    %2918 = vst [vmem:[%s2917] sm:%s2916] %v2914
    %s2919 = scalar_lea.vmem [#allocation0], 240
    %v2920 = vld [vmem:[%s2919] sm:%s2710]
    %v2921 = vpack.c.bf16 0.0, %v2920
    %s2923 = ssub.s32 16, 1
    %s2924 = scalar_lea.vmem %s1, 120
    %2925 = vst [vmem:[%s2924] sm:%s2923] %v2921
    %s2926 = scalar_lea.vmem [#allocation0], 248
    %v2927 = vld [vmem:[%s2926] sm:%s2710]
    %v2928 = vpack.c.bf16 0.0, %v2927
    %s2930 = ssub.s32 16, 1
    %s2931 = scalar_lea.vmem %s1, 124
    %2932 = vst [vmem:[%s2931] sm:%s2930] %v2928
    %s2933 = scalar_lea.vmem [#allocation0], 256
    %v2934 = vld [vmem:[%s2933] sm:%s2710]
    %v2935 = vpack.c.bf16 0.0, %v2934
    %s2937 = ssub.s32 16, 1
    %s2938 = scalar_lea.vmem %s1, 128
    %2939 = vst [vmem:[%s2938] sm:%s2937] %v2935
    %s2940 = scalar_lea.vmem [#allocation0], 264
    %v2941 = vld [vmem:[%s2940] sm:%s2710]
    %v2942 = vpack.c.bf16 0.0, %v2941
    %s2944 = ssub.s32 16, 1
    %s2945 = scalar_lea.vmem %s1, 132
    %2946 = vst [vmem:[%s2945] sm:%s2944] %v2942
    %s2947 = scalar_lea.vmem [#allocation0], 272
    %v2948 = vld [vmem:[%s2947] sm:%s2710]
    %v2949 = vpack.c.bf16 0.0, %v2948
    %s2951 = ssub.s32 16, 1
    %s2952 = scalar_lea.vmem %s1, 136
    %2953 = vst [vmem:[%s2952] sm:%s2951] %v2949
    %s2954 = scalar_lea.vmem [#allocation0], 280
    %v2955 = vld [vmem:[%s2954] sm:%s2710]
    %v2956 = vpack.c.bf16 0.0, %v2955
    %s2958 = ssub.s32 16, 1
    %s2959 = scalar_lea.vmem %s1, 140
    %2960 = vst [vmem:[%s2959] sm:%s2958] %v2956
    %s2961 = scalar_lea.vmem [#allocation0], 288
    %v2962 = vld [vmem:[%s2961] sm:%s2710]
    %v2963 = vpack.c.bf16 0.0, %v2962
    %s2965 = ssub.s32 16, 1
    %s2966 = scalar_lea.vmem %s1, 144
    %2967 = vst [vmem:[%s2966] sm:%s2965] %v2963
    %s2968 = scalar_lea.vmem [#allocation0], 296
    %v2969 = vld [vmem:[%s2968] sm:%s2710]
    %v2970 = vpack.c.bf16 0.0, %v2969
    %s2972 = ssub.s32 16, 1
    %s2973 = scalar_lea.vmem %s1, 148
    %2974 = vst [vmem:[%s2973] sm:%s2972] %v2970
    %s2975 = scalar_lea.vmem [#allocation0], 304
    %v2976 = vld [vmem:[%s2975] sm:%s2710]
    %v2977 = vpack.c.bf16 0.0, %v2976
    %s2979 = ssub.s32 16, 1
    %s2980 = scalar_lea.vmem %s1, 152
    %2981 = vst [vmem:[%s2980] sm:%s2979] %v2977
    %s2982 = scalar_lea.vmem [#allocation0], 312
    %v2983 = vld [vmem:[%s2982] sm:%s2710]
    %v2984 = vpack.c.bf16 0.0, %v2983
    %s2986 = ssub.s32 16, 1
    %s2987 = scalar_lea.vmem %s1, 156
    %2988 = vst [vmem:[%s2987] sm:%s2986] %v2984
    %s2989 = scalar_lea.vmem [#allocation0], 320
    %v2990 = vld [vmem:[%s2989] sm:%s2710]
    %v2991 = vpack.c.bf16 0.0, %v2990
    %s2993 = ssub.s32 16, 1
    %s2994 = scalar_lea.vmem %s1, 160
    %2995 = vst [vmem:[%s2994] sm:%s2993] %v2991
    %s2996 = scalar_lea.vmem [#allocation0], 328
    %v2997 = vld [vmem:[%s2996] sm:%s2710]
    %v2998 = vpack.c.bf16 0.0, %v2997
    %s3000 = ssub.s32 16, 1
    %s3001 = scalar_lea.vmem %s1, 164
    %3002 = vst [vmem:[%s3001] sm:%s3000] %v2998
    %s3003 = scalar_lea.vmem [#allocation0], 336
    %v3004 = vld [vmem:[%s3003] sm:%s2710]
    %v3005 = vpack.c.bf16 0.0, %v3004
    %s3007 = ssub.s32 16, 1
    %s3008 = scalar_lea.vmem %s1, 168
    %3009 = vst [vmem:[%s3008] sm:%s3007] %v3005
    %s3010 = scalar_lea.vmem [#allocation0], 344
    %v3011 = vld [vmem:[%s3010] sm:%s2710]
    %v3012 = vpack.c.bf16 0.0, %v3011
    %s3014 = ssub.s32 16, 1
    %s3015 = scalar_lea.vmem %s1, 172
    %3016 = vst [vmem:[%s3015] sm:%s3014] %v3012
    %s3017 = scalar_lea.vmem [#allocation0], 352
    %v3018 = vld [vmem:[%s3017] sm:%s2710]
    %v3019 = vpack.c.bf16 0.0, %v3018
    %s3021 = ssub.s32 16, 1
    %s3022 = scalar_lea.vmem %s1, 176
    %3023 = vst [vmem:[%s3022] sm:%s3021] %v3019
    %s3024 = scalar_lea.vmem [#allocation0], 360
    %v3025 = vld [vmem:[%s3024] sm:%s2710]
    %v3026 = vpack.c.bf16 0.0, %v3025
    %s3028 = ssub.s32 16, 1
    %s3029 = scalar_lea.vmem %s1, 180
    %3030 = vst [vmem:[%s3029] sm:%s3028] %v3026
    %s3031 = scalar_lea.vmem [#allocation0], 368
    %v3032 = vld [vmem:[%s3031] sm:%s2710]
    %v3033 = vpack.c.bf16 0.0, %v3032
    %s3035 = ssub.s32 16, 1
    %s3036 = scalar_lea.vmem %s1, 184
    %3037 = vst [vmem:[%s3036] sm:%s3035] %v3033
    %s3038 = scalar_lea.vmem [#allocation0], 376
    %v3039 = vld [vmem:[%s3038] sm:%s2710]
    %v3040 = vpack.c.bf16 0.0, %v3039
    %s3042 = ssub.s32 16, 1
    %s3043 = scalar_lea.vmem %s1, 188
    %3044 = vst [vmem:[%s3043] sm:%s3042] %v3040
    %s3045 = scalar_lea.vmem [#allocation0], 384
    %v3046 = vld [vmem:[%s3045] sm:%s2710]
    %v3047 = vpack.c.bf16 0.0, %v3046
    %s3049 = ssub.s32 16, 1
    %s3050 = scalar_lea.vmem %s1, 192
    %3051 = vst [vmem:[%s3050] sm:%s3049] %v3047
    %s3052 = scalar_lea.vmem [#allocation0], 392
    %v3053 = vld [vmem:[%s3052] sm:%s2710]
    %v3054 = vpack.c.bf16 0.0, %v3053
    %s3056 = ssub.s32 16, 1
    %s3057 = scalar_lea.vmem %s1, 196
    %3058 = vst [vmem:[%s3057] sm:%s3056] %v3054
    %s3059 = scalar_lea.vmem [#allocation0], 400
    %v3060 = vld [vmem:[%s3059] sm:%s2710]
    %v3061 = vpack.c.bf16 0.0, %v3060
    %s3063 = ssub.s32 16, 1
    %s3064 = scalar_lea.vmem %s1, 200
    %3065 = vst [vmem:[%s3064] sm:%s3063] %v3061
    %s3066 = scalar_lea.vmem [#allocation0], 408
    %v3067 = vld [vmem:[%s3066] sm:%s2710]
    %v3068 = vpack.c.bf16 0.0, %v3067
    %s3070 = ssub.s32 16, 1
    %s3071 = scalar_lea.vmem %s1, 204
    %3072 = vst [vmem:[%s3071] sm:%s3070] %v3068
    %s3073 = scalar_lea.vmem [#allocation0], 416
    %v3074 = vld [vmem:[%s3073] sm:%s2710]
    %v3075 = vpack.c.bf16 0.0, %v3074
    %s3077 = ssub.s32 16, 1
    %s3078 = scalar_lea.vmem %s1, 208
    %3079 = vst [vmem:[%s3078] sm:%s3077] %v3075
    %s3080 = scalar_lea.vmem [#allocation0], 424
    %v3081 = vld [vmem:[%s3080] sm:%s2710]
    %v3082 = vpack.c.bf16 0.0, %v3081
    %s3084 = ssub.s32 16, 1
    %s3085 = scalar_lea.vmem %s1, 212
    %3086 = vst [vmem:[%s3085] sm:%s3084] %v3082
    %s3087 = scalar_lea.vmem [#allocation0], 432
    %v3088 = vld [vmem:[%s3087] sm:%s2710]
    %v3089 = vpack.c.bf16 0.0, %v3088
    %s3091 = ssub.s32 16, 1
    %s3092 = scalar_lea.vmem %s1, 216
    %3093 = vst [vmem:[%s3092] sm:%s3091] %v3089
    %s3094 = scalar_lea.vmem [#allocation0], 440
    %v3095 = vld [vmem:[%s3094] sm:%s2710]
    %v3096 = vpack.c.bf16 0.0, %v3095
    %s3098 = ssub.s32 16, 1
    %s3099 = scalar_lea.vmem %s1, 220
    %3100 = vst [vmem:[%s3099] sm:%s3098] %v3096
    %s3101 = scalar_lea.vmem [#allocation0], 448
    %v3102 = vld [vmem:[%s3101] sm:%s2710]
    %v3103 = vpack.c.bf16 0.0, %v3102
    %s3105 = ssub.s32 16, 1
    %s3106 = scalar_lea.vmem %s1, 224
    %3107 = vst [vmem:[%s3106] sm:%s3105] %v3103
    %s3108 = scalar_lea.vmem [#allocation0], 456
    %v3109 = vld [vmem:[%s3108] sm:%s2710]
    %v3110 = vpack.c.bf16 0.0, %v3109
    %s3112 = ssub.s32 16, 1
    %s3113 = scalar_lea.vmem %s1, 228
    %3114 = vst [vmem:[%s3113] sm:%s3112] %v3110
    %s3115 = scalar_lea.vmem [#allocation0], 464
    %v3116 = vld [vmem:[%s3115] sm:%s2710]
    %v3117 = vpack.c.bf16 0.0, %v3116
    %s3119 = ssub.s32 16, 1
    %s3120 = scalar_lea.vmem %s1, 232
    %3121 = vst [vmem:[%s3120] sm:%s3119] %v3117
    %s3122 = scalar_lea.vmem [#allocation0], 472
    %v3123 = vld [vmem:[%s3122] sm:%s2710]
    %v3124 = vpack.c.bf16 0.0, %v3123
    %s3126 = ssub.s32 16, 1
    %s3127 = scalar_lea.vmem %s1, 236
    %3128 = vst [vmem:[%s3127] sm:%s3126] %v3124
    %s3129 = scalar_lea.vmem [#allocation0], 480
    %v3130 = vld [vmem:[%s3129] sm:%s2710]
    %v3131 = vpack.c.bf16 0.0, %v3130
    %s3133 = ssub.s32 16, 1
    %s3134 = scalar_lea.vmem %s1, 240
    %3135 = vst [vmem:[%s3134] sm:%s3133] %v3131
    %s3136 = scalar_lea.vmem [#allocation0], 488
    %v3137 = vld [vmem:[%s3136] sm:%s2710]
    %v3138 = vpack.c.bf16 0.0, %v3137
    %s3140 = ssub.s32 16, 1
    %s3141 = scalar_lea.vmem %s1, 244
    %3142 = vst [vmem:[%s3141] sm:%s3140] %v3138
    %s3143 = scalar_lea.vmem [#allocation0], 496
    %v3144 = vld [vmem:[%s3143] sm:%s2710]
    %v3145 = vpack.c.bf16 0.0, %v3144
    %s3147 = ssub.s32 16, 1
    %s3148 = scalar_lea.vmem %s1, 248
    %3149 = vst [vmem:[%s3148] sm:%s3147] %v3145
    %s3150 = scalar_lea.vmem [#allocation0], 504
    %v3151 = vld [vmem:[%s3150] sm:%s2710]
    %v3152 = vpack.c.bf16 0.0, %v3151
    %s3154 = ssub.s32 16, 1
    %s3155 = scalar_lea.vmem %s1, 252
    %3156 = vst [vmem:[%s3155] sm:%s3154] %v3152
    %s3157 = scalar_lea.vmem [#allocation0], 512
    %v3158 = vld [vmem:[%s3157] sm:%s2710]
    %v3159 = vpack.c.bf16 0.0, %v3158
    %s3161 = ssub.s32 16, 1
    %s3162 = scalar_lea.vmem %s1, 256
    %3163 = vst [vmem:[%s3162] sm:%s3161] %v3159
    %s3164 = scalar_lea.vmem [#allocation0], 520
    %v3165 = vld [vmem:[%s3164] sm:%s2710]
    %v3166 = vpack.c.bf16 0.0, %v3165
    %s3168 = ssub.s32 16, 1
    %s3169 = scalar_lea.vmem %s1, 260
    %3170 = vst [vmem:[%s3169] sm:%s3168] %v3166
    %s3171 = scalar_lea.vmem [#allocation0], 528
    %v3172 = vld [vmem:[%s3171] sm:%s2710]
    %v3173 = vpack.c.bf16 0.0, %v3172
    %s3175 = ssub.s32 16, 1
    %s3176 = scalar_lea.vmem %s1, 264
    %3177 = vst [vmem:[%s3176] sm:%s3175] %v3173
    %s3178 = scalar_lea.vmem [#allocation0], 536
    %v3179 = vld [vmem:[%s3178] sm:%s2710]
    %v3180 = vpack.c.bf16 0.0, %v3179
    %s3182 = ssub.s32 16, 1
    %s3183 = scalar_lea.vmem %s1, 268
    %3184 = vst [vmem:[%s3183] sm:%s3182] %v3180
    %s3185 = scalar_lea.vmem [#allocation0], 544
    %v3186 = vld [vmem:[%s3185] sm:%s2710]
    %v3187 = vpack.c.bf16 0.0, %v3186
    %s3189 = ssub.s32 16, 1
    %s3190 = scalar_lea.vmem %s1, 272
    %3191 = vst [vmem:[%s3190] sm:%s3189] %v3187
    %s3192 = scalar_lea.vmem [#allocation0], 552
    %v3193 = vld [vmem:[%s3192] sm:%s2710]
    %v3194 = vpack.c.bf16 0.0, %v3193
    %s3196 = ssub.s32 16, 1
    %s3197 = scalar_lea.vmem %s1, 276
    %3198 = vst [vmem:[%s3197] sm:%s3196] %v3194
    %s3199 = scalar_lea.vmem [#allocation0], 560
    %v3200 = vld [vmem:[%s3199] sm:%s2710]
    %v3201 = vpack.c.bf16 0.0, %v3200
    %s3203 = ssub.s32 16, 1
    %s3204 = scalar_lea.vmem %s1, 280
    %3205 = vst [vmem:[%s3204] sm:%s3203] %v3201
    %s3206 = scalar_lea.vmem [#allocation0], 568
    %v3207 = vld [vmem:[%s3206] sm:%s2710]
    %v3208 = vpack.c.bf16 0.0, %v3207
    %s3210 = ssub.s32 16, 1
    %s3211 = scalar_lea.vmem %s1, 284
    %3212 = vst [vmem:[%s3211] sm:%s3210] %v3208
    %s3213 = scalar_lea.vmem [#allocation0], 576
    %v3214 = vld [vmem:[%s3213] sm:%s2710]
    %v3215 = vpack.c.bf16 0.0, %v3214
    %s3217 = ssub.s32 16, 1
    %s3218 = scalar_lea.vmem %s1, 288
    %3219 = vst [vmem:[%s3218] sm:%s3217] %v3215
    %s3220 = scalar_lea.vmem [#allocation0], 584
    %v3221 = vld [vmem:[%s3220] sm:%s2710]
    %v3222 = vpack.c.bf16 0.0, %v3221
    %s3224 = ssub.s32 16, 1
    %s3225 = scalar_lea.vmem %s1, 292
    %3226 = vst [vmem:[%s3225] sm:%s3224] %v3222
    %s3227 = scalar_lea.vmem [#allocation0], 592
    %v3228 = vld [vmem:[%s3227] sm:%s2710]
    %v3229 = vpack.c.bf16 0.0, %v3228
    %s3231 = ssub.s32 16, 1
    %s3232 = scalar_lea.vmem %s1, 296
    %3233 = vst [vmem:[%s3232] sm:%s3231] %v3229
    %s3234 = scalar_lea.vmem [#allocation0], 600
    %v3235 = vld [vmem:[%s3234] sm:%s2710]
    %v3236 = vpack.c.bf16 0.0, %v3235
    %s3238 = ssub.s32 16, 1
    %s3239 = scalar_lea.vmem %s1, 300
    %3240 = vst [vmem:[%s3239] sm:%s3238] %v3236
    %s3241 = scalar_lea.vmem [#allocation0], 608
    %v3242 = vld [vmem:[%s3241] sm:%s2710]
    %v3243 = vpack.c.bf16 0.0, %v3242
    %s3245 = ssub.s32 16, 1
    %s3246 = scalar_lea.vmem %s1, 304
    %3247 = vst [vmem:[%s3246] sm:%s3245] %v3243
    %s3248 = scalar_lea.vmem [#allocation0], 616
    %v3249 = vld [vmem:[%s3248] sm:%s2710]
    %v3250 = vpack.c.bf16 0.0, %v3249
    %s3252 = ssub.s32 16, 1
    %s3253 = scalar_lea.vmem %s1, 308
    %3254 = vst [vmem:[%s3253] sm:%s3252] %v3250
    %s3255 = scalar_lea.vmem [#allocation0], 624
    %v3256 = vld [vmem:[%s3255] sm:%s2710]
    %v3257 = vpack.c.bf16 0.0, %v3256
    %s3259 = ssub.s32 16, 1
    %s3260 = scalar_lea.vmem %s1, 312
    %3261 = vst [vmem:[%s3260] sm:%s3259] %v3257
    %s3262 = scalar_lea.vmem [#allocation0], 632
    %v3263 = vld [vmem:[%s3262] sm:%s2710]
    %v3264 = vpack.c.bf16 0.0, %v3263
    %s3266 = ssub.s32 16, 1
    %s3267 = scalar_lea.vmem %s1, 316
    %3268 = vst [vmem:[%s3267] sm:%s3266] %v3264
    %s3269 = scalar_lea.vmem [#allocation0], 640
    %v3270 = vld [vmem:[%s3269] sm:%s2710]
    %v3271 = vpack.c.bf16 0.0, %v3270
    %s3273 = ssub.s32 16, 1
    %s3274 = scalar_lea.vmem %s1, 320
    %3275 = vst [vmem:[%s3274] sm:%s3273] %v3271
    %s3276 = scalar_lea.vmem [#allocation0], 648
    %v3277 = vld [vmem:[%s3276] sm:%s2710]
    %v3278 = vpack.c.bf16 0.0, %v3277
    %s3280 = ssub.s32 16, 1
    %s3281 = scalar_lea.vmem %s1, 324
    %3282 = vst [vmem:[%s3281] sm:%s3280] %v3278
    %s3283 = scalar_lea.vmem [#allocation0], 656
    %v3284 = vld [vmem:[%s3283] sm:%s2710]
    %v3285 = vpack.c.bf16 0.0, %v3284
    %s3287 = ssub.s32 16, 1
    %s3288 = scalar_lea.vmem %s1, 328
    %3289 = vst [vmem:[%s3288] sm:%s3287] %v3285
    %s3290 = scalar_lea.vmem [#allocation0], 664
    %v3291 = vld [vmem:[%s3290] sm:%s2710]
    %v3292 = vpack.c.bf16 0.0, %v3291
    %s3294 = ssub.s32 16, 1
    %s3295 = scalar_lea.vmem %s1, 332
    %3296 = vst [vmem:[%s3295] sm:%s3294] %v3292
    %s3297 = scalar_lea.vmem [#allocation0], 672
    %v3298 = vld [vmem:[%s3297] sm:%s2710]
    %v3299 = vpack.c.bf16 0.0, %v3298
    %s3301 = ssub.s32 16, 1
    %s3302 = scalar_lea.vmem %s1, 336
    %3303 = vst [vmem:[%s3302] sm:%s3301] %v3299
    %s3304 = scalar_lea.vmem [#allocation0], 680
    %v3305 = vld [vmem:[%s3304] sm:%s2710]
    %v3306 = vpack.c.bf16 0.0, %v3305
    %s3308 = ssub.s32 16, 1
    %s3309 = scalar_lea.vmem %s1, 340
    %3310 = vst [vmem:[%s3309] sm:%s3308] %v3306
    %s3311 = scalar_lea.vmem [#allocation0], 688
    %v3312 = vld [vmem:[%s3311] sm:%s2710]
    %v3313 = vpack.c.bf16 0.0, %v3312
    %s3315 = ssub.s32 16, 1
    %s3316 = scalar_lea.vmem %s1, 344
    %3317 = vst [vmem:[%s3316] sm:%s3315] %v3313
    %s3318 = scalar_lea.vmem [#allocation0], 696
    %v3319 = vld [vmem:[%s3318] sm:%s2710]
    %v3320 = vpack.c.bf16 0.0, %v3319
    %s3322 = ssub.s32 16, 1
    %s3323 = scalar_lea.vmem %s1, 348
    %3324 = vst [vmem:[%s3323] sm:%s3322] %v3320
    %s3325 = scalar_lea.vmem [#allocation0], 704
    %v3326 = vld [vmem:[%s3325] sm:%s2710]
    %v3327 = vpack.c.bf16 0.0, %v3326
    %s3329 = ssub.s32 16, 1
    %s3330 = scalar_lea.vmem %s1, 352
    %3331 = vst [vmem:[%s3330] sm:%s3329] %v3327
    %s3332 = scalar_lea.vmem [#allocation0], 712
    %v3333 = vld [vmem:[%s3332] sm:%s2710]
    %v3334 = vpack.c.bf16 0.0, %v3333
    %s3336 = ssub.s32 16, 1
    %s3337 = scalar_lea.vmem %s1, 356
    %3338 = vst [vmem:[%s3337] sm:%s3336] %v3334
    %s3339 = scalar_lea.vmem [#allocation0], 720
    %v3340 = vld [vmem:[%s3339] sm:%s2710]
    %v3341 = vpack.c.bf16 0.0, %v3340
    %s3343 = ssub.s32 16, 1
    %s3344 = scalar_lea.vmem %s1, 360
    %3345 = vst [vmem:[%s3344] sm:%s3343] %v3341
    %s3346 = scalar_lea.vmem [#allocation0], 728
    %v3347 = vld [vmem:[%s3346] sm:%s2710]
    %v3348 = vpack.c.bf16 0.0, %v3347
    %s3350 = ssub.s32 16, 1
    %s3351 = scalar_lea.vmem %s1, 364
    %3352 = vst [vmem:[%s3351] sm:%s3350] %v3348
    %s3353 = scalar_lea.vmem [#allocation0], 736
    %v3354 = vld [vmem:[%s3353] sm:%s2710]
    %v3355 = vpack.c.bf16 0.0, %v3354
    %s3357 = ssub.s32 16, 1
    %s3358 = scalar_lea.vmem %s1, 368
    %3359 = vst [vmem:[%s3358] sm:%s3357] %v3355
    %s3360 = scalar_lea.vmem [#allocation0], 744
    %v3361 = vld [vmem:[%s3360] sm:%s2710]
    %v3362 = vpack.c.bf16 0.0, %v3361
    %s3364 = ssub.s32 16, 1
    %s3365 = scalar_lea.vmem %s1, 372
    %3366 = vst [vmem:[%s3365] sm:%s3364] %v3362
    %s3367 = scalar_lea.vmem [#allocation0], 752
    %v3368 = vld [vmem:[%s3367] sm:%s2710]
    %v3369 = vpack.c.bf16 0.0, %v3368
    %s3371 = ssub.s32 16, 1
    %s3372 = scalar_lea.vmem %s1, 376
    %3373 = vst [vmem:[%s3372] sm:%s3371] %v3369
    %s3374 = scalar_lea.vmem [#allocation0], 760
    %v3375 = vld [vmem:[%s3374] sm:%s2710]
    %v3376 = vpack.c.bf16 0.0, %v3375
    %s3378 = ssub.s32 16, 1
    %s3379 = scalar_lea.vmem %s1, 380
    %3380 = vst [vmem:[%s3379] sm:%s3378] %v3376
    %s3381 = scalar_lea.vmem [#allocation0], 768
    %v3382 = vld [vmem:[%s3381] sm:%s2710]
    %v3383 = vpack.c.bf16 0.0, %v3382
    %s3385 = ssub.s32 16, 1
    %s3386 = scalar_lea.vmem %s1, 384
    %3387 = vst [vmem:[%s3386] sm:%s3385] %v3383
    %s3388 = scalar_lea.vmem [#allocation0], 776
    %v3389 = vld [vmem:[%s3388] sm:%s2710]
    %v3390 = vpack.c.bf16 0.0, %v3389
    %s3392 = ssub.s32 16, 1
    %s3393 = scalar_lea.vmem %s1, 388
    %3394 = vst [vmem:[%s3393] sm:%s3392] %v3390
    %s3395 = scalar_lea.vmem [#allocation0], 784
    %v3396 = vld [vmem:[%s3395] sm:%s2710]
    %v3397 = vpack.c.bf16 0.0, %v3396
    %s3399 = ssub.s32 16, 1
    %s3400 = scalar_lea.vmem %s1, 392
    %3401 = vst [vmem:[%s3400] sm:%s3399] %v3397
    %s3402 = scalar_lea.vmem [#allocation0], 792
    %v3403 = vld [vmem:[%s3402] sm:%s2710]
    %v3404 = vpack.c.bf16 0.0, %v3403
    %s3406 = ssub.s32 16, 1
    %s3407 = scalar_lea.vmem %s1, 396
    %3408 = vst [vmem:[%s3407] sm:%s3406] %v3404
    %s3409 = scalar_lea.vmem [#allocation0], 800
    %v3410 = vld [vmem:[%s3409] sm:%s2710]
    %v3411 = vpack.c.bf16 0.0, %v3410
    %s3413 = ssub.s32 16, 1
    %s3414 = scalar_lea.vmem %s1, 400
    %3415 = vst [vmem:[%s3414] sm:%s3413] %v3411
    %s3416 = scalar_lea.vmem [#allocation0], 808
    %v3417 = vld [vmem:[%s3416] sm:%s2710]
    %v3418 = vpack.c.bf16 0.0, %v3417
    %s3420 = ssub.s32 16, 1
    %s3421 = scalar_lea.vmem %s1, 404
    %3422 = vst [vmem:[%s3421] sm:%s3420] %v3418
    %s3423 = scalar_lea.vmem [#allocation0], 816
    %v3424 = vld [vmem:[%s3423] sm:%s2710]
    %v3425 = vpack.c.bf16 0.0, %v3424
    %s3427 = ssub.s32 16, 1
    %s3428 = scalar_lea.vmem %s1, 408
    %3429 = vst [vmem:[%s3428] sm:%s3427] %v3425
    %s3430 = scalar_lea.vmem [#allocation0], 824
    %v3431 = vld [vmem:[%s3430] sm:%s2710]
    %v3432 = vpack.c.bf16 0.0, %v3431
    %s3434 = ssub.s32 16, 1
    %s3435 = scalar_lea.vmem %s1, 412
    %3436 = vst [vmem:[%s3435] sm:%s3434] %v3432
    %s3437 = scalar_lea.vmem [#allocation0], 832
    %v3438 = vld [vmem:[%s3437] sm:%s2710]
    %v3439 = vpack.c.bf16 0.0, %v3438
    %s3441 = ssub.s32 16, 1
    %s3442 = scalar_lea.vmem %s1, 416
    %3443 = vst [vmem:[%s3442] sm:%s3441] %v3439
    %s3444 = scalar_lea.vmem [#allocation0], 840
    %v3445 = vld [vmem:[%s3444] sm:%s2710]
    %v3446 = vpack.c.bf16 0.0, %v3445
    %s3448 = ssub.s32 16, 1
    %s3449 = scalar_lea.vmem %s1, 420
    %3450 = vst [vmem:[%s3449] sm:%s3448] %v3446
    %s3451 = scalar_lea.vmem [#allocation0], 848
    %v3452 = vld [vmem:[%s3451] sm:%s2710]
    %v3453 = vpack.c.bf16 0.0, %v3452
    %s3455 = ssub.s32 16, 1
    %s3456 = scalar_lea.vmem %s1, 424
    %3457 = vst [vmem:[%s3456] sm:%s3455] %v3453
    %s3458 = scalar_lea.vmem [#allocation0], 856
    %v3459 = vld [vmem:[%s3458] sm:%s2710]
    %v3460 = vpack.c.bf16 0.0, %v3459
    %s3462 = ssub.s32 16, 1
    %s3463 = scalar_lea.vmem %s1, 428
    %3464 = vst [vmem:[%s3463] sm:%s3462] %v3460
    %s3465 = scalar_lea.vmem [#allocation0], 864
    %v3466 = vld [vmem:[%s3465] sm:%s2710]
    %v3467 = vpack.c.bf16 0.0, %v3466
    %s3469 = ssub.s32 16, 1
    %s3470 = scalar_lea.vmem %s1, 432
    %3471 = vst [vmem:[%s3470] sm:%s3469] %v3467
    %s3472 = scalar_lea.vmem [#allocation0], 872
    %v3473 = vld [vmem:[%s3472] sm:%s2710]
    %v3474 = vpack.c.bf16 0.0, %v3473
    %s3476 = ssub.s32 16, 1
    %s3477 = scalar_lea.vmem %s1, 436
    %3478 = vst [vmem:[%s3477] sm:%s3476] %v3474
    %s3479 = scalar_lea.vmem [#allocation0], 880
    %v3480 = vld [vmem:[%s3479] sm:%s2710]
    %v3481 = vpack.c.bf16 0.0, %v3480
    %s3483 = ssub.s32 16, 1
    %s3484 = scalar_lea.vmem %s1, 440
    %3485 = vst [vmem:[%s3484] sm:%s3483] %v3481
    %s3486 = scalar_lea.vmem [#allocation0], 888
    %v3487 = vld [vmem:[%s3486] sm:%s2710]
    %v3488 = vpack.c.bf16 0.0, %v3487
    %s3490 = ssub.s32 16, 1
    %s3491 = scalar_lea.vmem %s1, 444
    %3492 = vst [vmem:[%s3491] sm:%s3490] %v3488
    %s3493 = scalar_lea.vmem [#allocation0], 896
    %v3494 = vld [vmem:[%s3493] sm:%s2710]
    %v3495 = vpack.c.bf16 0.0, %v3494
    %s3497 = ssub.s32 16, 1
    %s3498 = scalar_lea.vmem %s1, 448
    %3499 = vst [vmem:[%s3498] sm:%s3497] %v3495
    %s3500 = scalar_lea.vmem [#allocation0], 904
    %v3501 = vld [vmem:[%s3500] sm:%s2710]
    %v3502 = vpack.c.bf16 0.0, %v3501
    %s3504 = ssub.s32 16, 1
    %s3505 = scalar_lea.vmem %s1, 452
    %3506 = vst [vmem:[%s3505] sm:%s3504] %v3502
    %s3507 = scalar_lea.vmem [#allocation0], 912
    %v3508 = vld [vmem:[%s3507] sm:%s2710]
    %v3509 = vpack.c.bf16 0.0, %v3508
    %s3511 = ssub.s32 16, 1
    %s3512 = scalar_lea.vmem %s1, 456
    %3513 = vst [vmem:[%s3512] sm:%s3511] %v3509
    %s3514 = scalar_lea.vmem [#allocation0], 920
    %v3515 = vld [vmem:[%s3514] sm:%s2710]
    %v3516 = vpack.c.bf16 0.0, %v3515
    %s3518 = ssub.s32 16, 1
    %s3519 = scalar_lea.vmem %s1, 460
    %3520 = vst [vmem:[%s3519] sm:%s3518] %v3516
    %s3521 = scalar_lea.vmem [#allocation0], 928
    %v3522 = vld [vmem:[%s3521] sm:%s2710]
    %v3523 = vpack.c.bf16 0.0, %v3522
    %s3525 = ssub.s32 16, 1
    %s3526 = scalar_lea.vmem %s1, 464
    %3527 = vst [vmem:[%s3526] sm:%s3525] %v3523
    %s3528 = scalar_lea.vmem [#allocation0], 936
    %v3529 = vld [vmem:[%s3528] sm:%s2710]
    %v3530 = vpack.c.bf16 0.0, %v3529
    %s3532 = ssub.s32 16, 1
    %s3533 = scalar_lea.vmem %s1, 468
    %3534 = vst [vmem:[%s3533] sm:%s3532] %v3530
    %s3535 = scalar_lea.vmem [#allocation0], 944
    %v3536 = vld [vmem:[%s3535] sm:%s2710]
    %v3537 = vpack.c.bf16 0.0, %v3536
    %s3539 = ssub.s32 16, 1
    %s3540 = scalar_lea.vmem %s1, 472
    %3541 = vst [vmem:[%s3540] sm:%s3539] %v3537
    %s3542 = scalar_lea.vmem [#allocation0], 952
    %v3543 = vld [vmem:[%s3542] sm:%s2710]
    %v3544 = vpack.c.bf16 0.0, %v3543
    %s3546 = ssub.s32 16, 1
    %s3547 = scalar_lea.vmem %s1, 476
    %3548 = vst [vmem:[%s3547] sm:%s3546] %v3544
    %s3549 = scalar_lea.vmem [#allocation0], 960
    %v3550 = vld [vmem:[%s3549] sm:%s2710]
    %v3551 = vpack.c.bf16 0.0, %v3550
    %s3553 = ssub.s32 16, 1
    %s3554 = scalar_lea.vmem %s1, 480
    %3555 = vst [vmem:[%s3554] sm:%s3553] %v3551
    %s3556 = scalar_lea.vmem [#allocation0], 968
    %v3557 = vld [vmem:[%s3556] sm:%s2710]
    %v3558 = vpack.c.bf16 0.0, %v3557
    %s3560 = ssub.s32 16, 1
    %s3561 = scalar_lea.vmem %s1, 484
    %3562 = vst [vmem:[%s3561] sm:%s3560] %v3558
    %s3563 = scalar_lea.vmem [#allocation0], 976
    %v3564 = vld [vmem:[%s3563] sm:%s2710]
    %v3565 = vpack.c.bf16 0.0, %v3564
    %s3567 = ssub.s32 16, 1
    %s3568 = scalar_lea.vmem %s1, 488
    %3569 = vst [vmem:[%s3568] sm:%s3567] %v3565
    %s3570 = scalar_lea.vmem [#allocation0], 984
    %v3571 = vld [vmem:[%s3570] sm:%s2710]
    %v3572 = vpack.c.bf16 0.0, %v3571
    %s3574 = ssub.s32 16, 1
    %s3575 = scalar_lea.vmem %s1, 492
    %3576 = vst [vmem:[%s3575] sm:%s3574] %v3572
    %s3577 = scalar_lea.vmem [#allocation0], 992
    %v3578 = vld [vmem:[%s3577] sm:%s2710]
    %v3579 = vpack.c.bf16 0.0, %v3578
    %s3581 = ssub.s32 16, 1
    %s3582 = scalar_lea.vmem %s1, 496
    %3583 = vst [vmem:[%s3582] sm:%s3581] %v3579
    %s3584 = scalar_lea.vmem [#allocation0], 1000
    %v3585 = vld [vmem:[%s3584] sm:%s2710]
    %v3586 = vpack.c.bf16 0.0, %v3585
    %s3588 = ssub.s32 16, 1
    %s3589 = scalar_lea.vmem %s1, 500
    %3590 = vst [vmem:[%s3589] sm:%s3588] %v3586
    %s3591 = scalar_lea.vmem [#allocation0], 1008
    %v3592 = vld [vmem:[%s3591] sm:%s2710]
    %v3593 = vpack.c.bf16 0.0, %v3592
    %s3595 = ssub.s32 16, 1
    %s3596 = scalar_lea.vmem %s1, 504
    %3597 = vst [vmem:[%s3596] sm:%s3595] %v3593
    %s3598 = scalar_lea.vmem [#allocation0], 1016
    %v3599 = vld [vmem:[%s3598] sm:%s2710]
    %v3600 = vpack.c.bf16 0.0, %v3599
    %s3602 = ssub.s32 16, 1
    %s3603 = scalar_lea.vmem %s1, 508
    %3604 = vst [vmem:[%s3603] sm:%s3602] %v3600

// kernel: improved_dhsa_forward.5
$region0: #{improved_dhsa_forward.5}
  #allocation0 [shape = 'u32[]', space=smem, size = 0x4, offset = 0x4, fixed_abs, tag = 'smem constant byte address 0x4 - core index']
  #allocation1 [shape = 'u32[72,128]{1,0:T(1,128)}', space=vmem, size = 0x9000, scoped, tag = 'internal scratch']
  #allocation2 [shape = 's32[1]{0}', space=sflag, size = 0x4, scoped, tag = 'scoped memory for improved_dhsa_forward.5']
  #allocation3 [shape = 'u8[512]{0}', space=smem, size = 0x200, scoped, tag = 'prefetched SMEM operand 0']
  %s0 = inlined_call_operand.vmem [shape: f32[8], index: 0, kind: input, shape index: {}]
  %s1 = inlined_call_operand.vmem [shape: bf16[8,8,64], index: 1, kind: input, shape index: {}]
  %s2 = inlined_call_operand.vmem [shape: bf16[8,8,64], index: 2, kind: input, shape index: {}]
  %s3 = inlined_call_operand.vmem [shape: bf16[8,8,64], index: 3, kind: input, shape index: {}]
  %s4 = inlined_call_operand.vmem [shape: bf16[8,8,64], index: 4, kind: output, shape index: {}]
  %s5 = sld [smem:[#allocation0]]
  $region22: #{improved_dhsa_forward.5} parent=0
    _
  %s7 = ssub.s32 1, %s5
  %s8 = scalar_select 0, %s7, %s5
  %s10 = sshll.u32 %s0, 4
  %s11 = int_to_ptr.vmem [resolvable:$true] %s10
  %13 = dma.vmem_to_smem %s11, 16, [#allocation3], [#allocation2]
  %15 = dma.done [#allocation2], 16
  %16 = sfence
  // Predicated region
  $region2: #{improved_dhsa_forward.5} parent=0 // pred_check
    _
  $region3: #{improved_dhsa_forward.5} parent=0 // pred_check_branch
    %18 = sbr.rel (0) target = $region5
  $region4: #{improved_dhsa_forward.5} parent=0 // pred_region
    _
  $region5: #{improved_dhsa_forward.5} parent=0 // pred_fallthru
    _
  // Predicated region
  $region6: #{improved_dhsa_forward.5} parent=0 // pred_check
    _
  $region7: #{improved_dhsa_forward.5} parent=0 // pred_check_branch
    %20 = sbr.rel (0) target = $region9
  $region8: #{improved_dhsa_forward.5} parent=0 // pred_region
    _
  $region9: #{improved_dhsa_forward.5} parent=0 // pred_fallthru
    _
  // Predicated region
  $region10: #{improved_dhsa_forward.5} parent=0 // pred_check
    _
  $region11: #{improved_dhsa_forward.5} parent=0 // pred_check_branch
    %22 = sbr.rel (0) target = $region13
  $region12: #{improved_dhsa_forward.5} parent=0 // pred_region
    _
  $region13: #{improved_dhsa_forward.5} parent=0 // pred_fallthru
    _
  %v24 = vld [vmem:[%s1] sm:$0xf]
  %v25 = vld [vmem:[%s1 + $0x4] sm:$0xf]
  %v26 = vld [vmem:[%s1 + $0x8] sm:$0xf]
  %v27 = vld [vmem:[%s1 + $0xc] sm:$0xf]
  %v28 = vld [vmem:[%s1 + $0x10] sm:$0xf]
  %v29 = vld [vmem:[%s1 + $0x14] sm:$0xf]
  %v30 = vld [vmem:[%s1 + $0x18] sm:$0xf]
  %v31 = vld [vmem:[%s1 + $0x1c] sm:$0xf]
  %v32 = vld [vmem:[%s2] sm:$0xf]
  %v33 = vld [vmem:[%s2 + $0x4] sm:$0xf]
  %v34 = vld [vmem:[%s2 + $0x8] sm:$0xf]
  %v35 = vld [vmem:[%s2 + $0xc] sm:$0xf]
  %v36 = vld [vmem:[%s2 + $0x10] sm:$0xf]
  %v37 = vld [vmem:[%s2 + $0x14] sm:$0xf]
  %v38 = vld [vmem:[%s2 + $0x18] sm:$0xf]
  %v39 = vld [vmem:[%s2 + $0x1c] sm:$0xf]
  %v40 = vld [vmem:[%s3] sm:$0xf]
  %v41 = vld [vmem:[%s3 + $0x4] sm:$0xf]
  %v42 = vld [vmem:[%s3 + $0x8] sm:$0xf]
  %v43 = vld [vmem:[%s3 + $0xc] sm:$0xf]
  %v44 = vld [vmem:[%s3 + $0x10] sm:$0xf]
  %v45 = vld [vmem:[%s3 + $0x14] sm:$0xf]
  %v46 = vld [vmem:[%s3 + $0x18] sm:$0xf]
  %v47 = vld [vmem:[%s3 + $0x1c] sm:$0xf]
  %v48 = vunpack.c.l.bf16 %v24
  %v49 = vunpack.c.l.bf16 %v25
  %v50 = vunpack.c.l.bf16 %v26
  %v51 = vunpack.c.l.bf16 %v27
  %v52 = vunpack.c.l.bf16 %v28
  %v53 = vunpack.c.l.bf16 %v29
  %v54 = vunpack.c.l.bf16 %v30
  %v55 = vunpack.c.l.bf16 %v31
  %v56 = vunpack.c.l.bf16 %v32
  %v57 = vunpack.c.l.bf16 %v33
  %v58 = vunpack.c.l.bf16 %v34
  %v59 = vunpack.c.l.bf16 %v35
  %v60 = vunpack.c.l.bf16 %v36
  %v61 = vunpack.c.l.bf16 %v37
  %v62 = vunpack.c.l.bf16 %v38
  %v63 = vunpack.c.l.bf16 %v39
  %v64 = vmul.f32 %v48, %v48
  %v65 = vmul.f32 %v49, %v49
  %v66 = vmul.f32 %v50, %v50
  %v67 = vmul.f32 %v51, %v51
  %v68 = vmul.f32 %v52, %v52
  %v69 = vmul.f32 %v53, %v53
  %v70 = vmul.f32 %v54, %v54
  %v71 = vmul.f32 %v55, %v55
  %vm72 = vcmask 523264
  %v73 = vsel %vm72, %v64, 0.0
  %74 = vadd.xlane.f32.xlu0 %v73
  %v75 = vpop.xlane.xlu0 %74
  %v76 = vsel %vm72, %v65, 0.0
  %77 = vadd.xlane.f32.xlu0 %v76
  %v78 = vpop.xlane.xlu0 %77
  %v79 = vsel %vm72, %v66, 0.0
  %80 = vadd.xlane.f32.xlu0 %v79
  %v81 = vpop.xlane.xlu0 %80
  %v82 = vsel %vm72, %v67, 0.0
  %83 = vadd.xlane.f32.xlu0 %v82
  %v84 = vpop.xlane.xlu0 %83
  %v85 = vsel %vm72, %v68, 0.0
  %86 = vadd.xlane.f32.xlu0 %v85
  %v87 = vpop.xlane.xlu0 %86
  %v88 = vsel %vm72, %v69, 0.0
  %89 = vadd.xlane.f32.xlu0 %v88
  %v90 = vpop.xlane.xlu0 %89
  %v91 = vsel %vm72, %v70, 0.0
  %92 = vadd.xlane.f32.xlu0 %v91
  %v93 = vpop.xlane.xlu0 %92
  %v94 = vsel %vm72, %v71, 0.0
  %95 = vadd.xlane.f32.xlu0 %v94
  %v96 = vpop.xlane.xlu0 %95
  %v97 = vadd.f32 %v75, 1e-12
  %v98 = vadd.f32 %v78, 1e-12
  %v99 = vadd.f32 %v81, 1e-12
  %v100 = vadd.f32 %v84, 1e-12
  %v101 = vadd.f32 %v87, 1e-12
  %v102 = vadd.f32 %v90, 1e-12
  %v103 = vadd.f32 %v93, 1e-12
  %v104 = vadd.f32 %v96, 1e-12
  %v105 = vrsqrt.pop %v97
  %v106 = vmul.f32 %v105, %v97
  %v107 = vmul.f32 %v106, %v105
  %v108 = vmul.f32 0.5, %v107
  %v109 = vsub.f32 1.5, %v108
  %v110 = vmul.f32 %v105, %v109
  %vm111 = vweird.f32 %v97
  %vm112 = vweird.f32 %v105
  %vm113 = vmor %vm111, %vm112
  %v114 = vsel %vm113, %v105, %v110
  %v115 = vrsqrt.pop %v98
  %v116 = vmul.f32 %v115, %v98
  %v117 = vmul.f32 %v116, %v115
  %v118 = vmul.f32 0.5, %v117
  %v119 = vsub.f32 1.5, %v118
  %v120 = vmul.f32 %v115, %v119
  %vm121 = vweird.f32 %v98
  %vm122 = vweird.f32 %v115
  %vm123 = vmor %vm121, %vm122
  %v124 = vsel %vm123, %v115, %v120
  %v125 = vrsqrt.pop %v99
  %v126 = vmul.f32 %v125, %v99
  %v127 = vmul.f32 %v126, %v125
  %v128 = vmul.f32 0.5, %v127
  %v129 = vsub.f32 1.5, %v128
  %v130 = vmul.f32 %v125, %v129
  %vm131 = vweird.f32 %v99
  %vm132 = vweird.f32 %v125
  %vm133 = vmor %vm131, %vm132
  %v134 = vsel %vm133, %v125, %v130
  %v135 = vrsqrt.pop %v100
  %v136 = vmul.f32 %v135, %v100
  %v137 = vmul.f32 %v136, %v135
  %v138 = vmul.f32 0.5, %v137
  %v139 = vsub.f32 1.5, %v138
  %v140 = vmul.f32 %v135, %v139
  %vm141 = vweird.f32 %v100
  %vm142 = vweird.f32 %v135
  %vm143 = vmor %vm141, %vm142
  %v144 = vsel %vm143, %v135, %v140
  %v145 = vrsqrt.pop %v101
  %v146 = vmul.f32 %v145, %v101
  %v147 = vmul.f32 %v146, %v145
  %v148 = vmul.f32 0.5, %v147
  %v149 = vsub.f32 1.5, %v148
  %v150 = vmul.f32 %v145, %v149
  %vm151 = vweird.f32 %v101
  %vm152 = vweird.f32 %v145
  %vm153 = vmor %vm151, %vm152
  %v154 = vsel %vm153, %v145, %v150
  %v155 = vrsqrt.pop %v102
  %v156 = vmul.f32 %v155, %v102
  %v157 = vmul.f32 %v156, %v155
  %v158 = vmul.f32 0.5, %v157
  %v159 = vsub.f32 1.5, %v158
  %v160 = vmul.f32 %v155, %v159
  %vm161 = vweird.f32 %v102
  %vm162 = vweird.f32 %v155
  %vm163 = vmor %vm161, %vm162
  %v164 = vsel %vm163, %v155, %v160
  %v165 = vrsqrt.pop %v103
  %v166 = vmul.f32 %v165, %v103
  %v167 = vmul.f32 %v166, %v165
  %v168 = vmul.f32 0.5, %v167
  %v169 = vsub.f32 1.5, %v168
  %v170 = vmul.f32 %v165, %v169
  %vm171 = vweird.f32 %v103
  %vm172 = vweird.f32 %v165
  %vm173 = vmor %vm171, %vm172
  %v174 = vsel %vm173, %v165, %v170
  %v175 = vrsqrt.pop %v104
  %v176 = vmul.f32 %v175, %v104
  %v177 = vmul.f32 %v176, %v175
  %v178 = vmul.f32 0.5, %v177
  %v179 = vsub.f32 1.5, %v178
  %v180 = vmul.f32 %v175, %v179
  %vm181 = vweird.f32 %v104
  %vm182 = vweird.f32 %v175
  %vm183 = vmor %vm181, %vm182
  %v184 = vsel %vm183, %v175, %v180
  %v185 = vmul.f32 %v56, %v56
  %v186 = vmul.f32 %v57, %v57
  %v187 = vmul.f32 %v58, %v58
  %v188 = vmul.f32 %v59, %v59
  %v189 = vmul.f32 %v60, %v60
  %v190 = vmul.f32 %v61, %v61
  %v191 = vmul.f32 %v62, %v62
  %v192 = vmul.f32 %v63, %v63
  %v193 = vsel %vm72, %v185, 0.0
  %194 = vadd.xlane.f32.xlu0 %v193
  %v195 = vpop.xlane.xlu0 %194
  %v196 = vsel %vm72, %v186, 0.0
  %197 = vadd.xlane.f32.xlu0 %v196
  %v198 = vpop.xlane.xlu0 %197
  %v199 = vsel %vm72, %v187, 0.0
  %200 = vadd.xlane.f32.xlu0 %v199
  %v201 = vpop.xlane.xlu0 %200
  %v202 = vsel %vm72, %v188, 0.0
  %203 = vadd.xlane.f32.xlu0 %v202
  %v204 = vpop.xlane.xlu0 %203
  %v205 = vsel %vm72, %v189, 0.0
  %206 = vadd.xlane.f32.xlu0 %v205
  %v207 = vpop.xlane.xlu0 %206
  %v208 = vsel %vm72, %v190, 0.0
  %209 = vadd.xlane.f32.xlu0 %v208
  %v210 = vpop.xlane.xlu0 %209
  %v211 = vsel %vm72, %v191, 0.0
  %212 = vadd.xlane.f32.xlu0 %v211
  %v213 = vpop.xlane.xlu0 %212
  %v214 = vsel %vm72, %v192, 0.0
  %215 = vadd.xlane.f32.xlu0 %v214
  %v216 = vpop.xlane.xlu0 %215
  %v217 = vadd.f32 %v195, 1e-12
  %v218 = vadd.f32 %v198, 1e-12
  %v219 = vadd.f32 %v201, 1e-12
  %v220 = vadd.f32 %v204, 1e-12
  %v221 = vadd.f32 %v207, 1e-12
  %v222 = vadd.f32 %v210, 1e-12
  %v223 = vadd.f32 %v213, 1e-12
  %v224 = vadd.f32 %v216, 1e-12
  %v225 = vrsqrt.pop %v217
  %v226 = vmul.f32 %v225, %v217
  %v227 = vmul.f32 %v226, %v225
  %v228 = vmul.f32 0.5, %v227
  %v229 = vsub.f32 1.5, %v228
  %v230 = vmul.f32 %v225, %v229
  %vm231 = vweird.f32 %v217
  %vm232 = vweird.f32 %v225
  %vm233 = vmor %vm231, %vm232
  %v234 = vsel %vm233, %v225, %v230
  %v235 = vrsqrt.pop %v218
  %v236 = vmul.f32 %v235, %v218
  %v237 = vmul.f32 %v236, %v235
  %v238 = vmul.f32 0.5, %v237
  %v239 = vsub.f32 1.5, %v238
  %v240 = vmul.f32 %v235, %v239
  %vm241 = vweird.f32 %v218
  %vm242 = vweird.f32 %v235
  %vm243 = vmor %vm241, %vm242
  %v244 = vsel %vm243, %v235, %v240
  %v245 = vrsqrt.pop %v219
  %v246 = vmul.f32 %v245, %v219
  %v247 = vmul.f32 %v246, %v245
  %v248 = vmul.f32 0.5, %v247
  %v249 = vsub.f32 1.5, %v248
  %v250 = vmul.f32 %v245, %v249
  %vm251 = vweird.f32 %v219
  %vm252 = vweird.f32 %v245
  %vm253 = vmor %vm251, %vm252
  %v254 = vsel %vm253, %v245, %v250
  %v255 = vrsqrt.pop %v220
  %v256 = vmul.f32 %v255, %v220
  %v257 = vmul.f32 %v256, %v255
  %v258 = vmul.f32 0.5, %v257
  %v259 = vsub.f32 1.5, %v258
  %v260 = vmul.f32 %v255, %v259
  %vm261 = vweird.f32 %v220
  %vm262 = vweird.f32 %v255
  %vm263 = vmor %vm261, %vm262
  %v264 = vsel %vm263, %v255, %v260
  %v265 = vrsqrt.pop %v221
  %v266 = vmul.f32 %v265, %v221
  %v267 = vmul.f32 %v266, %v265
  %v268 = vmul.f32 0.5, %v267
  %v269 = vsub.f32 1.5, %v268
  %v270 = vmul.f32 %v265, %v269
  %vm271 = vweird.f32 %v221
  %vm272 = vweird.f32 %v265
  %vm273 = vmor %vm271, %vm272
  %v274 = vsel %vm273, %v265, %v270
  %v275 = vrsqrt.pop %v222
  %v276 = vmul.f32 %v275, %v222
  %v277 = vmul.f32 %v276, %v275
  %v278 = vmul.f32 0.5, %v277
  %v279 = vsub.f32 1.5, %v278
  %v280 = vmul.f32 %v275, %v279
  %vm281 = vweird.f32 %v222
  %vm282 = vweird.f32 %v275
  %vm283 = vmor %vm281, %vm282
  %v284 = vsel %vm283, %v275, %v280
  %v285 = vrsqrt.pop %v223
  %v286 = vmul.f32 %v285, %v223
  %v287 = vmul.f32 %v286, %v285
  %v288 = vmul.f32 0.5, %v287
  %v289 = vsub.f32 1.5, %v288
  %v290 = vmul.f32 %v285, %v289
  %vm291 = vweird.f32 %v223
  %vm292 = vweird.f32 %v285
  %vm293 = vmor %vm291, %vm292
  %v294 = vsel %vm293, %v285, %v290
  %v295 = vrsqrt.pop %v224
  %v296 = vmul.f32 %v295, %v224
  %v297 = vmul.f32 %v296, %v295
  %v298 = vmul.f32 0.5, %v297
  %v299 = vsub.f32 1.5, %v298
  %v300 = vmul.f32 %v295, %v299
  %vm301 = vweird.f32 %v224
  %vm302 = vweird.f32 %v295
  %vm303 = vmor %vm301, %vm302
  %v304 = vsel %vm303, %v295, %v300
  %v305 = vpack.c.bf16 %v114, %v114
  %v306 = vpack.c.bf16 %v124, %v124
  %v307 = vpack.c.bf16 %v134, %v134
  %v308 = vpack.c.bf16 %v144, %v144
  %v309 = vpack.c.bf16 %v154, %v154
  %v310 = vpack.c.bf16 %v164, %v164
  %v311 = vpack.c.bf16 %v174, %v174
  %v312 = vpack.c.bf16 %v184, %v184
  %v313 = vunpack.c.l.bf16 %v305
  %v314 = vunpack.c.l.bf16 %v306
  %v315 = vunpack.c.l.bf16 %v307
  %v316 = vunpack.c.l.bf16 %v308
  %v317 = vunpack.c.l.bf16 %v309
  %v318 = vunpack.c.l.bf16 %v310
  %v319 = vunpack.c.l.bf16 %v311
  %v320 = vunpack.c.l.bf16 %v312
  %v321 = vmul.f32 %v48, %v313
  %v322 = vmul.f32 %v49, %v314
  %v323 = vmul.f32 %v50, %v315
  %v324 = vmul.f32 %v51, %v316
  %v325 = vmul.f32 %v52, %v317
  %v326 = vmul.f32 %v53, %v318
  %v327 = vmul.f32 %v54, %v319
  %v328 = vmul.f32 %v55, %v320
  %v329 = vpack.c.bf16 %v321, %v321
  %v330 = vpack.c.bf16 %v322, %v322
  %v331 = vpack.c.bf16 %v323, %v323
  %v332 = vpack.c.bf16 %v324, %v324
  %v333 = vpack.c.bf16 %v325, %v325
  %v334 = vpack.c.bf16 %v326, %v326
  %v335 = vpack.c.bf16 %v327, %v327
  %v336 = vpack.c.bf16 %v328, %v328
  %v337 = vpack.c.bf16 %v234, %v234
  %v338 = vpack.c.bf16 %v244, %v244
  %v339 = vpack.c.bf16 %v254, %v254
  %v340 = vpack.c.bf16 %v264, %v264
  %v341 = vpack.c.bf16 %v274, %v274
  %v342 = vpack.c.bf16 %v284, %v284
  %v343 = vpack.c.bf16 %v294, %v294
  %v344 = vpack.c.bf16 %v304, %v304
  %v345 = vunpack.c.l.bf16 %v337
  %v346 = vunpack.c.l.bf16 %v338
  %v347 = vunpack.c.l.bf16 %v339
  %v348 = vunpack.c.l.bf16 %v340
  %v349 = vunpack.c.l.bf16 %v341
  %v350 = vunpack.c.l.bf16 %v342
  %v351 = vunpack.c.l.bf16 %v343
  %v352 = vunpack.c.l.bf16 %v344
  %v353 = vmul.f32 %v56, %v345
  %v354 = vmul.f32 %v57, %v346
  %v355 = vmul.f32 %v58, %v347
  %v356 = vmul.f32 %v59, %v348
  %v357 = vmul.f32 %v60, %v349
  %v358 = vmul.f32 %v61, %v350
  %v359 = vmul.f32 %v62, %v351
  %v360 = vmul.f32 %v63, %v352
  %v361 = vpack.c.bf16 %v353, %v353
  %v362 = vpack.c.bf16 %v354, %v354
  %v363 = vpack.c.bf16 %v355, %v355
  %v364 = vpack.c.bf16 %v356, %v356
  %v365 = vpack.c.bf16 %v357, %v357
  %v366 = vpack.c.bf16 %v358, %v358
  %v367 = vpack.c.bf16 %v359, %v359
  %v368 = vpack.c.bf16 %v360, %v360
  %v370 = vsel %vm72, %v329, 0
  %v373 = vsel %vm72, %v361, 0
  %375 = vmatpush.bf16.xpose.msra.mxu0 0
  %376 = vmatpush.bf16.xpose.msra.mxu0 0
  %377 = vmatpush.bf16.xpose.msra.mxu0 0
  %378 = vmatpush.bf16.xpose.msra.mxu0 0
  %379 = vmatpush.bf16.xpose.msra.mxu0 0
  %380 = vmatpush.bf16.xpose.msra.mxu0 0
  %381 = vmatpush.bf16.xpose.msra.mxu0 0
  %382 = vmatpush.bf16.xpose.msra.mxu0 %v373
  %383 = vmatmul.bf16.gmra.mxu0 %v370
  %v384 = vpop.f32.mrf.mxu0
  %v385 = vadd.f32 0.0, %v384
  %v386 = vpop.f32.mrf.mxu0
  %387 = vdwg.mxu0
  %v389 = vsel %vm72, %v330, 0
  %v392 = vsel %vm72, %v362, 0
  %394 = vmatpush.bf16.xpose.msra.mxu0 0
  %395 = vmatpush.bf16.xpose.msra.mxu0 0
  %396 = vmatpush.bf16.xpose.msra.mxu0 0
  %397 = vmatpush.bf16.xpose.msra.mxu0 0
  %398 = vmatpush.bf16.xpose.msra.mxu0 0
  %399 = vmatpush.bf16.xpose.msra.mxu0 0
  %400 = vmatpush.bf16.xpose.msra.mxu0 0
  %401 = vmatpush.bf16.xpose.msra.mxu0 %v392
  %402 = vmatmul.bf16.gmra.mxu0 %v389
  %v403 = vpop.f32.mrf.mxu0
  %v404 = vadd.f32 0.0, %v403
  %v405 = vpop.f32.mrf.mxu0
  %406 = vdwg.mxu0
  %v408 = vsel %vm72, %v331, 0
  %v411 = vsel %vm72, %v363, 0
  %413 = vmatpush.bf16.xpose.msra.mxu0 0
  %414 = vmatpush.bf16.xpose.msra.mxu0 0
  %415 = vmatpush.bf16.xpose.msra.mxu0 0
  %416 = vmatpush.bf16.xpose.msra.mxu0 0
  %417 = vmatpush.bf16.xpose.msra.mxu0 0
  %418 = vmatpush.bf16.xpose.msra.mxu0 0
  %419 = vmatpush.bf16.xpose.msra.mxu0 0
  %420 = vmatpush.bf16.xpose.msra.mxu0 %v411
  %421 = vmatmul.bf16.gmra.mxu0 %v408
  %v422 = vpop.f32.mrf.mxu0
  %v423 = vadd.f32 0.0, %v422
  %v424 = vpop.f32.mrf.mxu0
  %425 = vdwg.mxu0
  %v427 = vsel %vm72, %v332, 0
  %v430 = vsel %vm72, %v364, 0
  %432 = vmatpush.bf16.xpose.msra.mxu0 0
  %433 = vmatpush.bf16.xpose.msra.mxu0 0
  %434 = vmatpush.bf16.xpose.msra.mxu0 0
  %435 = vmatpush.bf16.xpose.msra.mxu0 0
  %436 = vmatpush.bf16.xpose.msra.mxu0 0
  %437 = vmatpush.bf16.xpose.msra.mxu0 0
  %438 = vmatpush.bf16.xpose.msra.mxu0 0
  %439 = vmatpush.bf16.xpose.msra.mxu0 %v430
  %440 = vmatmul.bf16.gmra.mxu0 %v427
  %v441 = vpop.f32.mrf.mxu0
  %v442 = vadd.f32 0.0, %v441
  %v443 = vpop.f32.mrf.mxu0
  %444 = vdwg.mxu0
  %v446 = vsel %vm72, %v333, 0
  %v449 = vsel %vm72, %v365, 0
  %451 = vmatpush.bf16.xpose.msra.mxu0 0
  %452 = vmatpush.bf16.xpose.msra.mxu0 0
  %453 = vmatpush.bf16.xpose.msra.mxu0 0
  %454 = vmatpush.bf16.xpose.msra.mxu0 0
  %455 = vmatpush.bf16.xpose.msra.mxu0 0
  %456 = vmatpush.bf16.xpose.msra.mxu0 0
  %457 = vmatpush.bf16.xpose.msra.mxu0 0
  %458 = vmatpush.bf16.xpose.msra.mxu0 %v449
  %459 = vmatmul.bf16.gmra.mxu0 %v446
  %v460 = vpop.f32.mrf.mxu0
  %v461 = vadd.f32 0.0, %v460
  %v462 = vpop.f32.mrf.mxu0
  %463 = vdwg.mxu0
  %v465 = vsel %vm72, %v334, 0
  %v468 = vsel %vm72, %v366, 0
  %470 = vmatpush.bf16.xpose.msra.mxu0 0
  %471 = vmatpush.bf16.xpose.msra.mxu0 0
  %472 = vmatpush.bf16.xpose.msra.mxu0 0
  %473 = vmatpush.bf16.xpose.msra.mxu0 0
  %474 = vmatpush.bf16.xpose.msra.mxu0 0
  %475 = vmatpush.bf16.xpose.msra.mxu0 0
  %476 = vmatpush.bf16.xpose.msra.mxu0 0
  %477 = vmatpush.bf16.xpose.msra.mxu0 %v468
  %478 = vmatmul.bf16.gmra.mxu0 %v465
  %v479 = vpop.f32.mrf.mxu0
  %v480 = vadd.f32 0.0, %v479
  %v481 = vpop.f32.mrf.mxu0
  %482 = vdwg.mxu0
  %v484 = vsel %vm72, %v335, 0
  %v487 = vsel %vm72, %v367, 0
  %489 = vmatpush.bf16.xpose.msra.mxu0 0
  %490 = vmatpush.bf16.xpose.msra.mxu0 0
  %491 = vmatpush.bf16.xpose.msra.mxu0 0
  %492 = vmatpush.bf16.xpose.msra.mxu0 0
  %493 = vmatpush.bf16.xpose.msra.mxu0 0
  %494 = vmatpush.bf16.xpose.msra.mxu0 0
  %495 = vmatpush.bf16.xpose.msra.mxu0 0
  %496 = vmatpush.bf16.xpose.msra.mxu0 %v487
  %497 = vmatmul.bf16.gmra.mxu0 %v484
  %v498 = vpop.f32.mrf.mxu0
  %v499 = vadd.f32 0.0, %v498
  %v500 = vpop.f32.mrf.mxu0
  %501 = vdwg.mxu0
  %v503 = vsel %vm72, %v336, 0
  %v506 = vsel %vm72, %v368, 0
  %508 = vmatpush.bf16.xpose.msra.mxu0 0
  %509 = vmatpush.bf16.xpose.msra.mxu0 0
  %510 = vmatpush.bf16.xpose.msra.mxu0 0
  %511 = vmatpush.bf16.xpose.msra.mxu0 0
  %512 = vmatpush.bf16.xpose.msra.mxu0 0
  %513 = vmatpush.bf16.xpose.msra.mxu0 0
  %514 = vmatpush.bf16.xpose.msra.mxu0 0
  %515 = vmatpush.bf16.xpose.msra.mxu0 %v506
  %516 = vmatmul.bf16.gmra.mxu0 %v503
  %v517 = vpop.f32.mrf.mxu0
  %v518 = vadd.f32 0.0, %v517
  %v519 = vpop.f32.mrf.mxu0
  %520 = vdwg.mxu0
  %s521 = smul.u32 0, 8
  %s522 = sld [smem:[#allocation3 + %s521]]
  %v523 = vstv %s522
  %s524 = sadd.s32 %s521, 1
  %s525 = sld [smem:[#allocation3 + %s524]]
  %v526 = vstv %s525
  %s527 = sadd.s32 %s521, 2
  %s528 = sld [smem:[#allocation3 + %s527]]
  %v529 = vstv %s528
  %s530 = sadd.s32 %s521, 3
  %s531 = sld [smem:[#allocation3 + %s530]]
  %v532 = vstv %s531
  %s533 = sadd.s32 %s521, 4
  %s534 = sld [smem:[#allocation3 + %s533]]
  %v535 = vstv %s534
  %s536 = sadd.s32 %s521, 5
  %s537 = sld [smem:[#allocation3 + %s536]]
  %v538 = vstv %s537
  %s539 = sadd.s32 %s521, 6
  %s540 = sld [smem:[#allocation3 + %s539]]
  %v541 = vstv %s540
  %s542 = sadd.s32 %s521, 7
  %s543 = sld [smem:[#allocation3 + %s542]]
  %v544 = vstv %s543
  %v545 = vmul.f32 %v385, %v523
  %v546 = vmul.f32 %v404, %v526
  %v547 = vmul.f32 %v423, %v529
  %v548 = vmul.f32 %v442, %v532
  %v549 = vmul.f32 %v461, %v535
  %v550 = vmul.f32 %v480, %v538
  %v551 = vmul.f32 %v499, %v541
  %v552 = vmul.f32 %v518, %v544
  %vm553 = vcmask 64512
  %v554 = vsel %vm553, %v545, -inf
  %555 = vmax.xlane.f32.xlu0 %v554
  %v556 = vpop.xlane.xlu0 %555
  %v557 = vsel %vm553, %v546, -inf
  %558 = vmax.xlane.f32.xlu0 %v557
  %v559 = vpop.xlane.xlu0 %558
  %v560 = vsel %vm553, %v547, -inf
  %561 = vmax.xlane.f32.xlu0 %v560
  %v562 = vpop.xlane.xlu0 %561
  %v563 = vsel %vm553, %v548, -inf
  %564 = vmax.xlane.f32.xlu0 %v563
  %v565 = vpop.xlane.xlu0 %564
  %v566 = vsel %vm553, %v549, -inf
  %567 = vmax.xlane.f32.xlu0 %v566
  %v568 = vpop.xlane.xlu0 %567
  %v569 = vsel %vm553, %v550, -inf
  %570 = vmax.xlane.f32.xlu0 %v569
  %v571 = vpop.xlane.xlu0 %570
  %v572 = vsel %vm553, %v551, -inf
  %573 = vmax.xlane.f32.xlu0 %v572
  %v574 = vpop.xlane.xlu0 %573
  %v575 = vsel %vm553, %v552, -inf
  %576 = vmax.xlane.f32.xlu0 %v575
  %v577 = vpop.xlane.xlu0 %576
  %v578 = vmax.f32 %v556, 0.0
  %v579 = vmax.f32 %v559, 0.0
  %v580 = vmax.f32 %v562, 0.0
  %v581 = vmax.f32 %v565, 0.0
  %v582 = vmax.f32 %v568, 0.0
  %v583 = vmax.f32 %v571, 0.0
  %v584 = vmax.f32 %v574, 0.0
  %v585 = vmax.f32 %v577, 0.0
  %v586 = vsub.f32 %v545, %v578
  %v587 = vsub.f32 %v546, %v579
  %v588 = vsub.f32 %v547, %v580
  %v589 = vsub.f32 %v548, %v581
  %v590 = vsub.f32 %v549, %v582
  %v591 = vsub.f32 %v550, %v583
  %v592 = vsub.f32 %v551, %v584
  %v593 = vsub.f32 %v552, %v585
  %v594 = vmul.f32 %v586, 1.442695
  %v595 = vpow.pop %v594
  %v596 = vmul.f32 %v587, 1.442695
  %v597 = vpow.pop %v596
  %v598 = vmul.f32 %v588, 1.442695
  %v599 = vpow.pop %v598
  %v600 = vmul.f32 %v589, 1.442695
  %v601 = vpow.pop %v600
  %v602 = vmul.f32 %v590, 1.442695
  %v603 = vpow.pop %v602
  %v604 = vmul.f32 %v591, 1.442695
  %v605 = vpow.pop %v604
  %v606 = vmul.f32 %v592, 1.442695
  %v607 = vpow.pop %v606
  %v608 = vmul.f32 %v593, 1.442695
  %v609 = vpow.pop %v608
  %v610 = vsel %vm553, %v595, 0.0
  %611 = vadd.xlane.f32.xlu0 %v610
  %v612 = vpop.xlane.xlu0 %611
  %v613 = vsel %vm553, %v597, 0.0
  %614 = vadd.xlane.f32.xlu0 %v613
  %v615 = vpop.xlane.xlu0 %614
  %v616 = vsel %vm553, %v599, 0.0
  %617 = vadd.xlane.f32.xlu0 %v616
  %v618 = vpop.xlane.xlu0 %617
  %v619 = vsel %vm553, %v601, 0.0
  %620 = vadd.xlane.f32.xlu0 %v619
  %v621 = vpop.xlane.xlu0 %620
  %v622 = vsel %vm553, %v603, 0.0
  %623 = vadd.xlane.f32.xlu0 %v622
  %v624 = vpop.xlane.xlu0 %623
  %v625 = vsel %vm553, %v605, 0.0
  %626 = vadd.xlane.f32.xlu0 %v625
  %v627 = vpop.xlane.xlu0 %626
  %v628 = vsel %vm553, %v607, 0.0
  %629 = vadd.xlane.f32.xlu0 %v628
  %v630 = vpop.xlane.xlu0 %629
  %v631 = vsel %vm553, %v609, 0.0
  %632 = vadd.xlane.f32.xlu0 %v631
  %v633 = vpop.xlane.xlu0 %632
  %v634 = vsub.f32 0.0, %v578
  %v635 = vsub.f32 0.0, %v579
  %v636 = vsub.f32 0.0, %v580
  %v637 = vsub.f32 0.0, %v581
  %v638 = vsub.f32 0.0, %v582
  %v639 = vsub.f32 0.0, %v583
  %v640 = vsub.f32 0.0, %v584
  %v641 = vsub.f32 0.0, %v585
  %v642 = vmul.f32 %v634, 1.442695
  %v643 = vpow.pop %v642
  %v644 = vmul.f32 %v635, 1.442695
  %v645 = vpow.pop %v644
  %v646 = vmul.f32 %v636, 1.442695
  %v647 = vpow.pop %v646
  %v648 = vmul.f32 %v637, 1.442695
  %v649 = vpow.pop %v648
  %v650 = vmul.f32 %v638, 1.442695
  %v651 = vpow.pop %v650
  %v652 = vmul.f32 %v639, 1.442695
  %v653 = vpow.pop %v652
  %v654 = vmul.f32 %v640, 1.442695
  %v655 = vpow.pop %v654
  %v656 = vmul.f32 %v641, 1.442695
  %v657 = vpow.pop %v656
  %v658 = vadd.f32 %v612, %v643
  %v659 = vadd.f32 %v615, %v645
  %v660 = vadd.f32 %v618, %v647
  %v661 = vadd.f32 %v621, %v649
  %v662 = vadd.f32 %v624, %v651
  %v663 = vadd.f32 %v627, %v653
  %v664 = vadd.f32 %v630, %v655
  %v665 = vadd.f32 %v633, %v657
  %v666 = vrcp.pop %v658
  %v667 = vrcp.pop %v659
  %v668 = vrcp.pop %v660
  %v669 = vrcp.pop %v661
  %v670 = vrcp.pop %v662
  %v671 = vrcp.pop %v663
  %v672 = vrcp.pop %v664
  %v673 = vrcp.pop %v665
  %v674 = vmul.f32 %v595, %v666
  %v675 = vmul.f32 %v597, %v667
  %v676 = vmul.f32 %v599, %v668
  %v677 = vmul.f32 %v601, %v669
  %v678 = vmul.f32 %v603, %v670
  %v679 = vmul.f32 %v605, %v671
  %v680 = vmul.f32 %v607, %v672
  %v681 = vmul.f32 %v609, %v673
  %v682 = vpack.c.bf16 %v674, %v674
  %v683 = vpack.c.bf16 %v675, %v675
  %v684 = vpack.c.bf16 %v676, %v676
  %v685 = vpack.c.bf16 %v677, %v677
  %v686 = vpack.c.bf16 %v678, %v678
  %v687 = vpack.c.bf16 %v679, %v679
  %v688 = vpack.c.bf16 %v680, %v680
  %v689 = vpack.c.bf16 %v681, %v681
  %v691 = vsel %vm553, %v682, 0
  %vm693 = vcmask 1043456
  %v695 = vsel %vm693, %v40, 0
  %697 = vmatpush.bf16.msra.mxu0 0
  %698 = vmatpush.bf16.msra.mxu0 0
  %699 = vmatpush.bf16.msra.mxu0 0
  %700 = vmatpush.bf16.msra.mxu0 0
  %701 = vmatpush.bf16.msra.mxu0 0
  %702 = vmatpush.bf16.msra.mxu0 0
  %703 = vmatpush.bf16.msra.mxu0 0
  %704 = vmatpush.bf16.msra.mxu0 %v695
  %705 = vmatmul.bf16.gmra.mxu0 %v691
  %v706 = vpop.f32.mrf.mxu0
  %v707 = vadd.f32 0.0, %v706
  %v708 = vpop.f32.mrf.mxu0
  %709 = vdwg.mxu0
  %v711 = vsel %vm553, %v683, 0
  %v714 = vsel %vm693, %v41, 0
  %716 = vmatpush.bf16.msra.mxu0 0
  %717 = vmatpush.bf16.msra.mxu0 0
  %718 = vmatpush.bf16.msra.mxu0 0
  %719 = vmatpush.bf16.msra.mxu0 0
  %720 = vmatpush.bf16.msra.mxu0 0
  %721 = vmatpush.bf16.msra.mxu0 0
  %722 = vmatpush.bf16.msra.mxu0 0
  %723 = vmatpush.bf16.msra.mxu0 %v714
  %724 = vmatmul.bf16.gmra.mxu0 %v711
  %v725 = vpop.f32.mrf.mxu0
  %v726 = vadd.f32 0.0, %v725
  %v727 = vpop.f32.mrf.mxu0
  %728 = vdwg.mxu0
  %v730 = vsel %vm553, %v684, 0
  %v733 = vsel %vm693, %v42, 0
  %735 = vmatpush.bf16.msra.mxu0 0
  %736 = vmatpush.bf16.msra.mxu0 0
  %737 = vmatpush.bf16.msra.mxu0 0
  %738 = vmatpush.bf16.msra.mxu0 0
  %739 = vmatpush.bf16.msra.mxu0 0
  %740 = vmatpush.bf16.msra.mxu0 0
  %741 = vmatpush.bf16.msra.mxu0 0
  %742 = vmatpush.bf16.msra.mxu0 %v733
  %743 = vmatmul.bf16.gmra.mxu0 %v730
  %v744 = vpop.f32.mrf.mxu0
  %v745 = vadd.f32 0.0, %v744
  %v746 = vpop.f32.mrf.mxu0
  %747 = vdwg.mxu0
  %v749 = vsel %vm553, %v685, 0
  %v752 = vsel %vm693, %v43, 0
  %754 = vmatpush.bf16.msra.mxu0 0
  %755 = vmatpush.bf16.msra.mxu0 0
  %756 = vmatpush.bf16.msra.mxu0 0
  %757 = vmatpush.bf16.msra.mxu0 0
  %758 = vmatpush.bf16.msra.mxu0 0
  %759 = vmatpush.bf16.msra.mxu0 0
  %760 = vmatpush.bf16.msra.mxu0 0
  %761 = vmatpush.bf16.msra.mxu0 %v752
  %762 = vmatmul.bf16.gmra.mxu0 %v749
  %v763 = vpop.f32.mrf.mxu0
  %v764 = vadd.f32 0.0, %v763
  %v765 = vpop.f32.mrf.mxu0
  %766 = vdwg.mxu0
  %v768 = vsel %vm553, %v686, 0
  %v771 = vsel %vm693, %v44, 0
  %773 = vmatpush.bf16.msra.mxu0 0
  %774 = vmatpush.bf16.msra.mxu0 0
  %775 = vmatpush.bf16.msra.mxu0 0
  %776 = vmatpush.bf16.msra.mxu0 0
  %777 = vmatpush.bf16.msra.mxu0 0
  %778 = vmatpush.bf16.msra.mxu0 0
  %779 = vmatpush.bf16.msra.mxu0 0
  %780 = vmatpush.bf16.msra.mxu0 %v771
  %781 = vmatmul.bf16.gmra.mxu0 %v768
  %v782 = vpop.f32.mrf.mxu0
  %v783 = vadd.f32 0.0, %v782
  %v784 = vpop.f32.mrf.mxu0
  %785 = vdwg.mxu0
  %v787 = vsel %vm553, %v687, 0
  %v790 = vsel %vm693, %v45, 0
  %792 = vmatpush.bf16.msra.mxu0 0
  %793 = vmatpush.bf16.msra.mxu0 0
  %794 = vmatpush.bf16.msra.mxu0 0
  %795 = vmatpush.bf16.msra.mxu0 0
  %796 = vmatpush.bf16.msra.mxu0 0
  %797 = vmatpush.bf16.msra.mxu0 0
  %798 = vmatpush.bf16.msra.mxu0 0
  %799 = vmatpush.bf16.msra.mxu0 %v790
  %800 = vmatmul.bf16.gmra.mxu0 %v787
  %v801 = vpop.f32.mrf.mxu0
  %v802 = vadd.f32 0.0, %v801
  %v803 = vpop.f32.mrf.mxu0
  %804 = vdwg.mxu0
  %v806 = vsel %vm553, %v688, 0
  %v809 = vsel %vm693, %v46, 0
  %811 = vmatpush.bf16.msra.mxu0 0
  %812 = vmatpush.bf16.msra.mxu0 0
  %813 = vmatpush.bf16.msra.mxu0 0
  %814 = vmatpush.bf16.msra.mxu0 0
  %815 = vmatpush.bf16.msra.mxu0 0
  %816 = vmatpush.bf16.msra.mxu0 0
  %817 = vmatpush.bf16.msra.mxu0 0
  %818 = vmatpush.bf16.msra.mxu0 %v809
  %819 = vmatmul.bf16.gmra.mxu0 %v806
  %v820 = vpop.f32.mrf.mxu0
  %v821 = vadd.f32 0.0, %v820
  %v822 = vpop.f32.mrf.mxu0
  %823 = vdwg.mxu0
  %v825 = vsel %vm553, %v689, 0
  %v828 = vsel %vm693, %v47, 0
  %830 = vmatpush.bf16.msra.mxu0 0
  %831 = vmatpush.bf16.msra.mxu0 0
  %832 = vmatpush.bf16.msra.mxu0 0
  %833 = vmatpush.bf16.msra.mxu0 0
  %834 = vmatpush.bf16.msra.mxu0 0
  %835 = vmatpush.bf16.msra.mxu0 0
  %836 = vmatpush.bf16.msra.mxu0 0
  %837 = vmatpush.bf16.msra.mxu0 %v828
  %838 = vmatmul.bf16.gmra.mxu0 %v825
  %v839 = vpop.f32.mrf.mxu0
  %v840 = vadd.f32 0.0, %v839
  %v841 = vpop.f32.mrf.mxu0
  %842 = vdwg.mxu0
  %v843 = vpack.c.bf16 %v707, %v707
  %v844 = vpack.c.bf16 %v726, %v726
  %v845 = vpack.c.bf16 %v745, %v745
  %v846 = vpack.c.bf16 %v764, %v764
  %v847 = vpack.c.bf16 %v783, %v783
  %v848 = vpack.c.bf16 %v802, %v802
  %v849 = vpack.c.bf16 %v821, %v821
  %v850 = vpack.c.bf16 %v840, %v840
  %vm851 = vcmask 519168
  %852 = vst.msk [vmem:[%s4] sm:$0xf] %vm851, %v843
  %853 = vst.msk [vmem:[%s4 + $0x4] sm:$0xf] %vm851, %v844
  %854 = vst.msk [vmem:[%s4 + $0x8] sm:$0xf] %vm851, %v845
  %855 = vst.msk [vmem:[%s4 + $0xc] sm:$0xf] %vm851, %v846
  %856 = vst.msk [vmem:[%s4 + $0x10] sm:$0xf] %vm851, %v847
  %857 = vst.msk [vmem:[%s4 + $0x14] sm:$0xf] %vm851, %v848
  %858 = vst.msk [vmem:[%s4 + $0x18] sm:$0xf] %vm851, %v849
  %859 = vst.msk [vmem:[%s4 + $0x1c] sm:$0xf] %vm851, %v850
  // Predicated region
  $region14: #{improved_dhsa_forward.5} parent=0 // pred_check
    _
  $region15: #{improved_dhsa_forward.5} parent=0 // pred_check_branch
    %861 = sbr.rel (0) target = $region17
  $region16: #{improved_dhsa_forward.5} parent=0 // pred_region
    _
  $region17: #{improved_dhsa_forward.5} parent=0 // pred_fallthru
    _
  // Predicated region
  $region18: #{improved_dhsa_forward.5} parent=0 // pred_check
    _
  $region19: #{improved_dhsa_forward.5} parent=0 // pred_check_branch
    %863 = sbr.rel (0) target = $region21
  $region20: #{improved_dhsa_forward.5} parent=0 // pred_region
    _
  $region21: #{improved_dhsa_forward.5} parent=0 // pred_fallthru
    _

// kernel: improved_dhsa_forward.7
$region0: #{improved_dhsa_forward.7}
  #allocation0 [shape = 'u32[]', space=smem, size = 0x4, offset = 0x4, fixed_abs, tag = 'smem constant byte address 0x4 - core index']
  #allocation1 [shape = 'u32[72,128]{1,0:T(1,128)}', space=vmem, size = 0x9000, scoped, tag = 'internal scratch']
  %s0 = inlined_call_operand.vmem [shape: bf16[2,8,256], index: 0, kind: input, shape index: {}]
  %s1 = inlined_call_operand.vmem [shape: bf16[2,8,256], index: 1, kind: input, shape index: {}]
  %s2 = inlined_call_operand.vmem [shape: bf16[8,8], index: 2, kind: input, shape index: {}]
  %s3 = inlined_call_operand.vmem [shape: f32[2,8,256], index: 3, kind: output, shape index: {}]
  %s4 = sld [smem:[#allocation0]]
  $region45: #{improved_dhsa_forward.7} parent=0
    _
  %s6 = ssub.s32 1, %s4
  %s7 = scalar_select 0, %s6, %s4
  loop: start=0, step=1, limit=4
  $region2: #{improved_dhsa_forward.7} parent=0 // loop_pre_header
    _
  $region3: #{improved_dhsa_forward.7} parent=0 // loop_header
    %s9 = sphi 0, %s13
    %p10 = scmp.ge.s32.totalorder %s9, 4
    %s16 = sphi 0, %s28
    %s17 = sphi 0, %s24
    %s18 = sphi 0, %s16
    %s19 = sphi 0, %s17
    %s20 = sphi 0, %s18
    %s21 = sphi 0, %s19
    %s33 = sphi 0, %s35
    %s36 = sphi 0, %s33
    %s37 = sphi 0, %s36
    %s53 = sphi 0, %s37
    %s61 = sphi 0, %s63
    %s64 = sphi 0, %s61
    %s65 = sphi 0, %s64
    %s81 = sphi 0, %s65
    %s85 = sphi 0, %s85
    %s87 = sphi 0, %s85
    %s88 = sphi 0, %s87
    %s102 = sphi 0, %s88
    %s110 = sphi 0, %s112
    %s113 = sphi 0, %s110
    %s114 = sphi 0, %s113
    %s130 = sphi 0, %s114
  $region4: #{improved_dhsa_forward.7} parent=0 // loop_header_branch
    %12 = sbr.rel (%p10) target = $region8
  $region5: #{improved_dhsa_forward.7} parent=0 // loop_body
    %s14 = ssub.s32 %s9, 1
    %s15 = ssub.s32 %s9, 2
    %s22 = sadd.s32 1, %s17
    %p23 = scmp.ge.s32.totalorder %s22, 1
    %s24 = scalar_select %p23, 0, %s22
    %s25 = sadd.s32 1, %s16
    %s26 = scalar_select %p23, %s25, %s16
    %p27 = scmp.ge.s32.totalorder %s26, 2
    %s28 = scalar_select %p27, 0, %s26
    %s29 = ssub.s32 %s16, %s28
    %s30 = ssub.s32 %s17, %s24
    %s31 = sor.u32 %s29, %s30
    %p32 = scmp.eq.s32.totalorder %s31, 0
    %s34 = sadd.s32 %s33, 1
    %s35 = scalar_select %p32, %s33, %s34
    %p38 = pneg %p32
    %p39 = scmp.eq.s32.totalorder %s9, 1
    %p40 = por %p38, %p39
    %p41 = scmp.ne.s32.totalorder %s33, %s36
    %p42 = scmp.eq.s32.totalorder %s9, 0
    %p43 = por %p41, %p42
    %p44 = scmp.ne.s32.totalorder %s33, %s36
    %p45 = scmp.eq.s32.totalorder %s14, 1
    %p46 = por %p44, %p45
    %p47 = scmp.ne.s32.totalorder %s36, %s37
    %p48 = scmp.eq.s32.totalorder %s14, 0
    %p49 = por %p47, %p48
    %p50 = scmp.ne.s32.totalorder %s36, %s37
    %p51 = scmp.eq.s32.totalorder %s15, 1
    %p52 = por %p50, %p51
    %p54 = scmp.ne.s32.totalorder %s37, %s53
    %p55 = scmp.eq.s32.totalorder %s15, 0
    %p56 = por %p54, %p55
    %s57 = ssub.s32 %s16, %s28
    %s58 = ssub.s32 %s17, %s24
    %s59 = sor.u32 %s57, %s58
    %p60 = scmp.eq.s32.totalorder %s59, 0
    %s62 = sadd.s32 %s61, 1
    %s63 = scalar_select %p60, %s61, %s62
    %p66 = pneg %p60
    %p67 = scmp.eq.s32.totalorder %s9, 1
    %p68 = por %p66, %p67
    %p69 = scmp.ne.s32.totalorder %s61, %s64
    %p70 = scmp.eq.s32.totalorder %s9, 0
    %p71 = por %p69, %p70
    %p72 = scmp.ne.s32.totalorder %s61, %s64
    %p73 = scmp.eq.s32.totalorder %s14, 1
    %p74 = por %p72, %p73
    %p75 = scmp.ne.s32.totalorder %s64, %s65
    %p76 = scmp.eq.s32.totalorder %s14, 0
    %p77 = por %p75, %p76
    %p78 = scmp.ne.s32.totalorder %s64, %s65
    %p79 = scmp.eq.s32.totalorder %s15, 1
    %p80 = por %p78, %p79
    %p82 = scmp.ne.s32.totalorder %s65, %s81
    %p83 = scmp.eq.s32.totalorder %s15, 0
    %p84 = por %p82, %p83
    %s86 = sadd.s32 %s85, 1
    %p89 = scmp.eq.s32.totalorder %s9, 1
    %p90 = scmp.ne.s32.totalorder %s85, %s87
    %p91 = scmp.eq.s32.totalorder %s9, 0
    %p92 = por %p90, %p91
    %p93 = scmp.ne.s32.totalorder %s85, %s87
    %p94 = scmp.eq.s32.totalorder %s14, 1
    %p95 = por %p93, %p94
    %p96 = scmp.ne.s32.totalorder %s87, %s88
    %p97 = scmp.eq.s32.totalorder %s14, 0
    %p98 = por %p96, %p97
    %p99 = scmp.ne.s32.totalorder %s87, %s88
    %p100 = scmp.eq.s32.totalorder %s15, 1
    %p101 = por %p99, %p100
    %p103 = scmp.ne.s32.totalorder %s88, %s102
    %p104 = scmp.eq.s32.totalorder %s15, 0
    %p105 = por %p103, %p104
    %s106 = ssub.s32 %s16, %s28
    %s107 = ssub.s32 %s17, %s24
    %s108 = sor.u32 %s106, %s107
    %p109 = scmp.eq.s32.totalorder %s108, 0
    %s111 = sadd.s32 %s110, 1
    %s112 = scalar_select %p109, %s110, %s111
    %p115 = pneg %p109
    %p116 = scmp.eq.s32.totalorder %s9, 1
    %p117 = por %p115, %p116
    %p118 = scmp.ne.s32.totalorder %s110, %s113
    %p119 = scmp.eq.s32.totalorder %s9, 0
    %p120 = por %p118, %p119
    %p121 = scmp.ne.s32.totalorder %s110, %s113
    %p122 = scmp.eq.s32.totalorder %s14, 1
    %p123 = por %p121, %p122
    %p124 = scmp.ne.s32.totalorder %s113, %s114
    %p125 = scmp.eq.s32.totalorder %s14, 0
    %p126 = por %p124, %p125
    %p127 = scmp.ne.s32.totalorder %s113, %s114
    %p128 = scmp.eq.s32.totalorder %s15, 1
    %p129 = por %p127, %p128
    %p131 = scmp.ne.s32.totalorder %s114, %s130
    %p132 = scmp.eq.s32.totalorder %s15, 0
    %p133 = por %p131, %p132
    %p134 = scmp.le.s32.totalorder 1, %s9
    %p135 = scmp.lt.s32.totalorder %s9, 3
    %p136 = pnand %p134, %p135
    %p137 = pneg %p136
    // Predicated region
    $region9: #{improved_dhsa_forward.7} parent=5 // pred_check
      _
    $region10: #{improved_dhsa_forward.7} parent=5 // pred_check_branch
      %139 = sbr.rel (%p136) target = $region12
    $region11: #{improved_dhsa_forward.7} parent=5 // pred_region
      %s140 = ssub.s32 %s9, 1
      // Predicated region
      $region13: #{improved_dhsa_forward.7} parent=11 // pred_check
        %p141 = pneg %p98
      $region14: #{improved_dhsa_forward.7} parent=11 // pred_check_branch
        %143 = sbr.rel (%p141) target = $region16
      $region15: #{improved_dhsa_forward.7} parent=11 // pred_region
        _
      $region16: #{improved_dhsa_forward.7} parent=11 // pred_fallthru
        _
    $region12: #{improved_dhsa_forward.7} parent=5 // pred_fallthru
      _
    %p144 = scmp.lt.s32.totalorder %s9, 2
    // Predicated region
    $region17: #{improved_dhsa_forward.7} parent=5 // pred_check
      %p145 = pneg %p144
    $region18: #{improved_dhsa_forward.7} parent=5 // pred_check_branch
      %147 = sbr.rel (%p145) target = $region20
    $region19: #{improved_dhsa_forward.7} parent=5 // pred_region
      // Predicated region
      $region21: #{improved_dhsa_forward.7} parent=19 // pred_check
        %p148 = pneg %p43
      $region22: #{improved_dhsa_forward.7} parent=19 // pred_check_branch
        %150 = sbr.rel (%p148) target = $region24
      $region23: #{improved_dhsa_forward.7} parent=19 // pred_region
        %s151 = smul.u32 2, %s17
        %p152 = scmp.lt.s32.totalorder %s16, 1
        %s153 = scalar_select %p152, %s16, 1
        %p154 = scmp.lt.s32.totalorder %s151, 1
        %s155 = scalar_select %p154, %s151, 1
        %s156 = smul.addr %s153, 2
        %s157 = sadd.s32 %s155, %s156
        %s158 = smul.addr %s157, 4
        %s159 = scalar_lea.vmem %s0, %s158
        %s160 = smul.u32 2, %s17
      $region24: #{improved_dhsa_forward.7} parent=19 // pred_fallthru
        _
      // Predicated region
      $region25: #{improved_dhsa_forward.7} parent=19 // pred_check
        %p161 = pneg %p71
      $region26: #{improved_dhsa_forward.7} parent=19 // pred_check_branch
        %163 = sbr.rel (%p161) target = $region28
      $region27: #{improved_dhsa_forward.7} parent=19 // pred_region
        %s164 = smul.u32 2, %s17
        %p165 = scmp.lt.s32.totalorder %s16, 1
        %s166 = scalar_select %p165, %s16, 1
        %p167 = scmp.lt.s32.totalorder %s164, 1
        %s168 = scalar_select %p167, %s164, 1
        %s169 = smul.addr %s166, 2
        %s170 = sadd.s32 %s168, %s169
        %s171 = smul.addr %s170, 4
        %s172 = scalar_lea.vmem %s1, %s171
        %s173 = smul.u32 2, %s17
      $region28: #{improved_dhsa_forward.7} parent=19 // pred_fallthru
        _
    $region20: #{improved_dhsa_forward.7} parent=5 // pred_fallthru
      _
    %p174 = scmp.le.s32.totalorder 1, %s9
    %p175 = scmp.lt.s32.totalorder %s9, 3
    %p176 = pnand %p174, %p175
    %p177 = pneg %p176
    // Predicated region
    $region29: #{improved_dhsa_forward.7} parent=5 // pred_check
      _
    $region30: #{improved_dhsa_forward.7} parent=5 // pred_check_branch
      %179 = sbr.rel (%p176) target = $region32
    $region31: #{improved_dhsa_forward.7} parent=5 // pred_region
      %s180 = ssub.s32 %s9, 1
      %s181 = smul.u32 2, %s19
      %p182 = scmp.lt.s32.totalorder %s18, 1
      %s183 = scalar_select %p182, %s18, 1
      %p184 = scmp.lt.s32.totalorder %s181, 1
      %s185 = scalar_select %p184, %s181, 1
      %s186 = smul.addr %s183, 2
      %s187 = sadd.s32 %s185, %s186
      %s188 = smul.addr %s187, 4
      %s189 = scalar_lea.vmem %s0, %s188
      %p190 = pneg %p49
      %p191 = pneg %p46
      %s192 = smul.u32 2, %s19
      %p193 = scmp.lt.s32.totalorder %s18, 1
      %s194 = scalar_select %p193, %s18, 1
      %p195 = scmp.lt.s32.totalorder %s192, 1
      %s196 = scalar_select %p195, %s192, 1
      %s197 = smul.addr %s194, 2
      %s198 = sadd.s32 %s196, %s197
      %s199 = smul.addr %s198, 4
      %s200 = scalar_lea.vmem %s1, %s199
      %p201 = pneg %p77
      %p202 = pneg %p74
      %p203 = pneg %p98
      %p204 = pneg %p95
      %p205 = pneg %p126
      %p206 = pneg %p123
      %s207 = smul.u32 2, %s19
      %p208 = scmp.lt.s32.totalorder %s18, 1
      %s209 = scalar_select %p208, %s18, 1
      %p210 = scmp.lt.s32.totalorder %s207, 1
      %s211 = scalar_select %p210, %s207, 1
      %s212 = smul.addr %s209, 2
      %s213 = sadd.s32 %s211, %s212
      %s214 = smul.addr %s213, 8
      %s215 = scalar_lea.vmem %s3, %s214
      %s216 = smul.u32 2, %s19
      %p217 = scmp.lt.s32.totalorder %s18, 1
      %s218 = scalar_select %p217, %s18, 1
      %p219 = scmp.lt.s32.totalorder %s216, 1
      %s220 = scalar_select %p219, %s216, 1
      %s221 = smul.addr %s218, 2
      %s222 = sadd.s32 %s220, %s221
      %s223 = smul.addr %s222, 4
      %s224 = scalar_lea.vmem %s0, %s223
      %s225 = smul.u32 2, %s19
      %s226 = smul.u32 2, %s19
      %p227 = scmp.lt.s32.totalorder %s18, 1
      %s228 = scalar_select %p227, %s18, 1
      %p229 = scmp.lt.s32.totalorder %s226, 1
      %s230 = scalar_select %p229, %s226, 1
      %s231 = smul.addr %s228, 2
      %s232 = sadd.s32 %s230, %s231
      %s233 = smul.addr %s232, 4
      %s234 = scalar_lea.vmem %s1, %s233
      %s235 = smul.u32 2, %s19
      %s236 = smul.u32 2, %s19
      %p237 = scmp.lt.s32.totalorder %s18, 1
      %s238 = scalar_select %p237, %s18, 1
      %p239 = scmp.lt.s32.totalorder %s236, 1
      %s240 = scalar_select %p239, %s236, 1
      %s241 = smul.addr %s238, 2
      %s242 = sadd.s32 %s240, %s241
      %s243 = smul.addr %s242, 8
      %s244 = scalar_lea.vmem %s3, %s243
      %s245 = smul.u32 2, %s19
      %v247 = vld [vmem:[%s224] sm:$0xff]
      %v248 = vld [vmem:[%s234] sm:$0xff]
      %v249 = vunpack.c.l.bf16 %v247
      %v250 = vunpack.c.h.bf16 %v247
      %v251 = vunpack.c.l.bf16 %v248
      %v252 = vunpack.c.h.bf16 %v248
      %v253 = vmul.f32 %v249, %v251
      %v254 = vmul.f32 %v250, %v252
      %v255 = vpack.c.bf16 %v253, %v253
      %v256 = vpack.c.bf16 %v254, %v254
      %v257 = vld [vmem:[%s2] sm:$0xf]
      %vm258 = vcmask 64512
      %v260 = vsel %vm258, %v257, 0
      %vm262 = vcmask 1043456
      %v264 = vsel %vm262, %v255, 0
      %v267 = vsel %vm262, %v256, 0
      %269 = vmatpush.bf16.msra.mxu0 0
      %270 = vmatpush.bf16.msra.mxu0 0
      %271 = vmatpush.bf16.msra.mxu0 0
      %272 = vmatpush.bf16.msra.mxu0 0
      %273 = vmatpush.bf16.msra.mxu0 0
      %274 = vmatpush.bf16.msra.mxu0 0
      %275 = vmatpush.bf16.msra.mxu0 0
      %276 = vmatpush.bf16.msra.mxu0 %v264
      %277 = vmatmul.bf16.gmra.mxu0 %v260
      %v278 = vpop.f32.mrf.mxu0
      %v279 = vadd.f32 0.0, %v278
      %v280 = vpop.f32.mrf.mxu0
      %281 = vdwg.mxu0
      %282 = vmatpush.bf16.msra.mxu0 0
      %283 = vmatpush.bf16.msra.mxu0 0
      %284 = vmatpush.bf16.msra.mxu0 0
      %285 = vmatpush.bf16.msra.mxu0 0
      %286 = vmatpush.bf16.msra.mxu0 0
      %287 = vmatpush.bf16.msra.mxu0 0
      %288 = vmatpush.bf16.msra.mxu0 0
      %289 = vmatpush.bf16.msra.mxu0 %v267
      %290 = vmatmul.bf16.gmra.mxu0 %v260
      %v291 = vpop.f32.mrf.mxu0
      %v292 = vadd.f32 0.0, %v291
      %v293 = vpop.f32.mrf.mxu0
      %294 = vdwg.mxu0
      %295 = vst [vmem:[%s244] sm:$0xff] %v279
      %296 = vst [vmem:[%s244 + $0x8] sm:$0xff] %v292
      %s297 = smul.u32 2, %s19
      %p298 = scmp.lt.s32.totalorder %s18, 1
      %s299 = scalar_select %p298, %s18, 1
      %p300 = scmp.lt.s32.totalorder %s297, 1
      %s301 = scalar_select %p300, %s297, 1
      %s302 = smul.addr %s299, 2
      %s303 = sadd.s32 %s301, %s302
      %s304 = smul.addr %s303, 8
      %s305 = scalar_lea.vmem %s3, %s304
      // Predicated region
      $region33: #{improved_dhsa_forward.7} parent=31 // pred_check
        %p306 = pneg %p123
      $region34: #{improved_dhsa_forward.7} parent=31 // pred_check_branch
        %308 = sbr.rel (%p306) target = $region36
      $region35: #{improved_dhsa_forward.7} parent=31 // pred_region
        %s309 = smul.u32 2, %s19
      $region36: #{improved_dhsa_forward.7} parent=31 // pred_fallthru
        _
    $region32: #{improved_dhsa_forward.7} parent=5 // pred_fallthru
      _
    %p310 = scmp.le.s32.totalorder 2, %s9
    // Predicated region
    $region37: #{improved_dhsa_forward.7} parent=5 // pred_check
      %p311 = pneg %p310
    $region38: #{improved_dhsa_forward.7} parent=5 // pred_check_branch
      %313 = sbr.rel (%p311) target = $region40
    $region39: #{improved_dhsa_forward.7} parent=5 // pred_region
      %s314 = ssub.s32 %s9, 2
      // Predicated region
      $region41: #{improved_dhsa_forward.7} parent=39 // pred_check
        %p315 = pneg %p129
      $region42: #{improved_dhsa_forward.7} parent=39 // pred_check_branch
        %317 = sbr.rel (%p315) target = $region44
      $region43: #{improved_dhsa_forward.7} parent=39 // pred_region
        %s318 = smul.u32 2, %s21
        %p319 = scmp.lt.s32.totalorder %s20, 1
        %s320 = scalar_select %p319, %s20, 1
        %p321 = scmp.lt.s32.totalorder %s318, 1
        %s322 = scalar_select %p321, %s318, 1
        %s323 = smul.addr %s320, 2
        %s324 = sadd.s32 %s322, %s323
        %s325 = smul.addr %s324, 8
        %s326 = scalar_lea.vmem %s3, %s325
      $region44: #{improved_dhsa_forward.7} parent=39 // pred_fallthru
        _
    $region40: #{improved_dhsa_forward.7} parent=5 // pred_fallthru
      _
  $region6: #{improved_dhsa_forward.7} parent=0 // loop_footer
    %s13 = sadd.s32 1, %s9
  $region7: #{improved_dhsa_forward.7} parent=0 // loop_footer_branch
    %8 = sbr.rel target = $region3
  $region8: #{improved_dhsa_forward.7} parent=0 // loop_exit
    _

</llo_original>
